<compile_context>
chip_gen: v5e
topology: v5e:2x2
jax: 0.10.0
libtpu: 0.0.40
codegen_flags: <defaults>
</compile_context>

<pallas_src>
import functools

import jax
import jax.numpy as jnp
from jax import lax
from jax.experimental import pallas as pl
from jax.experimental.pallas import tpu as pltpu

LANE = 128          # channel padding granularity (lane width)
HALO = 8            # left halo width -> sublane-aligned interior writes


# ----------------------------------------------------------------------------
# Fused conv-group kernel:  (Conv3x3 -> ReLU) * P  [-> MaxPool2x2]
# ----------------------------------------------------------------------------
def _make_group_kernel(num_layers, H, W, cin0, cpad, do_pool):
    """All conv layers of one group run inside a single kernel invocation.

    refs layout: x, (w, b) * num_layers, out, xpad_scratch
      x    : (1, H, W, cin0)      f32   (cin0 = actual input channels)
      w    : (9, cpad, cpad)      bf16  (zero-padded channels)
      b    : (1, cpad)            f32   (zero-padded)
      out  : (1, Ho, Wo, cpad)    f32   (cpad multiple of 128 -> dense stores)
      xpad : (H+2, W+2*HALO, cpad) f32  VMEM halo buffer
    """
    H2, W2 = H // 2, W // 2

    def kernel(*refs):
        x_ref = refs[0]
        o_ref = refs[1 + 2 * num_layers]
        xpad = refs[2 + 2 * num_layers]

        # Zero the halo buffer every grid step: the zero border and the zero
        # padded channels are required for correctness, and re-zeroing is safe
        # under "parallel" grid semantics (each core owns its own scratch).
        # Cost is ~70 aligned vreg stores -- negligible next to 9*P matmuls.
        xpad[...] = jnp.zeros_like(xpad)
        # Interior starts at column HALO (sublane-aligned); row offset 1 is a
        # major-dim offset (free).  Only layer 0 does a lane-partial store.
        xpad[1:H + 1, HALO:HALO + W, 0:cin0] = x_ref[0]

        act = None  # (H*W, cpad) f32 output of the previous conv layer
        for layer in range(num_layers):
            w_ref = refs[1 + 2 * layer]
            b_ref = refs[2 + 2 * layer]

            if layer > 0:
                # Aligned, dense write-back of the previous activation.
                xpad[1:H + 1, HALO:HALO + W, :] = act.reshape(H, W, cpad)

            # 9 accumulating MXU dots (K = cpad), one per 3x3 tap.  The tap
            # read is a shifted slice (reads are cheap); the reshape
            # (H, W, cpad) -> (H*W, cpad) is layout-trivial (W % 8 == 0).
            psum = None
            for t in range(9):
                kh, kw = divmod(t, 3)
                tap = xpad[kh:kh + H, HALO - 1 + kw:HALO - 1 + kw + W, :]
                tap = tap.reshape(H * W, cpad).astype(jnp.bfloat16)
                d = jnp.dot(tap, w_ref[t], preferred_element_type=jnp.float32)
                psum = d if psum is None else psum + d
            act = jnp.maximum(psum + b_ref[...], 0.0)      # fused bias + ReLU

        if do_pool:
            # 2x2 max-pool directly on the accumulator (no write-back, no
            # strided gathers):  W-pairs are adjacent in the flat index, so a
            # (H*W/2, 2, cpad) reshape + max over the second-minor axis pools
            # along W; H-pairs then become contiguous sublane halves.
            mw = jnp.max(act.reshape(H * W2, 2, cpad), axis=1)   # (H*W2, cpad)
            mh = mw.reshape(H2, 2 * W2, cpad)                    # (H2, W, cpad)
            pooled = jnp.maximum(mh[:, 0:W2, :], mh[:, W2:2 * W2, :])
            o_ref[0] = pooled.astype(o_ref.dtype)                # dense store
        else:
            o_ref[0] = act.reshape(H, W, cpad).astype(o_ref.dtype)

    return kernel


def conv_group(x_nhwc, layers, do_pool, *, cpad, vmem_limit=64 * 1024 * 1024):
    """One fused [(conv3x3 -> ReLU)*P -> optional maxpool2x2] group.

    x_nhwc: (B, H, W, Cin) f32 (Cin = actual channels for the first group,
    cpad for later groups).  layers: list of pre-transformed (w9, bias).
    Returns (B, Ho, Wo, cpad) f32 with zero padded channels.
    """
    B, H, W, cin0 = x_nhwc.shape
    P = len(layers)
    if do_pool:
        assert H % 2 == 0 and W % 2 == 0, "maxpool2x2 needs even H, W"

    inputs = [x_nhwc]
    in_specs = [pl.BlockSpec((1, H, W, cin0), lambda b: (b, 0, 0, 0))]
    for (w9, bias) in layers:
        inputs.append(w9)       # (9, cpad, cpad) bf16 (prepared once)
        inputs.append(bias)     # (1, cpad)       f32  (prepared once)
        in_specs.append(pl.BlockSpec((9, cpad, cpad), lambda b: (0, 0, 0)))
        in_specs.append(pl.BlockSpec((1, cpad), lambda b: (0, 0)))

    Ho, Wo = (H // 2, W // 2) if do_pool else (H, W)

    return pl.pallas_call(
        _make_group_kernel(P, H, W, cin0, cpad, do_pool),
        grid=(B,),
        in_specs=in_specs,
        out_specs=pl.BlockSpec((1, Ho, Wo, cpad), lambda b: (b, 0, 0, 0)),
        out_shape=jax.ShapeDtypeStruct((B, Ho, Wo, cpad), jnp.float32),
        scratch_shapes=[pltpu.VMEM((H + 2, W + 2 * HALO, cpad), jnp.float32)],
        compiler_params=pltpu.CompilerParams(
            dimension_semantics=("parallel",),   # batch split across TCs
            vmem_limit_bytes=vmem_limit,
        ),
    )(*inputs)


# ----------------------------------------------------------------------------
# Fused classifier head: (Linear -> ReLU) * M -> Linear in ONE pallas_call
# ----------------------------------------------------------------------------
def _make_mlp_kernel(num_layers):
    def kernel(*refs):
        x_ref = refs[0]
        o_ref = refs[1 + 2 * num_layers]
        h = x_ref[...].astype(jnp.bfloat16)
        for l in range(num_layers):
            w_ref = refs[1 + 2 * l]
            b_ref = refs[2 + 2 * l]
            y = jnp.dot(h, w_ref[...],
                        preferred_element_type=jnp.float32) + b_ref[...]
            if l < num_layers - 1:
                h = jnp.maximum(y, 0.0).astype(jnp.bfloat16)
            else:
                o_ref[...] = y.astype(o_ref.dtype)
    return kernel


def fused_mlp(x, fc_layers, *, vmem_limit=64 * 1024 * 1024):
    """x: (B, Fin) f32.  fc_layers: [(w bf16 (Fin,F1), b f32 (1,F1)), ...]."""
    B, fin = x.shape
    nl = len(fc_layers)
    fout = fc_layers[-1][0].shape[1]

    # Batch tiling: keep >= 2 grid steps when B is large (multi-core split).
    bt = next((c for c in (256, 128, 64, 32, 16, 8) if c < B and B % c == 0), B)

    inputs = [x]
    in_specs = [pl.BlockSpec((bt, fin), lambda i: (i, 0))]
    for (w, b) in fc_layers:
        k, n = w.shape
        inputs.extend([w, b])
        in_specs.append(pl.BlockSpec((k, n), lambda i: (0, 0)))
        in_specs.append(pl.BlockSpec((1, n), lambda i: (0, 0)))

    return pl.pallas_call(
        _make_mlp_kernel(nl),
        grid=(B // bt,),
        in_specs=in_specs,
        out_specs=pl.BlockSpec((bt, fout), lambda i: (i, 0)),
        out_shape=jax.ShapeDtypeStruct((B, fout), jnp.float32),
        compiler_params=pltpu.CompilerParams(
            dimension_semantics=("parallel",),
            vmem_limit_bytes=vmem_limit,
        ),
    )(*inputs)


# ----------------------------------------------------------------------------
# Fallback K-tiled linear (only used when the head does not fit in VMEM)
# ----------------------------------------------------------------------------
def _linear_kernel(x_ref, w_ref, b_ref, o_ref, acc_ref, *, relu):
    k = pl.program_id(0)

    @pl.when(k == 0)
    def _():
        acc_ref[...] = jnp.zeros_like(acc_ref)

    acc_ref[...] += jnp.dot(x_ref[...], w_ref[...],
                            preferred_element_type=jnp.float32)

    @pl.when(k == pl.num_programs(0) - 1)
    def _():
        y = acc_ref[...] + b_ref[...]
        if relu:
            y = jnp.maximum(y, 0.0)
        o_ref[...] = y.astype(o_ref.dtype)


def linear(x, w, b, relu=False, tile_k=1024):
    """y = x @ w + b (optional ReLU).  w bf16 (Fin,Fout), b f32 (1,Fout)."""
    B, fin = x.shape
    fout = w.shape[1]
    if fin <= tile_k:
        tk, nk = fin, 1
    else:
        tk = tile_k
        nk = pl.cdiv(fin, tk)
        pad = nk * tk - fin
        if pad:
            x = jnp.pad(x, ((0, 0), (0, pad)))
            w = jnp.pad(w, ((0, pad), (0, 0)))
    xb = x.astype(jnp.bfloat16)
    wb = w.astype(jnp.bfloat16)

    return pl.pallas_call(
        functools.partial(_linear_kernel, relu=relu),
        grid=(nk,),
        in_specs=[
            pl.BlockSpec((B, tk), lambda k: (0, k)),
            pl.BlockSpec((tk, fout), lambda k: (k, 0)),
            pl.BlockSpec((1, fout), lambda k: (0, 0)),
        ],
        out_specs=pl.BlockSpec((B, fout), lambda k: (0, 0)),
        out_shape=jax.ShapeDtypeStruct((B, fout), jnp.float32),
        scratch_shapes=[pltpu.VMEM((B, fout), jnp.float32)],
        compiler_params=pltpu.CompilerParams(
            dimension_semantics=("arbitrary",),   # K is a reduction axis
            vmem_limit_bytes=64 * 1024 * 1024,
        ),
    )(xb, wb, b)


# ----------------------------------------------------------------------------
# One-time parameter preparation (all per-forward weight transforms hoisted)
# ----------------------------------------------------------------------------
def prepare_params(params, in_size, pool_every):
    cin, H, W = in_size
    conv = params["conv"]

    # Channel padding so matmul K/N and all channel-dim stores are full-width.
    max_c = max([cin] + [w.shape[-1] for (w, _) in conv])
    cpad = ((max_c + LANE - 1) // LANE) * LANE

    groups, do_pool_flags = [], []
    for s in range(0, len(conv), pool_every):
        grp = conv[s:s + pool_every]
        layers = []
        for (w, b) in grp:
            _, _, ci, co = w.shape
            wp = jnp.zeros((3, 3, cpad, cpad), jnp.float32)
            wp = wp.at[:, :, :ci, :co].set(w)
            bp = jnp.zeros((1, cpad), jnp.float32).at[:, :co].set(b.reshape(1, -1))
            layers.append((wp.reshape(9, cpad, cpad).astype(jnp.bfloat16), bp))
        groups.append(layers)
        do_pool_flags.append(len(grp) == pool_every)

    num_pools = len(conv) // pool_every
    Hp, Wp = H >> num_pools, W >> num_pools
    C = conv[-1][0].shape[-1]

    # Fold the PyTorch NCHW flatten order into the first classifier weight:
    # W1p[h*Wp*C + w*C + c] = W1[c*Hp*Wp + h*Wp + w]   (exact, one-time).
    fcs = list(params["hidden"]) + [params["out"]]
    w1, b1 = fcs[0]
    w1 = w1.reshape(C, Hp, Wp, -1).transpose(1, 2, 0, 3).reshape(Hp * Wp * C, -1)
    fcs[0] = (w1, b1)
    fc = [(w.astype(jnp.bfloat16), b.reshape(1, -1).astype(jnp.float32))
          for (w, b) in fcs]

    prepped = {"groups": groups, "fc": fc}                    # arrays only
    cfg = {"do_pool": tuple(do_pool_flags), "Hp": Hp, "Wp": Wp,
           "C": C, "cpad": cpad}                              # static config
    return prepped, cfg


# ----------------------------------------------------------------------------
# ConvClassifier forward
# ----------------------------------------------------------------------------
def conv_classifier_forward(prepped, x_nchw, *, cfg):
    B = x_nchw.shape[0]
    cpad = cfg["cpad"]

    # One small NCHW -> NHWC transpose of the network input; everything after
    # stays NHWC (channels on the lane dim).
    x = jnp.transpose(x_nchw, (0, 2, 3, 1))

    for gi, layers in enumerate(prepped["groups"]):
        x = conv_group(x, layers, cfg["do_pool"][gi], cpad=cpad)

    Hp, Wp, C = cfg["Hp"], cfg["Wp"], cfg["C"]
    feats = x[..., :C].reshape(B, Hp * Wp * C)    # drop zero padded channels

    fc = prepped["fc"]
    fc_bytes = sum(int(w.size) * w.dtype.itemsize for w, _ in fc)
    if fc_bytes <= 16 * 1024 * 1024:
        return fused_mlp(feats, fc)               # single launch for the head

    # Fallback for very large heads: K-tiled per-layer linears.
    h = feats
    for (w, b) in fc[:-1]:
        h = linear(h, w, b, relu=True)
    w, b = fc[-1]
    return linear(h, w, b, relu=False)


# Pure-JAX reference (mirrors the PyTorch module exactly, f32)
def conv_classifier_reference(params, x_nchw, pool_every):
    x = x_nchw
    for i, (w, b) in enumerate(params["conv"]):
        x = lax.conv_general_dilated(
            x, w, window_strides=(1, 1), padding=((1, 1), (1, 1)),
            dimension_numbers=("NCHW", "HWIO", "NCHW"))
        x = jnp.maximum(x + b.reshape(1, -1, 1, 1), 0.0)
        if (i + 1) % pool_every == 0:
            x = lax.reduce_window(x, -jnp.inf, lax.max,
                                  (1, 1, 2, 2), (1, 1, 2, 2), "VALID")
    feats = x.reshape(x.shape[0], -1)
    for (w, b) in params["hidden"]:
        feats = jnp.maximum(feats @ w + b, 0.0)
    w, b = params["out"]
    return feats @ w + b


# ----------------------------------------------------------------------------
# Deterministic parameter initialization (shapes follow the nn.Module)
# ----------------------------------------------------------------------------
def init_params(key, in_size, out_classes, channels, pool_every, hidden_dims):
    cin, in_h, in_w = in_size
    params = {"conv": [], "hidden": []}

    cur = cin
    for cout in channels:
        key, k1, k2 = jax.random.split(key, 3)
        scale = (cur * 9) ** -0.5
        w = jax.random.uniform(k1, (3, 3, cur, cout), jnp.float32, -scale, scale)
        b = jax.random.uniform(k2, (cout,), jnp.float32, -scale, scale)
        params["conv"].append((w, b))
        cur = cout

    num_pools = len(channels) // pool_every
    in_features = (in_h // 2 ** num_pools) * (in_w // 2 ** num_pools) * channels[-1]
    for hid in hidden_dims:
        key, k1, k2 = jax.random.split(key, 3)
        scale = in_features ** -0.5
        # Stored transposed relative to PyTorch: (in_features, out_features)
        w = jax.random.uniform(k1, (in_features, hid), jnp.float32, -scale, scale)
        b = jax.random.uniform(k2, (hid,), jnp.float32, -scale, scale)
        params["hidden"].append((w, b))
        in_features = hid

    key, k1, k2 = jax.random.split(key, 3)
    scale = in_features ** -0.5
    w = jax.random.uniform(k1, (in_features, out_classes), jnp.float32, -scale, scale)
    b = jax.random.uniform(k2, (out_classes,), jnp.float32, -scale, scale)
    params["out"] = (w, b)
    return params


if __name__ == "__main__":
    in_size = (4, 16, 16)       # (C, H, W)
    out_classes = 10
    channels = [8, 8]           # N = 2 conv layers
    pool_every = 2              # P = 2 -> one max-pool
    hidden_dims = [32]          # M = 1 hidden linear
    batch = 2

    key = jax.random.PRNGKey(0)
    key, kx = jax.random.split(key)
    params = init_params(key, in_size, out_classes, channels, pool_every,
                         hidden_dims)
    x = jax.random.normal(kx, (batch,) + in_size, jnp.float32)

    # One-time parameter preparation (channel padding, bf16, permutations).
    prepped, cfg = prepare_params(params, in_size, pool_every)

    fwd = jax.jit(functools.partial(conv_classifier_forward, cfg=cfg))
    out = jax.block_until_ready(fwd(prepped, x))
    assert out.shape == (batch, out_classes), out.shape

    ref = conv_classifier_reference(params, x, pool_every)
    # Kernel matmuls use bf16 operands (f32 accumulation); the reference is
    # full f32, so allow a small tolerance.
    if not jnp.allclose(out, ref, atol=5e-2, rtol=5e-2):
        raise AssertionError(
            f"mismatch vs reference, max abs err = {jnp.max(jnp.abs(out - ref))}")

    print("KERNEL_OK")
</pallas_src>

<mosaic_0001>
module attributes {stable_mosaic.version = 11 : i64} {
  func.func @kernel(%arg0: i32, %arg1: memref<1x16x16x4xf32, #tpu.memory_space<vmem>>, %arg2: memref<9x128x128xbf16, #tpu.memory_space<vmem>>, %arg3: memref<1x128xf32, #tpu.memory_space<vmem>>, %arg4: memref<9x128x128xbf16, #tpu.memory_space<vmem>>, %arg5: memref<1x128xf32, #tpu.memory_space<vmem>>, %arg6: memref<1x8x8x128xf32, #tpu.memory_space<vmem>>, %arg7: memref<18x32x128xf32, #tpu.memory_space<vmem>>) attributes {dimension_semantics = [#tpu.dimension_semantics<parallel>], iteration_bounds = array<i64: 2>, scalar_prefetch = 0 : i64, scratch_operands = 1 : i64, tpu.core_type = #tpu.core_type<tc>, window_params = [{transform_indices = @transform_0, window_bounds = array<i64: 1, 16, 16, 4>}, {pipeline_mode = #tpu.pipeline_mode<synchronous>, transform_indices = @transform_1, window_bounds = array<i64: 9, 128, 128>}, {pipeline_mode = #tpu.pipeline_mode<synchronous>, transform_indices = @transform_2, window_bounds = array<i64: 1, 128>}, {pipeline_mode = #tpu.pipeline_mode<synchronous>, transform_indices = @transform_3, window_bounds = array<i64: 9, 128, 128>}, {pipeline_mode = #tpu.pipeline_mode<synchronous>, transform_indices = @transform_4, window_bounds = array<i64: 1, 128>}, {transform_indices = @transform_5, window_bounds = array<i64: 1, 8, 8, 128>}]} {
    %cst = arith.constant 0.000000e+00 : f32
    %0 = vector.broadcast %cst : f32 to vector<18x32x128xf32>
    %c0 = arith.constant 0 : index
    %c0_0 = arith.constant 0 : index
    %c0_1 = arith.constant 0 : index
    %1 = vector.load %arg7[%c0, %c0_0, %c0_1] : memref<18x32x128xf32, #tpu.memory_space<vmem>>, vector<18x32x128xf32>
    tpu.vector_store %arg7[%c0, %c0_0, %c0_1], %0 {strides = array<i32>} : memref<18x32x128xf32, #tpu.memory_space<vmem>>, vector<18x32x128xf32>,
    %c0_2 = arith.constant 0 : index
    %c0_3 = arith.constant 0 : index
    %c0_4 = arith.constant 0 : index
    %c0_5 = arith.constant 0 : index
    %2 = vector.load %arg1[%c0_2, %c0_3, %c0_4, %c0_5] : memref<1x16x16x4xf32, #tpu.memory_space<vmem>>, vector<1x16x16x4xf32>
    %3 = vector.shape_cast %2 : vector<1x16x16x4xf32> to vector<16x16x4xf32>
    %c1 = arith.constant 1 : index
    %c8 = arith.constant 8 : index
    %c0_6 = arith.constant 0 : index
    %4 = vector.load %arg7[%c1, %c8, %c0_6] : memref<18x32x128xf32, #tpu.memory_space<vmem>>, vector<16x16x4xf32>
    tpu.vector_store %arg7[%c1, %c8, %c0_6], %3 {strides = array<i32>} : memref<18x32x128xf32, #tpu.memory_space<vmem>>, vector<16x16x4xf32>,
    %c0_7 = arith.constant 0 : index
    %c7 = arith.constant 7 : index
    %c0_8 = arith.constant 0 : index
    %5 = vector.load %arg7[%c0_7, %c7, %c0_8] : memref<18x32x128xf32, #tpu.memory_space<vmem>>, vector<16x16x128xf32>
    %6 = vector.shape_cast %5 : vector<16x16x128xf32> to vector<256x128xf32>
    %7 = arith.truncf %6 : vector<256x128xf32> to vector<256x128xbf16>
    %c0_9 = arith.constant 0 : index
    %c0_10 = arith.constant 0 : index
    %c0_11 = arith.constant 0 : index
    %8 = vector.load %arg2[%c0_9, %c0_10, %c0_11] : memref<9x128x128xbf16, #tpu.memory_space<vmem>>, vector<1x128x128xbf16>
    %9 = vector.shape_cast %8 : vector<1x128x128xbf16> to vector<128x128xbf16>
    %cst_12 = arith.constant dense<0.000000e+00> : vector<256x128xf32>
    %10 = tpu.matmul %7, %9, %cst_12 {dimension_numbers = #tpu.dot_dimension_numbers<[1], [0], [0], [1], [0, 0, 1, 1], [], []>} : vector<256x128xbf16>, vector<128x128xbf16>, vector<256x128xf32> -> vector<256x128xf32>
    %c0_13 = arith.constant 0 : index
    %c8_14 = arith.constant 8 : index
    %c0_15 = arith.constant 0 : index
    %11 = vector.load %arg7[%c0_13, %c8_14, %c0_15] : memref<18x32x128xf32, #tpu.memory_space<vmem>>, vector<16x16x128xf32>
    %12 = vector.shape_cast %11 : vector<16x16x128xf32> to vector<256x128xf32>
    %13 = arith.truncf %12 : vector<256x128xf32> to vector<256x128xbf16>
    %c1_16 = arith.constant 1 : index
    %c0_17 = arith.constant 0 : index
    %c0_18 = arith.constant 0 : index
    %14 = vector.load %arg2[%c1_16, %c0_17, %c0_18] : memref<9x128x128xbf16, #tpu.memory_space<vmem>>, vector<1x128x128xbf16>
    %15 = vector.shape_cast %14 : vector<1x128x128xbf16> to vector<128x128xbf16>
    %cst_19 = arith.constant dense<0.000000e+00> : vector<256x128xf32>
    %16 = tpu.matmul %13, %15, %cst_19 {dimension_numbers = #tpu.dot_dimension_numbers<[1], [0], [0], [1], [0, 0, 1, 1], [], []>} : vector<256x128xbf16>, vector<128x128xbf16>, vector<256x128xf32> -> vector<256x128xf32>
    %17 = arith.addf %10, %16 : vector<256x128xf32>
    %c0_20 = arith.constant 0 : index
    %c9 = arith.constant 9 : index
    %c0_21 = arith.constant 0 : index
    %18 = vector.load %arg7[%c0_20, %c9, %c0_21] : memref<18x32x128xf32, #tpu.memory_space<vmem>>, vector<16x16x128xf32>
    %19 = vector.shape_cast %18 : vector<16x16x128xf32> to vector<256x128xf32>
    %20 = arith.truncf %19 : vector<256x128xf32> to vector<256x128xbf16>
    %c2 = arith.constant 2 : index
    %c0_22 = arith.constant 0 : index
    %c0_23 = arith.constant 0 : index
    %21 = vector.load %arg2[%c2, %c0_22, %c0_23] : memref<9x128x128xbf16, #tpu.memory_space<vmem>>, vector<1x128x128xbf16>
    %22 = vector.shape_cast %21 : vector<1x128x128xbf16> to vector<128x128xbf16>
    %cst_24 = arith.constant dense<0.000000e+00> : vector<256x128xf32>
    %23 = tpu.matmul %20, %22, %cst_24 {dimension_numbers = #tpu.dot_dimension_numbers<[1], [0], [0], [1], [0, 0, 1, 1], [], []>} : vector<256x128xbf16>, vector<128x128xbf16>, vector<256x128xf32> -> vector<256x128xf32>
    %24 = arith.addf %17, %23 : vector<256x128xf32>
    %c1_25 = arith.constant 1 : index
    %c7_26 = arith.constant 7 : index
    %c0_27 = arith.constant 0 : index
    %25 = vector.load %arg7[%c1_25, %c7_26, %c0_27] : memref<18x32x128xf32, #tpu.memory_space<vmem>>, vector<16x16x128xf32>
    %26 = vector.shape_cast %25 : vector<16x16x128xf32> to vector<256x128xf32>
    %27 = arith.truncf %26 : vector<256x128xf32> to vector<256x128xbf16>
    %c3 = arith.constant 3 : index
    %c0_28 = arith.constant 0 : index
    %c0_29 = arith.constant 0 : index
    %28 = vector.load %arg2[%c3, %c0_28, %c0_29] : memref<9x128x128xbf16, #tpu.memory_space<vmem>>, vector<1x128x128xbf16>
    %29 = vector.shape_cast %28 : vector<1x128x128xbf16> to vector<128x128xbf16>
    %cst_30 = arith.constant dense<0.000000e+00> : vector<256x128xf32>
    %30 = tpu.matmul %27, %29, %cst_30 {dimension_numbers = #tpu.dot_dimension_numbers<[1], [0], [0], [1], [0, 0, 1, 1], [], []>} : vector<256x128xbf16>, vector<128x128xbf16>, vector<256x128xf32> -> vector<256x128xf32>
    %31 = arith.addf %24, %30 : vector<256x128xf32>
    %c1_31 = arith.constant 1 : index
    %c8_32 = arith.constant 8 : index
    %c0_33 = arith.constant 0 : index
    %32 = vector.load %arg7[%c1_31, %c8_32, %c0_33] : memref<18x32x128xf32, #tpu.memory_space<vmem>>, vector<16x16x128xf32>
    %33 = vector.shape_cast %32 : vector<16x16x128xf32> to vector<256x128xf32>
    %34 = arith.truncf %33 : vector<256x128xf32> to vector<256x128xbf16>
    %c4 = arith.constant 4 : index
    %c0_34 = arith.constant 0 : index
    %c0_35 = arith.constant 0 : index
    %35 = vector.load %arg2[%c4, %c0_34, %c0_35] : memref<9x128x128xbf16, #tpu.memory_space<vmem>>, vector<1x128x128xbf16>
    %36 = vector.shape_cast %35 : vector<1x128x128xbf16> to vector<128x128xbf16>
    %cst_36 = arith.constant dense<0.000000e+00> : vector<256x128xf32>
    %37 = tpu.matmul %34, %36, %cst_36 {dimension_numbers = #tpu.dot_dimension_numbers<[1], [0], [0], [1], [0, 0, 1, 1], [], []>} : vector<256x128xbf16>, vector<128x128xbf16>, vector<256x128xf32> -> vector<256x128xf32>
    %38 = arith.addf %31, %37 : vector<256x128xf32>
    %c1_37 = arith.constant 1 : index
    %c9_38 = arith.constant 9 : index
    %c0_39 = arith.constant 0 : index
    %39 = vector.load %arg7[%c1_37, %c9_38, %c0_39] : memref<18x32x128xf32, #tpu.memory_space<vmem>>, vector<16x16x128xf32>
    %40 = vector.shape_cast %39 : vector<16x16x128xf32> to vector<256x128xf32>
    %41 = arith.truncf %40 : vector<256x128xf32> to vector<256x128xbf16>
    %c5 = arith.constant 5 : index
    %c0_40 = arith.constant 0 : index
    %c0_41 = arith.constant 0 : index
    %42 = vector.load %arg2[%c5, %c0_40, %c0_41] : memref<9x128x128xbf16, #tpu.memory_space<vmem>>, vector<1x128x128xbf16>
    %43 = vector.shape_cast %42 : vector<1x128x128xbf16> to vector<128x128xbf16>
    %cst_42 = arith.constant dense<0.000000e+00> : vector<256x128xf32>
    %44 = tpu.matmul %41, %43, %cst_42 {dimension_numbers = #tpu.dot_dimension_numbers<[1], [0], [0], [1], [0, 0, 1, 1], [], []>} : vector<256x128xbf16>, vector<128x128xbf16>, vector<256x128xf32> -> vector<256x128xf32>
    %45 = arith.addf %38, %44 : vector<256x128xf32>
    %c2_43 = arith.constant 2 : index
    %c7_44 = arith.constant 7 : index
    %c0_45 = arith.constant 0 : index
    %46 = vector.load %arg7[%c2_43, %c7_44, %c0_45] : memref<18x32x128xf32, #tpu.memory_space<vmem>>, vector<16x16x128xf32>
    %47 = vector.shape_cast %46 : vector<16x16x128xf32> to vector<256x128xf32>
    %48 = arith.truncf %47 : vector<256x128xf32> to vector<256x128xbf16>
    %c6 = arith.constant 6 : index
    %c0_46 = arith.constant 0 : index
    %c0_47 = arith.constant 0 : index
    %49 = vector.load %arg2[%c6, %c0_46, %c0_47] : memref<9x128x128xbf16, #tpu.memory_space<vmem>>, vector<1x128x128xbf16>
    %50 = vector.shape_cast %49 : vector<1x128x128xbf16> to vector<128x128xbf16>
    %cst_48 = arith.constant dense<0.000000e+00> : vector<256x128xf32>
    %51 = tpu.matmul %48, %50, %cst_48 {dimension_numbers = #tpu.dot_dimension_numbers<[1], [0], [0], [1], [0, 0, 1, 1], [], []>} : vector<256x128xbf16>, vector<128x128xbf16>, vector<256x128xf32> -> vector<256x128xf32>
    %52 = arith.addf %45, %51 : vector<256x128xf32>
    %c2_49 = arith.constant 2 : index
    %c8_50 = arith.constant 8 : index
    %c0_51 = arith.constant 0 : index
    %53 = vector.load %arg7[%c2_49, %c8_50, %c0_51] : memref<18x32x128xf32, #tpu.memory_space<vmem>>, vector<16x16x128xf32>
    %54 = vector.shape_cast %53 : vector<16x16x128xf32> to vector<256x128xf32>
    %55 = arith.truncf %54 : vector<256x128xf32> to vector<256x128xbf16>
    %c7_52 = arith.constant 7 : index
    %c0_53 = arith.constant 0 : index
    %c0_54 = arith.constant 0 : index
    %56 = vector.load %arg2[%c7_52, %c0_53, %c0_54] : memref<9x128x128xbf16, #tpu.memory_space<vmem>>, vector<1x128x128xbf16>
    %57 = vector.shape_cast %56 : vector<1x128x128xbf16> to vector<128x128xbf16>
    %cst_55 = arith.constant dense<0.000000e+00> : vector<256x128xf32>
    %58 = tpu.matmul %55, %57, %cst_55 {dimension_numbers = #tpu.dot_dimension_numbers<[1], [0], [0], [1], [0, 0, 1, 1], [], []>} : vector<256x128xbf16>, vector<128x128xbf16>, vector<256x128xf32> -> vector<256x128xf32>
    %59 = arith.addf %52, %58 : vector<256x128xf32>
    %c2_56 = arith.constant 2 : index
    %c9_57 = arith.constant 9 : index
    %c0_58 = arith.constant 0 : index
    %60 = vector.load %arg7[%c2_56, %c9_57, %c0_58] : memref<18x32x128xf32, #tpu.memory_space<vmem>>, vector<16x16x128xf32>
    %61 = vector.shape_cast %60 : vector<16x16x128xf32> to vector<256x128xf32>
    %62 = arith.truncf %61 : vector<256x128xf32> to vector<256x128xbf16>
    %c8_59 = arith.constant 8 : index
    %c0_60 = arith.constant 0 : index
    %c0_61 = arith.constant 0 : index
    %63 = vector.load %arg2[%c8_59, %c0_60, %c0_61] : memref<9x128x128xbf16, #tpu.memory_space<vmem>>, vector<1x128x128xbf16>
    %64 = vector.shape_cast %63 : vector<1x128x128xbf16> to vector<128x128xbf16>
    %cst_62 = arith.constant dense<0.000000e+00> : vector<256x128xf32>
    %65 = tpu.matmul %62, %64, %cst_62 {dimension_numbers = #tpu.dot_dimension_numbers<[1], [0], [0], [1], [0, 0, 1, 1], [], []>} : vector<256x128xbf16>, vector<128x128xbf16>, vector<256x128xf32> -> vector<256x128xf32>
    %66 = arith.addf %59, %65 : vector<256x128xf32>
    %c0_63 = arith.constant 0 : index
    %c0_64 = arith.constant 0 : index
    %67 = vector.load %arg3[%c0_63, %c0_64] : memref<1x128xf32, #tpu.memory_space<vmem>>, vector<1x128xf32>
    %68 = vector.broadcast %67 : vector<1x128xf32> to vector<256x128xf32>
    %69 = arith.addf %66, %68 : vector<256x128xf32>
    %cst_65 = arith.constant 0.000000e+00 : f32
    %70 = vector.broadcast %cst_65 : f32 to vector<256x128xf32>
    %71 = arith.maximumf %69, %70 : vector<256x128xf32>
    %72 = vector.shape_cast %71 : vector<256x128xf32> to vector<16x16x128xf32>
    %c1_66 = arith.constant 1 : index
    %c8_67 = arith.constant 8 : index
    %c0_68 = arith.constant 0 : index
    %73 = vector.load %arg7[%c1_66, %c8_67, %c0_68] : memref<18x32x128xf32, #tpu.memory_space<vmem>>, vector<16x16x128xf32>
    tpu.vector_store %arg7[%c1_66, %c8_67, %c0_68], %72 {strides = array<i32>} : memref<18x32x128xf32, #tpu.memory_space<vmem>>, vector<16x16x128xf32>,
    %c0_69 = arith.constant 0 : index
    %c7_70 = arith.constant 7 : index
    %c0_71 = arith.constant 0 : index
    %74 = vector.load %arg7[%c0_69, %c7_70, %c0_71] : memref<18x32x128xf32, #tpu.memory_space<vmem>>, vector<16x16x128xf32>
    %75 = vector.shape_cast %74 : vector<16x16x128xf32> to vector<256x128xf32>
    %76 = arith.truncf %75 : vector<256x128xf32> to vector<256x128xbf16>
    %c0_72 = arith.constant 0 : index
    %c0_73 = arith.constant 0 : index
    %c0_74 = arith.constant 0 : index
    %77 = vector.load %arg4[%c0_72, %c0_73, %c0_74] : memref<9x128x128xbf16, #tpu.memory_space<vmem>>, vector<1x128x128xbf16>
    %78 = vector.shape_cast %77 : vector<1x128x128xbf16> to vector<128x128xbf16>
    %cst_75 = arith.constant dense<0.000000e+00> : vector<256x128xf32>
    %79 = tpu.matmul %76, %78, %cst_75 {dimension_numbers = #tpu.dot_dimension_numbers<[1], [0], [0], [1], [0, 0, 1, 1], [], []>} : vector<256x128xbf16>, vector<128x128xbf16>, vector<256x128xf32> -> vector<256x128xf32>
    %c0_76 = arith.constant 0 : index
    %c8_77 = arith.constant 8 : index
    %c0_78 = arith.constant 0 : index
    %80 = vector.load %arg7[%c0_76, %c8_77, %c0_78] : memref<18x32x128xf32, #tpu.memory_space<vmem>>, vector<16x16x128xf32>
    %81 = vector.shape_cast %80 : vector<16x16x128xf32> to vector<256x128xf32>
    %82 = arith.truncf %81 : vector<256x128xf32> to vector<256x128xbf16>
    %c1_79 = arith.constant 1 : index
    %c0_80 = arith.constant 0 : index
    %c0_81 = arith.constant 0 : index
    %83 = vector.load %arg4[%c1_79, %c0_80, %c0_81] : memref<9x128x128xbf16, #tpu.memory_space<vmem>>, vector<1x128x128xbf16>
    %84 = vector.shape_cast %83 : vector<1x128x128xbf16> to vector<128x128xbf16>
    %cst_82 = arith.constant dense<0.000000e+00> : vector<256x128xf32>
    %85 = tpu.matmul %82, %84, %cst_82 {dimension_numbers = #tpu.dot_dimension_numbers<[1], [0], [0], [1], [0, 0, 1, 1], [], []>} : vector<256x128xbf16>, vector<128x128xbf16>, vector<256x128xf32> -> vector<256x128xf32>
    %86 = arith.addf %79, %85 : vector<256x128xf32>
    %c0_83 = arith.constant 0 : index
    %c9_84 = arith.constant 9 : index
    %c0_85 = arith.constant 0 : index
    %87 = vector.load %arg7[%c0_83, %c9_84, %c0_85] : memref<18x32x128xf32, #tpu.memory_space<vmem>>, vector<16x16x128xf32>
    %88 = vector.shape_cast %87 : vector<16x16x128xf32> to vector<256x128xf32>
    %89 = arith.truncf %88 : vector<256x128xf32> to vector<256x128xbf16>
    %c2_86 = arith.constant 2 : index
    %c0_87 = arith.constant 0 : index
    %c0_88 = arith.constant 0 : index
    %90 = vector.load %arg4[%c2_86, %c0_87, %c0_88] : memref<9x128x128xbf16, #tpu.memory_space<vmem>>, vector<1x128x128xbf16>
    %91 = vector.shape_cast %90 : vector<1x128x128xbf16> to vector<128x128xbf16>
    %cst_89 = arith.constant dense<0.000000e+00> : vector<256x128xf32>
    %92 = tpu.matmul %89, %91, %cst_89 {dimension_numbers = #tpu.dot_dimension_numbers<[1], [0], [0], [1], [0, 0, 1, 1], [], []>} : vector<256x128xbf16>, vector<128x128xbf16>, vector<256x128xf32> -> vector<256x128xf32>
    %93 = arith.addf %86, %92 : vector<256x128xf32>
    %c1_90 = arith.constant 1 : index
    %c7_91 = arith.constant 7 : index
    %c0_92 = arith.constant 0 : index
    %94 = vector.load %arg7[%c1_90, %c7_91, %c0_92] : memref<18x32x128xf32, #tpu.memory_space<vmem>>, vector<16x16x128xf32>
    %95 = vector.shape_cast %94 : vector<16x16x128xf32> to vector<256x128xf32>
    %96 = arith.truncf %95 : vector<256x128xf32> to vector<256x128xbf16>
    %c3_93 = arith.constant 3 : index
    %c0_94 = arith.constant 0 : index
    %c0_95 = arith.constant 0 : index
    %97 = vector.load %arg4[%c3_93, %c0_94, %c0_95] : memref<9x128x128xbf16, #tpu.memory_space<vmem>>, vector<1x128x128xbf16>
    %98 = vector.shape_cast %97 : vector<1x128x128xbf16> to vector<128x128xbf16>
    %cst_96 = arith.constant dense<0.000000e+00> : vector<256x128xf32>
    %99 = tpu.matmul %96, %98, %cst_96 {dimension_numbers = #tpu.dot_dimension_numbers<[1], [0], [0], [1], [0, 0, 1, 1], [], []>} : vector<256x128xbf16>, vector<128x128xbf16>, vector<256x128xf32> -> vector<256x128xf32>
    %100 = arith.addf %93, %99 : vector<256x128xf32>
    %c1_97 = arith.constant 1 : index
    %c8_98 = arith.constant 8 : index
    %c0_99 = arith.constant 0 : index
    %101 = vector.load %arg7[%c1_97, %c8_98, %c0_99] : memref<18x32x128xf32, #tpu.memory_space<vmem>>, vector<16x16x128xf32>
    %102 = vector.shape_cast %101 : vector<16x16x128xf32> to vector<256x128xf32>
    %103 = arith.truncf %102 : vector<256x128xf32> to vector<256x128xbf16>
    %c4_100 = arith.constant 4 : index
    %c0_101 = arith.constant 0 : index
    %c0_102 = arith.constant 0 : index
    %104 = vector.load %arg4[%c4_100, %c0_101, %c0_102] : memref<9x128x128xbf16, #tpu.memory_space<vmem>>, vector<1x128x128xbf16>
    %105 = vector.shape_cast %104 : vector<1x128x128xbf16> to vector<128x128xbf16>
    %cst_103 = arith.constant dense<0.000000e+00> : vector<256x128xf32>
    %106 = tpu.matmul %103, %105, %cst_103 {dimension_numbers = #tpu.dot_dimension_numbers<[1], [0], [0], [1], [0, 0, 1, 1], [], []>} : vector<256x128xbf16>, vector<128x128xbf16>, vector<256x128xf32> -> vector<256x128xf32>
    %107 = arith.addf %100, %106 : vector<256x128xf32>
    %c1_104 = arith.constant 1 : index
    %c9_105 = arith.constant 9 : index
    %c0_106 = arith.constant 0 : index
    %108 = vector.load %arg7[%c1_104, %c9_105, %c0_106] : memref<18x32x128xf32, #tpu.memory_space<vmem>>, vector<16x16x128xf32>
    %109 = vector.shape_cast %108 : vector<16x16x128xf32> to vector<256x128xf32>
    %110 = arith.truncf %109 : vector<256x128xf32> to vector<256x128xbf16>
    %c5_107 = arith.constant 5 : index
    %c0_108 = arith.constant 0 : index
    %c0_109 = arith.constant 0 : index
    %111 = vector.load %arg4[%c5_107, %c0_108, %c0_109] : memref<9x128x128xbf16, #tpu.memory_space<vmem>>, vector<1x128x128xbf16>
    %112 = vector.shape_cast %111 : vector<1x128x128xbf16> to vector<128x128xbf16>
    %cst_110 = arith.constant dense<0.000000e+00> : vector<256x128xf32>
    %113 = tpu.matmul %110, %112, %cst_110 {dimension_numbers = #tpu.dot_dimension_numbers<[1], [0], [0], [1], [0, 0, 1, 1], [], []>} : vector<256x128xbf16>, vector<128x128xbf16>, vector<256x128xf32> -> vector<256x128xf32>
    %114 = arith.addf %107, %113 : vector<256x128xf32>
    %c2_111 = arith.constant 2 : index
    %c7_112 = arith.constant 7 : index
    %c0_113 = arith.constant 0 : index
    %115 = vector.load %arg7[%c2_111, %c7_112, %c0_113] : memref<18x32x128xf32, #tpu.memory_space<vmem>>, vector<16x16x128xf32>
    %116 = vector.shape_cast %115 : vector<16x16x128xf32> to vector<256x128xf32>
    %117 = arith.truncf %116 : vector<256x128xf32> to vector<256x128xbf16>
    %c6_114 = arith.constant 6 : index
    %c0_115 = arith.constant 0 : index
    %c0_116 = arith.constant 0 : index
    %118 = vector.load %arg4[%c6_114, %c0_115, %c0_116] : memref<9x128x128xbf16, #tpu.memory_space<vmem>>, vector<1x128x128xbf16>
    %119 = vector.shape_cast %118 : vector<1x128x128xbf16> to vector<128x128xbf16>
    %cst_117 = arith.constant dense<0.000000e+00> : vector<256x128xf32>
    %120 = tpu.matmul %117, %119, %cst_117 {dimension_numbers = #tpu.dot_dimension_numbers<[1], [0], [0], [1], [0, 0, 1, 1], [], []>} : vector<256x128xbf16>, vector<128x128xbf16>, vector<256x128xf32> -> vector<256x128xf32>
    %121 = arith.addf %114, %120 : vector<256x128xf32>
    %c2_118 = arith.constant 2 : index
    %c8_119 = arith.constant 8 : index
    %c0_120 = arith.constant 0 : index
    %122 = vector.load %arg7[%c2_118, %c8_119, %c0_120] : memref<18x32x128xf32, #tpu.memory_space<vmem>>, vector<16x16x128xf32>
    %123 = vector.shape_cast %122 : vector<16x16x128xf32> to vector<256x128xf32>
    %124 = arith.truncf %123 : vector<256x128xf32> to vector<256x128xbf16>
    %c7_121 = arith.constant 7 : index
    %c0_122 = arith.constant 0 : index
    %c0_123 = arith.constant 0 : index
    %125 = vector.load %arg4[%c7_121, %c0_122, %c0_123] : memref<9x128x128xbf16, #tpu.memory_space<vmem>>, vector<1x128x128xbf16>
    %126 = vector.shape_cast %125 : vector<1x128x128xbf16> to vector<128x128xbf16>
    %cst_124 = arith.constant dense<0.000000e+00> : vector<256x128xf32>
    %127 = tpu.matmul %124, %126, %cst_124 {dimension_numbers = #tpu.dot_dimension_numbers<[1], [0], [0], [1], [0, 0, 1, 1], [], []>} : vector<256x128xbf16>, vector<128x128xbf16>, vector<256x128xf32> -> vector<256x128xf32>
    %128 = arith.addf %121, %127 : vector<256x128xf32>
    %c2_125 = arith.constant 2 : index
    %c9_126 = arith.constant 9 : index
    %c0_127 = arith.constant 0 : index
    %129 = vector.load %arg7[%c2_125, %c9_126, %c0_127] : memref<18x32x128xf32, #tpu.memory_space<vmem>>, vector<16x16x128xf32>
    %130 = vector.shape_cast %129 : vector<16x16x128xf32> to vector<256x128xf32>
    %131 = arith.truncf %130 : vector<256x128xf32> to vector<256x128xbf16>
    %c8_128 = arith.constant 8 : index
    %c0_129 = arith.constant 0 : index
    %c0_130 = arith.constant 0 : index
    %132 = vector.load %arg4[%c8_128, %c0_129, %c0_130] : memref<9x128x128xbf16, #tpu.memory_space<vmem>>, vector<1x128x128xbf16>
    %133 = vector.shape_cast %132 : vector<1x128x128xbf16> to vector<128x128xbf16>
    %cst_131 = arith.constant dense<0.000000e+00> : vector<256x128xf32>
    %134 = tpu.matmul %131, %133, %cst_131 {dimension_numbers = #tpu.dot_dimension_numbers<[1], [0], [0], [1], [0, 0, 1, 1], [], []>} : vector<256x128xbf16>, vector<128x128xbf16>, vector<256x128xf32> -> vector<256x128xf32>
    %135 = arith.addf %128, %134 : vector<256x128xf32>
    %c0_132 = arith.constant 0 : index
    %c0_133 = arith.constant 0 : index
    %136 = vector.load %arg5[%c0_132, %c0_133] : memref<1x128xf32, #tpu.memory_space<vmem>>, vector<1x128xf32>
    %137 = vector.broadcast %136 : vector<1x128xf32> to vector<256x128xf32>
    %138 = arith.addf %135, %137 : vector<256x128xf32>
    %cst_134 = arith.constant 0.000000e+00 : f32
    %139 = vector.broadcast %cst_134 : f32 to vector<256x128xf32>
    %140 = arith.maximumf %138, %139 : vector<256x128xf32>
    %141 = vector.shape_cast %140 : vector<256x128xf32> to vector<128x2x128xf32>
    %cst_135 = arith.constant dense<0xFF800000> : vector<128x128xf32>
    %142 = vector.multi_reduction <maximumf>, %141, %cst_135 [1] : vector<128x2x128xf32> to vector<128x128xf32>
    %143 = vector.shape_cast %142 : vector<128x128xf32> to vector<8x16x128xf32>
    %144 = vector.extract_strided_slice %143 {offsets = [0, 0, 0], sizes = [8, 8, 128], strides = [1, 1, 1]} : vector<8x16x128xf32> to vector<8x8x128xf32>
    %145 = vector.extract_strided_slice %143 {offsets = [0, 8, 0], sizes = [8, 8, 128], strides = [1, 1, 1]} : vector<8x16x128xf32> to vector<8x8x128xf32>
    %146 = arith.maximumf %144, %145 : vector<8x8x128xf32>
    %c0_136 = arith.constant 0 : index
    %c0_137 = arith.constant 0 : index
    %c0_138 = arith.constant 0 : index
    %c0_139 = arith.constant 0 : index
    %147 = vector.load %arg6[%c0_136, %c0_137, %c0_138, %c0_139] : memref<1x8x8x128xf32, #tpu.memory_space<vmem>>, vector<1x8x8x128xf32>
    %148 = vector.shape_cast %147 : vector<1x8x8x128xf32> to vector<8x8x128xf32>
    %149 = vector.shape_cast %146 : vector<8x8x128xf32> to vector<1x8x8x128xf32>
    tpu.vector_store %arg6[%c0_136, %c0_137, %c0_138, %c0_139], %149 {strides = array<i32>} : memref<1x8x8x128xf32, #tpu.memory_space<vmem>>, vector<1x8x8x128xf32>,
    return
  }
  func.func @transform_0(%arg0: i32) -> (i32, i32, i32, i32) {
    %c0_i32 = arith.constant 0 : i32
    %c0_i32_0 = arith.constant 0 : i32
    %c0_i32_1 = arith.constant 0 : i32
    %c0_i32_2 = arith.constant 0 : i32
    return %arg0, %c0_i32, %c0_i32_0, %c0_i32_1 : i32, i32, i32, i32
  }
  func.func @transform_1(%arg0: i32) -> (i32, i32, i32) {
    %c0_i32 = arith.constant 0 : i32
    %c0_i32_0 = arith.constant 0 : i32
    %c0_i32_1 = arith.constant 0 : i32
    %c0_i32_2 = arith.constant 0 : i32
    return %c0_i32, %c0_i32_0, %c0_i32_1 : i32, i32, i32
  }
  func.func @transform_2(%arg0: i32) -> (i32, i32) {
    %c0_i32 = arith.constant 0 : i32
    %c0_i32_0 = arith.constant 0 : i32
    %c0_i32_1 = arith.constant 0 : i32
    return %c0_i32, %c0_i32_0 : i32, i32
  }
  func.func @transform_3(%arg0: i32) -> (i32, i32, i32) {
    %c0_i32 = arith.constant 0 : i32
    %c0_i32_0 = arith.constant 0 : i32
    %c0_i32_1 = arith.constant 0 : i32
    %c0_i32_2 = arith.constant 0 : i32
    return %c0_i32, %c0_i32_0, %c0_i32_1 : i32, i32, i32
  }
  func.func @transform_4(%arg0: i32) -> (i32, i32) {
    %c0_i32 = arith.constant 0 : i32
    %c0_i32_0 = arith.constant 0 : i32
    %c0_i32_1 = arith.constant 0 : i32
    return %c0_i32, %c0_i32_0 : i32, i32
  }
  func.func @transform_5(%arg0: i32) -> (i32, i32, i32, i32) {
    %c0_i32 = arith.constant 0 : i32
    %c0_i32_0 = arith.constant 0 : i32
    %c0_i32_1 = arith.constant 0 : i32
    %c0_i32_2 = arith.constant 0 : i32
    return %arg0, %c0_i32, %c0_i32_0, %c0_i32_1 : i32, i32, i32, i32
  }
}

module attributes {stable_mosaic.version = 11 : i64} {
  func.func @kernel(%arg0: i32, %arg1: memref<2x512xf32, #tpu.memory_space<vmem>>, %arg2: memref<512x32xbf16, #tpu.memory_space<vmem>>, %arg3: memref<1x32xf32, #tpu.memory_space<vmem>>, %arg4: memref<32x10xbf16, #tpu.memory_space<vmem>>, %arg5: memref<1x10xf32, #tpu.memory_space<vmem>>, %arg6: memref<2x10xf32, #tpu.memory_space<vmem>>) attributes {dimension_semantics = [#tpu.dimension_semantics<parallel>], iteration_bounds = array<i64: 1>, scalar_prefetch = 0 : i64, scratch_operands = 0 : i64, tpu.core_type = #tpu.core_type<tc>, window_params = [{transform_indices = @transform_0, window_bounds = array<i64: 2, 512>}, {pipeline_mode = #tpu.pipeline_mode<synchronous>, transform_indices = @transform_1, window_bounds = array<i64: 512, 32>}, {pipeline_mode = #tpu.pipeline_mode<synchronous>, transform_indices = @transform_2, window_bounds = array<i64: 1, 32>}, {pipeline_mode = #tpu.pipeline_mode<synchronous>, transform_indices = @transform_3, window_bounds = array<i64: 32, 10>}, {pipeline_mode = #tpu.pipeline_mode<synchronous>, transform_indices = @transform_4, window_bounds = array<i64: 1, 10>}, {transform_indices = @transform_5, window_bounds = array<i64: 2, 10>}]} {
    %c0 = arith.constant 0 : index
    %c0_0 = arith.constant 0 : index
    %0 = vector.load %arg1[%c0, %c0_0] : memref<2x512xf32, #tpu.memory_space<vmem>>, vector<2x512xf32>
    %1 = arith.truncf %0 : vector<2x512xf32> to vector<2x512xbf16>
    %c0_1 = arith.constant 0 : index
    %c0_2 = arith.constant 0 : index
    %2 = vector.load %arg2[%c0_1, %c0_2] : memref<512x32xbf16, #tpu.memory_space<vmem>>, vector<512x32xbf16>
    %cst = arith.constant dense<0.000000e+00> : vector<2x32xf32>
    %3 = tpu.matmul %1, %2, %cst {dimension_numbers = #tpu.dot_dimension_numbers<[1], [0], [0], [1], [0, 0, 1, 1], [], []>} : vector<2x512xbf16>, vector<512x32xbf16>, vector<2x32xf32> -> vector<2x32xf32>
    %c0_3 = arith.constant 0 : index
    %c0_4 = arith.constant 0 : index
    %4 = vector.load %arg3[%c0_3, %c0_4] : memref<1x32xf32, #tpu.memory_space<vmem>>, vector<1x32xf32>
    %5 = vector.broadcast %4 : vector<1x32xf32> to vector<2x32xf32>
    %6 = arith.addf %3, %5 : vector<2x32xf32>
    %cst_5 = arith.constant 0.000000e+00 : f32
    %7 = vector.broadcast %cst_5 : f32 to vector<2x32xf32>
    %8 = arith.maximumf %6, %7 : vector<2x32xf32>
    %9 = arith.truncf %8 : vector<2x32xf32> to vector<2x32xbf16>
    %c0_6 = arith.constant 0 : index
    %c0_7 = arith.constant 0 : index
    %10 = vector.load %arg4[%c0_6, %c0_7] : memref<32x10xbf16, #tpu.memory_space<vmem>>, vector<32x10xbf16>
    %cst_8 = arith.constant dense<0.000000e+00> : vector<2x10xf32>
    %11 = tpu.matmul %9, %10, %cst_8 {dimension_numbers = #tpu.dot_dimension_numbers<[1], [0], [0], [1], [0, 0, 1, 1], [], []>} : vector<2x32xbf16>, vector<32x10xbf16>, vector<2x10xf32> -> vector<2x10xf32>
    %c0_9 = arith.constant 0 : index
    %c0_10 = arith.constant 0 : index
    %12 = vector.load %arg5[%c0_9, %c0_10] : memref<1x10xf32, #tpu.memory_space<vmem>>, vector<1x10xf32>
    %13 = vector.broadcast %12 : vector<1x10xf32> to vector<2x10xf32>
    %14 = arith.addf %11, %13 : vector<2x10xf32>
    %c0_11 = arith.constant 0 : index
    %c0_12 = arith.constant 0 : index
    %15 = vector.load %arg6[%c0_11, %c0_12] : memref<2x10xf32, #tpu.memory_space<vmem>>, vector<2x10xf32>
    tpu.vector_store %arg6[%c0_11, %c0_12], %14 {strides = array<i32>} : memref<2x10xf32, #tpu.memory_space<vmem>>, vector<2x10xf32>,
    return
  }
  func.func @transform_0(%arg0: i32) -> (i32, i32) {
    %c0_i32 = arith.constant 0 : i32
    %c0_i32_0 = arith.constant 0 : i32
    return %arg0, %c0_i32 : i32, i32
  }
  func.func @transform_1(%arg0: i32) -> (i32, i32) {
    %c0_i32 = arith.constant 0 : i32
    %c0_i32_0 = arith.constant 0 : i32
    %c0_i32_1 = arith.constant 0 : i32
    return %c0_i32, %c0_i32_0 : i32, i32
  }
  func.func @transform_2(%arg0: i32) -> (i32, i32) {
    %c0_i32 = arith.constant 0 : i32
    %c0_i32_0 = arith.constant 0 : i32
    %c0_i32_1 = arith.constant 0 : i32
    return %c0_i32, %c0_i32_0 : i32, i32
  }
  func.func @transform_3(%arg0: i32) -> (i32, i32) {
    %c0_i32 = arith.constant 0 : i32
    %c0_i32_0 = arith.constant 0 : i32
    %c0_i32_1 = arith.constant 0 : i32
    return %c0_i32, %c0_i32_0 : i32, i32
  }
  func.func @transform_4(%arg0: i32) -> (i32, i32) {
    %c0_i32 = arith.constant 0 : i32
    %c0_i32_0 = arith.constant 0 : i32
    %c0_i32_1 = arith.constant 0 : i32
    return %c0_i32, %c0_i32_0 : i32, i32
  }
  func.func @transform_5(%arg0: i32) -> (i32, i32) {
    %c0_i32 = arith.constant 0 : i32
    %c0_i32_0 = arith.constant 0 : i32
    return %arg0, %c0_i32 : i32, i32
  }
}

</mosaic_0001>

<llo_original>
// kernel: conv_classifier_forward.3
$region0: #{conv_classifier_forward.3}
  #allocation0 [shape = 'u32[]', space=smem, size = 0x4, offset = 0x4, fixed_abs, tag = 'smem constant byte address 0x4 - core index']
  #allocation1 [shape = 'u32[72,128]{1,0:T(1,128)}', space=vmem, size = 0x9000, scoped, tag = 'internal scratch']
  %s0 = inlined_call_operand.vmem [shape: f32[2,512], index: 0, kind: input, shape index: {}]
  %s1 = inlined_call_operand.vmem [shape: bf16[512,32], index: 1, kind: input, shape index: {}]
  %s2 = inlined_call_operand.vmem [shape: f32[1,32], index: 2, kind: input, shape index: {}]
  %s3 = inlined_call_operand.vmem [shape: bf16[32,10], index: 3, kind: input, shape index: {}]
  %s4 = inlined_call_operand.vmem [shape: f32[1,10], index: 4, kind: input, shape index: {}]
  %s5 = inlined_call_operand.hbm [shape: f32[2,10], index: 5, kind: output, shape index: {}]
  %s6 = sld [smem:[#allocation0]]
  $region30: #{conv_classifier_forward.3} parent=0
    _
  %s8 = ssub.s32 1, %s6
  %s9 = scalar_select 0, %s8, %s6
  $region1: #{conv_classifier_forward.3} parent=0
    #allocation2 [shape = 'u8[1024]{0}', space=vmem, size = 0x400, scoped, tag = 'output window, operand 0, single buffered']
    #allocation3 [shape = 's32[1]{0}', space=sflag, size = 0x4, scoped, tag = 'scoped memory for conv_classifier_forward.3']
    %10 = vsyncpa [#allocation3], 0
    // Predicated region
    $region2: #{conv_classifier_forward.3} parent=1 // pred_check
      _
    $region3: #{conv_classifier_forward.3} parent=1 // pred_check_branch
      %12 = sbr.rel (0) target = $region5
    $region4: #{conv_classifier_forward.3} parent=1 // pred_region
      _
    $region5: #{conv_classifier_forward.3} parent=1 // pred_fallthru
      _
    // Predicated region
    $region6: #{conv_classifier_forward.3} parent=1 // pred_check
      _
    $region7: #{conv_classifier_forward.3} parent=1 // pred_check_branch
      %14 = sbr.rel (0) target = $region9
    $region8: #{conv_classifier_forward.3} parent=1 // pred_region
      _
    $region9: #{conv_classifier_forward.3} parent=1 // pred_fallthru
      _
    // Predicated region
    $region10: #{conv_classifier_forward.3} parent=1 // pred_check
      _
    $region11: #{conv_classifier_forward.3} parent=1 // pred_check_branch
      %16 = sbr.rel (0) target = $region13
    $region12: #{conv_classifier_forward.3} parent=1 // pred_region
      _
    $region13: #{conv_classifier_forward.3} parent=1 // pred_fallthru
      _
    // Predicated region
    $region14: #{conv_classifier_forward.3} parent=1 // pred_check
      _
    $region15: #{conv_classifier_forward.3} parent=1 // pred_check_branch
      %18 = sbr.rel (0) target = $region17
    $region16: #{conv_classifier_forward.3} parent=1 // pred_region
      _
    $region17: #{conv_classifier_forward.3} parent=1 // pred_fallthru
      _
    // Predicated region
    $region18: #{conv_classifier_forward.3} parent=1 // pred_check
      _
    $region19: #{conv_classifier_forward.3} parent=1 // pred_check_branch
      %20 = sbr.rel (0) target = $region21
    $region20: #{conv_classifier_forward.3} parent=1 // pred_region
      _
    $region21: #{conv_classifier_forward.3} parent=1 // pred_fallthru
      _
    %v22 = vld [vmem:[%s0] sm:$0xff]
    %24 = vst [vmem:[#allocation1] ss:$4 sm:$0xff] %v22
    %v25 = vld.sshfl [vmem:[#allocation1] sm:$0xff pattern:$0x73625140]
    %v26 = vld.sshfl [vmem:[#allocation1 + $0x8] sm:$0xff pattern:$0x73625140]
    %v27 = vld.sshfl [vmem:[#allocation1 + $0x10] sm:$0xff pattern:$0x73625140]
    %v28 = vld.sshfl [vmem:[#allocation1 + $0x18] sm:$0xff pattern:$0x73625140]
    %v33 = vpack.c.bf16 %v25, %v25
    %v34 = vpack.c.bf16 %v26, %v26
    %v35 = vpack.c.bf16 %v27, %v27
    %v36 = vpack.c.bf16 %v28, %v28
    %v37 = vld [vmem:[%s1] sm:$0xf]
    %v38 = vld [vmem:[%s1 + $0x4] sm:$0xf]
    %v39 = vld [vmem:[%s1 + $0x8] sm:$0xf]
    %v40 = vld [vmem:[%s1 + $0xc] sm:$0xf]
    %v41 = vld [vmem:[%s1 + $0x10] sm:$0xf]
    %v42 = vld [vmem:[%s1 + $0x14] sm:$0xf]
    %v43 = vld [vmem:[%s1 + $0x18] sm:$0xf]
    %v44 = vld [vmem:[%s1 + $0x1c] sm:$0xf]
    %v45 = vld [vmem:[%s1 + $0x20] sm:$0xf]
    %v46 = vld [vmem:[%s1 + $0x24] sm:$0xf]
    %v47 = vld [vmem:[%s1 + $0x28] sm:$0xf]
    %v48 = vld [vmem:[%s1 + $0x2c] sm:$0xf]
    %v49 = vld [vmem:[%s1 + $0x30] sm:$0xf]
    %v50 = vld [vmem:[%s1 + $0x34] sm:$0xf]
    %v51 = vld [vmem:[%s1 + $0x38] sm:$0xf]
    %v52 = vld [vmem:[%s1 + $0x3c] sm:$0xf]
    %v53 = vld [vmem:[%s1 + $0x40] sm:$0xf]
    %v54 = vld [vmem:[%s1 + $0x44] sm:$0xf]
    %v55 = vld [vmem:[%s1 + $0x48] sm:$0xf]
    %v56 = vld [vmem:[%s1 + $0x4c] sm:$0xf]
    %v57 = vld [vmem:[%s1 + $0x50] sm:$0xf]
    %v58 = vld [vmem:[%s1 + $0x54] sm:$0xf]
    %v59 = vld [vmem:[%s1 + $0x58] sm:$0xf]
    %v60 = vld [vmem:[%s1 + $0x5c] sm:$0xf]
    %v61 = vld [vmem:[%s1 + $0x60] sm:$0xf]
    %v62 = vld [vmem:[%s1 + $0x64] sm:$0xf]
    %v63 = vld [vmem:[%s1 + $0x68] sm:$0xf]
    %v64 = vld [vmem:[%s1 + $0x6c] sm:$0xf]
    %v65 = vld [vmem:[%s1 + $0x70] sm:$0xf]
    %v66 = vld [vmem:[%s1 + $0x74] sm:$0xf]
    %v67 = vld [vmem:[%s1 + $0x78] sm:$0xf]
    %v68 = vld [vmem:[%s1 + $0x7c] sm:$0xf]
    %v69 = vld [vmem:[%s1 + $0x80] sm:$0xf]
    %v70 = vld [vmem:[%s1 + $0x84] sm:$0xf]
    %v71 = vld [vmem:[%s1 + $0x88] sm:$0xf]
    %v72 = vld [vmem:[%s1 + $0x8c] sm:$0xf]
    %v73 = vld [vmem:[%s1 + $0x90] sm:$0xf]
    %v74 = vld [vmem:[%s1 + $0x94] sm:$0xf]
    %v75 = vld [vmem:[%s1 + $0x98] sm:$0xf]
    %v76 = vld [vmem:[%s1 + $0x9c] sm:$0xf]
    %v77 = vld [vmem:[%s1 + $0xa0] sm:$0xf]
    %v78 = vld [vmem:[%s1 + $0xa4] sm:$0xf]
    %v79 = vld [vmem:[%s1 + $0xa8] sm:$0xf]
    %v80 = vld [vmem:[%s1 + $0xac] sm:$0xf]
    %v81 = vld [vmem:[%s1 + $0xb0] sm:$0xf]
    %v82 = vld [vmem:[%s1 + $0xb4] sm:$0xf]
    %v83 = vld [vmem:[%s1 + $0xb8] sm:$0xf]
    %v84 = vld [vmem:[%s1 + $0xbc] sm:$0xf]
    %v85 = vld [vmem:[%s1 + $0xc0] sm:$0xf]
    %v86 = vld [vmem:[%s1 + $0xc4] sm:$0xf]
    %v87 = vld [vmem:[%s1 + $0xc8] sm:$0xf]
    %v88 = vld [vmem:[%s1 + $0xcc] sm:$0xf]
    %v89 = vld [vmem:[%s1 + $0xd0] sm:$0xf]
    %v90 = vld [vmem:[%s1 + $0xd4] sm:$0xf]
    %v91 = vld [vmem:[%s1 + $0xd8] sm:$0xf]
    %v92 = vld [vmem:[%s1 + $0xdc] sm:$0xf]
    %v93 = vld [vmem:[%s1 + $0xe0] sm:$0xf]
    %v94 = vld [vmem:[%s1 + $0xe4] sm:$0xf]
    %v95 = vld [vmem:[%s1 + $0xe8] sm:$0xf]
    %v96 = vld [vmem:[%s1 + $0xec] sm:$0xf]
    %v97 = vld [vmem:[%s1 + $0xf0] sm:$0xf]
    %v98 = vld [vmem:[%s1 + $0xf4] sm:$0xf]
    %v99 = vld [vmem:[%s1 + $0xf8] sm:$0xf]
    %v100 = vld [vmem:[%s1 + $0xfc] sm:$0xf]
    %v101 = vld [vmem:[%s2] sm:$0x1]
    %v103 = vperm.slane %v101, 0
    %v169 = vunpack.c.l.b16 %v37
    %v170 = vunpack.c.l.b16 %v38
    %v171 = vunpack.c.l.b16 %v39
    %v172 = vunpack.c.l.b16 %v40
    %v173 = vunpack.c.l.b16 %v41
    %v174 = vunpack.c.l.b16 %v42
    %v175 = vunpack.c.l.b16 %v43
    %v176 = vunpack.c.l.b16 %v44
    %v177 = vunpack.c.l.b16 %v45
    %v178 = vunpack.c.l.b16 %v46
    %v179 = vunpack.c.l.b16 %v47
    %v180 = vunpack.c.l.b16 %v48
    %v181 = vunpack.c.l.b16 %v49
    %v182 = vunpack.c.l.b16 %v50
    %v183 = vunpack.c.l.b16 %v51
    %v184 = vunpack.c.l.b16 %v52
    %v185 = vunpack.c.l.b16 %v53
    %v186 = vunpack.c.l.b16 %v54
    %v187 = vunpack.c.l.b16 %v55
    %v188 = vunpack.c.l.b16 %v56
    %v189 = vunpack.c.l.b16 %v57
    %v190 = vunpack.c.l.b16 %v58
    %v191 = vunpack.c.l.b16 %v59
    %v192 = vunpack.c.l.b16 %v60
    %v193 = vunpack.c.l.b16 %v61
    %v194 = vunpack.c.l.b16 %v62
    %v195 = vunpack.c.l.b16 %v63
    %v196 = vunpack.c.l.b16 %v64
    %v197 = vunpack.c.l.b16 %v65
    %v198 = vunpack.c.l.b16 %v66
    %v199 = vunpack.c.l.b16 %v67
    %v200 = vunpack.c.l.b16 %v68
    %v201 = vunpack.c.l.b16 %v69
    %v202 = vunpack.c.l.b16 %v70
    %v203 = vunpack.c.l.b16 %v71
    %v204 = vunpack.c.l.b16 %v72
    %v205 = vunpack.c.l.b16 %v73
    %v206 = vunpack.c.l.b16 %v74
    %v207 = vunpack.c.l.b16 %v75
    %v208 = vunpack.c.l.b16 %v76
    %v209 = vunpack.c.l.b16 %v77
    %v210 = vunpack.c.l.b16 %v78
    %v211 = vunpack.c.l.b16 %v79
    %v212 = vunpack.c.l.b16 %v80
    %v213 = vunpack.c.l.b16 %v81
    %v214 = vunpack.c.l.b16 %v82
    %v215 = vunpack.c.l.b16 %v83
    %v216 = vunpack.c.l.b16 %v84
    %v217 = vunpack.c.l.b16 %v85
    %v218 = vunpack.c.l.b16 %v86
    %v219 = vunpack.c.l.b16 %v87
    %v220 = vunpack.c.l.b16 %v88
    %v221 = vunpack.c.l.b16 %v89
    %v222 = vunpack.c.l.b16 %v90
    %v223 = vunpack.c.l.b16 %v91
    %v224 = vunpack.c.l.b16 %v92
    %v225 = vunpack.c.l.b16 %v93
    %v226 = vunpack.c.l.b16 %v94
    %v227 = vunpack.c.l.b16 %v95
    %v228 = vunpack.c.l.b16 %v96
    %v229 = vunpack.c.l.b16 %v97
    %v230 = vunpack.c.l.b16 %v98
    %v231 = vunpack.c.l.b16 %v99
    %v232 = vunpack.c.l.b16 %v100
    %v233 = vpack.c.b16 %v170, %v169
    %v234 = vpack.c.b16 %v172, %v171
    %v235 = vpack.c.b16 %v174, %v173
    %v236 = vpack.c.b16 %v176, %v175
    %v237 = vpack.c.b16 %v178, %v177
    %v238 = vpack.c.b16 %v180, %v179
    %v239 = vpack.c.b16 %v182, %v181
    %v240 = vpack.c.b16 %v184, %v183
    %v241 = vpack.c.b16 %v186, %v185
    %v242 = vpack.c.b16 %v188, %v187
    %v243 = vpack.c.b16 %v190, %v189
    %v244 = vpack.c.b16 %v192, %v191
    %v245 = vpack.c.b16 %v194, %v193
    %v246 = vpack.c.b16 %v196, %v195
    %v247 = vpack.c.b16 %v198, %v197
    %v248 = vpack.c.b16 %v200, %v199
    %v249 = vpack.c.b16 %v202, %v201
    %v250 = vpack.c.b16 %v204, %v203
    %v251 = vpack.c.b16 %v206, %v205
    %v252 = vpack.c.b16 %v208, %v207
    %v253 = vpack.c.b16 %v210, %v209
    %v254 = vpack.c.b16 %v212, %v211
    %v255 = vpack.c.b16 %v214, %v213
    %v256 = vpack.c.b16 %v216, %v215
    %v257 = vpack.c.b16 %v218, %v217
    %v258 = vpack.c.b16 %v220, %v219
    %v259 = vpack.c.b16 %v222, %v221
    %v260 = vpack.c.b16 %v224, %v223
    %v261 = vpack.c.b16 %v226, %v225
    %v262 = vpack.c.b16 %v228, %v227
    %v263 = vpack.c.b16 %v230, %v229
    %v264 = vpack.c.b16 %v232, %v231
    %297 = vmatpush.bf16.msra.mxu0 %v240
    %298 = vmatpush.bf16.msra.mxu0 %v239
    %299 = vmatpush.bf16.msra.mxu0 %v238
    %300 = vmatpush.bf16.msra.mxu0 %v237
    %301 = vmatpush.bf16.msra.mxu0 %v236
    %302 = vmatpush.bf16.msra.mxu0 %v235
    %303 = vmatpush.bf16.msra.mxu0 %v234
    %304 = vmatpush.bf16.msra.mxu0 %v233
    %305 = vmatmul.bf16.gmra.mxu0 %v33
    %v306 = vpop.f32.mrf.mxu0
    %v307 = vadd.f32 %v103, %v306
    %v308 = vpop.f32.mrf.mxu0
    %309 = vdwg.mxu0
    %310 = vmatpush.bf16.msra.mxu0 %v248
    %311 = vmatpush.bf16.msra.mxu0 %v247
    %312 = vmatpush.bf16.msra.mxu0 %v246
    %313 = vmatpush.bf16.msra.mxu0 %v245
    %314 = vmatpush.bf16.msra.mxu0 %v244
    %315 = vmatpush.bf16.msra.mxu0 %v243
    %316 = vmatpush.bf16.msra.mxu0 %v242
    %317 = vmatpush.bf16.msra.mxu0 %v241
    %318 = vmatmul.bf16.gmra.mxu0 %v34
    %v319 = vpop.f32.mrf.mxu0
    %v320 = vadd.f32 %v307, %v319
    %v321 = vpop.f32.mrf.mxu0
    %322 = vdwg.mxu0
    %323 = vmatpush.bf16.msra.mxu0 %v256
    %324 = vmatpush.bf16.msra.mxu0 %v255
    %325 = vmatpush.bf16.msra.mxu0 %v254
    %326 = vmatpush.bf16.msra.mxu0 %v253
    %327 = vmatpush.bf16.msra.mxu0 %v252
    %328 = vmatpush.bf16.msra.mxu0 %v251
    %329 = vmatpush.bf16.msra.mxu0 %v250
    %330 = vmatpush.bf16.msra.mxu0 %v249
    %331 = vmatmul.bf16.gmra.mxu0 %v35
    %v332 = vpop.f32.mrf.mxu0
    %v333 = vadd.f32 %v320, %v332
    %v334 = vpop.f32.mrf.mxu0
    %335 = vdwg.mxu0
    %336 = vmatpush.bf16.msra.mxu0 %v264
    %337 = vmatpush.bf16.msra.mxu0 %v263
    %338 = vmatpush.bf16.msra.mxu0 %v262
    %339 = vmatpush.bf16.msra.mxu0 %v261
    %340 = vmatpush.bf16.msra.mxu0 %v260
    %341 = vmatpush.bf16.msra.mxu0 %v259
    %342 = vmatpush.bf16.msra.mxu0 %v258
    %343 = vmatpush.bf16.msra.mxu0 %v257
    %344 = vmatmul.bf16.gmra.mxu0 %v36
    %v345 = vpop.f32.mrf.mxu0
    %v346 = vadd.f32 %v333, %v345
    %v347 = vpop.f32.mrf.mxu0
    %348 = vdwg.mxu0
    %v349 = vmax.f32 %v346, 0.0
    %v350 = vpack.c.bf16 %v349, %v349
    %v351 = vld [vmem:[%s3] sm:$0xf]
    %v352 = vld [vmem:[%s3 + $0x4] sm:$0xf]
    %v353 = vld [vmem:[%s3 + $0x8] sm:$0xf]
    %v354 = vld [vmem:[%s3 + $0xc] sm:$0xf]
    %v355 = vld [vmem:[%s4] sm:$0x1]
    %v357 = vperm.slane %v355, 0
    %v363 = vunpack.c.l.b16 %v351
    %v364 = vunpack.c.l.b16 %v352
    %v365 = vunpack.c.l.b16 %v353
    %v366 = vunpack.c.l.b16 %v354
    %v367 = vpack.c.b16 %v364, %v363
    %v368 = vpack.c.b16 %v366, %v365
    %vm371 = vcmask 261120
    %v373 = vsel %vm371, %v350, 0
    %375 = vmatpush.bf16.msra.mxu0 0
    %376 = vmatpush.bf16.msra.mxu0 0
    %377 = vmatpush.bf16.msra.mxu0 0
    %378 = vmatpush.bf16.msra.mxu0 0
    %379 = vmatpush.bf16.msra.mxu0 0
    %380 = vmatpush.bf16.msra.mxu0 0
    %381 = vmatpush.bf16.msra.mxu0 %v368
    %382 = vmatpush.bf16.msra.mxu0 %v367
    %383 = vmatmul.bf16.gmra.mxu0 %v373
    %v384 = vpop.f32.mrf.mxu0
    %v385 = vadd.f32 %v357, %v384
    %v386 = vpop.f32.mrf.mxu0
    %387 = vdwg.mxu0
    %vm388 = vcmask 74752
    %389 = vst.msk [vmem:[#allocation2] sm:$0x3] %vm388, %v385
    // Predicated region
    $region22: #{conv_classifier_forward.3} parent=1 // pred_check
      _
    $region23: #{conv_classifier_forward.3} parent=1 // pred_check_branch
      %391 = sbr.rel (0) target = $region25
    $region24: #{conv_classifier_forward.3} parent=1 // pred_region
      %393 = vsyncadd [#allocation3], 0
      %s395 = sshll.u32 [#allocation2], 4
      %s396 = int_to_ptr.vmem [resolvable:$true] %s395
      %s397 = sshll.u32 %s5, 4
      %s398 = int_to_ptr.hbm [resolvable:$true] %s397
      %400 = dma.vmem_to_hbm [thread:$0]  %s396, 32, %s398, [#allocation3]
    $region25: #{conv_classifier_forward.3} parent=1 // pred_fallthru
      _
    // Predicated region
    $region26: #{conv_classifier_forward.3} parent=1 // pred_check
      _
    $region27: #{conv_classifier_forward.3} parent=1 // pred_check_branch
      %402 = sbr.rel (0) target = $region29
    $region28: #{conv_classifier_forward.3} parent=1 // pred_region
      %404 = dma.done [#allocation3], 32
    $region29: #{conv_classifier_forward.3} parent=1 // pred_fallthru
      _
    %405 = vsyncpa [#allocation3], 1

// kernel: conv_classifier_forward.2
$region0: #{conv_classifier_forward.2}
  #allocation0 [shape = 'u32[]', space=smem, size = 0x4, offset = 0x4, fixed_abs, tag = 'smem constant byte address 0x4 - core index']
  #allocation1 [shape = 'u32[72,128]{1,0:T(1,128)}', space=vmem, size = 0x9000, scoped, tag = 'internal scratch']
  #allocation2 [shape = 'f32[18,32,128]{2,1,0:T(8,128)}', space=vmem, size = 0x48000, scoped, tag = 'scratch operand']
  %s0 = inlined_call_operand.vmem [shape: f32[2,16,16,4], index: 0, kind: input, shape index: {}]
  %s1 = inlined_call_operand.vmem [shape: bf16[9,128,128], index: 1, kind: input, shape index: {}]
  %s2 = inlined_call_operand.vmem [shape: f32[1,128], index: 2, kind: input, shape index: {}]
  %s3 = inlined_call_operand.hbm [shape: bf16[9,128,128], index: 3, kind: input, shape index: {}]
  %s4 = inlined_call_operand.vmem [shape: f32[1,128], index: 4, kind: input, shape index: {}]
  %s5 = inlined_call_operand.vmem [shape: f32[2,8,8,128], index: 5, kind: output, shape index: {}]
  %s6 = sld [smem:[#allocation0]]
  $region57: #{conv_classifier_forward.2} parent=0
    _
  %s8 = ssub.s32 1, %s6
  %s9 = scalar_select 0, %s8, %s6
  $region1: #{conv_classifier_forward.2} parent=0
    #allocation3 [shape = 'u8[294912]{0}', space=vmem, size = 0x48000, scoped, tag = 'input window, operand 3, single buffered']
    #allocation4 [shape = 's32[2]{0}', space=sflag, size = 0x8, scoped, tag = 'scoped memory for conv_classifier_forward.2']
    %10 = vsyncpa [#allocation4], 0
    loop: start=0, step=1, limit=4
    $region2: #{conv_classifier_forward.2} parent=1 // loop_pre_header
      _
    $region3: #{conv_classifier_forward.2} parent=1 // loop_header
      %s12 = sphi 0, %s16
      %p13 = scmp.ge.s32.totalorder %s12, 4
      %s22 = sphi 0, %s24
      %s25 = sphi 0, %s22
      %s26 = sphi 0, %s25
      %s42 = sphi 0, %s26
      %s46 = sphi 0, %s46
      %s48 = sphi 0, %s46
      %s49 = sphi 0, %s48
      %s63 = sphi 0, %s49
      %s67 = sphi 0, %s67
      %s69 = sphi 0, %s67
      %s70 = sphi 0, %s69
      %s84 = sphi 0, %s70
      %s88 = sphi 0, %s88
      %s90 = sphi 0, %s88
      %s91 = sphi 0, %s90
      %s105 = sphi 0, %s91
      %s109 = sphi 0, %s109
      %s111 = sphi 0, %s109
      %s112 = sphi 0, %s111
      %s126 = sphi 0, %s112
      %s132 = sphi 0, %s134
      %s135 = sphi 0, %s132
      %s136 = sphi 0, %s135
      %s152 = sphi 0, %s136
    $region4: #{conv_classifier_forward.2} parent=1 // loop_header_branch
      %15 = sbr.rel (%p13) target = $region8
    $region5: #{conv_classifier_forward.2} parent=1 // loop_body
      %s17 = ssub.s32 %s12, 1
      %s18 = ssub.s32 %s12, 2
      %s19 = sadd.s32 %s12, 1
      %s20 = ssub.s32 %s12, %s19
      %p21 = scmp.eq.s32.totalorder %s20, 0
      %s23 = sadd.s32 %s22, 1
      %s24 = scalar_select %p21, %s22, %s23
      %p27 = pneg %p21
      %p28 = scmp.eq.s32.totalorder %s12, 1
      %p29 = por %p27, %p28
      %p30 = scmp.ne.s32.totalorder %s22, %s25
      %p31 = scmp.eq.s32.totalorder %s12, 0
      %p32 = por %p30, %p31
      %p33 = scmp.ne.s32.totalorder %s22, %s25
      %p34 = scmp.eq.s32.totalorder %s17, 1
      %p35 = por %p33, %p34
      %p36 = scmp.ne.s32.totalorder %s25, %s26
      %p37 = scmp.eq.s32.totalorder %s17, 0
      %p38 = por %p36, %p37
      %p39 = scmp.ne.s32.totalorder %s25, %s26
      %p40 = scmp.eq.s32.totalorder %s18, 1
      %p41 = por %p39, %p40
      %p43 = scmp.ne.s32.totalorder %s26, %s42
      %p44 = scmp.eq.s32.totalorder %s18, 0
      %p45 = por %p43, %p44
      %s47 = sadd.s32 %s46, 1
      %p50 = scmp.eq.s32.totalorder %s12, 1
      %p51 = scmp.ne.s32.totalorder %s46, %s48
      %p52 = scmp.eq.s32.totalorder %s12, 0
      %p53 = por %p51, %p52
      %p54 = scmp.ne.s32.totalorder %s46, %s48
      %p55 = scmp.eq.s32.totalorder %s17, 1
      %p56 = por %p54, %p55
      %p57 = scmp.ne.s32.totalorder %s48, %s49
      %p58 = scmp.eq.s32.totalorder %s17, 0
      %p59 = por %p57, %p58
      %p60 = scmp.ne.s32.totalorder %s48, %s49
      %p61 = scmp.eq.s32.totalorder %s18, 1
      %p62 = por %p60, %p61
      %p64 = scmp.ne.s32.totalorder %s49, %s63
      %p65 = scmp.eq.s32.totalorder %s18, 0
      %p66 = por %p64, %p65
      %s68 = sadd.s32 %s67, 1
      %p71 = scmp.eq.s32.totalorder %s12, 1
      %p72 = scmp.ne.s32.totalorder %s67, %s69
      %p73 = scmp.eq.s32.totalorder %s12, 0
      %p74 = por %p72, %p73
      %p75 = scmp.ne.s32.totalorder %s67, %s69
      %p76 = scmp.eq.s32.totalorder %s17, 1
      %p77 = por %p75, %p76
      %p78 = scmp.ne.s32.totalorder %s69, %s70
      %p79 = scmp.eq.s32.totalorder %s17, 0
      %p80 = por %p78, %p79
      %p81 = scmp.ne.s32.totalorder %s69, %s70
      %p82 = scmp.eq.s32.totalorder %s18, 1
      %p83 = por %p81, %p82
      %p85 = scmp.ne.s32.totalorder %s70, %s84
      %p86 = scmp.eq.s32.totalorder %s18, 0
      %p87 = por %p85, %p86
      %s89 = sadd.s32 %s88, 1
      %p92 = scmp.eq.s32.totalorder %s12, 1
      %p93 = scmp.ne.s32.totalorder %s88, %s90
      %p94 = scmp.eq.s32.totalorder %s12, 0
      %p95 = por %p93, %p94
      %p96 = scmp.ne.s32.totalorder %s88, %s90
      %p97 = scmp.eq.s32.totalorder %s17, 1
      %p98 = por %p96, %p97
      %p99 = scmp.ne.s32.totalorder %s90, %s91
      %p100 = scmp.eq.s32.totalorder %s17, 0
      %p101 = por %p99, %p100
      %p102 = scmp.ne.s32.totalorder %s90, %s91
      %p103 = scmp.eq.s32.totalorder %s18, 1
      %p104 = por %p102, %p103
      %p106 = scmp.ne.s32.totalorder %s91, %s105
      %p107 = scmp.eq.s32.totalorder %s18, 0
      %p108 = por %p106, %p107
      %s110 = sadd.s32 %s109, 1
      %p113 = scmp.eq.s32.totalorder %s12, 1
      %p114 = scmp.ne.s32.totalorder %s109, %s111
      %p115 = scmp.eq.s32.totalorder %s12, 0
      %p116 = por %p114, %p115
      %p117 = scmp.ne.s32.totalorder %s109, %s111
      %p118 = scmp.eq.s32.totalorder %s17, 1
      %p119 = por %p117, %p118
      %p120 = scmp.ne.s32.totalorder %s111, %s112
      %p121 = scmp.eq.s32.totalorder %s17, 0
      %p122 = por %p120, %p121
      %p123 = scmp.ne.s32.totalorder %s111, %s112
      %p124 = scmp.eq.s32.totalorder %s18, 1
      %p125 = por %p123, %p124
      %p127 = scmp.ne.s32.totalorder %s112, %s126
      %p128 = scmp.eq.s32.totalorder %s18, 0
      %p129 = por %p127, %p128
      %s130 = ssub.s32 %s12, %s19
      %p131 = scmp.eq.s32.totalorder %s130, 0
      %s133 = sadd.s32 %s132, 1
      %s134 = scalar_select %p131, %s132, %s133
      %p137 = pneg %p131
      %p138 = scmp.eq.s32.totalorder %s12, 1
      %p139 = por %p137, %p138
      %p140 = scmp.ne.s32.totalorder %s132, %s135
      %p141 = scmp.eq.s32.totalorder %s12, 0
      %p142 = por %p140, %p141
      %p143 = scmp.ne.s32.totalorder %s132, %s135
      %p144 = scmp.eq.s32.totalorder %s17, 1
      %p145 = por %p143, %p144
      %p146 = scmp.ne.s32.totalorder %s135, %s136
      %p147 = scmp.eq.s32.totalorder %s17, 0
      %p148 = por %p146, %p147
      %p149 = scmp.ne.s32.totalorder %s135, %s136
      %p150 = scmp.eq.s32.totalorder %s18, 1
      %p151 = por %p149, %p150
      %p153 = scmp.ne.s32.totalorder %s136, %s152
      %p154 = scmp.eq.s32.totalorder %s18, 0
      %p155 = por %p153, %p154
      %p156 = scmp.le.s32.totalorder 1, %s12
      %p157 = scmp.lt.s32.totalorder %s12, 3
      %p158 = pnand %p156, %p157
      %p159 = pneg %p158
      // Predicated region
      $region9: #{conv_classifier_forward.2} parent=5 // pred_check
        _
      $region10: #{conv_classifier_forward.2} parent=5 // pred_check_branch
        %161 = sbr.rel (%p158) target = $region12
      $region11: #{conv_classifier_forward.2} parent=5 // pred_region
        %s162 = ssub.s32 %s12, 1
        // Predicated region
        $region13: #{conv_classifier_forward.2} parent=11 // pred_check
          %p163 = pneg %p59
        $region14: #{conv_classifier_forward.2} parent=11 // pred_check_branch
          %165 = sbr.rel (%p163) target = $region16
        $region15: #{conv_classifier_forward.2} parent=11 // pred_region
          _
        $region16: #{conv_classifier_forward.2} parent=11 // pred_fallthru
          _
        // Predicated region
        $region17: #{conv_classifier_forward.2} parent=11 // pred_check
          %p166 = pneg %p80
        $region18: #{conv_classifier_forward.2} parent=11 // pred_check_branch
          %168 = sbr.rel (%p166) target = $region20
        $region19: #{conv_classifier_forward.2} parent=11 // pred_region
          _
        $region20: #{conv_classifier_forward.2} parent=11 // pred_fallthru
          _
        // Predicated region
        $region21: #{conv_classifier_forward.2} parent=11 // pred_check
          %p169 = pneg %p101
        $region22: #{conv_classifier_forward.2} parent=11 // pred_check_branch
          %171 = sbr.rel (%p169) target = $region24
        $region23: #{conv_classifier_forward.2} parent=11 // pred_region
          %173 = vsyncadd [#allocation4], 0
          %s174 = sshll.u32 %s3, 4
          %s175 = int_to_ptr.hbm [resolvable:$true] %s174
          %s176 = sshll.u32 [#allocation3], 4
          %s177 = int_to_ptr.vmem [resolvable:$true] %s176
          %182 = dma.hbm_to_vmem [thread:$0]  %s175, 9216, %s177, [#allocation4], 64, 64, 4
        $region24: #{conv_classifier_forward.2} parent=11 // pred_fallthru
          _
        // Predicated region
        $region25: #{conv_classifier_forward.2} parent=11 // pred_check
          %p183 = pneg %p122
        $region26: #{conv_classifier_forward.2} parent=11 // pred_check_branch
          %185 = sbr.rel (%p183) target = $region28
        $region27: #{conv_classifier_forward.2} parent=11 // pred_region
          _
        $region28: #{conv_classifier_forward.2} parent=11 // pred_fallthru
          _
      $region12: #{conv_classifier_forward.2} parent=5 // pred_fallthru
        _
      %p186 = scmp.lt.s32.totalorder %s12, 2
      // Predicated region
      $region29: #{conv_classifier_forward.2} parent=5 // pred_check
        %p187 = pneg %p186
      $region30: #{conv_classifier_forward.2} parent=5 // pred_check_branch
        %189 = sbr.rel (%p187) target = $region32
      $region31: #{conv_classifier_forward.2} parent=5 // pred_region
        // Predicated region
        $region33: #{conv_classifier_forward.2} parent=31 // pred_check
          %p190 = pneg %p32
        $region34: #{conv_classifier_forward.2} parent=31 // pred_check_branch
          %192 = sbr.rel (%p190) target = $region36
        $region35: #{conv_classifier_forward.2} parent=31 // pred_region
          %p193 = scmp.lt.s32.totalorder %s12, 1
          %s194 = scalar_select %p193, %s12, 1
          %s195 = smul.addr %s194, 32
          %s196 = smul.addr %s195, 8
          %s197 = scalar_lea.vmem %s0, %s196
        $region36: #{conv_classifier_forward.2} parent=31 // pred_fallthru
          _
      $region32: #{conv_classifier_forward.2} parent=5 // pred_fallthru
        _
      %p198 = scmp.le.s32.totalorder 1, %s12
      %p199 = scmp.lt.s32.totalorder %s12, 3
      %p200 = pnand %p198, %p199
      %p201 = pneg %p200
      // Predicated region
      $region37: #{conv_classifier_forward.2} parent=5 // pred_check
        _
      $region38: #{conv_classifier_forward.2} parent=5 // pred_check_branch
        %203 = sbr.rel (%p200) target = $region40
      $region39: #{conv_classifier_forward.2} parent=5 // pred_region
        %s204 = ssub.s32 %s12, 1
        // Predicated region
        $region41: #{conv_classifier_forward.2} parent=39 // pred_check
          %p205 = pneg %p101
        $region42: #{conv_classifier_forward.2} parent=39 // pred_check_branch
          %207 = sbr.rel (%p205) target = $region44
        $region43: #{conv_classifier_forward.2} parent=39 // pred_region
          %209 = dma.done [#allocation4], 9216
        $region44: #{conv_classifier_forward.2} parent=39 // pred_fallthru
          _
        %p210 = scmp.lt.s32.totalorder %s17, 1
        %s211 = scalar_select %p210, %s17, 1
        %s212 = smul.addr %s211, 32
        %s213 = smul.addr %s212, 8
        %s214 = scalar_lea.vmem %s0, %s213
        %p215 = pneg %p38
        %p216 = pneg %p35
        %p217 = pneg %p59
        %p218 = pneg %p56
        %p219 = pneg %p80
        %p220 = pneg %p77
        %p221 = pneg %p101
        %p222 = pneg %p98
        %p223 = pneg %p122
        %p224 = pneg %p119
        %p225 = pneg %p148
        %p226 = pneg %p145
        %p227 = scmp.lt.s32.totalorder %s17, 1
        %s228 = scalar_select %p227, %s17, 1
        %s229 = smul.addr %s228, 8
        %s230 = smul.addr %s229, 8
        %s231 = scalar_lea.vmem %s5, %s230
        %p232 = scmp.lt.s32.totalorder %s17, 1
        %s233 = scalar_select %p232, %s17, 1
        %s234 = smul.addr %s233, 32
        %s235 = smul.addr %s234, 8
        %s236 = scalar_lea.vmem %s0, %s235
        %p237 = scmp.lt.s32.totalorder %s17, 1
        %s238 = scalar_select %p237, %s17, 1
        %s239 = smul.addr %s238, 8
        %s240 = smul.addr %s239, 8
        %s241 = scalar_lea.vmem %s5, %s240
        %242 = vst [vmem:[#allocation2] sm:$0xff] 0.0
        %243 = vst [vmem:[#allocation2 + $0x8] sm:$0xff] 0.0
        %244 = vst [vmem:[#allocation2 + $0x10] sm:$0xff] 0.0
        %245 = vst [vmem:[#allocation2 + $0x18] sm:$0xff] 0.0
        %246 = vst [vmem:[#allocation2 + $0x20] sm:$0xff] 0.0
        %247 = vst [vmem:[#allocation2 + $0x28] sm:$0xff] 0.0
        %248 = vst [vmem:[#allocation2 + $0x30] sm:$0xff] 0.0
        %249 = vst [vmem:[#allocation2 + $0x38] sm:$0xff] 0.0
        %250 = vst [vmem:[#allocation2 + $0x40] sm:$0xff] 0.0
        %251 = vst [vmem:[#allocation2 + $0x48] sm:$0xff] 0.0
        %252 = vst [vmem:[#allocation2 + $0x50] sm:$0xff] 0.0
        %253 = vst [vmem:[#allocation2 + $0x58] sm:$0xff] 0.0
        %254 = vst [vmem:[#allocation2 + $0x60] sm:$0xff] 0.0
        %255 = vst [vmem:[#allocation2 + $0x68] sm:$0xff] 0.0
        %256 = vst [vmem:[#allocation2 + $0x70] sm:$0xff] 0.0
        %257 = vst [vmem:[#allocation2 + $0x78] sm:$0xff] 0.0
        %258 = vst [vmem:[#allocation2 + $0x80] sm:$0xff] 0.0
        %259 = vst [vmem:[#allocation2 + $0x88] sm:$0xff] 0.0
        %260 = vst [vmem:[#allocation2 + $0x90] sm:$0xff] 0.0
        %261 = vst [vmem:[#allocation2 + $0x98] sm:$0xff] 0.0
        %262 = vst [vmem:[#allocation2 + $0xa0] sm:$0xff] 0.0
        %263 = vst [vmem:[#allocation2 + $0xa8] sm:$0xff] 0.0
        %264 = vst [vmem:[#allocation2 + $0xb0] sm:$0xff] 0.0
        %265 = vst [vmem:[#allocation2 + $0xb8] sm:$0xff] 0.0
        %266 = vst [vmem:[#allocation2 + $0xc0] sm:$0xff] 0.0
        %267 = vst [vmem:[#allocation2 + $0xc8] sm:$0xff] 0.0
        %268 = vst [vmem:[#allocation2 + $0xd0] sm:$0xff] 0.0
        %269 = vst [vmem:[#allocation2 + $0xd8] sm:$0xff] 0.0
        %270 = vst [vmem:[#allocation2 + $0xe0] sm:$0xff] 0.0
        %271 = vst [vmem:[#allocation2 + $0xe8] sm:$0xff] 0.0
        %272 = vst [vmem:[#allocation2 + $0xf0] sm:$0xff] 0.0
        %273 = vst [vmem:[#allocation2 + $0xf8] sm:$0xff] 0.0
        %274 = vst [vmem:[#allocation2 + $0x100] sm:$0xff] 0.0
        %275 = vst [vmem:[#allocation2 + $0x108] sm:$0xff] 0.0
        %276 = vst [vmem:[#allocation2 + $0x110] sm:$0xff] 0.0
        %277 = vst [vmem:[#allocation2 + $0x118] sm:$0xff] 0.0
        %278 = vst [vmem:[#allocation2 + $0x120] sm:$0xff] 0.0
        %279 = vst [vmem:[#allocation2 + $0x128] sm:$0xff] 0.0
        %280 = vst [vmem:[#allocation2 + $0x130] sm:$0xff] 0.0
        %281 = vst [vmem:[#allocation2 + $0x138] sm:$0xff] 0.0
        %282 = vst [vmem:[#allocation2 + $0x140] sm:$0xff] 0.0
        %283 = vst [vmem:[#allocation2 + $0x148] sm:$0xff] 0.0
        %284 = vst [vmem:[#allocation2 + $0x150] sm:$0xff] 0.0
        %285 = vst [vmem:[#allocation2 + $0x158] sm:$0xff] 0.0
        %286 = vst [vmem:[#allocation2 + $0x160] sm:$0xff] 0.0
        %287 = vst [vmem:[#allocation2 + $0x168] sm:$0xff] 0.0
        %288 = vst [vmem:[#allocation2 + $0x170] sm:$0xff] 0.0
        %289 = vst [vmem:[#allocation2 + $0x178] sm:$0xff] 0.0
        %290 = vst [vmem:[#allocation2 + $0x180] sm:$0xff] 0.0
        %291 = vst [vmem:[#allocation2 + $0x188] sm:$0xff] 0.0
        %292 = vst [vmem:[#allocation2 + $0x190] sm:$0xff] 0.0
        %293 = vst [vmem:[#allocation2 + $0x198] sm:$0xff] 0.0
        %294 = vst [vmem:[#allocation2 + $0x1a0] sm:$0xff] 0.0
        %295 = vst [vmem:[#allocation2 + $0x1a8] sm:$0xff] 0.0
        %296 = vst [vmem:[#allocation2 + $0x1b0] sm:$0xff] 0.0
        %297 = vst [vmem:[#allocation2 + $0x1b8] sm:$0xff] 0.0
        %298 = vst [vmem:[#allocation2 + $0x1c0] sm:$0xff] 0.0
        %299 = vst [vmem:[#allocation2 + $0x1c8] sm:$0xff] 0.0
        %300 = vst [vmem:[#allocation2 + $0x1d0] sm:$0xff] 0.0
        %301 = vst [vmem:[#allocation2 + $0x1d8] sm:$0xff] 0.0
        %302 = vst [vmem:[#allocation2 + $0x1e0] sm:$0xff] 0.0
        %303 = vst [vmem:[#allocation2 + $0x1e8] sm:$0xff] 0.0
        %304 = vst [vmem:[#allocation2 + $0x1f0] sm:$0xff] 0.0
        %305 = vst [vmem:[#allocation2 + $0x1f8] sm:$0xff] 0.0
        %306 = vst [vmem:[#allocation2 + $0x200] sm:$0xff] 0.0
        %307 = vst [vmem:[#allocation2 + $0x208] sm:$0xff] 0.0
        %308 = vst [vmem:[#allocation2 + $0x210] sm:$0xff] 0.0
        %309 = vst [vmem:[#allocation2 + $0x218] sm:$0xff] 0.0
        %310 = vst [vmem:[#allocation2 + $0x220] sm:$0xff] 0.0
        %311 = vst [vmem:[#allocation2 + $0x228] sm:$0xff] 0.0
        %312 = vst [vmem:[#allocation2 + $0x230] sm:$0xff] 0.0
        %313 = vst [vmem:[#allocation2 + $0x238] sm:$0xff] 0.0
        %v314 = vld [vmem:[%s236] sm:$0xff]
        %v315 = vld [vmem:[%s236 + $0x8] sm:$0xff]
        %v316 = vld [vmem:[%s236 + $0x10] sm:$0xff]
        %v317 = vld [vmem:[%s236 + $0x18] sm:$0xff]
        %v318 = vld [vmem:[%s236 + $0x20] sm:$0xff]
        %v319 = vld [vmem:[%s236 + $0x28] sm:$0xff]
        %v320 = vld [vmem:[%s236 + $0x30] sm:$0xff]
        %v321 = vld [vmem:[%s236 + $0x38] sm:$0xff]
        %v322 = vld [vmem:[%s236 + $0x40] sm:$0xff]
        %v323 = vld [vmem:[%s236 + $0x48] sm:$0xff]
        %v324 = vld [vmem:[%s236 + $0x50] sm:$0xff]
        %v325 = vld [vmem:[%s236 + $0x58] sm:$0xff]
        %v326 = vld [vmem:[%s236 + $0x60] sm:$0xff]
        %v327 = vld [vmem:[%s236 + $0x68] sm:$0xff]
        %v328 = vld [vmem:[%s236 + $0x70] sm:$0xff]
        %v329 = vld [vmem:[%s236 + $0x78] sm:$0xff]
        %v330 = vld [vmem:[%s236 + $0x80] sm:$0xff]
        %v331 = vld [vmem:[%s236 + $0x88] sm:$0xff]
        %v332 = vld [vmem:[%s236 + $0x90] sm:$0xff]
        %v333 = vld [vmem:[%s236 + $0x98] sm:$0xff]
        %v334 = vld [vmem:[%s236 + $0xa0] sm:$0xff]
        %v335 = vld [vmem:[%s236 + $0xa8] sm:$0xff]
        %v336 = vld [vmem:[%s236 + $0xb0] sm:$0xff]
        %v337 = vld [vmem:[%s236 + $0xb8] sm:$0xff]
        %v338 = vld [vmem:[%s236 + $0xc0] sm:$0xff]
        %v339 = vld [vmem:[%s236 + $0xc8] sm:$0xff]
        %v340 = vld [vmem:[%s236 + $0xd0] sm:$0xff]
        %v341 = vld [vmem:[%s236 + $0xd8] sm:$0xff]
        %v342 = vld [vmem:[%s236 + $0xe0] sm:$0xff]
        %v343 = vld [vmem:[%s236 + $0xe8] sm:$0xff]
        %v344 = vld [vmem:[%s236 + $0xf0] sm:$0xff]
        %v345 = vld [vmem:[%s236 + $0xf8] sm:$0xff]
        %s346 = scalar_lea.vmem [#allocation2], 32
        %vm347 = vcmask 31744
        %348 = vst.msk [vmem:[%s346 + $0x8] sm:$0xff] %vm347, %v314
        %349 = vst.msk [vmem:[%s346 + $0x10] sm:$0xff] %vm347, %v315
        %350 = vst.msk [vmem:[%s346 + $0x28] sm:$0xff] %vm347, %v316
        %351 = vst.msk [vmem:[%s346 + $0x30] sm:$0xff] %vm347, %v317
        %352 = vst.msk [vmem:[%s346 + $0x48] sm:$0xff] %vm347, %v318
        %353 = vst.msk [vmem:[%s346 + $0x50] sm:$0xff] %vm347, %v319
        %354 = vst.msk [vmem:[%s346 + $0x68] sm:$0xff] %vm347, %v320
        %355 = vst.msk [vmem:[%s346 + $0x70] sm:$0xff] %vm347, %v321
        %356 = vst.msk [vmem:[%s346 + $0x88] sm:$0xff] %vm347, %v322
        %357 = vst.msk [vmem:[%s346 + $0x90] sm:$0xff] %vm347, %v323
        %358 = vst.msk [vmem:[%s346 + $0xa8] sm:$0xff] %vm347, %v324
        %359 = vst.msk [vmem:[%s346 + $0xb0] sm:$0xff] %vm347, %v325
        %360 = vst.msk [vmem:[%s346 + $0xc8] sm:$0xff] %vm347, %v326
        %361 = vst.msk [vmem:[%s346 + $0xd0] sm:$0xff] %vm347, %v327
        %362 = vst.msk [vmem:[%s346 + $0xe8] sm:$0xff] %vm347, %v328
        %363 = vst.msk [vmem:[%s346 + $0xf0] sm:$0xff] %vm347, %v329
        %364 = vst.msk [vmem:[%s346 + $0x108] sm:$0xff] %vm347, %v330
        %365 = vst.msk [vmem:[%s346 + $0x110] sm:$0xff] %vm347, %v331
        %366 = vst.msk [vmem:[%s346 + $0x128] sm:$0xff] %vm347, %v332
        %367 = vst.msk [vmem:[%s346 + $0x130] sm:$0xff] %vm347, %v333
        %368 = vst.msk [vmem:[%s346 + $0x148] sm:$0xff] %vm347, %v334
        %369 = vst.msk [vmem:[%s346 + $0x150] sm:$0xff] %vm347, %v335
        %370 = vst.msk [vmem:[%s346 + $0x168] sm:$0xff] %vm347, %v336
        %371 = vst.msk [vmem:[%s346 + $0x170] sm:$0xff] %vm347, %v337
        %372 = vst.msk [vmem:[%s346 + $0x188] sm:$0xff] %vm347, %v338
        %373 = vst.msk [vmem:[%s346 + $0x190] sm:$0xff] %vm347, %v339
        %374 = vst.msk [vmem:[%s346 + $0x1a8] sm:$0xff] %vm347, %v340
        %375 = vst.msk [vmem:[%s346 + $0x1b0] sm:$0xff] %vm347, %v341
        %376 = vst.msk [vmem:[%s346 + $0x1c8] sm:$0xff] %vm347, %v342
        %377 = vst.msk [vmem:[%s346 + $0x1d0] sm:$0xff] %vm347, %v343
        %378 = vst.msk [vmem:[%s346 + $0x1e8] sm:$0xff] %vm347, %v344
        %379 = vst.msk [vmem:[%s346 + $0x1f0] sm:$0xff] %vm347, %v345
        %v380 = vld [vmem:[#allocation2 + $0x7] sm:$0xff]
        %v381 = vld [vmem:[#allocation2 + $0xf] sm:$0xff]
        %v382 = vld [vmem:[#allocation2 + $0x27] sm:$0xff]
        %v383 = vld [vmem:[#allocation2 + $0x2f] sm:$0xff]
        %v384 = vld [vmem:[#allocation2 + $0x47] sm:$0xff]
        %v385 = vld [vmem:[#allocation2 + $0x4f] sm:$0xff]
        %v386 = vld [vmem:[#allocation2 + $0x67] sm:$0xff]
        %v387 = vld [vmem:[#allocation2 + $0x6f] sm:$0xff]
        %v388 = vld [vmem:[#allocation2 + $0x87] sm:$0xff]
        %v389 = vld [vmem:[#allocation2 + $0x8f] sm:$0xff]
        %v390 = vld [vmem:[#allocation2 + $0xa7] sm:$0xff]
        %v391 = vld [vmem:[#allocation2 + $0xaf] sm:$0xff]
        %v392 = vld [vmem:[#allocation2 + $0xc7] sm:$0xff]
        %v393 = vld [vmem:[#allocation2 + $0xcf] sm:$0xff]
        %v394 = vld [vmem:[#allocation2 + $0xe7] sm:$0xff]
        %v395 = vld [vmem:[#allocation2 + $0xef] sm:$0xff]
        %v396 = vld [vmem:[#allocation2 + $0x107] sm:$0xff]
        %v397 = vld [vmem:[#allocation2 + $0x10f] sm:$0xff]
        %v398 = vld [vmem:[#allocation2 + $0x127] sm:$0xff]
        %v399 = vld [vmem:[#allocation2 + $0x12f] sm:$0xff]
        %v400 = vld [vmem:[#allocation2 + $0x147] sm:$0xff]
        %v401 = vld [vmem:[#allocation2 + $0x14f] sm:$0xff]
        %v402 = vld [vmem:[#allocation2 + $0x167] sm:$0xff]
        %v403 = vld [vmem:[#allocation2 + $0x16f] sm:$0xff]
        %v404 = vld [vmem:[#allocation2 + $0x187] sm:$0xff]
        %v405 = vld [vmem:[#allocation2 + $0x18f] sm:$0xff]
        %v406 = vld [vmem:[#allocation2 + $0x1a7] sm:$0xff]
        %v407 = vld [vmem:[#allocation2 + $0x1af] sm:$0xff]
        %v408 = vld [vmem:[#allocation2 + $0x1c7] sm:$0xff]
        %v409 = vld [vmem:[#allocation2 + $0x1cf] sm:$0xff]
        %v410 = vld [vmem:[#allocation2 + $0x1e7] sm:$0xff]
        %v411 = vld [vmem:[#allocation2 + $0x1ef] sm:$0xff]
        %v412 = vpack.c.bf16 %v381, %v380
        %v413 = vpack.c.bf16 %v383, %v382
        %v414 = vpack.c.bf16 %v385, %v384
        %v415 = vpack.c.bf16 %v387, %v386
        %v416 = vpack.c.bf16 %v389, %v388
        %v417 = vpack.c.bf16 %v391, %v390
        %v418 = vpack.c.bf16 %v393, %v392
        %v419 = vpack.c.bf16 %v395, %v394
        %v420 = vpack.c.bf16 %v397, %v396
        %v421 = vpack.c.bf16 %v399, %v398
        %v422 = vpack.c.bf16 %v401, %v400
        %v423 = vpack.c.bf16 %v403, %v402
        %v424 = vpack.c.bf16 %v405, %v404
        %v425 = vpack.c.bf16 %v407, %v406
        %v426 = vpack.c.bf16 %v409, %v408
        %v427 = vpack.c.bf16 %v411, %v410
        %v428 = vld [vmem:[%s1] sm:$0xf]
        %v429 = vld [vmem:[%s1 + $0x4] sm:$0xf]
        %v430 = vld [vmem:[%s1 + $0x8] sm:$0xf]
        %v431 = vld [vmem:[%s1 + $0xc] sm:$0xf]
        %v432 = vld [vmem:[%s1 + $0x10] sm:$0xf]
        %v433 = vld [vmem:[%s1 + $0x14] sm:$0xf]
        %v434 = vld [vmem:[%s1 + $0x18] sm:$0xf]
        %v435 = vld [vmem:[%s1 + $0x1c] sm:$0xf]
        %v436 = vld [vmem:[%s1 + $0x20] sm:$0xf]
        %v437 = vld [vmem:[%s1 + $0x24] sm:$0xf]
        %v438 = vld [vmem:[%s1 + $0x28] sm:$0xf]
        %v439 = vld [vmem:[%s1 + $0x2c] sm:$0xf]
        %v440 = vld [vmem:[%s1 + $0x30] sm:$0xf]
        %v441 = vld [vmem:[%s1 + $0x34] sm:$0xf]
        %v442 = vld [vmem:[%s1 + $0x38] sm:$0xf]
        %v443 = vld [vmem:[%s1 + $0x3c] sm:$0xf]
        %v444 = vld [vmem:[#allocation2 + $0x8] sm:$0xff]
        %v445 = vld [vmem:[#allocation2 + $0x10] sm:$0xff]
        %v446 = vld [vmem:[#allocation2 + $0x28] sm:$0xff]
        %v447 = vld [vmem:[#allocation2 + $0x30] sm:$0xff]
        %v448 = vld [vmem:[#allocation2 + $0x48] sm:$0xff]
        %v449 = vld [vmem:[#allocation2 + $0x50] sm:$0xff]
        %v450 = vld [vmem:[#allocation2 + $0x68] sm:$0xff]
        %v451 = vld [vmem:[#allocation2 + $0x70] sm:$0xff]
        %v452 = vld [vmem:[#allocation2 + $0x88] sm:$0xff]
        %v453 = vld [vmem:[#allocation2 + $0x90] sm:$0xff]
        %v454 = vld [vmem:[#allocation2 + $0xa8] sm:$0xff]
        %v455 = vld [vmem:[#allocation2 + $0xb0] sm:$0xff]
        %v456 = vld [vmem:[#allocation2 + $0xc8] sm:$0xff]
        %v457 = vld [vmem:[#allocation2 + $0xd0] sm:$0xff]
        %v458 = vld [vmem:[#allocation2 + $0xe8] sm:$0xff]
        %v459 = vld [vmem:[#allocation2 + $0xf0] sm:$0xff]
        %v460 = vld [vmem:[#allocation2 + $0x108] sm:$0xff]
        %v461 = vld [vmem:[#allocation2 + $0x110] sm:$0xff]
        %v462 = vld [vmem:[#allocation2 + $0x128] sm:$0xff]
        %v463 = vld [vmem:[#allocation2 + $0x130] sm:$0xff]
        %v464 = vld [vmem:[#allocation2 + $0x148] sm:$0xff]
        %v465 = vld [vmem:[#allocation2 + $0x150] sm:$0xff]
        %v466 = vld [vmem:[#allocation2 + $0x168] sm:$0xff]
        %v467 = vld [vmem:[#allocation2 + $0x170] sm:$0xff]
        %v468 = vld [vmem:[#allocation2 + $0x188] sm:$0xff]
        %v469 = vld [vmem:[#allocation2 + $0x190] sm:$0xff]
        %v470 = vld [vmem:[#allocation2 + $0x1a8] sm:$0xff]
        %v471 = vld [vmem:[#allocation2 + $0x1b0] sm:$0xff]
        %v472 = vld [vmem:[#allocation2 + $0x1c8] sm:$0xff]
        %v473 = vld [vmem:[#allocation2 + $0x1d0] sm:$0xff]
        %v474 = vld [vmem:[#allocation2 + $0x1e8] sm:$0xff]
        %v475 = vld [vmem:[#allocation2 + $0x1f0] sm:$0xff]
        %v476 = vpack.c.bf16 %v445, %v444
        %v477 = vpack.c.bf16 %v447, %v446
        %v478 = vpack.c.bf16 %v449, %v448
        %v479 = vpack.c.bf16 %v451, %v450
        %v480 = vpack.c.bf16 %v453, %v452
        %v481 = vpack.c.bf16 %v455, %v454
        %v482 = vpack.c.bf16 %v457, %v456
        %v483 = vpack.c.bf16 %v459, %v458
        %v484 = vpack.c.bf16 %v461, %v460
        %v485 = vpack.c.bf16 %v463, %v462
        %v486 = vpack.c.bf16 %v465, %v464
        %v487 = vpack.c.bf16 %v467, %v466
        %v488 = vpack.c.bf16 %v469, %v468
        %v489 = vpack.c.bf16 %v471, %v470
        %v490 = vpack.c.bf16 %v473, %v472
        %v491 = vpack.c.bf16 %v475, %v474
        %s492 = scalar_lea.vmem %s1, 64
        %v493 = vld [vmem:[%s492] sm:$0xf]
        %v494 = vld [vmem:[%s492 + $0x4] sm:$0xf]
        %v495 = vld [vmem:[%s492 + $0x8] sm:$0xf]
        %v496 = vld [vmem:[%s492 + $0xc] sm:$0xf]
        %v497 = vld [vmem:[%s492 + $0x10] sm:$0xf]
        %v498 = vld [vmem:[%s492 + $0x14] sm:$0xf]
        %v499 = vld [vmem:[%s492 + $0x18] sm:$0xf]
        %v500 = vld [vmem:[%s492 + $0x1c] sm:$0xf]
        %v501 = vld [vmem:[%s492 + $0x20] sm:$0xf]
        %v502 = vld [vmem:[%s492 + $0x24] sm:$0xf]
        %v503 = vld [vmem:[%s492 + $0x28] sm:$0xf]
        %v504 = vld [vmem:[%s492 + $0x2c] sm:$0xf]
        %v505 = vld [vmem:[%s492 + $0x30] sm:$0xf]
        %v506 = vld [vmem:[%s492 + $0x34] sm:$0xf]
        %v507 = vld [vmem:[%s492 + $0x38] sm:$0xf]
        %v508 = vld [vmem:[%s492 + $0x3c] sm:$0xf]
        %v525 = vunpack.c.l.b16 %v493
        %v526 = vunpack.c.l.b16 %v494
        %v527 = vunpack.c.l.b16 %v495
        %v528 = vunpack.c.l.b16 %v496
        %v529 = vunpack.c.l.b16 %v497
        %v530 = vunpack.c.l.b16 %v498
        %v531 = vunpack.c.l.b16 %v499
        %v532 = vunpack.c.l.b16 %v500
        %v533 = vunpack.c.l.b16 %v501
        %v534 = vunpack.c.l.b16 %v502
        %v535 = vunpack.c.l.b16 %v503
        %v536 = vunpack.c.l.b16 %v504
        %v537 = vunpack.c.l.b16 %v505
        %v538 = vunpack.c.l.b16 %v506
        %v539 = vunpack.c.l.b16 %v507
        %v540 = vunpack.c.l.b16 %v508
        %v541 = vpack.c.b16 %v526, %v525
        %v542 = vpack.c.b16 %v528, %v527
        %v543 = vpack.c.b16 %v530, %v529
        %v544 = vpack.c.b16 %v532, %v531
        %v545 = vpack.c.b16 %v534, %v533
        %v546 = vpack.c.b16 %v536, %v535
        %v547 = vpack.c.b16 %v538, %v537
        %v548 = vpack.c.b16 %v540, %v539
        %557 = vmatpush.bf16.msra.mxu0 %v548
        %558 = vmatpush.bf16.msra.mxu0 %v547
        %559 = vmatpush.bf16.msra.mxu0 %v546
        %560 = vmatpush.bf16.msra.mxu0 %v545
        %561 = vmatpush.bf16.msra.mxu0 %v544
        %562 = vmatpush.bf16.msra.mxu0 %v543
        %563 = vmatpush.bf16.msra.mxu0 %v542
        %564 = vmatpush.bf16.msra.mxu0 %v541
        %565 = vmatmul.bf16.gmra.mxu0 %v476
        %v566 = vpop.f32.mrf.mxu0
        %v567 = vadd.f32 0.0, %v566
        %v568 = vpop.f32.mrf.mxu0
        %v569 = vadd.f32 0.0, %v568
        %570 = vmatmul.bf16.gmra.mxu0 %v477
        %v571 = vpop.f32.mrf.mxu0
        %v572 = vadd.f32 0.0, %v571
        %v573 = vpop.f32.mrf.mxu0
        %v574 = vadd.f32 0.0, %v573
        %575 = vmatmul.bf16.gmra.mxu0 %v478
        %v576 = vpop.f32.mrf.mxu0
        %v577 = vadd.f32 0.0, %v576
        %v578 = vpop.f32.mrf.mxu0
        %v579 = vadd.f32 0.0, %v578
        %580 = vmatmul.bf16.gmra.mxu0 %v479
        %v581 = vpop.f32.mrf.mxu0
        %v582 = vadd.f32 0.0, %v581
        %v583 = vpop.f32.mrf.mxu0
        %v584 = vadd.f32 0.0, %v583
        %585 = vmatmul.bf16.gmra.mxu0 %v480
        %v586 = vpop.f32.mrf.mxu0
        %v587 = vadd.f32 0.0, %v586
        %v588 = vpop.f32.mrf.mxu0
        %v589 = vadd.f32 0.0, %v588
        %590 = vmatmul.bf16.gmra.mxu0 %v481
        %v591 = vpop.f32.mrf.mxu0
        %v592 = vadd.f32 0.0, %v591
        %v593 = vpop.f32.mrf.mxu0
        %v594 = vadd.f32 0.0, %v593
        %595 = vmatmul.bf16.gmra.mxu0 %v482
        %v596 = vpop.f32.mrf.mxu0
        %v597 = vadd.f32 0.0, %v596
        %v598 = vpop.f32.mrf.mxu0
        %v599 = vadd.f32 0.0, %v598
        %600 = vmatmul.bf16.gmra.mxu0 %v483
        %v601 = vpop.f32.mrf.mxu0
        %v602 = vadd.f32 0.0, %v601
        %v603 = vpop.f32.mrf.mxu0
        %v604 = vadd.f32 0.0, %v603
        %605 = vmatmul.bf16.gmra.mxu0 %v484
        %v606 = vpop.f32.mrf.mxu0
        %v607 = vadd.f32 0.0, %v606
        %v608 = vpop.f32.mrf.mxu0
        %v609 = vadd.f32 0.0, %v608
        %610 = vmatmul.bf16.gmra.mxu0 %v485
        %v611 = vpop.f32.mrf.mxu0
        %v612 = vadd.f32 0.0, %v611
        %v613 = vpop.f32.mrf.mxu0
        %v614 = vadd.f32 0.0, %v613
        %615 = vmatmul.bf16.gmra.mxu0 %v486
        %v616 = vpop.f32.mrf.mxu0
        %v617 = vadd.f32 0.0, %v616
        %v618 = vpop.f32.mrf.mxu0
        %v619 = vadd.f32 0.0, %v618
        %620 = vmatmul.bf16.gmra.mxu0 %v487
        %v621 = vpop.f32.mrf.mxu0
        %v622 = vadd.f32 0.0, %v621
        %v623 = vpop.f32.mrf.mxu0
        %v624 = vadd.f32 0.0, %v623
        %625 = vmatmul.bf16.gmra.mxu0 %v488
        %v626 = vpop.f32.mrf.mxu0
        %v627 = vadd.f32 0.0, %v626
        %v628 = vpop.f32.mrf.mxu0
        %v629 = vadd.f32 0.0, %v628
        %630 = vmatmul.bf16.gmra.mxu0 %v489
        %v631 = vpop.f32.mrf.mxu0
        %v632 = vadd.f32 0.0, %v631
        %v633 = vpop.f32.mrf.mxu0
        %v634 = vadd.f32 0.0, %v633
        %635 = vmatmul.bf16.gmra.mxu0 %v490
        %v636 = vpop.f32.mrf.mxu0
        %v637 = vadd.f32 0.0, %v636
        %v638 = vpop.f32.mrf.mxu0
        %v639 = vadd.f32 0.0, %v638
        %640 = vmatmul.bf16.gmra.mxu0 %v491
        %v641 = vpop.f32.mrf.mxu0
        %v642 = vadd.f32 0.0, %v641
        %v643 = vpop.f32.mrf.mxu0
        %v644 = vadd.f32 0.0, %v643
        %645 = vdwg.mxu0
        %v662 = vunpack.c.l.b16 %v428
        %v663 = vunpack.c.l.b16 %v429
        %v664 = vunpack.c.l.b16 %v430
        %v665 = vunpack.c.l.b16 %v431
        %v666 = vunpack.c.l.b16 %v432
        %v667 = vunpack.c.l.b16 %v433
        %v668 = vunpack.c.l.b16 %v434
        %v669 = vunpack.c.l.b16 %v435
        %v670 = vunpack.c.l.b16 %v436
        %v671 = vunpack.c.l.b16 %v437
        %v672 = vunpack.c.l.b16 %v438
        %v673 = vunpack.c.l.b16 %v439
        %v674 = vunpack.c.l.b16 %v440
        %v675 = vunpack.c.l.b16 %v441
        %v676 = vunpack.c.l.b16 %v442
        %v677 = vunpack.c.l.b16 %v443
        %v678 = vpack.c.b16 %v663, %v662
        %v679 = vpack.c.b16 %v665, %v664
        %v680 = vpack.c.b16 %v667, %v666
        %v681 = vpack.c.b16 %v669, %v668
        %v682 = vpack.c.b16 %v671, %v670
        %v683 = vpack.c.b16 %v673, %v672
        %v684 = vpack.c.b16 %v675, %v674
        %v685 = vpack.c.b16 %v677, %v676
        %694 = vmatpush.bf16.msra.mxu0 %v685
        %695 = vmatpush.bf16.msra.mxu0 %v684
        %696 = vmatpush.bf16.msra.mxu0 %v683
        %697 = vmatpush.bf16.msra.mxu0 %v682
        %698 = vmatpush.bf16.msra.mxu0 %v681
        %699 = vmatpush.bf16.msra.mxu0 %v680
        %700 = vmatpush.bf16.msra.mxu0 %v679
        %701 = vmatpush.bf16.msra.mxu0 %v678
        %702 = vmatmul.bf16.gmra.mxu0 %v412
        %v703 = vpop.f32.mrf.mxu0
        %v704 = vadd.f32 %v567, %v703
        %v705 = vpop.f32.mrf.mxu0
        %v706 = vadd.f32 %v569, %v705
        %707 = vmatmul.bf16.gmra.mxu0 %v413
        %v708 = vpop.f32.mrf.mxu0
        %v709 = vadd.f32 %v572, %v708
        %v710 = vpop.f32.mrf.mxu0
        %v711 = vadd.f32 %v574, %v710
        %712 = vmatmul.bf16.gmra.mxu0 %v414
        %v713 = vpop.f32.mrf.mxu0
        %v714 = vadd.f32 %v577, %v713
        %v715 = vpop.f32.mrf.mxu0
        %v716 = vadd.f32 %v579, %v715
        %717 = vmatmul.bf16.gmra.mxu0 %v415
        %v718 = vpop.f32.mrf.mxu0
        %v719 = vadd.f32 %v582, %v718
        %v720 = vpop.f32.mrf.mxu0
        %v721 = vadd.f32 %v584, %v720
        %722 = vmatmul.bf16.gmra.mxu0 %v416
        %v723 = vpop.f32.mrf.mxu0
        %v724 = vadd.f32 %v587, %v723
        %v725 = vpop.f32.mrf.mxu0
        %v726 = vadd.f32 %v589, %v725
        %727 = vmatmul.bf16.gmra.mxu0 %v417
        %v728 = vpop.f32.mrf.mxu0
        %v729 = vadd.f32 %v592, %v728
        %v730 = vpop.f32.mrf.mxu0
        %v731 = vadd.f32 %v594, %v730
        %732 = vmatmul.bf16.gmra.mxu0 %v418
        %v733 = vpop.f32.mrf.mxu0
        %v734 = vadd.f32 %v597, %v733
        %v735 = vpop.f32.mrf.mxu0
        %v736 = vadd.f32 %v599, %v735
        %737 = vmatmul.bf16.gmra.mxu0 %v419
        %v738 = vpop.f32.mrf.mxu0
        %v739 = vadd.f32 %v602, %v738
        %v740 = vpop.f32.mrf.mxu0
        %v741 = vadd.f32 %v604, %v740
        %742 = vmatmul.bf16.gmra.mxu0 %v420
        %v743 = vpop.f32.mrf.mxu0
        %v744 = vadd.f32 %v607, %v743
        %v745 = vpop.f32.mrf.mxu0
        %v746 = vadd.f32 %v609, %v745
        %747 = vmatmul.bf16.gmra.mxu0 %v421
        %v748 = vpop.f32.mrf.mxu0
        %v749 = vadd.f32 %v612, %v748
        %v750 = vpop.f32.mrf.mxu0
        %v751 = vadd.f32 %v614, %v750
        %752 = vmatmul.bf16.gmra.mxu0 %v422
        %v753 = vpop.f32.mrf.mxu0
        %v754 = vadd.f32 %v617, %v753
        %v755 = vpop.f32.mrf.mxu0
        %v756 = vadd.f32 %v619, %v755
        %757 = vmatmul.bf16.gmra.mxu0 %v423
        %v758 = vpop.f32.mrf.mxu0
        %v759 = vadd.f32 %v622, %v758
        %v760 = vpop.f32.mrf.mxu0
        %v761 = vadd.f32 %v624, %v760
        %762 = vmatmul.bf16.gmra.mxu0 %v424
        %v763 = vpop.f32.mrf.mxu0
        %v764 = vadd.f32 %v627, %v763
        %v765 = vpop.f32.mrf.mxu0
        %v766 = vadd.f32 %v629, %v765
        %767 = vmatmul.bf16.gmra.mxu0 %v425
        %v768 = vpop.f32.mrf.mxu0
        %v769 = vadd.f32 %v632, %v768
        %v770 = vpop.f32.mrf.mxu0
        %v771 = vadd.f32 %v634, %v770
        %772 = vmatmul.bf16.gmra.mxu0 %v426
        %v773 = vpop.f32.mrf.mxu0
        %v774 = vadd.f32 %v637, %v773
        %v775 = vpop.f32.mrf.mxu0
        %v776 = vadd.f32 %v639, %v775
        %777 = vmatmul.bf16.gmra.mxu0 %v427
        %v778 = vpop.f32.mrf.mxu0
        %v779 = vadd.f32 %v642, %v778
        %v780 = vpop.f32.mrf.mxu0
        %v781 = vadd.f32 %v644, %v780
        %782 = vdwg.mxu0
        %v783 = vld [vmem:[#allocation2 + $0x9] sm:$0xff]
        %v784 = vld [vmem:[#allocation2 + $0x11] sm:$0xff]
        %v785 = vld [vmem:[#allocation2 + $0x29] sm:$0xff]
        %v786 = vld [vmem:[#allocation2 + $0x31] sm:$0xff]
        %v787 = vld [vmem:[#allocation2 + $0x49] sm:$0xff]
        %v788 = vld [vmem:[#allocation2 + $0x51] sm:$0xff]
        %v789 = vld [vmem:[#allocation2 + $0x69] sm:$0xff]
        %v790 = vld [vmem:[#allocation2 + $0x71] sm:$0xff]
        %v791 = vld [vmem:[#allocation2 + $0x89] sm:$0xff]
        %v792 = vld [vmem:[#allocation2 + $0x91] sm:$0xff]
        %v793 = vld [vmem:[#allocation2 + $0xa9] sm:$0xff]
        %v794 = vld [vmem:[#allocation2 + $0xb1] sm:$0xff]
        %v795 = vld [vmem:[#allocation2 + $0xc9] sm:$0xff]
        %v796 = vld [vmem:[#allocation2 + $0xd1] sm:$0xff]
        %v797 = vld [vmem:[#allocation2 + $0xe9] sm:$0xff]
        %v798 = vld [vmem:[#allocation2 + $0xf1] sm:$0xff]
        %v799 = vld [vmem:[#allocation2 + $0x109] sm:$0xff]
        %v800 = vld [vmem:[#allocation2 + $0x111] sm:$0xff]
        %v801 = vld [vmem:[#allocation2 + $0x129] sm:$0xff]
        %v802 = vld [vmem:[#allocation2 + $0x131] sm:$0xff]
        %v803 = vld [vmem:[#allocation2 + $0x149] sm:$0xff]
        %v804 = vld [vmem:[#allocation2 + $0x151] sm:$0xff]
        %v805 = vld [vmem:[#allocation2 + $0x169] sm:$0xff]
        %v806 = vld [vmem:[#allocation2 + $0x171] sm:$0xff]
        %v807 = vld [vmem:[#allocation2 + $0x189] sm:$0xff]
        %v808 = vld [vmem:[#allocation2 + $0x191] sm:$0xff]
        %v809 = vld [vmem:[#allocation2 + $0x1a9] sm:$0xff]
        %v810 = vld [vmem:[#allocation2 + $0x1b1] sm:$0xff]
        %v811 = vld [vmem:[#allocation2 + $0x1c9] sm:$0xff]
        %v812 = vld [vmem:[#allocation2 + $0x1d1] sm:$0xff]
        %v813 = vld [vmem:[#allocation2 + $0x1e9] sm:$0xff]
        %v814 = vld [vmem:[#allocation2 + $0x1f1] sm:$0xff]
        %v815 = vpack.c.bf16 %v784, %v783
        %v816 = vpack.c.bf16 %v786, %v785
        %v817 = vpack.c.bf16 %v788, %v787
        %v818 = vpack.c.bf16 %v790, %v789
        %v819 = vpack.c.bf16 %v792, %v791
        %v820 = vpack.c.bf16 %v794, %v793
        %v821 = vpack.c.bf16 %v796, %v795
        %v822 = vpack.c.bf16 %v798, %v797
        %v823 = vpack.c.bf16 %v800, %v799
        %v824 = vpack.c.bf16 %v802, %v801
        %v825 = vpack.c.bf16 %v804, %v803
        %v826 = vpack.c.bf16 %v806, %v805
        %v827 = vpack.c.bf16 %v808, %v807
        %v828 = vpack.c.bf16 %v810, %v809
        %v829 = vpack.c.bf16 %v812, %v811
        %v830 = vpack.c.bf16 %v814, %v813
        %s831 = scalar_lea.vmem %s1, 128
        %v832 = vld [vmem:[%s831] sm:$0xf]
        %v833 = vld [vmem:[%s831 + $0x4] sm:$0xf]
        %v834 = vld [vmem:[%s831 + $0x8] sm:$0xf]
        %v835 = vld [vmem:[%s831 + $0xc] sm:$0xf]
        %v836 = vld [vmem:[%s831 + $0x10] sm:$0xf]
        %v837 = vld [vmem:[%s831 + $0x14] sm:$0xf]
        %v838 = vld [vmem:[%s831 + $0x18] sm:$0xf]
        %v839 = vld [vmem:[%s831 + $0x1c] sm:$0xf]
        %v840 = vld [vmem:[%s831 + $0x20] sm:$0xf]
        %v841 = vld [vmem:[%s831 + $0x24] sm:$0xf]
        %v842 = vld [vmem:[%s831 + $0x28] sm:$0xf]
        %v843 = vld [vmem:[%s831 + $0x2c] sm:$0xf]
        %v844 = vld [vmem:[%s831 + $0x30] sm:$0xf]
        %v845 = vld [vmem:[%s831 + $0x34] sm:$0xf]
        %v846 = vld [vmem:[%s831 + $0x38] sm:$0xf]
        %v847 = vld [vmem:[%s831 + $0x3c] sm:$0xf]
        %v864 = vunpack.c.l.b16 %v832
        %v865 = vunpack.c.l.b16 %v833
        %v866 = vunpack.c.l.b16 %v834
        %v867 = vunpack.c.l.b16 %v835
        %v868 = vunpack.c.l.b16 %v836
        %v869 = vunpack.c.l.b16 %v837
        %v870 = vunpack.c.l.b16 %v838
        %v871 = vunpack.c.l.b16 %v839
        %v872 = vunpack.c.l.b16 %v840
        %v873 = vunpack.c.l.b16 %v841
        %v874 = vunpack.c.l.b16 %v842
        %v875 = vunpack.c.l.b16 %v843
        %v876 = vunpack.c.l.b16 %v844
        %v877 = vunpack.c.l.b16 %v845
        %v878 = vunpack.c.l.b16 %v846
        %v879 = vunpack.c.l.b16 %v847
        %v880 = vpack.c.b16 %v865, %v864
        %v881 = vpack.c.b16 %v867, %v866
        %v882 = vpack.c.b16 %v869, %v868
        %v883 = vpack.c.b16 %v871, %v870
        %v884 = vpack.c.b16 %v873, %v872
        %v885 = vpack.c.b16 %v875, %v874
        %v886 = vpack.c.b16 %v877, %v876
        %v887 = vpack.c.b16 %v879, %v878
        %896 = vmatpush.bf16.msra.mxu0 %v887
        %897 = vmatpush.bf16.msra.mxu0 %v886
        %898 = vmatpush.bf16.msra.mxu0 %v885
        %899 = vmatpush.bf16.msra.mxu0 %v884
        %900 = vmatpush.bf16.msra.mxu0 %v883
        %901 = vmatpush.bf16.msra.mxu0 %v882
        %902 = vmatpush.bf16.msra.mxu0 %v881
        %903 = vmatpush.bf16.msra.mxu0 %v880
        %904 = vmatmul.bf16.gmra.mxu0 %v815
        %v905 = vpop.f32.mrf.mxu0
        %v906 = vadd.f32 0.0, %v905
        %v907 = vpop.f32.mrf.mxu0
        %v908 = vadd.f32 0.0, %v907
        %909 = vmatmul.bf16.gmra.mxu0 %v816
        %v910 = vpop.f32.mrf.mxu0
        %v911 = vadd.f32 0.0, %v910
        %v912 = vpop.f32.mrf.mxu0
        %v913 = vadd.f32 0.0, %v912
        %914 = vmatmul.bf16.gmra.mxu0 %v817
        %v915 = vpop.f32.mrf.mxu0
        %v916 = vadd.f32 0.0, %v915
        %v917 = vpop.f32.mrf.mxu0
        %v918 = vadd.f32 0.0, %v917
        %919 = vmatmul.bf16.gmra.mxu0 %v818
        %v920 = vpop.f32.mrf.mxu0
        %v921 = vadd.f32 0.0, %v920
        %v922 = vpop.f32.mrf.mxu0
        %v923 = vadd.f32 0.0, %v922
        %924 = vmatmul.bf16.gmra.mxu0 %v819
        %v925 = vpop.f32.mrf.mxu0
        %v926 = vadd.f32 0.0, %v925
        %v927 = vpop.f32.mrf.mxu0
        %v928 = vadd.f32 0.0, %v927
        %929 = vmatmul.bf16.gmra.mxu0 %v820
        %v930 = vpop.f32.mrf.mxu0
        %v931 = vadd.f32 0.0, %v930
        %v932 = vpop.f32.mrf.mxu0
        %v933 = vadd.f32 0.0, %v932
        %934 = vmatmul.bf16.gmra.mxu0 %v821
        %v935 = vpop.f32.mrf.mxu0
        %v936 = vadd.f32 0.0, %v935
        %v937 = vpop.f32.mrf.mxu0
        %v938 = vadd.f32 0.0, %v937
        %939 = vmatmul.bf16.gmra.mxu0 %v822
        %v940 = vpop.f32.mrf.mxu0
        %v941 = vadd.f32 0.0, %v940
        %v942 = vpop.f32.mrf.mxu0
        %v943 = vadd.f32 0.0, %v942
        %944 = vmatmul.bf16.gmra.mxu0 %v823
        %v945 = vpop.f32.mrf.mxu0
        %v946 = vadd.f32 0.0, %v945
        %v947 = vpop.f32.mrf.mxu0
        %v948 = vadd.f32 0.0, %v947
        %949 = vmatmul.bf16.gmra.mxu0 %v824
        %v950 = vpop.f32.mrf.mxu0
        %v951 = vadd.f32 0.0, %v950
        %v952 = vpop.f32.mrf.mxu0
        %v953 = vadd.f32 0.0, %v952
        %954 = vmatmul.bf16.gmra.mxu0 %v825
        %v955 = vpop.f32.mrf.mxu0
        %v956 = vadd.f32 0.0, %v955
        %v957 = vpop.f32.mrf.mxu0
        %v958 = vadd.f32 0.0, %v957
        %959 = vmatmul.bf16.gmra.mxu0 %v826
        %v960 = vpop.f32.mrf.mxu0
        %v961 = vadd.f32 0.0, %v960
        %v962 = vpop.f32.mrf.mxu0
        %v963 = vadd.f32 0.0, %v962
        %964 = vmatmul.bf16.gmra.mxu0 %v827
        %v965 = vpop.f32.mrf.mxu0
        %v966 = vadd.f32 0.0, %v965
        %v967 = vpop.f32.mrf.mxu0
        %v968 = vadd.f32 0.0, %v967
        %969 = vmatmul.bf16.gmra.mxu0 %v828
        %v970 = vpop.f32.mrf.mxu0
        %v971 = vadd.f32 0.0, %v970
        %v972 = vpop.f32.mrf.mxu0
        %v973 = vadd.f32 0.0, %v972
        %974 = vmatmul.bf16.gmra.mxu0 %v829
        %v975 = vpop.f32.mrf.mxu0
        %v976 = vadd.f32 0.0, %v975
        %v977 = vpop.f32.mrf.mxu0
        %v978 = vadd.f32 0.0, %v977
        %979 = vmatmul.bf16.gmra.mxu0 %v830
        %v980 = vpop.f32.mrf.mxu0
        %v981 = vadd.f32 0.0, %v980
        %v982 = vpop.f32.mrf.mxu0
        %v983 = vadd.f32 0.0, %v982
        %984 = vdwg.mxu0
        %v985 = vadd.f32 %v704, %v906
        %v986 = vadd.f32 %v706, %v908
        %v987 = vadd.f32 %v709, %v911
        %v988 = vadd.f32 %v711, %v913
        %v989 = vadd.f32 %v714, %v916
        %v990 = vadd.f32 %v716, %v918
        %v991 = vadd.f32 %v719, %v921
        %v992 = vadd.f32 %v721, %v923
        %v993 = vadd.f32 %v724, %v926
        %v994 = vadd.f32 %v726, %v928
        %v995 = vadd.f32 %v729, %v931
        %v996 = vadd.f32 %v731, %v933
        %v997 = vadd.f32 %v734, %v936
        %v998 = vadd.f32 %v736, %v938
        %v999 = vadd.f32 %v739, %v941
        %v1000 = vadd.f32 %v741, %v943
        %v1001 = vadd.f32 %v744, %v946
        %v1002 = vadd.f32 %v746, %v948
        %v1003 = vadd.f32 %v749, %v951
        %v1004 = vadd.f32 %v751, %v953
        %v1005 = vadd.f32 %v754, %v956
        %v1006 = vadd.f32 %v756, %v958
        %v1007 = vadd.f32 %v759, %v961
        %v1008 = vadd.f32 %v761, %v963
        %v1009 = vadd.f32 %v764, %v966
        %v1010 = vadd.f32 %v766, %v968
        %v1011 = vadd.f32 %v769, %v971
        %v1012 = vadd.f32 %v771, %v973
        %v1013 = vadd.f32 %v774, %v976
        %v1014 = vadd.f32 %v776, %v978
        %v1015 = vadd.f32 %v779, %v981
        %v1016 = vadd.f32 %v781, %v983
        %v1017 = vld [vmem:[%s346 + $0x7] sm:$0xff]
        %v1018 = vld [vmem:[%s346 + $0xf] sm:$0xff]
        %v1019 = vld [vmem:[%s346 + $0x27] sm:$0xff]
        %v1020 = vld [vmem:[%s346 + $0x2f] sm:$0xff]
        %v1021 = vld [vmem:[%s346 + $0x47] sm:$0xff]
        %v1022 = vld [vmem:[%s346 + $0x4f] sm:$0xff]
        %v1023 = vld [vmem:[%s346 + $0x67] sm:$0xff]
        %v1024 = vld [vmem:[%s346 + $0x6f] sm:$0xff]
        %v1025 = vld [vmem:[%s346 + $0x87] sm:$0xff]
        %v1026 = vld [vmem:[%s346 + $0x8f] sm:$0xff]
        %v1027 = vld [vmem:[%s346 + $0xa7] sm:$0xff]
        %v1028 = vld [vmem:[%s346 + $0xaf] sm:$0xff]
        %v1029 = vld [vmem:[%s346 + $0xc7] sm:$0xff]
        %v1030 = vld [vmem:[%s346 + $0xcf] sm:$0xff]
        %v1031 = vld [vmem:[%s346 + $0xe7] sm:$0xff]
        %v1032 = vld [vmem:[%s346 + $0xef] sm:$0xff]
        %v1033 = vld [vmem:[%s346 + $0x107] sm:$0xff]
        %v1034 = vld [vmem:[%s346 + $0x10f] sm:$0xff]
        %v1035 = vld [vmem:[%s346 + $0x127] sm:$0xff]
        %v1036 = vld [vmem:[%s346 + $0x12f] sm:$0xff]
        %v1037 = vld [vmem:[%s346 + $0x147] sm:$0xff]
        %v1038 = vld [vmem:[%s346 + $0x14f] sm:$0xff]
        %v1039 = vld [vmem:[%s346 + $0x167] sm:$0xff]
        %v1040 = vld [vmem:[%s346 + $0x16f] sm:$0xff]
        %v1041 = vld [vmem:[%s346 + $0x187] sm:$0xff]
        %v1042 = vld [vmem:[%s346 + $0x18f] sm:$0xff]
        %v1043 = vld [vmem:[%s346 + $0x1a7] sm:$0xff]
        %v1044 = vld [vmem:[%s346 + $0x1af] sm:$0xff]
        %v1045 = vld [vmem:[%s346 + $0x1c7] sm:$0xff]
        %v1046 = vld [vmem:[%s346 + $0x1cf] sm:$0xff]
        %v1047 = vld [vmem:[%s346 + $0x1e7] sm:$0xff]
        %v1048 = vld [vmem:[%s346 + $0x1ef] sm:$0xff]
        %v1049 = vpack.c.bf16 %v1018, %v1017
        %v1050 = vpack.c.bf16 %v1020, %v1019
        %v1051 = vpack.c.bf16 %v1022, %v1021
        %v1052 = vpack.c.bf16 %v1024, %v1023
        %v1053 = vpack.c.bf16 %v1026, %v1025
        %v1054 = vpack.c.bf16 %v1028, %v1027
        %v1055 = vpack.c.bf16 %v1030, %v1029
        %v1056 = vpack.c.bf16 %v1032, %v1031
        %v1057 = vpack.c.bf16 %v1034, %v1033
        %v1058 = vpack.c.bf16 %v1036, %v1035
        %v1059 = vpack.c.bf16 %v1038, %v1037
        %v1060 = vpack.c.bf16 %v1040, %v1039
        %v1061 = vpack.c.bf16 %v1042, %v1041
        %v1062 = vpack.c.bf16 %v1044, %v1043
        %v1063 = vpack.c.bf16 %v1046, %v1045
        %v1064 = vpack.c.bf16 %v1048, %v1047
        %s1065 = scalar_lea.vmem %s1, 192
        %v1066 = vld [vmem:[%s1065] sm:$0xf]
        %v1067 = vld [vmem:[%s1065 + $0x4] sm:$0xf]
        %v1068 = vld [vmem:[%s1065 + $0x8] sm:$0xf]
        %v1069 = vld [vmem:[%s1065 + $0xc] sm:$0xf]
        %v1070 = vld [vmem:[%s1065 + $0x10] sm:$0xf]
        %v1071 = vld [vmem:[%s1065 + $0x14] sm:$0xf]
        %v1072 = vld [vmem:[%s1065 + $0x18] sm:$0xf]
        %v1073 = vld [vmem:[%s1065 + $0x1c] sm:$0xf]
        %v1074 = vld [vmem:[%s1065 + $0x20] sm:$0xf]
        %v1075 = vld [vmem:[%s1065 + $0x24] sm:$0xf]
        %v1076 = vld [vmem:[%s1065 + $0x28] sm:$0xf]
        %v1077 = vld [vmem:[%s1065 + $0x2c] sm:$0xf]
        %v1078 = vld [vmem:[%s1065 + $0x30] sm:$0xf]
        %v1079 = vld [vmem:[%s1065 + $0x34] sm:$0xf]
        %v1080 = vld [vmem:[%s1065 + $0x38] sm:$0xf]
        %v1081 = vld [vmem:[%s1065 + $0x3c] sm:$0xf]
        %v1098 = vunpack.c.l.b16 %v1066
        %v1099 = vunpack.c.l.b16 %v1067
        %v1100 = vunpack.c.l.b16 %v1068
        %v1101 = vunpack.c.l.b16 %v1069
        %v1102 = vunpack.c.l.b16 %v1070
        %v1103 = vunpack.c.l.b16 %v1071
        %v1104 = vunpack.c.l.b16 %v1072
        %v1105 = vunpack.c.l.b16 %v1073
        %v1106 = vunpack.c.l.b16 %v1074
        %v1107 = vunpack.c.l.b16 %v1075
        %v1108 = vunpack.c.l.b16 %v1076
        %v1109 = vunpack.c.l.b16 %v1077
        %v1110 = vunpack.c.l.b16 %v1078
        %v1111 = vunpack.c.l.b16 %v1079
        %v1112 = vunpack.c.l.b16 %v1080
        %v1113 = vunpack.c.l.b16 %v1081
        %v1114 = vpack.c.b16 %v1099, %v1098
        %v1115 = vpack.c.b16 %v1101, %v1100
        %v1116 = vpack.c.b16 %v1103, %v1102
        %v1117 = vpack.c.b16 %v1105, %v1104
        %v1118 = vpack.c.b16 %v1107, %v1106
        %v1119 = vpack.c.b16 %v1109, %v1108
        %v1120 = vpack.c.b16 %v1111, %v1110
        %v1121 = vpack.c.b16 %v1113, %v1112
        %1130 = vmatpush.bf16.msra.mxu0 %v1121
        %1131 = vmatpush.bf16.msra.mxu0 %v1120
        %1132 = vmatpush.bf16.msra.mxu0 %v1119
        %1133 = vmatpush.bf16.msra.mxu0 %v1118
        %1134 = vmatpush.bf16.msra.mxu0 %v1117
        %1135 = vmatpush.bf16.msra.mxu0 %v1116
        %1136 = vmatpush.bf16.msra.mxu0 %v1115
        %1137 = vmatpush.bf16.msra.mxu0 %v1114
        %1138 = vmatmul.bf16.gmra.mxu0 %v1049
        %v1139 = vpop.f32.mrf.mxu0
        %v1140 = vadd.f32 0.0, %v1139
        %v1141 = vpop.f32.mrf.mxu0
        %v1142 = vadd.f32 0.0, %v1141
        %1143 = vmatmul.bf16.gmra.mxu0 %v1050
        %v1144 = vpop.f32.mrf.mxu0
        %v1145 = vadd.f32 0.0, %v1144
        %v1146 = vpop.f32.mrf.mxu0
        %v1147 = vadd.f32 0.0, %v1146
        %1148 = vmatmul.bf16.gmra.mxu0 %v1051
        %v1149 = vpop.f32.mrf.mxu0
        %v1150 = vadd.f32 0.0, %v1149
        %v1151 = vpop.f32.mrf.mxu0
        %v1152 = vadd.f32 0.0, %v1151
        %1153 = vmatmul.bf16.gmra.mxu0 %v1052
        %v1154 = vpop.f32.mrf.mxu0
        %v1155 = vadd.f32 0.0, %v1154
        %v1156 = vpop.f32.mrf.mxu0
        %v1157 = vadd.f32 0.0, %v1156
        %1158 = vmatmul.bf16.gmra.mxu0 %v1053
        %v1159 = vpop.f32.mrf.mxu0
        %v1160 = vadd.f32 0.0, %v1159
        %v1161 = vpop.f32.mrf.mxu0
        %v1162 = vadd.f32 0.0, %v1161
        %1163 = vmatmul.bf16.gmra.mxu0 %v1054
        %v1164 = vpop.f32.mrf.mxu0
        %v1165 = vadd.f32 0.0, %v1164
        %v1166 = vpop.f32.mrf.mxu0
        %v1167 = vadd.f32 0.0, %v1166
        %1168 = vmatmul.bf16.gmra.mxu0 %v1055
        %v1169 = vpop.f32.mrf.mxu0
        %v1170 = vadd.f32 0.0, %v1169
        %v1171 = vpop.f32.mrf.mxu0
        %v1172 = vadd.f32 0.0, %v1171
        %1173 = vmatmul.bf16.gmra.mxu0 %v1056
        %v1174 = vpop.f32.mrf.mxu0
        %v1175 = vadd.f32 0.0, %v1174
        %v1176 = vpop.f32.mrf.mxu0
        %v1177 = vadd.f32 0.0, %v1176
        %1178 = vmatmul.bf16.gmra.mxu0 %v1057
        %v1179 = vpop.f32.mrf.mxu0
        %v1180 = vadd.f32 0.0, %v1179
        %v1181 = vpop.f32.mrf.mxu0
        %v1182 = vadd.f32 0.0, %v1181
        %1183 = vmatmul.bf16.gmra.mxu0 %v1058
        %v1184 = vpop.f32.mrf.mxu0
        %v1185 = vadd.f32 0.0, %v1184
        %v1186 = vpop.f32.mrf.mxu0
        %v1187 = vadd.f32 0.0, %v1186
        %1188 = vmatmul.bf16.gmra.mxu0 %v1059
        %v1189 = vpop.f32.mrf.mxu0
        %v1190 = vadd.f32 0.0, %v1189
        %v1191 = vpop.f32.mrf.mxu0
        %v1192 = vadd.f32 0.0, %v1191
        %1193 = vmatmul.bf16.gmra.mxu0 %v1060
        %v1194 = vpop.f32.mrf.mxu0
        %v1195 = vadd.f32 0.0, %v1194
        %v1196 = vpop.f32.mrf.mxu0
        %v1197 = vadd.f32 0.0, %v1196
        %1198 = vmatmul.bf16.gmra.mxu0 %v1061
        %v1199 = vpop.f32.mrf.mxu0
        %v1200 = vadd.f32 0.0, %v1199
        %v1201 = vpop.f32.mrf.mxu0
        %v1202 = vadd.f32 0.0, %v1201
        %1203 = vmatmul.bf16.gmra.mxu0 %v1062
        %v1204 = vpop.f32.mrf.mxu0
        %v1205 = vadd.f32 0.0, %v1204
        %v1206 = vpop.f32.mrf.mxu0
        %v1207 = vadd.f32 0.0, %v1206
        %1208 = vmatmul.bf16.gmra.mxu0 %v1063
        %v1209 = vpop.f32.mrf.mxu0
        %v1210 = vadd.f32 0.0, %v1209
        %v1211 = vpop.f32.mrf.mxu0
        %v1212 = vadd.f32 0.0, %v1211
        %1213 = vmatmul.bf16.gmra.mxu0 %v1064
        %v1214 = vpop.f32.mrf.mxu0
        %v1215 = vadd.f32 0.0, %v1214
        %v1216 = vpop.f32.mrf.mxu0
        %v1217 = vadd.f32 0.0, %v1216
        %1218 = vdwg.mxu0
        %v1219 = vadd.f32 %v985, %v1140
        %v1220 = vadd.f32 %v986, %v1142
        %v1221 = vadd.f32 %v987, %v1145
        %v1222 = vadd.f32 %v988, %v1147
        %v1223 = vadd.f32 %v989, %v1150
        %v1224 = vadd.f32 %v990, %v1152
        %v1225 = vadd.f32 %v991, %v1155
        %v1226 = vadd.f32 %v992, %v1157
        %v1227 = vadd.f32 %v993, %v1160
        %v1228 = vadd.f32 %v994, %v1162
        %v1229 = vadd.f32 %v995, %v1165
        %v1230 = vadd.f32 %v996, %v1167
        %v1231 = vadd.f32 %v997, %v1170
        %v1232 = vadd.f32 %v998, %v1172
        %v1233 = vadd.f32 %v999, %v1175
        %v1234 = vadd.f32 %v1000, %v1177
        %v1235 = vadd.f32 %v1001, %v1180
        %v1236 = vadd.f32 %v1002, %v1182
        %v1237 = vadd.f32 %v1003, %v1185
        %v1238 = vadd.f32 %v1004, %v1187
        %v1239 = vadd.f32 %v1005, %v1190
        %v1240 = vadd.f32 %v1006, %v1192
        %v1241 = vadd.f32 %v1007, %v1195
        %v1242 = vadd.f32 %v1008, %v1197
        %v1243 = vadd.f32 %v1009, %v1200
        %v1244 = vadd.f32 %v1010, %v1202
        %v1245 = vadd.f32 %v1011, %v1205
        %v1246 = vadd.f32 %v1012, %v1207
        %v1247 = vadd.f32 %v1013, %v1210
        %v1248 = vadd.f32 %v1014, %v1212
        %v1249 = vadd.f32 %v1015, %v1215
        %v1250 = vadd.f32 %v1016, %v1217
        %v1251 = vld [vmem:[%s346 + $0x8] sm:$0xff]
        %v1252 = vld [vmem:[%s346 + $0x10] sm:$0xff]
        %v1253 = vld [vmem:[%s346 + $0x28] sm:$0xff]
        %v1254 = vld [vmem:[%s346 + $0x30] sm:$0xff]
        %v1255 = vld [vmem:[%s346 + $0x48] sm:$0xff]
        %v1256 = vld [vmem:[%s346 + $0x50] sm:$0xff]
        %v1257 = vld [vmem:[%s346 + $0x68] sm:$0xff]
        %v1258 = vld [vmem:[%s346 + $0x70] sm:$0xff]
        %v1259 = vld [vmem:[%s346 + $0x88] sm:$0xff]
        %v1260 = vld [vmem:[%s346 + $0x90] sm:$0xff]
        %v1261 = vld [vmem:[%s346 + $0xa8] sm:$0xff]
        %v1262 = vld [vmem:[%s346 + $0xb0] sm:$0xff]
        %v1263 = vld [vmem:[%s346 + $0xc8] sm:$0xff]
        %v1264 = vld [vmem:[%s346 + $0xd0] sm:$0xff]
        %v1265 = vld [vmem:[%s346 + $0xe8] sm:$0xff]
        %v1266 = vld [vmem:[%s346 + $0xf0] sm:$0xff]
        %v1267 = vld [vmem:[%s346 + $0x108] sm:$0xff]
        %v1268 = vld [vmem:[%s346 + $0x110] sm:$0xff]
        %v1269 = vld [vmem:[%s346 + $0x128] sm:$0xff]
        %v1270 = vld [vmem:[%s346 + $0x130] sm:$0xff]
        %v1271 = vld [vmem:[%s346 + $0x148] sm:$0xff]
        %v1272 = vld [vmem:[%s346 + $0x150] sm:$0xff]
        %v1273 = vld [vmem:[%s346 + $0x168] sm:$0xff]
        %v1274 = vld [vmem:[%s346 + $0x170] sm:$0xff]
        %v1275 = vld [vmem:[%s346 + $0x188] sm:$0xff]
        %v1276 = vld [vmem:[%s346 + $0x190] sm:$0xff]
        %v1277 = vld [vmem:[%s346 + $0x1a8] sm:$0xff]
        %v1278 = vld [vmem:[%s346 + $0x1b0] sm:$0xff]
        %v1279 = vld [vmem:[%s346 + $0x1c8] sm:$0xff]
        %v1280 = vld [vmem:[%s346 + $0x1d0] sm:$0xff]
        %v1281 = vld [vmem:[%s346 + $0x1e8] sm:$0xff]
        %v1282 = vld [vmem:[%s346 + $0x1f0] sm:$0xff]
        %v1283 = vpack.c.bf16 %v1252, %v1251
        %v1284 = vpack.c.bf16 %v1254, %v1253
        %v1285 = vpack.c.bf16 %v1256, %v1255
        %v1286 = vpack.c.bf16 %v1258, %v1257
        %v1287 = vpack.c.bf16 %v1260, %v1259
        %v1288 = vpack.c.bf16 %v1262, %v1261
        %v1289 = vpack.c.bf16 %v1264, %v1263
        %v1290 = vpack.c.bf16 %v1266, %v1265
        %v1291 = vpack.c.bf16 %v1268, %v1267
        %v1292 = vpack.c.bf16 %v1270, %v1269
        %v1293 = vpack.c.bf16 %v1272, %v1271
        %v1294 = vpack.c.bf16 %v1274, %v1273
        %v1295 = vpack.c.bf16 %v1276, %v1275
        %v1296 = vpack.c.bf16 %v1278, %v1277
        %v1297 = vpack.c.bf16 %v1280, %v1279
        %v1298 = vpack.c.bf16 %v1282, %v1281
        %s1299 = scalar_lea.vmem %s1, 256
        %v1300 = vld [vmem:[%s1299] sm:$0xf]
        %v1301 = vld [vmem:[%s1299 + $0x4] sm:$0xf]
        %v1302 = vld [vmem:[%s1299 + $0x8] sm:$0xf]
        %v1303 = vld [vmem:[%s1299 + $0xc] sm:$0xf]
        %v1304 = vld [vmem:[%s1299 + $0x10] sm:$0xf]
        %v1305 = vld [vmem:[%s1299 + $0x14] sm:$0xf]
        %v1306 = vld [vmem:[%s1299 + $0x18] sm:$0xf]
        %v1307 = vld [vmem:[%s1299 + $0x1c] sm:$0xf]
        %v1308 = vld [vmem:[%s1299 + $0x20] sm:$0xf]
        %v1309 = vld [vmem:[%s1299 + $0x24] sm:$0xf]
        %v1310 = vld [vmem:[%s1299 + $0x28] sm:$0xf]
        %v1311 = vld [vmem:[%s1299 + $0x2c] sm:$0xf]
        %v1312 = vld [vmem:[%s1299 + $0x30] sm:$0xf]
        %v1313 = vld [vmem:[%s1299 + $0x34] sm:$0xf]
        %v1314 = vld [vmem:[%s1299 + $0x38] sm:$0xf]
        %v1315 = vld [vmem:[%s1299 + $0x3c] sm:$0xf]
        %v1332 = vunpack.c.l.b16 %v1300
        %v1333 = vunpack.c.l.b16 %v1301
        %v1334 = vunpack.c.l.b16 %v1302
        %v1335 = vunpack.c.l.b16 %v1303
        %v1336 = vunpack.c.l.b16 %v1304
        %v1337 = vunpack.c.l.b16 %v1305
        %v1338 = vunpack.c.l.b16 %v1306
        %v1339 = vunpack.c.l.b16 %v1307
        %v1340 = vunpack.c.l.b16 %v1308
        %v1341 = vunpack.c.l.b16 %v1309
        %v1342 = vunpack.c.l.b16 %v1310
        %v1343 = vunpack.c.l.b16 %v1311
        %v1344 = vunpack.c.l.b16 %v1312
        %v1345 = vunpack.c.l.b16 %v1313
        %v1346 = vunpack.c.l.b16 %v1314
        %v1347 = vunpack.c.l.b16 %v1315
        %v1348 = vpack.c.b16 %v1333, %v1332
        %v1349 = vpack.c.b16 %v1335, %v1334
        %v1350 = vpack.c.b16 %v1337, %v1336
        %v1351 = vpack.c.b16 %v1339, %v1338
        %v1352 = vpack.c.b16 %v1341, %v1340
        %v1353 = vpack.c.b16 %v1343, %v1342
        %v1354 = vpack.c.b16 %v1345, %v1344
        %v1355 = vpack.c.b16 %v1347, %v1346
        %1364 = vmatpush.bf16.msra.mxu0 %v1355
        %1365 = vmatpush.bf16.msra.mxu0 %v1354
        %1366 = vmatpush.bf16.msra.mxu0 %v1353
        %1367 = vmatpush.bf16.msra.mxu0 %v1352
        %1368 = vmatpush.bf16.msra.mxu0 %v1351
        %1369 = vmatpush.bf16.msra.mxu0 %v1350
        %1370 = vmatpush.bf16.msra.mxu0 %v1349
        %1371 = vmatpush.bf16.msra.mxu0 %v1348
        %1372 = vmatmul.bf16.gmra.mxu0 %v1283
        %v1373 = vpop.f32.mrf.mxu0
        %v1374 = vadd.f32 0.0, %v1373
        %v1375 = vpop.f32.mrf.mxu0
        %v1376 = vadd.f32 0.0, %v1375
        %1377 = vmatmul.bf16.gmra.mxu0 %v1284
        %v1378 = vpop.f32.mrf.mxu0
        %v1379 = vadd.f32 0.0, %v1378
        %v1380 = vpop.f32.mrf.mxu0
        %v1381 = vadd.f32 0.0, %v1380
        %1382 = vmatmul.bf16.gmra.mxu0 %v1285
        %v1383 = vpop.f32.mrf.mxu0
        %v1384 = vadd.f32 0.0, %v1383
        %v1385 = vpop.f32.mrf.mxu0
        %v1386 = vadd.f32 0.0, %v1385
        %1387 = vmatmul.bf16.gmra.mxu0 %v1286
        %v1388 = vpop.f32.mrf.mxu0
        %v1389 = vadd.f32 0.0, %v1388
        %v1390 = vpop.f32.mrf.mxu0
        %v1391 = vadd.f32 0.0, %v1390
        %1392 = vmatmul.bf16.gmra.mxu0 %v1287
        %v1393 = vpop.f32.mrf.mxu0
        %v1394 = vadd.f32 0.0, %v1393
        %v1395 = vpop.f32.mrf.mxu0
        %v1396 = vadd.f32 0.0, %v1395
        %1397 = vmatmul.bf16.gmra.mxu0 %v1288
        %v1398 = vpop.f32.mrf.mxu0
        %v1399 = vadd.f32 0.0, %v1398
        %v1400 = vpop.f32.mrf.mxu0
        %v1401 = vadd.f32 0.0, %v1400
        %1402 = vmatmul.bf16.gmra.mxu0 %v1289
        %v1403 = vpop.f32.mrf.mxu0
        %v1404 = vadd.f32 0.0, %v1403
        %v1405 = vpop.f32.mrf.mxu0
        %v1406 = vadd.f32 0.0, %v1405
        %1407 = vmatmul.bf16.gmra.mxu0 %v1290
        %v1408 = vpop.f32.mrf.mxu0
        %v1409 = vadd.f32 0.0, %v1408
        %v1410 = vpop.f32.mrf.mxu0
        %v1411 = vadd.f32 0.0, %v1410
        %1412 = vmatmul.bf16.gmra.mxu0 %v1291
        %v1413 = vpop.f32.mrf.mxu0
        %v1414 = vadd.f32 0.0, %v1413
        %v1415 = vpop.f32.mrf.mxu0
        %v1416 = vadd.f32 0.0, %v1415
        %1417 = vmatmul.bf16.gmra.mxu0 %v1292
        %v1418 = vpop.f32.mrf.mxu0
        %v1419 = vadd.f32 0.0, %v1418
        %v1420 = vpop.f32.mrf.mxu0
        %v1421 = vadd.f32 0.0, %v1420
        %1422 = vmatmul.bf16.gmra.mxu0 %v1293
        %v1423 = vpop.f32.mrf.mxu0
        %v1424 = vadd.f32 0.0, %v1423
        %v1425 = vpop.f32.mrf.mxu0
        %v1426 = vadd.f32 0.0, %v1425
        %1427 = vmatmul.bf16.gmra.mxu0 %v1294
        %v1428 = vpop.f32.mrf.mxu0
        %v1429 = vadd.f32 0.0, %v1428
        %v1430 = vpop.f32.mrf.mxu0
        %v1431 = vadd.f32 0.0, %v1430
        %1432 = vmatmul.bf16.gmra.mxu0 %v1295
        %v1433 = vpop.f32.mrf.mxu0
        %v1434 = vadd.f32 0.0, %v1433
        %v1435 = vpop.f32.mrf.mxu0
        %v1436 = vadd.f32 0.0, %v1435
        %1437 = vmatmul.bf16.gmra.mxu0 %v1296
        %v1438 = vpop.f32.mrf.mxu0
        %v1439 = vadd.f32 0.0, %v1438
        %v1440 = vpop.f32.mrf.mxu0
        %v1441 = vadd.f32 0.0, %v1440
        %1442 = vmatmul.bf16.gmra.mxu0 %v1297
        %v1443 = vpop.f32.mrf.mxu0
        %v1444 = vadd.f32 0.0, %v1443
        %v1445 = vpop.f32.mrf.mxu0
        %v1446 = vadd.f32 0.0, %v1445
        %1447 = vmatmul.bf16.gmra.mxu0 %v1298
        %v1448 = vpop.f32.mrf.mxu0
        %v1449 = vadd.f32 0.0, %v1448
        %v1450 = vpop.f32.mrf.mxu0
        %v1451 = vadd.f32 0.0, %v1450
        %1452 = vdwg.mxu0
        %v1453 = vadd.f32 %v1219, %v1374
        %v1454 = vadd.f32 %v1220, %v1376
        %v1455 = vadd.f32 %v1221, %v1379
        %v1456 = vadd.f32 %v1222, %v1381
        %v1457 = vadd.f32 %v1223, %v1384
        %v1458 = vadd.f32 %v1224, %v1386
        %v1459 = vadd.f32 %v1225, %v1389
        %v1460 = vadd.f32 %v1226, %v1391
        %v1461 = vadd.f32 %v1227, %v1394
        %v1462 = vadd.f32 %v1228, %v1396
        %v1463 = vadd.f32 %v1229, %v1399
        %v1464 = vadd.f32 %v1230, %v1401
        %v1465 = vadd.f32 %v1231, %v1404
        %v1466 = vadd.f32 %v1232, %v1406
        %v1467 = vadd.f32 %v1233, %v1409
        %v1468 = vadd.f32 %v1234, %v1411
        %v1469 = vadd.f32 %v1235, %v1414
        %v1470 = vadd.f32 %v1236, %v1416
        %v1471 = vadd.f32 %v1237, %v1419
        %v1472 = vadd.f32 %v1238, %v1421
        %v1473 = vadd.f32 %v1239, %v1424
        %v1474 = vadd.f32 %v1240, %v1426
        %v1475 = vadd.f32 %v1241, %v1429
        %v1476 = vadd.f32 %v1242, %v1431
        %v1477 = vadd.f32 %v1243, %v1434
        %v1478 = vadd.f32 %v1244, %v1436
        %v1479 = vadd.f32 %v1245, %v1439
        %v1480 = vadd.f32 %v1246, %v1441
        %v1481 = vadd.f32 %v1247, %v1444
        %v1482 = vadd.f32 %v1248, %v1446
        %v1483 = vadd.f32 %v1249, %v1449
        %v1484 = vadd.f32 %v1250, %v1451
        %v1485 = vld [vmem:[%s346 + $0x9] sm:$0xff]
        %v1486 = vld [vmem:[%s346 + $0x11] sm:$0xff]
        %v1487 = vld [vmem:[%s346 + $0x29] sm:$0xff]
        %v1488 = vld [vmem:[%s346 + $0x31] sm:$0xff]
        %v1489 = vld [vmem:[%s346 + $0x49] sm:$0xff]
        %v1490 = vld [vmem:[%s346 + $0x51] sm:$0xff]
        %v1491 = vld [vmem:[%s346 + $0x69] sm:$0xff]
        %v1492 = vld [vmem:[%s346 + $0x71] sm:$0xff]
        %v1493 = vld [vmem:[%s346 + $0x89] sm:$0xff]
        %v1494 = vld [vmem:[%s346 + $0x91] sm:$0xff]
        %v1495 = vld [vmem:[%s346 + $0xa9] sm:$0xff]
        %v1496 = vld [vmem:[%s346 + $0xb1] sm:$0xff]
        %v1497 = vld [vmem:[%s346 + $0xc9] sm:$0xff]
        %v1498 = vld [vmem:[%s346 + $0xd1] sm:$0xff]
        %v1499 = vld [vmem:[%s346 + $0xe9] sm:$0xff]
        %v1500 = vld [vmem:[%s346 + $0xf1] sm:$0xff]
        %v1501 = vld [vmem:[%s346 + $0x109] sm:$0xff]
        %v1502 = vld [vmem:[%s346 + $0x111] sm:$0xff]
        %v1503 = vld [vmem:[%s346 + $0x129] sm:$0xff]
        %v1504 = vld [vmem:[%s346 + $0x131] sm:$0xff]
        %v1505 = vld [vmem:[%s346 + $0x149] sm:$0xff]
        %v1506 = vld [vmem:[%s346 + $0x151] sm:$0xff]
        %v1507 = vld [vmem:[%s346 + $0x169] sm:$0xff]
        %v1508 = vld [vmem:[%s346 + $0x171] sm:$0xff]
        %v1509 = vld [vmem:[%s346 + $0x189] sm:$0xff]
        %v1510 = vld [vmem:[%s346 + $0x191] sm:$0xff]
        %v1511 = vld [vmem:[%s346 + $0x1a9] sm:$0xff]
        %v1512 = vld [vmem:[%s346 + $0x1b1] sm:$0xff]
        %v1513 = vld [vmem:[%s346 + $0x1c9] sm:$0xff]
        %v1514 = vld [vmem:[%s346 + $0x1d1] sm:$0xff]
        %v1515 = vld [vmem:[%s346 + $0x1e9] sm:$0xff]
        %v1516 = vld [vmem:[%s346 + $0x1f1] sm:$0xff]
        %v1517 = vpack.c.bf16 %v1486, %v1485
        %v1518 = vpack.c.bf16 %v1488, %v1487
        %v1519 = vpack.c.bf16 %v1490, %v1489
        %v1520 = vpack.c.bf16 %v1492, %v1491
        %v1521 = vpack.c.bf16 %v1494, %v1493
        %v1522 = vpack.c.bf16 %v1496, %v1495
        %v1523 = vpack.c.bf16 %v1498, %v1497
        %v1524 = vpack.c.bf16 %v1500, %v1499
        %v1525 = vpack.c.bf16 %v1502, %v1501
        %v1526 = vpack.c.bf16 %v1504, %v1503
        %v1527 = vpack.c.bf16 %v1506, %v1505
        %v1528 = vpack.c.bf16 %v1508, %v1507
        %v1529 = vpack.c.bf16 %v1510, %v1509
        %v1530 = vpack.c.bf16 %v1512, %v1511
        %v1531 = vpack.c.bf16 %v1514, %v1513
        %v1532 = vpack.c.bf16 %v1516, %v1515
        %s1533 = scalar_lea.vmem %s1, 320
        %v1534 = vld [vmem:[%s1533] sm:$0xf]
        %v1535 = vld [vmem:[%s1533 + $0x4] sm:$0xf]
        %v1536 = vld [vmem:[%s1533 + $0x8] sm:$0xf]
        %v1537 = vld [vmem:[%s1533 + $0xc] sm:$0xf]
        %v1538 = vld [vmem:[%s1533 + $0x10] sm:$0xf]
        %v1539 = vld [vmem:[%s1533 + $0x14] sm:$0xf]
        %v1540 = vld [vmem:[%s1533 + $0x18] sm:$0xf]
        %v1541 = vld [vmem:[%s1533 + $0x1c] sm:$0xf]
        %v1542 = vld [vmem:[%s1533 + $0x20] sm:$0xf]
        %v1543 = vld [vmem:[%s1533 + $0x24] sm:$0xf]
        %v1544 = vld [vmem:[%s1533 + $0x28] sm:$0xf]
        %v1545 = vld [vmem:[%s1533 + $0x2c] sm:$0xf]
        %v1546 = vld [vmem:[%s1533 + $0x30] sm:$0xf]
        %v1547 = vld [vmem:[%s1533 + $0x34] sm:$0xf]
        %v1548 = vld [vmem:[%s1533 + $0x38] sm:$0xf]
        %v1549 = vld [vmem:[%s1533 + $0x3c] sm:$0xf]
        %v1566 = vunpack.c.l.b16 %v1534
        %v1567 = vunpack.c.l.b16 %v1535
        %v1568 = vunpack.c.l.b16 %v1536
        %v1569 = vunpack.c.l.b16 %v1537
        %v1570 = vunpack.c.l.b16 %v1538
        %v1571 = vunpack.c.l.b16 %v1539
        %v1572 = vunpack.c.l.b16 %v1540
        %v1573 = vunpack.c.l.b16 %v1541
        %v1574 = vunpack.c.l.b16 %v1542
        %v1575 = vunpack.c.l.b16 %v1543
        %v1576 = vunpack.c.l.b16 %v1544
        %v1577 = vunpack.c.l.b16 %v1545
        %v1578 = vunpack.c.l.b16 %v1546
        %v1579 = vunpack.c.l.b16 %v1547
        %v1580 = vunpack.c.l.b16 %v1548
        %v1581 = vunpack.c.l.b16 %v1549
        %v1582 = vpack.c.b16 %v1567, %v1566
        %v1583 = vpack.c.b16 %v1569, %v1568
        %v1584 = vpack.c.b16 %v1571, %v1570
        %v1585 = vpack.c.b16 %v1573, %v1572
        %v1586 = vpack.c.b16 %v1575, %v1574
        %v1587 = vpack.c.b16 %v1577, %v1576
        %v1588 = vpack.c.b16 %v1579, %v1578
        %v1589 = vpack.c.b16 %v1581, %v1580
        %1598 = vmatpush.bf16.msra.mxu0 %v1589
        %1599 = vmatpush.bf16.msra.mxu0 %v1588
        %1600 = vmatpush.bf16.msra.mxu0 %v1587
        %1601 = vmatpush.bf16.msra.mxu0 %v1586
        %1602 = vmatpush.bf16.msra.mxu0 %v1585
        %1603 = vmatpush.bf16.msra.mxu0 %v1584
        %1604 = vmatpush.bf16.msra.mxu0 %v1583
        %1605 = vmatpush.bf16.msra.mxu0 %v1582
        %1606 = vmatmul.bf16.gmra.mxu0 %v1517
        %v1607 = vpop.f32.mrf.mxu0
        %v1608 = vadd.f32 0.0, %v1607
        %v1609 = vpop.f32.mrf.mxu0
        %v1610 = vadd.f32 0.0, %v1609
        %1611 = vmatmul.bf16.gmra.mxu0 %v1518
        %v1612 = vpop.f32.mrf.mxu0
        %v1613 = vadd.f32 0.0, %v1612
        %v1614 = vpop.f32.mrf.mxu0
        %v1615 = vadd.f32 0.0, %v1614
        %1616 = vmatmul.bf16.gmra.mxu0 %v1519
        %v1617 = vpop.f32.mrf.mxu0
        %v1618 = vadd.f32 0.0, %v1617
        %v1619 = vpop.f32.mrf.mxu0
        %v1620 = vadd.f32 0.0, %v1619
        %1621 = vmatmul.bf16.gmra.mxu0 %v1520
        %v1622 = vpop.f32.mrf.mxu0
        %v1623 = vadd.f32 0.0, %v1622
        %v1624 = vpop.f32.mrf.mxu0
        %v1625 = vadd.f32 0.0, %v1624
        %1626 = vmatmul.bf16.gmra.mxu0 %v1521
        %v1627 = vpop.f32.mrf.mxu0
        %v1628 = vadd.f32 0.0, %v1627
        %v1629 = vpop.f32.mrf.mxu0
        %v1630 = vadd.f32 0.0, %v1629
        %1631 = vmatmul.bf16.gmra.mxu0 %v1522
        %v1632 = vpop.f32.mrf.mxu0
        %v1633 = vadd.f32 0.0, %v1632
        %v1634 = vpop.f32.mrf.mxu0
        %v1635 = vadd.f32 0.0, %v1634
        %1636 = vmatmul.bf16.gmra.mxu0 %v1523
        %v1637 = vpop.f32.mrf.mxu0
        %v1638 = vadd.f32 0.0, %v1637
        %v1639 = vpop.f32.mrf.mxu0
        %v1640 = vadd.f32 0.0, %v1639
        %1641 = vmatmul.bf16.gmra.mxu0 %v1524
        %v1642 = vpop.f32.mrf.mxu0
        %v1643 = vadd.f32 0.0, %v1642
        %v1644 = vpop.f32.mrf.mxu0
        %v1645 = vadd.f32 0.0, %v1644
        %1646 = vmatmul.bf16.gmra.mxu0 %v1525
        %v1647 = vpop.f32.mrf.mxu0
        %v1648 = vadd.f32 0.0, %v1647
        %v1649 = vpop.f32.mrf.mxu0
        %v1650 = vadd.f32 0.0, %v1649
        %1651 = vmatmul.bf16.gmra.mxu0 %v1526
        %v1652 = vpop.f32.mrf.mxu0
        %v1653 = vadd.f32 0.0, %v1652
        %v1654 = vpop.f32.mrf.mxu0
        %v1655 = vadd.f32 0.0, %v1654
        %1656 = vmatmul.bf16.gmra.mxu0 %v1527
        %v1657 = vpop.f32.mrf.mxu0
        %v1658 = vadd.f32 0.0, %v1657
        %v1659 = vpop.f32.mrf.mxu0
        %v1660 = vadd.f32 0.0, %v1659
        %1661 = vmatmul.bf16.gmra.mxu0 %v1528
        %v1662 = vpop.f32.mrf.mxu0
        %v1663 = vadd.f32 0.0, %v1662
        %v1664 = vpop.f32.mrf.mxu0
        %v1665 = vadd.f32 0.0, %v1664
        %1666 = vmatmul.bf16.gmra.mxu0 %v1529
        %v1667 = vpop.f32.mrf.mxu0
        %v1668 = vadd.f32 0.0, %v1667
        %v1669 = vpop.f32.mrf.mxu0
        %v1670 = vadd.f32 0.0, %v1669
        %1671 = vmatmul.bf16.gmra.mxu0 %v1530
        %v1672 = vpop.f32.mrf.mxu0
        %v1673 = vadd.f32 0.0, %v1672
        %v1674 = vpop.f32.mrf.mxu0
        %v1675 = vadd.f32 0.0, %v1674
        %1676 = vmatmul.bf16.gmra.mxu0 %v1531
        %v1677 = vpop.f32.mrf.mxu0
        %v1678 = vadd.f32 0.0, %v1677
        %v1679 = vpop.f32.mrf.mxu0
        %v1680 = vadd.f32 0.0, %v1679
        %1681 = vmatmul.bf16.gmra.mxu0 %v1532
        %v1682 = vpop.f32.mrf.mxu0
        %v1683 = vadd.f32 0.0, %v1682
        %v1684 = vpop.f32.mrf.mxu0
        %v1685 = vadd.f32 0.0, %v1684
        %1686 = vdwg.mxu0
        %v1687 = vadd.f32 %v1453, %v1608
        %v1688 = vadd.f32 %v1454, %v1610
        %v1689 = vadd.f32 %v1455, %v1613
        %v1690 = vadd.f32 %v1456, %v1615
        %v1691 = vadd.f32 %v1457, %v1618
        %v1692 = vadd.f32 %v1458, %v1620
        %v1693 = vadd.f32 %v1459, %v1623
        %v1694 = vadd.f32 %v1460, %v1625
        %v1695 = vadd.f32 %v1461, %v1628
        %v1696 = vadd.f32 %v1462, %v1630
        %v1697 = vadd.f32 %v1463, %v1633
        %v1698 = vadd.f32 %v1464, %v1635
        %v1699 = vadd.f32 %v1465, %v1638
        %v1700 = vadd.f32 %v1466, %v1640
        %v1701 = vadd.f32 %v1467, %v1643
        %v1702 = vadd.f32 %v1468, %v1645
        %v1703 = vadd.f32 %v1469, %v1648
        %v1704 = vadd.f32 %v1470, %v1650
        %v1705 = vadd.f32 %v1471, %v1653
        %v1706 = vadd.f32 %v1472, %v1655
        %v1707 = vadd.f32 %v1473, %v1658
        %v1708 = vadd.f32 %v1474, %v1660
        %v1709 = vadd.f32 %v1475, %v1663
        %v1710 = vadd.f32 %v1476, %v1665
        %v1711 = vadd.f32 %v1477, %v1668
        %v1712 = vadd.f32 %v1478, %v1670
        %v1713 = vadd.f32 %v1479, %v1673
        %v1714 = vadd.f32 %v1480, %v1675
        %v1715 = vadd.f32 %v1481, %v1678
        %v1716 = vadd.f32 %v1482, %v1680
        %v1717 = vadd.f32 %v1483, %v1683
        %v1718 = vadd.f32 %v1484, %v1685
        %s1719 = scalar_lea.vmem [#allocation2], 64
        %v1720 = vld [vmem:[%s1719 + $0x7] sm:$0xff]
        %v1721 = vld [vmem:[%s1719 + $0xf] sm:$0xff]
        %v1722 = vld [vmem:[%s1719 + $0x27] sm:$0xff]
        %v1723 = vld [vmem:[%s1719 + $0x2f] sm:$0xff]
        %v1724 = vld [vmem:[%s1719 + $0x47] sm:$0xff]
        %v1725 = vld [vmem:[%s1719 + $0x4f] sm:$0xff]
        %v1726 = vld [vmem:[%s1719 + $0x67] sm:$0xff]
        %v1727 = vld [vmem:[%s1719 + $0x6f] sm:$0xff]
        %v1728 = vld [vmem:[%s1719 + $0x87] sm:$0xff]
        %v1729 = vld [vmem:[%s1719 + $0x8f] sm:$0xff]
        %v1730 = vld [vmem:[%s1719 + $0xa7] sm:$0xff]
        %v1731 = vld [vmem:[%s1719 + $0xaf] sm:$0xff]
        %v1732 = vld [vmem:[%s1719 + $0xc7] sm:$0xff]
        %v1733 = vld [vmem:[%s1719 + $0xcf] sm:$0xff]
        %v1734 = vld [vmem:[%s1719 + $0xe7] sm:$0xff]
        %v1735 = vld [vmem:[%s1719 + $0xef] sm:$0xff]
        %v1736 = vld [vmem:[%s1719 + $0x107] sm:$0xff]
        %v1737 = vld [vmem:[%s1719 + $0x10f] sm:$0xff]
        %v1738 = vld [vmem:[%s1719 + $0x127] sm:$0xff]
        %v1739 = vld [vmem:[%s1719 + $0x12f] sm:$0xff]
        %v1740 = vld [vmem:[%s1719 + $0x147] sm:$0xff]
        %v1741 = vld [vmem:[%s1719 + $0x14f] sm:$0xff]
        %v1742 = vld [vmem:[%s1719 + $0x167] sm:$0xff]
        %v1743 = vld [vmem:[%s1719 + $0x16f] sm:$0xff]
        %v1744 = vld [vmem:[%s1719 + $0x187] sm:$0xff]
        %v1745 = vld [vmem:[%s1719 + $0x18f] sm:$0xff]
        %v1746 = vld [vmem:[%s1719 + $0x1a7] sm:$0xff]
        %v1747 = vld [vmem:[%s1719 + $0x1af] sm:$0xff]
        %v1748 = vld [vmem:[%s1719 + $0x1c7] sm:$0xff]
        %v1749 = vld [vmem:[%s1719 + $0x1cf] sm:$0xff]
        %v1750 = vld [vmem:[%s1719 + $0x1e7] sm:$0xff]
        %v1751 = vld [vmem:[%s1719 + $0x1ef] sm:$0xff]
        %v1752 = vpack.c.bf16 %v1721, %v1720
        %v1753 = vpack.c.bf16 %v1723, %v1722
        %v1754 = vpack.c.bf16 %v1725, %v1724
        %v1755 = vpack.c.bf16 %v1727, %v1726
        %v1756 = vpack.c.bf16 %v1729, %v1728
        %v1757 = vpack.c.bf16 %v1731, %v1730
        %v1758 = vpack.c.bf16 %v1733, %v1732
        %v1759 = vpack.c.bf16 %v1735, %v1734
        %v1760 = vpack.c.bf16 %v1737, %v1736
        %v1761 = vpack.c.bf16 %v1739, %v1738
        %v1762 = vpack.c.bf16 %v1741, %v1740
        %v1763 = vpack.c.bf16 %v1743, %v1742
        %v1764 = vpack.c.bf16 %v1745, %v1744
        %v1765 = vpack.c.bf16 %v1747, %v1746
        %v1766 = vpack.c.bf16 %v1749, %v1748
        %v1767 = vpack.c.bf16 %v1751, %v1750
        %s1768 = scalar_lea.vmem %s1, 384
        %v1769 = vld [vmem:[%s1768] sm:$0xf]
        %v1770 = vld [vmem:[%s1768 + $0x4] sm:$0xf]
        %v1771 = vld [vmem:[%s1768 + $0x8] sm:$0xf]
        %v1772 = vld [vmem:[%s1768 + $0xc] sm:$0xf]
        %v1773 = vld [vmem:[%s1768 + $0x10] sm:$0xf]
        %v1774 = vld [vmem:[%s1768 + $0x14] sm:$0xf]
        %v1775 = vld [vmem:[%s1768 + $0x18] sm:$0xf]
        %v1776 = vld [vmem:[%s1768 + $0x1c] sm:$0xf]
        %v1777 = vld [vmem:[%s1768 + $0x20] sm:$0xf]
        %v1778 = vld [vmem:[%s1768 + $0x24] sm:$0xf]
        %v1779 = vld [vmem:[%s1768 + $0x28] sm:$0xf]
        %v1780 = vld [vmem:[%s1768 + $0x2c] sm:$0xf]
        %v1781 = vld [vmem:[%s1768 + $0x30] sm:$0xf]
        %v1782 = vld [vmem:[%s1768 + $0x34] sm:$0xf]
        %v1783 = vld [vmem:[%s1768 + $0x38] sm:$0xf]
        %v1784 = vld [vmem:[%s1768 + $0x3c] sm:$0xf]
        %v1801 = vunpack.c.l.b16 %v1769
        %v1802 = vunpack.c.l.b16 %v1770
        %v1803 = vunpack.c.l.b16 %v1771
        %v1804 = vunpack.c.l.b16 %v1772
        %v1805 = vunpack.c.l.b16 %v1773
        %v1806 = vunpack.c.l.b16 %v1774
        %v1807 = vunpack.c.l.b16 %v1775
        %v1808 = vunpack.c.l.b16 %v1776
        %v1809 = vunpack.c.l.b16 %v1777
        %v1810 = vunpack.c.l.b16 %v1778
        %v1811 = vunpack.c.l.b16 %v1779
        %v1812 = vunpack.c.l.b16 %v1780
        %v1813 = vunpack.c.l.b16 %v1781
        %v1814 = vunpack.c.l.b16 %v1782
        %v1815 = vunpack.c.l.b16 %v1783
        %v1816 = vunpack.c.l.b16 %v1784
        %v1817 = vpack.c.b16 %v1802, %v1801
        %v1818 = vpack.c.b16 %v1804, %v1803
        %v1819 = vpack.c.b16 %v1806, %v1805
        %v1820 = vpack.c.b16 %v1808, %v1807
        %v1821 = vpack.c.b16 %v1810, %v1809
        %v1822 = vpack.c.b16 %v1812, %v1811
        %v1823 = vpack.c.b16 %v1814, %v1813
        %v1824 = vpack.c.b16 %v1816, %v1815
        %1833 = vmatpush.bf16.msra.mxu0 %v1824
        %1834 = vmatpush.bf16.msra.mxu0 %v1823
        %1835 = vmatpush.bf16.msra.mxu0 %v1822
        %1836 = vmatpush.bf16.msra.mxu0 %v1821
        %1837 = vmatpush.bf16.msra.mxu0 %v1820
        %1838 = vmatpush.bf16.msra.mxu0 %v1819
        %1839 = vmatpush.bf16.msra.mxu0 %v1818
        %1840 = vmatpush.bf16.msra.mxu0 %v1817
        %1841 = vmatmul.bf16.gmra.mxu0 %v1752
        %v1842 = vpop.f32.mrf.mxu0
        %v1843 = vadd.f32 0.0, %v1842
        %v1844 = vpop.f32.mrf.mxu0
        %v1845 = vadd.f32 0.0, %v1844
        %1846 = vmatmul.bf16.gmra.mxu0 %v1753
        %v1847 = vpop.f32.mrf.mxu0
        %v1848 = vadd.f32 0.0, %v1847
        %v1849 = vpop.f32.mrf.mxu0
        %v1850 = vadd.f32 0.0, %v1849
        %1851 = vmatmul.bf16.gmra.mxu0 %v1754
        %v1852 = vpop.f32.mrf.mxu0
        %v1853 = vadd.f32 0.0, %v1852
        %v1854 = vpop.f32.mrf.mxu0
        %v1855 = vadd.f32 0.0, %v1854
        %1856 = vmatmul.bf16.gmra.mxu0 %v1755
        %v1857 = vpop.f32.mrf.mxu0
        %v1858 = vadd.f32 0.0, %v1857
        %v1859 = vpop.f32.mrf.mxu0
        %v1860 = vadd.f32 0.0, %v1859
        %1861 = vmatmul.bf16.gmra.mxu0 %v1756
        %v1862 = vpop.f32.mrf.mxu0
        %v1863 = vadd.f32 0.0, %v1862
        %v1864 = vpop.f32.mrf.mxu0
        %v1865 = vadd.f32 0.0, %v1864
        %1866 = vmatmul.bf16.gmra.mxu0 %v1757
        %v1867 = vpop.f32.mrf.mxu0
        %v1868 = vadd.f32 0.0, %v1867
        %v1869 = vpop.f32.mrf.mxu0
        %v1870 = vadd.f32 0.0, %v1869
        %1871 = vmatmul.bf16.gmra.mxu0 %v1758
        %v1872 = vpop.f32.mrf.mxu0
        %v1873 = vadd.f32 0.0, %v1872
        %v1874 = vpop.f32.mrf.mxu0
        %v1875 = vadd.f32 0.0, %v1874
        %1876 = vmatmul.bf16.gmra.mxu0 %v1759
        %v1877 = vpop.f32.mrf.mxu0
        %v1878 = vadd.f32 0.0, %v1877
        %v1879 = vpop.f32.mrf.mxu0
        %v1880 = vadd.f32 0.0, %v1879
        %1881 = vmatmul.bf16.gmra.mxu0 %v1760
        %v1882 = vpop.f32.mrf.mxu0
        %v1883 = vadd.f32 0.0, %v1882
        %v1884 = vpop.f32.mrf.mxu0
        %v1885 = vadd.f32 0.0, %v1884
        %1886 = vmatmul.bf16.gmra.mxu0 %v1761
        %v1887 = vpop.f32.mrf.mxu0
        %v1888 = vadd.f32 0.0, %v1887
        %v1889 = vpop.f32.mrf.mxu0
        %v1890 = vadd.f32 0.0, %v1889
        %1891 = vmatmul.bf16.gmra.mxu0 %v1762
        %v1892 = vpop.f32.mrf.mxu0
        %v1893 = vadd.f32 0.0, %v1892
        %v1894 = vpop.f32.mrf.mxu0
        %v1895 = vadd.f32 0.0, %v1894
        %1896 = vmatmul.bf16.gmra.mxu0 %v1763
        %v1897 = vpop.f32.mrf.mxu0
        %v1898 = vadd.f32 0.0, %v1897
        %v1899 = vpop.f32.mrf.mxu0
        %v1900 = vadd.f32 0.0, %v1899
        %1901 = vmatmul.bf16.gmra.mxu0 %v1764
        %v1902 = vpop.f32.mrf.mxu0
        %v1903 = vadd.f32 0.0, %v1902
        %v1904 = vpop.f32.mrf.mxu0
        %v1905 = vadd.f32 0.0, %v1904
        %1906 = vmatmul.bf16.gmra.mxu0 %v1765
        %v1907 = vpop.f32.mrf.mxu0
        %v1908 = vadd.f32 0.0, %v1907
        %v1909 = vpop.f32.mrf.mxu0
        %v1910 = vadd.f32 0.0, %v1909
        %1911 = vmatmul.bf16.gmra.mxu0 %v1766
        %v1912 = vpop.f32.mrf.mxu0
        %v1913 = vadd.f32 0.0, %v1912
        %v1914 = vpop.f32.mrf.mxu0
        %v1915 = vadd.f32 0.0, %v1914
        %1916 = vmatmul.bf16.gmra.mxu0 %v1767
        %v1917 = vpop.f32.mrf.mxu0
        %v1918 = vadd.f32 0.0, %v1917
        %v1919 = vpop.f32.mrf.mxu0
        %v1920 = vadd.f32 0.0, %v1919
        %1921 = vdwg.mxu0
        %v1922 = vadd.f32 %v1687, %v1843
        %v1923 = vadd.f32 %v1688, %v1845
        %v1924 = vadd.f32 %v1689, %v1848
        %v1925 = vadd.f32 %v1690, %v1850
        %v1926 = vadd.f32 %v1691, %v1853
        %v1927 = vadd.f32 %v1692, %v1855
        %v1928 = vadd.f32 %v1693, %v1858
        %v1929 = vadd.f32 %v1694, %v1860
        %v1930 = vadd.f32 %v1695, %v1863
        %v1931 = vadd.f32 %v1696, %v1865
        %v1932 = vadd.f32 %v1697, %v1868
        %v1933 = vadd.f32 %v1698, %v1870
        %v1934 = vadd.f32 %v1699, %v1873
        %v1935 = vadd.f32 %v1700, %v1875
        %v1936 = vadd.f32 %v1701, %v1878
        %v1937 = vadd.f32 %v1702, %v1880
        %v1938 = vadd.f32 %v1703, %v1883
        %v1939 = vadd.f32 %v1704, %v1885
        %v1940 = vadd.f32 %v1705, %v1888
        %v1941 = vadd.f32 %v1706, %v1890
        %v1942 = vadd.f32 %v1707, %v1893
        %v1943 = vadd.f32 %v1708, %v1895
        %v1944 = vadd.f32 %v1709, %v1898
        %v1945 = vadd.f32 %v1710, %v1900
        %v1946 = vadd.f32 %v1711, %v1903
        %v1947 = vadd.f32 %v1712, %v1905
        %v1948 = vadd.f32 %v1713, %v1908
        %v1949 = vadd.f32 %v1714, %v1910
        %v1950 = vadd.f32 %v1715, %v1913
        %v1951 = vadd.f32 %v1716, %v1915
        %v1952 = vadd.f32 %v1717, %v1918
        %v1953 = vadd.f32 %v1718, %v1920
        %v1954 = vld [vmem:[%s1719 + $0x8] sm:$0xff]
        %v1955 = vld [vmem:[%s1719 + $0x10] sm:$0xff]
        %v1956 = vld [vmem:[%s1719 + $0x28] sm:$0xff]
        %v1957 = vld [vmem:[%s1719 + $0x30] sm:$0xff]
        %v1958 = vld [vmem:[%s1719 + $0x48] sm:$0xff]
        %v1959 = vld [vmem:[%s1719 + $0x50] sm:$0xff]
        %v1960 = vld [vmem:[%s1719 + $0x68] sm:$0xff]
        %v1961 = vld [vmem:[%s1719 + $0x70] sm:$0xff]
        %v1962 = vld [vmem:[%s1719 + $0x88] sm:$0xff]
        %v1963 = vld [vmem:[%s1719 + $0x90] sm:$0xff]
        %v1964 = vld [vmem:[%s1719 + $0xa8] sm:$0xff]
        %v1965 = vld [vmem:[%s1719 + $0xb0] sm:$0xff]
        %v1966 = vld [vmem:[%s1719 + $0xc8] sm:$0xff]
        %v1967 = vld [vmem:[%s1719 + $0xd0] sm:$0xff]
        %v1968 = vld [vmem:[%s1719 + $0xe8] sm:$0xff]
        %v1969 = vld [vmem:[%s1719 + $0xf0] sm:$0xff]
        %v1970 = vld [vmem:[%s1719 + $0x108] sm:$0xff]
        %v1971 = vld [vmem:[%s1719 + $0x110] sm:$0xff]
        %v1972 = vld [vmem:[%s1719 + $0x128] sm:$0xff]
        %v1973 = vld [vmem:[%s1719 + $0x130] sm:$0xff]
        %v1974 = vld [vmem:[%s1719 + $0x148] sm:$0xff]
        %v1975 = vld [vmem:[%s1719 + $0x150] sm:$0xff]
        %v1976 = vld [vmem:[%s1719 + $0x168] sm:$0xff]
        %v1977 = vld [vmem:[%s1719 + $0x170] sm:$0xff]
        %v1978 = vld [vmem:[%s1719 + $0x188] sm:$0xff]
        %v1979 = vld [vmem:[%s1719 + $0x190] sm:$0xff]
        %v1980 = vld [vmem:[%s1719 + $0x1a8] sm:$0xff]
        %v1981 = vld [vmem:[%s1719 + $0x1b0] sm:$0xff]
        %v1982 = vld [vmem:[%s1719 + $0x1c8] sm:$0xff]
        %v1983 = vld [vmem:[%s1719 + $0x1d0] sm:$0xff]
        %v1984 = vld [vmem:[%s1719 + $0x1e8] sm:$0xff]
        %v1985 = vld [vmem:[%s1719 + $0x1f0] sm:$0xff]
        %v1986 = vpack.c.bf16 %v1955, %v1954
        %v1987 = vpack.c.bf16 %v1957, %v1956
        %v1988 = vpack.c.bf16 %v1959, %v1958
        %v1989 = vpack.c.bf16 %v1961, %v1960
        %v1990 = vpack.c.bf16 %v1963, %v1962
        %v1991 = vpack.c.bf16 %v1965, %v1964
        %v1992 = vpack.c.bf16 %v1967, %v1966
        %v1993 = vpack.c.bf16 %v1969, %v1968
        %v1994 = vpack.c.bf16 %v1971, %v1970
        %v1995 = vpack.c.bf16 %v1973, %v1972
        %v1996 = vpack.c.bf16 %v1975, %v1974
        %v1997 = vpack.c.bf16 %v1977, %v1976
        %v1998 = vpack.c.bf16 %v1979, %v1978
        %v1999 = vpack.c.bf16 %v1981, %v1980
        %v2000 = vpack.c.bf16 %v1983, %v1982
        %v2001 = vpack.c.bf16 %v1985, %v1984
        %s2002 = scalar_lea.vmem %s1, 448
        %v2003 = vld [vmem:[%s2002] sm:$0xf]
        %v2004 = vld [vmem:[%s2002 + $0x4] sm:$0xf]
        %v2005 = vld [vmem:[%s2002 + $0x8] sm:$0xf]
        %v2006 = vld [vmem:[%s2002 + $0xc] sm:$0xf]
        %v2007 = vld [vmem:[%s2002 + $0x10] sm:$0xf]
        %v2008 = vld [vmem:[%s2002 + $0x14] sm:$0xf]
        %v2009 = vld [vmem:[%s2002 + $0x18] sm:$0xf]
        %v2010 = vld [vmem:[%s2002 + $0x1c] sm:$0xf]
        %v2011 = vld [vmem:[%s2002 + $0x20] sm:$0xf]
        %v2012 = vld [vmem:[%s2002 + $0x24] sm:$0xf]
        %v2013 = vld [vmem:[%s2002 + $0x28] sm:$0xf]
        %v2014 = vld [vmem:[%s2002 + $0x2c] sm:$0xf]
        %v2015 = vld [vmem:[%s2002 + $0x30] sm:$0xf]
        %v2016 = vld [vmem:[%s2002 + $0x34] sm:$0xf]
        %v2017 = vld [vmem:[%s2002 + $0x38] sm:$0xf]
        %v2018 = vld [vmem:[%s2002 + $0x3c] sm:$0xf]
        %v2035 = vunpack.c.l.b16 %v2003
        %v2036 = vunpack.c.l.b16 %v2004
        %v2037 = vunpack.c.l.b16 %v2005
        %v2038 = vunpack.c.l.b16 %v2006
        %v2039 = vunpack.c.l.b16 %v2007
        %v2040 = vunpack.c.l.b16 %v2008
        %v2041 = vunpack.c.l.b16 %v2009
        %v2042 = vunpack.c.l.b16 %v2010
        %v2043 = vunpack.c.l.b16 %v2011
        %v2044 = vunpack.c.l.b16 %v2012
        %v2045 = vunpack.c.l.b16 %v2013
        %v2046 = vunpack.c.l.b16 %v2014
        %v2047 = vunpack.c.l.b16 %v2015
        %v2048 = vunpack.c.l.b16 %v2016
        %v2049 = vunpack.c.l.b16 %v2017
        %v2050 = vunpack.c.l.b16 %v2018
        %v2051 = vpack.c.b16 %v2036, %v2035
        %v2052 = vpack.c.b16 %v2038, %v2037
        %v2053 = vpack.c.b16 %v2040, %v2039
        %v2054 = vpack.c.b16 %v2042, %v2041
        %v2055 = vpack.c.b16 %v2044, %v2043
        %v2056 = vpack.c.b16 %v2046, %v2045
        %v2057 = vpack.c.b16 %v2048, %v2047
        %v2058 = vpack.c.b16 %v2050, %v2049
        %2067 = vmatpush.bf16.msra.mxu0 %v2058
        %2068 = vmatpush.bf16.msra.mxu0 %v2057
        %2069 = vmatpush.bf16.msra.mxu0 %v2056
        %2070 = vmatpush.bf16.msra.mxu0 %v2055
        %2071 = vmatpush.bf16.msra.mxu0 %v2054
        %2072 = vmatpush.bf16.msra.mxu0 %v2053
        %2073 = vmatpush.bf16.msra.mxu0 %v2052
        %2074 = vmatpush.bf16.msra.mxu0 %v2051
        %2075 = vmatmul.bf16.gmra.mxu0 %v1986
        %v2076 = vpop.f32.mrf.mxu0
        %v2077 = vadd.f32 0.0, %v2076
        %v2078 = vpop.f32.mrf.mxu0
        %v2079 = vadd.f32 0.0, %v2078
        %2080 = vmatmul.bf16.gmra.mxu0 %v1987
        %v2081 = vpop.f32.mrf.mxu0
        %v2082 = vadd.f32 0.0, %v2081
        %v2083 = vpop.f32.mrf.mxu0
        %v2084 = vadd.f32 0.0, %v2083
        %2085 = vmatmul.bf16.gmra.mxu0 %v1988
        %v2086 = vpop.f32.mrf.mxu0
        %v2087 = vadd.f32 0.0, %v2086
        %v2088 = vpop.f32.mrf.mxu0
        %v2089 = vadd.f32 0.0, %v2088
        %2090 = vmatmul.bf16.gmra.mxu0 %v1989
        %v2091 = vpop.f32.mrf.mxu0
        %v2092 = vadd.f32 0.0, %v2091
        %v2093 = vpop.f32.mrf.mxu0
        %v2094 = vadd.f32 0.0, %v2093
        %2095 = vmatmul.bf16.gmra.mxu0 %v1990
        %v2096 = vpop.f32.mrf.mxu0
        %v2097 = vadd.f32 0.0, %v2096
        %v2098 = vpop.f32.mrf.mxu0
        %v2099 = vadd.f32 0.0, %v2098
        %2100 = vmatmul.bf16.gmra.mxu0 %v1991
        %v2101 = vpop.f32.mrf.mxu0
        %v2102 = vadd.f32 0.0, %v2101
        %v2103 = vpop.f32.mrf.mxu0
        %v2104 = vadd.f32 0.0, %v2103
        %2105 = vmatmul.bf16.gmra.mxu0 %v1992
        %v2106 = vpop.f32.mrf.mxu0
        %v2107 = vadd.f32 0.0, %v2106
        %v2108 = vpop.f32.mrf.mxu0
        %v2109 = vadd.f32 0.0, %v2108
        %2110 = vmatmul.bf16.gmra.mxu0 %v1993
        %v2111 = vpop.f32.mrf.mxu0
        %v2112 = vadd.f32 0.0, %v2111
        %v2113 = vpop.f32.mrf.mxu0
        %v2114 = vadd.f32 0.0, %v2113
        %2115 = vmatmul.bf16.gmra.mxu0 %v1994
        %v2116 = vpop.f32.mrf.mxu0
        %v2117 = vadd.f32 0.0, %v2116
        %v2118 = vpop.f32.mrf.mxu0
        %v2119 = vadd.f32 0.0, %v2118
        %2120 = vmatmul.bf16.gmra.mxu0 %v1995
        %v2121 = vpop.f32.mrf.mxu0
        %v2122 = vadd.f32 0.0, %v2121
        %v2123 = vpop.f32.mrf.mxu0
        %v2124 = vadd.f32 0.0, %v2123
        %2125 = vmatmul.bf16.gmra.mxu0 %v1996
        %v2126 = vpop.f32.mrf.mxu0
        %v2127 = vadd.f32 0.0, %v2126
        %v2128 = vpop.f32.mrf.mxu0
        %v2129 = vadd.f32 0.0, %v2128
        %2130 = vmatmul.bf16.gmra.mxu0 %v1997
        %v2131 = vpop.f32.mrf.mxu0
        %v2132 = vadd.f32 0.0, %v2131
        %v2133 = vpop.f32.mrf.mxu0
        %v2134 = vadd.f32 0.0, %v2133
        %2135 = vmatmul.bf16.gmra.mxu0 %v1998
        %v2136 = vpop.f32.mrf.mxu0
        %v2137 = vadd.f32 0.0, %v2136
        %v2138 = vpop.f32.mrf.mxu0
        %v2139 = vadd.f32 0.0, %v2138
        %2140 = vmatmul.bf16.gmra.mxu0 %v1999
        %v2141 = vpop.f32.mrf.mxu0
        %v2142 = vadd.f32 0.0, %v2141
        %v2143 = vpop.f32.mrf.mxu0
        %v2144 = vadd.f32 0.0, %v2143
        %2145 = vmatmul.bf16.gmra.mxu0 %v2000
        %v2146 = vpop.f32.mrf.mxu0
        %v2147 = vadd.f32 0.0, %v2146
        %v2148 = vpop.f32.mrf.mxu0
        %v2149 = vadd.f32 0.0, %v2148
        %2150 = vmatmul.bf16.gmra.mxu0 %v2001
        %v2151 = vpop.f32.mrf.mxu0
        %v2152 = vadd.f32 0.0, %v2151
        %v2153 = vpop.f32.mrf.mxu0
        %v2154 = vadd.f32 0.0, %v2153
        %2155 = vdwg.mxu0
        %v2156 = vadd.f32 %v1922, %v2077
        %v2157 = vadd.f32 %v1923, %v2079
        %v2158 = vadd.f32 %v1924, %v2082
        %v2159 = vadd.f32 %v1925, %v2084
        %v2160 = vadd.f32 %v1926, %v2087
        %v2161 = vadd.f32 %v1927, %v2089
        %v2162 = vadd.f32 %v1928, %v2092
        %v2163 = vadd.f32 %v1929, %v2094
        %v2164 = vadd.f32 %v1930, %v2097
        %v2165 = vadd.f32 %v1931, %v2099
        %v2166 = vadd.f32 %v1932, %v2102
        %v2167 = vadd.f32 %v1933, %v2104
        %v2168 = vadd.f32 %v1934, %v2107
        %v2169 = vadd.f32 %v1935, %v2109
        %v2170 = vadd.f32 %v1936, %v2112
        %v2171 = vadd.f32 %v1937, %v2114
        %v2172 = vadd.f32 %v1938, %v2117
        %v2173 = vadd.f32 %v1939, %v2119
        %v2174 = vadd.f32 %v1940, %v2122
        %v2175 = vadd.f32 %v1941, %v2124
        %v2176 = vadd.f32 %v1942, %v2127
        %v2177 = vadd.f32 %v1943, %v2129
        %v2178 = vadd.f32 %v1944, %v2132
        %v2179 = vadd.f32 %v1945, %v2134
        %v2180 = vadd.f32 %v1946, %v2137
        %v2181 = vadd.f32 %v1947, %v2139
        %v2182 = vadd.f32 %v1948, %v2142
        %v2183 = vadd.f32 %v1949, %v2144
        %v2184 = vadd.f32 %v1950, %v2147
        %v2185 = vadd.f32 %v1951, %v2149
        %v2186 = vadd.f32 %v1952, %v2152
        %v2187 = vadd.f32 %v1953, %v2154
        %v2188 = vld [vmem:[%s1719 + $0x9] sm:$0xff]
        %v2189 = vld [vmem:[%s1719 + $0x11] sm:$0xff]
        %v2190 = vld [vmem:[%s1719 + $0x29] sm:$0xff]
        %v2191 = vld [vmem:[%s1719 + $0x31] sm:$0xff]
        %v2192 = vld [vmem:[%s1719 + $0x49] sm:$0xff]
        %v2193 = vld [vmem:[%s1719 + $0x51] sm:$0xff]
        %v2194 = vld [vmem:[%s1719 + $0x69] sm:$0xff]
        %v2195 = vld [vmem:[%s1719 + $0x71] sm:$0xff]
        %v2196 = vld [vmem:[%s1719 + $0x89] sm:$0xff]
        %v2197 = vld [vmem:[%s1719 + $0x91] sm:$0xff]
        %v2198 = vld [vmem:[%s1719 + $0xa9] sm:$0xff]
        %v2199 = vld [vmem:[%s1719 + $0xb1] sm:$0xff]
        %v2200 = vld [vmem:[%s1719 + $0xc9] sm:$0xff]
        %v2201 = vld [vmem:[%s1719 + $0xd1] sm:$0xff]
        %v2202 = vld [vmem:[%s1719 + $0xe9] sm:$0xff]
        %v2203 = vld [vmem:[%s1719 + $0xf1] sm:$0xff]
        %v2204 = vld [vmem:[%s1719 + $0x109] sm:$0xff]
        %v2205 = vld [vmem:[%s1719 + $0x111] sm:$0xff]
        %v2206 = vld [vmem:[%s1719 + $0x129] sm:$0xff]
        %v2207 = vld [vmem:[%s1719 + $0x131] sm:$0xff]
        %v2208 = vld [vmem:[%s1719 + $0x149] sm:$0xff]
        %v2209 = vld [vmem:[%s1719 + $0x151] sm:$0xff]
        %v2210 = vld [vmem:[%s1719 + $0x169] sm:$0xff]
        %v2211 = vld [vmem:[%s1719 + $0x171] sm:$0xff]
        %v2212 = vld [vmem:[%s1719 + $0x189] sm:$0xff]
        %v2213 = vld [vmem:[%s1719 + $0x191] sm:$0xff]
        %v2214 = vld [vmem:[%s1719 + $0x1a9] sm:$0xff]
        %v2215 = vld [vmem:[%s1719 + $0x1b1] sm:$0xff]
        %v2216 = vld [vmem:[%s1719 + $0x1c9] sm:$0xff]
        %v2217 = vld [vmem:[%s1719 + $0x1d1] sm:$0xff]
        %v2218 = vld [vmem:[%s1719 + $0x1e9] sm:$0xff]
        %v2219 = vld [vmem:[%s1719 + $0x1f1] sm:$0xff]
        %v2220 = vpack.c.bf16 %v2189, %v2188
        %v2221 = vpack.c.bf16 %v2191, %v2190
        %v2222 = vpack.c.bf16 %v2193, %v2192
        %v2223 = vpack.c.bf16 %v2195, %v2194
        %v2224 = vpack.c.bf16 %v2197, %v2196
        %v2225 = vpack.c.bf16 %v2199, %v2198
        %v2226 = vpack.c.bf16 %v2201, %v2200
        %v2227 = vpack.c.bf16 %v2203, %v2202
        %v2228 = vpack.c.bf16 %v2205, %v2204
        %v2229 = vpack.c.bf16 %v2207, %v2206
        %v2230 = vpack.c.bf16 %v2209, %v2208
        %v2231 = vpack.c.bf16 %v2211, %v2210
        %v2232 = vpack.c.bf16 %v2213, %v2212
        %v2233 = vpack.c.bf16 %v2215, %v2214
        %v2234 = vpack.c.bf16 %v2217, %v2216
        %v2235 = vpack.c.bf16 %v2219, %v2218
        %s2236 = scalar_lea.vmem %s1, 512
        %v2237 = vld [vmem:[%s2236] sm:$0xf]
        %v2238 = vld [vmem:[%s2236 + $0x4] sm:$0xf]
        %v2239 = vld [vmem:[%s2236 + $0x8] sm:$0xf]
        %v2240 = vld [vmem:[%s2236 + $0xc] sm:$0xf]
        %v2241 = vld [vmem:[%s2236 + $0x10] sm:$0xf]
        %v2242 = vld [vmem:[%s2236 + $0x14] sm:$0xf]
        %v2243 = vld [vmem:[%s2236 + $0x18] sm:$0xf]
        %v2244 = vld [vmem:[%s2236 + $0x1c] sm:$0xf]
        %v2245 = vld [vmem:[%s2236 + $0x20] sm:$0xf]
        %v2246 = vld [vmem:[%s2236 + $0x24] sm:$0xf]
        %v2247 = vld [vmem:[%s2236 + $0x28] sm:$0xf]
        %v2248 = vld [vmem:[%s2236 + $0x2c] sm:$0xf]
        %v2249 = vld [vmem:[%s2236 + $0x30] sm:$0xf]
        %v2250 = vld [vmem:[%s2236 + $0x34] sm:$0xf]
        %v2251 = vld [vmem:[%s2236 + $0x38] sm:$0xf]
        %v2252 = vld [vmem:[%s2236 + $0x3c] sm:$0xf]
        %v2269 = vunpack.c.l.b16 %v2237
        %v2270 = vunpack.c.l.b16 %v2238
        %v2271 = vunpack.c.l.b16 %v2239
        %v2272 = vunpack.c.l.b16 %v2240
        %v2273 = vunpack.c.l.b16 %v2241
        %v2274 = vunpack.c.l.b16 %v2242
        %v2275 = vunpack.c.l.b16 %v2243
        %v2276 = vunpack.c.l.b16 %v2244
        %v2277 = vunpack.c.l.b16 %v2245
        %v2278 = vunpack.c.l.b16 %v2246
        %v2279 = vunpack.c.l.b16 %v2247
        %v2280 = vunpack.c.l.b16 %v2248
        %v2281 = vunpack.c.l.b16 %v2249
        %v2282 = vunpack.c.l.b16 %v2250
        %v2283 = vunpack.c.l.b16 %v2251
        %v2284 = vunpack.c.l.b16 %v2252
        %v2285 = vpack.c.b16 %v2270, %v2269
        %v2286 = vpack.c.b16 %v2272, %v2271
        %v2287 = vpack.c.b16 %v2274, %v2273
        %v2288 = vpack.c.b16 %v2276, %v2275
        %v2289 = vpack.c.b16 %v2278, %v2277
        %v2290 = vpack.c.b16 %v2280, %v2279
        %v2291 = vpack.c.b16 %v2282, %v2281
        %v2292 = vpack.c.b16 %v2284, %v2283
        %2301 = vmatpush.bf16.msra.mxu0 %v2292
        %2302 = vmatpush.bf16.msra.mxu0 %v2291
        %2303 = vmatpush.bf16.msra.mxu0 %v2290
        %2304 = vmatpush.bf16.msra.mxu0 %v2289
        %2305 = vmatpush.bf16.msra.mxu0 %v2288
        %2306 = vmatpush.bf16.msra.mxu0 %v2287
        %2307 = vmatpush.bf16.msra.mxu0 %v2286
        %2308 = vmatpush.bf16.msra.mxu0 %v2285
        %2309 = vmatmul.bf16.gmra.mxu0 %v2220
        %v2310 = vpop.f32.mrf.mxu0
        %v2311 = vadd.f32 0.0, %v2310
        %v2312 = vpop.f32.mrf.mxu0
        %v2313 = vadd.f32 0.0, %v2312
        %2314 = vmatmul.bf16.gmra.mxu0 %v2221
        %v2315 = vpop.f32.mrf.mxu0
        %v2316 = vadd.f32 0.0, %v2315
        %v2317 = vpop.f32.mrf.mxu0
        %v2318 = vadd.f32 0.0, %v2317
        %2319 = vmatmul.bf16.gmra.mxu0 %v2222
        %v2320 = vpop.f32.mrf.mxu0
        %v2321 = vadd.f32 0.0, %v2320
        %v2322 = vpop.f32.mrf.mxu0
        %v2323 = vadd.f32 0.0, %v2322
        %2324 = vmatmul.bf16.gmra.mxu0 %v2223
        %v2325 = vpop.f32.mrf.mxu0
        %v2326 = vadd.f32 0.0, %v2325
        %v2327 = vpop.f32.mrf.mxu0
        %v2328 = vadd.f32 0.0, %v2327
        %2329 = vmatmul.bf16.gmra.mxu0 %v2224
        %v2330 = vpop.f32.mrf.mxu0
        %v2331 = vadd.f32 0.0, %v2330
        %v2332 = vpop.f32.mrf.mxu0
        %v2333 = vadd.f32 0.0, %v2332
        %2334 = vmatmul.bf16.gmra.mxu0 %v2225
        %v2335 = vpop.f32.mrf.mxu0
        %v2336 = vadd.f32 0.0, %v2335
        %v2337 = vpop.f32.mrf.mxu0
        %v2338 = vadd.f32 0.0, %v2337
        %2339 = vmatmul.bf16.gmra.mxu0 %v2226
        %v2340 = vpop.f32.mrf.mxu0
        %v2341 = vadd.f32 0.0, %v2340
        %v2342 = vpop.f32.mrf.mxu0
        %v2343 = vadd.f32 0.0, %v2342
        %2344 = vmatmul.bf16.gmra.mxu0 %v2227
        %v2345 = vpop.f32.mrf.mxu0
        %v2346 = vadd.f32 0.0, %v2345
        %v2347 = vpop.f32.mrf.mxu0
        %v2348 = vadd.f32 0.0, %v2347
        %2349 = vmatmul.bf16.gmra.mxu0 %v2228
        %v2350 = vpop.f32.mrf.mxu0
        %v2351 = vadd.f32 0.0, %v2350
        %v2352 = vpop.f32.mrf.mxu0
        %v2353 = vadd.f32 0.0, %v2352
        %2354 = vmatmul.bf16.gmra.mxu0 %v2229
        %v2355 = vpop.f32.mrf.mxu0
        %v2356 = vadd.f32 0.0, %v2355
        %v2357 = vpop.f32.mrf.mxu0
        %v2358 = vadd.f32 0.0, %v2357
        %2359 = vmatmul.bf16.gmra.mxu0 %v2230
        %v2360 = vpop.f32.mrf.mxu0
        %v2361 = vadd.f32 0.0, %v2360
        %v2362 = vpop.f32.mrf.mxu0
        %v2363 = vadd.f32 0.0, %v2362
        %2364 = vmatmul.bf16.gmra.mxu0 %v2231
        %v2365 = vpop.f32.mrf.mxu0
        %v2366 = vadd.f32 0.0, %v2365
        %v2367 = vpop.f32.mrf.mxu0
        %v2368 = vadd.f32 0.0, %v2367
        %2369 = vmatmul.bf16.gmra.mxu0 %v2232
        %v2370 = vpop.f32.mrf.mxu0
        %v2371 = vadd.f32 0.0, %v2370
        %v2372 = vpop.f32.mrf.mxu0
        %v2373 = vadd.f32 0.0, %v2372
        %2374 = vmatmul.bf16.gmra.mxu0 %v2233
        %v2375 = vpop.f32.mrf.mxu0
        %v2376 = vadd.f32 0.0, %v2375
        %v2377 = vpop.f32.mrf.mxu0
        %v2378 = vadd.f32 0.0, %v2377
        %2379 = vmatmul.bf16.gmra.mxu0 %v2234
        %v2380 = vpop.f32.mrf.mxu0
        %v2381 = vadd.f32 0.0, %v2380
        %v2382 = vpop.f32.mrf.mxu0
        %v2383 = vadd.f32 0.0, %v2382
        %2384 = vmatmul.bf16.gmra.mxu0 %v2235
        %v2385 = vpop.f32.mrf.mxu0
        %v2386 = vadd.f32 0.0, %v2385
        %v2387 = vpop.f32.mrf.mxu0
        %v2388 = vadd.f32 0.0, %v2387
        %2389 = vdwg.mxu0
        %v2390 = vadd.f32 %v2156, %v2311
        %v2391 = vadd.f32 %v2157, %v2313
        %v2392 = vadd.f32 %v2158, %v2316
        %v2393 = vadd.f32 %v2159, %v2318
        %v2394 = vadd.f32 %v2160, %v2321
        %v2395 = vadd.f32 %v2161, %v2323
        %v2396 = vadd.f32 %v2162, %v2326
        %v2397 = vadd.f32 %v2163, %v2328
        %v2398 = vadd.f32 %v2164, %v2331
        %v2399 = vadd.f32 %v2165, %v2333
        %v2400 = vadd.f32 %v2166, %v2336
        %v2401 = vadd.f32 %v2167, %v2338
        %v2402 = vadd.f32 %v2168, %v2341
        %v2403 = vadd.f32 %v2169, %v2343
        %v2404 = vadd.f32 %v2170, %v2346
        %v2405 = vadd.f32 %v2171, %v2348
        %v2406 = vadd.f32 %v2172, %v2351
        %v2407 = vadd.f32 %v2173, %v2353
        %v2408 = vadd.f32 %v2174, %v2356
        %v2409 = vadd.f32 %v2175, %v2358
        %v2410 = vadd.f32 %v2176, %v2361
        %v2411 = vadd.f32 %v2177, %v2363
        %v2412 = vadd.f32 %v2178, %v2366
        %v2413 = vadd.f32 %v2179, %v2368
        %v2414 = vadd.f32 %v2180, %v2371
        %v2415 = vadd.f32 %v2181, %v2373
        %v2416 = vadd.f32 %v2182, %v2376
        %v2417 = vadd.f32 %v2183, %v2378
        %v2418 = vadd.f32 %v2184, %v2381
        %v2419 = vadd.f32 %v2185, %v2383
        %v2420 = vadd.f32 %v2186, %v2386
        %v2421 = vadd.f32 %v2187, %v2388
        %v2422 = vld [vmem:[%s2] sm:$0x1]
        %v2424 = vperm.slane %v2422, 0
        %v2426 = vadd.f32 %v2390, %v2424
        %v2427 = vadd.f32 %v2391, %v2424
        %v2428 = vadd.f32 %v2392, %v2424
        %v2429 = vadd.f32 %v2393, %v2424
        %v2430 = vadd.f32 %v2394, %v2424
        %v2431 = vadd.f32 %v2395, %v2424
        %v2432 = vadd.f32 %v2396, %v2424
        %v2433 = vadd.f32 %v2397, %v2424
        %v2434 = vadd.f32 %v2398, %v2424
        %v2435 = vadd.f32 %v2399, %v2424
        %v2436 = vadd.f32 %v2400, %v2424
        %v2437 = vadd.f32 %v2401, %v2424
        %v2438 = vadd.f32 %v2402, %v2424
        %v2439 = vadd.f32 %v2403, %v2424
        %v2440 = vadd.f32 %v2404, %v2424
        %v2441 = vadd.f32 %v2405, %v2424
        %v2442 = vadd.f32 %v2406, %v2424
        %v2443 = vadd.f32 %v2407, %v2424
        %v2444 = vadd.f32 %v2408, %v2424
        %v2445 = vadd.f32 %v2409, %v2424
        %v2446 = vadd.f32 %v2410, %v2424
        %v2447 = vadd.f32 %v2411, %v2424
        %v2448 = vadd.f32 %v2412, %v2424
        %v2449 = vadd.f32 %v2413, %v2424
        %v2450 = vadd.f32 %v2414, %v2424
        %v2451 = vadd.f32 %v2415, %v2424
        %v2452 = vadd.f32 %v2416, %v2424
        %v2453 = vadd.f32 %v2417, %v2424
        %v2454 = vadd.f32 %v2418, %v2424
        %v2455 = vadd.f32 %v2419, %v2424
        %v2456 = vadd.f32 %v2420, %v2424
        %v2457 = vadd.f32 %v2421, %v2424
        %v2458 = vmax.f32 %v2426, 0.0
        %v2459 = vmax.f32 %v2427, 0.0
        %v2460 = vmax.f32 %v2428, 0.0
        %v2461 = vmax.f32 %v2429, 0.0
        %v2462 = vmax.f32 %v2430, 0.0
        %v2463 = vmax.f32 %v2431, 0.0
        %v2464 = vmax.f32 %v2432, 0.0
        %v2465 = vmax.f32 %v2433, 0.0
        %v2466 = vmax.f32 %v2434, 0.0
        %v2467 = vmax.f32 %v2435, 0.0
        %v2468 = vmax.f32 %v2436, 0.0
        %v2469 = vmax.f32 %v2437, 0.0
        %v2470 = vmax.f32 %v2438, 0.0
        %v2471 = vmax.f32 %v2439, 0.0
        %v2472 = vmax.f32 %v2440, 0.0
        %v2473 = vmax.f32 %v2441, 0.0
        %v2474 = vmax.f32 %v2442, 0.0
        %v2475 = vmax.f32 %v2443, 0.0
        %v2476 = vmax.f32 %v2444, 0.0
        %v2477 = vmax.f32 %v2445, 0.0
        %v2478 = vmax.f32 %v2446, 0.0
        %v2479 = vmax.f32 %v2447, 0.0
        %v2480 = vmax.f32 %v2448, 0.0
        %v2481 = vmax.f32 %v2449, 0.0
        %v2482 = vmax.f32 %v2450, 0.0
        %v2483 = vmax.f32 %v2451, 0.0
        %v2484 = vmax.f32 %v2452, 0.0
        %v2485 = vmax.f32 %v2453, 0.0
        %v2486 = vmax.f32 %v2454, 0.0
        %v2487 = vmax.f32 %v2455, 0.0
        %v2488 = vmax.f32 %v2456, 0.0
        %v2489 = vmax.f32 %v2457, 0.0
        %2490 = vst [vmem:[%s346 + $0x8] sm:$0xff] %v2458
        %2491 = vst [vmem:[%s346 + $0x10] sm:$0xff] %v2459
        %2492 = vst [vmem:[%s346 + $0x28] sm:$0xff] %v2460
        %2493 = vst [vmem:[%s346 + $0x30] sm:$0xff] %v2461
        %2494 = vst [vmem:[%s346 + $0x48] sm:$0xff] %v2462
        %2495 = vst [vmem:[%s346 + $0x50] sm:$0xff] %v2463
        %2496 = vst [vmem:[%s346 + $0x68] sm:$0xff] %v2464
        %2497 = vst [vmem:[%s346 + $0x70] sm:$0xff] %v2465
        %2498 = vst [vmem:[%s346 + $0x88] sm:$0xff] %v2466
        %2499 = vst [vmem:[%s346 + $0x90] sm:$0xff] %v2467
        %2500 = vst [vmem:[%s346 + $0xa8] sm:$0xff] %v2468
        %2501 = vst [vmem:[%s346 + $0xb0] sm:$0xff] %v2469
        %2502 = vst [vmem:[%s346 + $0xc8] sm:$0xff] %v2470
        %2503 = vst [vmem:[%s346 + $0xd0] sm:$0xff] %v2471
        %2504 = vst [vmem:[%s346 + $0xe8] sm:$0xff] %v2472
        %2505 = vst [vmem:[%s346 + $0xf0] sm:$0xff] %v2473
        %2506 = vst [vmem:[%s346 + $0x108] sm:$0xff] %v2474
        %2507 = vst [vmem:[%s346 + $0x110] sm:$0xff] %v2475
        %2508 = vst [vmem:[%s346 + $0x128] sm:$0xff] %v2476
        %2509 = vst [vmem:[%s346 + $0x130] sm:$0xff] %v2477
        %2510 = vst [vmem:[%s346 + $0x148] sm:$0xff] %v2478
        %2511 = vst [vmem:[%s346 + $0x150] sm:$0xff] %v2479
        %2512 = vst [vmem:[%s346 + $0x168] sm:$0xff] %v2480
        %2513 = vst [vmem:[%s346 + $0x170] sm:$0xff] %v2481
        %2514 = vst [vmem:[%s346 + $0x188] sm:$0xff] %v2482
        %2515 = vst [vmem:[%s346 + $0x190] sm:$0xff] %v2483
        %2516 = vst [vmem:[%s346 + $0x1a8] sm:$0xff] %v2484
        %2517 = vst [vmem:[%s346 + $0x1b0] sm:$0xff] %v2485
        %2518 = vst [vmem:[%s346 + $0x1c8] sm:$0xff] %v2486
        %2519 = vst [vmem:[%s346 + $0x1d0] sm:$0xff] %v2487
        %2520 = vst [vmem:[%s346 + $0x1e8] sm:$0xff] %v2488
        %2521 = vst [vmem:[%s346 + $0x1f0] sm:$0xff] %v2489
        %v2522 = vld [vmem:[#allocation2 + $0x7] sm:$0xff]
        %v2523 = vld [vmem:[#allocation2 + $0xf] sm:$0xff]
        %v2524 = vld [vmem:[#allocation2 + $0x27] sm:$0xff]
        %v2525 = vld [vmem:[#allocation2 + $0x2f] sm:$0xff]
        %v2526 = vld [vmem:[#allocation2 + $0x47] sm:$0xff]
        %v2527 = vld [vmem:[#allocation2 + $0x4f] sm:$0xff]
        %v2528 = vld [vmem:[#allocation2 + $0x67] sm:$0xff]
        %v2529 = vld [vmem:[#allocation2 + $0x6f] sm:$0xff]
        %v2530 = vld [vmem:[#allocation2 + $0x87] sm:$0xff]
        %v2531 = vld [vmem:[#allocation2 + $0x8f] sm:$0xff]
        %v2532 = vld [vmem:[#allocation2 + $0xa7] sm:$0xff]
        %v2533 = vld [vmem:[#allocation2 + $0xaf] sm:$0xff]
        %v2534 = vld [vmem:[#allocation2 + $0xc7] sm:$0xff]
        %v2535 = vld [vmem:[#allocation2 + $0xcf] sm:$0xff]
        %v2536 = vld [vmem:[#allocation2 + $0xe7] sm:$0xff]
        %v2537 = vld [vmem:[#allocation2 + $0xef] sm:$0xff]
        %v2538 = vld [vmem:[#allocation2 + $0x107] sm:$0xff]
        %v2539 = vld [vmem:[#allocation2 + $0x10f] sm:$0xff]
        %v2540 = vld [vmem:[#allocation2 + $0x127] sm:$0xff]
        %v2541 = vld [vmem:[#allocation2 + $0x12f] sm:$0xff]
        %v2542 = vld [vmem:[#allocation2 + $0x147] sm:$0xff]
        %v2543 = vld [vmem:[#allocation2 + $0x14f] sm:$0xff]
        %v2544 = vld [vmem:[#allocation2 + $0x167] sm:$0xff]
        %v2545 = vld [vmem:[#allocation2 + $0x16f] sm:$0xff]
        %v2546 = vld [vmem:[#allocation2 + $0x187] sm:$0xff]
        %v2547 = vld [vmem:[#allocation2 + $0x18f] sm:$0xff]
        %v2548 = vld [vmem:[#allocation2 + $0x1a7] sm:$0xff]
        %v2549 = vld [vmem:[#allocation2 + $0x1af] sm:$0xff]
        %v2550 = vld [vmem:[#allocation2 + $0x1c7] sm:$0xff]
        %v2551 = vld [vmem:[#allocation2 + $0x1cf] sm:$0xff]
        %v2552 = vld [vmem:[#allocation2 + $0x1e7] sm:$0xff]
        %v2553 = vld [vmem:[#allocation2 + $0x1ef] sm:$0xff]
        %v2554 = vpack.c.bf16 %v2523, %v2522
        %v2555 = vpack.c.bf16 %v2525, %v2524
        %v2556 = vpack.c.bf16 %v2527, %v2526
        %v2557 = vpack.c.bf16 %v2529, %v2528
        %v2558 = vpack.c.bf16 %v2531, %v2530
        %v2559 = vpack.c.bf16 %v2533, %v2532
        %v2560 = vpack.c.bf16 %v2535, %v2534
        %v2561 = vpack.c.bf16 %v2537, %v2536
        %v2562 = vpack.c.bf16 %v2539, %v2538
        %v2563 = vpack.c.bf16 %v2541, %v2540
        %v2564 = vpack.c.bf16 %v2543, %v2542
        %v2565 = vpack.c.bf16 %v2545, %v2544
        %v2566 = vpack.c.bf16 %v2547, %v2546
        %v2567 = vpack.c.bf16 %v2549, %v2548
        %v2568 = vpack.c.bf16 %v2551, %v2550
        %v2569 = vpack.c.bf16 %v2553, %v2552
        %v2570 = vld [vmem:[#allocation3] sm:$0xf]
        %v2571 = vld [vmem:[#allocation3 + $0x4] sm:$0xf]
        %v2572 = vld [vmem:[#allocation3 + $0x8] sm:$0xf]
        %v2573 = vld [vmem:[#allocation3 + $0xc] sm:$0xf]
        %v2574 = vld [vmem:[#allocation3 + $0x10] sm:$0xf]
        %v2575 = vld [vmem:[#allocation3 + $0x14] sm:$0xf]
        %v2576 = vld [vmem:[#allocation3 + $0x18] sm:$0xf]
        %v2577 = vld [vmem:[#allocation3 + $0x1c] sm:$0xf]
        %v2578 = vld [vmem:[#allocation3 + $0x20] sm:$0xf]
        %v2579 = vld [vmem:[#allocation3 + $0x24] sm:$0xf]
        %v2580 = vld [vmem:[#allocation3 + $0x28] sm:$0xf]
        %v2581 = vld [vmem:[#allocation3 + $0x2c] sm:$0xf]
        %v2582 = vld [vmem:[#allocation3 + $0x30] sm:$0xf]
        %v2583 = vld [vmem:[#allocation3 + $0x34] sm:$0xf]
        %v2584 = vld [vmem:[#allocation3 + $0x38] sm:$0xf]
        %v2585 = vld [vmem:[#allocation3 + $0x3c] sm:$0xf]
        %v2586 = vld [vmem:[#allocation2 + $0x8] sm:$0xff]
        %v2587 = vld [vmem:[#allocation2 + $0x10] sm:$0xff]
        %v2588 = vld [vmem:[#allocation2 + $0x28] sm:$0xff]
        %v2589 = vld [vmem:[#allocation2 + $0x30] sm:$0xff]
        %v2590 = vld [vmem:[#allocation2 + $0x48] sm:$0xff]
        %v2591 = vld [vmem:[#allocation2 + $0x50] sm:$0xff]
        %v2592 = vld [vmem:[#allocation2 + $0x68] sm:$0xff]
        %v2593 = vld [vmem:[#allocation2 + $0x70] sm:$0xff]
        %v2594 = vld [vmem:[#allocation2 + $0x88] sm:$0xff]
        %v2595 = vld [vmem:[#allocation2 + $0x90] sm:$0xff]
        %v2596 = vld [vmem:[#allocation2 + $0xa8] sm:$0xff]
        %v2597 = vld [vmem:[#allocation2 + $0xb0] sm:$0xff]
        %v2598 = vld [vmem:[#allocation2 + $0xc8] sm:$0xff]
        %v2599 = vld [vmem:[#allocation2 + $0xd0] sm:$0xff]
        %v2600 = vld [vmem:[#allocation2 + $0xe8] sm:$0xff]
        %v2601 = vld [vmem:[#allocation2 + $0xf0] sm:$0xff]
        %v2602 = vld [vmem:[#allocation2 + $0x108] sm:$0xff]
        %v2603 = vld [vmem:[#allocation2 + $0x110] sm:$0xff]
        %v2604 = vld [vmem:[#allocation2 + $0x128] sm:$0xff]
        %v2605 = vld [vmem:[#allocation2 + $0x130] sm:$0xff]
        %v2606 = vld [vmem:[#allocation2 + $0x148] sm:$0xff]
        %v2607 = vld [vmem:[#allocation2 + $0x150] sm:$0xff]
        %v2608 = vld [vmem:[#allocation2 + $0x168] sm:$0xff]
        %v2609 = vld [vmem:[#allocation2 + $0x170] sm:$0xff]
        %v2610 = vld [vmem:[#allocation2 + $0x188] sm:$0xff]
        %v2611 = vld [vmem:[#allocation2 + $0x190] sm:$0xff]
        %v2612 = vld [vmem:[#allocation2 + $0x1a8] sm:$0xff]
        %v2613 = vld [vmem:[#allocation2 + $0x1b0] sm:$0xff]
        %v2614 = vld [vmem:[#allocation2 + $0x1c8] sm:$0xff]
        %v2615 = vld [vmem:[#allocation2 + $0x1d0] sm:$0xff]
        %v2616 = vld [vmem:[#allocation2 + $0x1e8] sm:$0xff]
        %v2617 = vld [vmem:[#allocation2 + $0x1f0] sm:$0xff]
        %v2618 = vpack.c.bf16 %v2587, %v2586
        %v2619 = vpack.c.bf16 %v2589, %v2588
        %v2620 = vpack.c.bf16 %v2591, %v2590
        %v2621 = vpack.c.bf16 %v2593, %v2592
        %v2622 = vpack.c.bf16 %v2595, %v2594
        %v2623 = vpack.c.bf16 %v2597, %v2596
        %v2624 = vpack.c.bf16 %v2599, %v2598
        %v2625 = vpack.c.bf16 %v2601, %v2600
        %v2626 = vpack.c.bf16 %v2603, %v2602
        %v2627 = vpack.c.bf16 %v2605, %v2604
        %v2628 = vpack.c.bf16 %v2607, %v2606
        %v2629 = vpack.c.bf16 %v2609, %v2608
        %v2630 = vpack.c.bf16 %v2611, %v2610
        %v2631 = vpack.c.bf16 %v2613, %v2612
        %v2632 = vpack.c.bf16 %v2615, %v2614
        %v2633 = vpack.c.bf16 %v2617, %v2616
        %s2634 = scalar_lea.vmem [#allocation3], 64
        %v2635 = vld [vmem:[%s2634] sm:$0xf]
        %v2636 = vld [vmem:[%s2634 + $0x4] sm:$0xf]
        %v2637 = vld [vmem:[%s2634 + $0x8] sm:$0xf]
        %v2638 = vld [vmem:[%s2634 + $0xc] sm:$0xf]
        %v2639 = vld [vmem:[%s2634 + $0x10] sm:$0xf]
        %v2640 = vld [vmem:[%s2634 + $0x14] sm:$0xf]
        %v2641 = vld [vmem:[%s2634 + $0x18] sm:$0xf]
        %v2642 = vld [vmem:[%s2634 + $0x1c] sm:$0xf]
        %v2643 = vld [vmem:[%s2634 + $0x20] sm:$0xf]
        %v2644 = vld [vmem:[%s2634 + $0x24] sm:$0xf]
        %v2645 = vld [vmem:[%s2634 + $0x28] sm:$0xf]
        %v2646 = vld [vmem:[%s2634 + $0x2c] sm:$0xf]
        %v2647 = vld [vmem:[%s2634 + $0x30] sm:$0xf]
        %v2648 = vld [vmem:[%s2634 + $0x34] sm:$0xf]
        %v2649 = vld [vmem:[%s2634 + $0x38] sm:$0xf]
        %v2650 = vld [vmem:[%s2634 + $0x3c] sm:$0xf]
        %v2667 = vunpack.c.l.b16 %v2635
        %v2668 = vunpack.c.l.b16 %v2636
        %v2669 = vunpack.c.l.b16 %v2637
        %v2670 = vunpack.c.l.b16 %v2638
        %v2671 = vunpack.c.l.b16 %v2639
        %v2672 = vunpack.c.l.b16 %v2640
        %v2673 = vunpack.c.l.b16 %v2641
        %v2674 = vunpack.c.l.b16 %v2642
        %v2675 = vunpack.c.l.b16 %v2643
        %v2676 = vunpack.c.l.b16 %v2644
        %v2677 = vunpack.c.l.b16 %v2645
        %v2678 = vunpack.c.l.b16 %v2646
        %v2679 = vunpack.c.l.b16 %v2647
        %v2680 = vunpack.c.l.b16 %v2648
        %v2681 = vunpack.c.l.b16 %v2649
        %v2682 = vunpack.c.l.b16 %v2650
        %v2683 = vpack.c.b16 %v2668, %v2667
        %v2684 = vpack.c.b16 %v2670, %v2669
        %v2685 = vpack.c.b16 %v2672, %v2671
        %v2686 = vpack.c.b16 %v2674, %v2673
        %v2687 = vpack.c.b16 %v2676, %v2675
        %v2688 = vpack.c.b16 %v2678, %v2677
        %v2689 = vpack.c.b16 %v2680, %v2679
        %v2690 = vpack.c.b16 %v2682, %v2681
        %2699 = vmatpush.bf16.msra.mxu0 %v2690
        %2700 = vmatpush.bf16.msra.mxu0 %v2689
        %2701 = vmatpush.bf16.msra.mxu0 %v2688
        %2702 = vmatpush.bf16.msra.mxu0 %v2687
        %2703 = vmatpush.bf16.msra.mxu0 %v2686
        %2704 = vmatpush.bf16.msra.mxu0 %v2685
        %2705 = vmatpush.bf16.msra.mxu0 %v2684
        %2706 = vmatpush.bf16.msra.mxu0 %v2683
        %2707 = vmatmul.bf16.gmra.mxu0 %v2618
        %v2708 = vpop.f32.mrf.mxu0
        %v2709 = vadd.f32 0.0, %v2708
        %v2710 = vpop.f32.mrf.mxu0
        %v2711 = vadd.f32 0.0, %v2710
        %2712 = vmatmul.bf16.gmra.mxu0 %v2619
        %v2713 = vpop.f32.mrf.mxu0
        %v2714 = vadd.f32 0.0, %v2713
        %v2715 = vpop.f32.mrf.mxu0
        %v2716 = vadd.f32 0.0, %v2715
        %2717 = vmatmul.bf16.gmra.mxu0 %v2620
        %v2718 = vpop.f32.mrf.mxu0
        %v2719 = vadd.f32 0.0, %v2718
        %v2720 = vpop.f32.mrf.mxu0
        %v2721 = vadd.f32 0.0, %v2720
        %2722 = vmatmul.bf16.gmra.mxu0 %v2621
        %v2723 = vpop.f32.mrf.mxu0
        %v2724 = vadd.f32 0.0, %v2723
        %v2725 = vpop.f32.mrf.mxu0
        %v2726 = vadd.f32 0.0, %v2725
        %2727 = vmatmul.bf16.gmra.mxu0 %v2622
        %v2728 = vpop.f32.mrf.mxu0
        %v2729 = vadd.f32 0.0, %v2728
        %v2730 = vpop.f32.mrf.mxu0
        %v2731 = vadd.f32 0.0, %v2730
        %2732 = vmatmul.bf16.gmra.mxu0 %v2623
        %v2733 = vpop.f32.mrf.mxu0
        %v2734 = vadd.f32 0.0, %v2733
        %v2735 = vpop.f32.mrf.mxu0
        %v2736 = vadd.f32 0.0, %v2735
        %2737 = vmatmul.bf16.gmra.mxu0 %v2624
        %v2738 = vpop.f32.mrf.mxu0
        %v2739 = vadd.f32 0.0, %v2738
        %v2740 = vpop.f32.mrf.mxu0
        %v2741 = vadd.f32 0.0, %v2740
        %2742 = vmatmul.bf16.gmra.mxu0 %v2625
        %v2743 = vpop.f32.mrf.mxu0
        %v2744 = vadd.f32 0.0, %v2743
        %v2745 = vpop.f32.mrf.mxu0
        %v2746 = vadd.f32 0.0, %v2745
        %2747 = vmatmul.bf16.gmra.mxu0 %v2626
        %v2748 = vpop.f32.mrf.mxu0
        %v2749 = vadd.f32 0.0, %v2748
        %v2750 = vpop.f32.mrf.mxu0
        %v2751 = vadd.f32 0.0, %v2750
        %2752 = vmatmul.bf16.gmra.mxu0 %v2627
        %v2753 = vpop.f32.mrf.mxu0
        %v2754 = vadd.f32 0.0, %v2753
        %v2755 = vpop.f32.mrf.mxu0
        %v2756 = vadd.f32 0.0, %v2755
        %2757 = vmatmul.bf16.gmra.mxu0 %v2628
        %v2758 = vpop.f32.mrf.mxu0
        %v2759 = vadd.f32 0.0, %v2758
        %v2760 = vpop.f32.mrf.mxu0
        %v2761 = vadd.f32 0.0, %v2760
        %2762 = vmatmul.bf16.gmra.mxu0 %v2629
        %v2763 = vpop.f32.mrf.mxu0
        %v2764 = vadd.f32 0.0, %v2763
        %v2765 = vpop.f32.mrf.mxu0
        %v2766 = vadd.f32 0.0, %v2765
        %2767 = vmatmul.bf16.gmra.mxu0 %v2630
        %v2768 = vpop.f32.mrf.mxu0
        %v2769 = vadd.f32 0.0, %v2768
        %v2770 = vpop.f32.mrf.mxu0
        %v2771 = vadd.f32 0.0, %v2770
        %2772 = vmatmul.bf16.gmra.mxu0 %v2631
        %v2773 = vpop.f32.mrf.mxu0
        %v2774 = vadd.f32 0.0, %v2773
        %v2775 = vpop.f32.mrf.mxu0
        %v2776 = vadd.f32 0.0, %v2775
        %2777 = vmatmul.bf16.gmra.mxu0 %v2632
        %v2778 = vpop.f32.mrf.mxu0
        %v2779 = vadd.f32 0.0, %v2778
        %v2780 = vpop.f32.mrf.mxu0
        %v2781 = vadd.f32 0.0, %v2780
        %2782 = vmatmul.bf16.gmra.mxu0 %v2633
        %v2783 = vpop.f32.mrf.mxu0
        %v2784 = vadd.f32 0.0, %v2783
        %v2785 = vpop.f32.mrf.mxu0
        %v2786 = vadd.f32 0.0, %v2785
        %2787 = vdwg.mxu0
        %v2804 = vunpack.c.l.b16 %v2570
        %v2805 = vunpack.c.l.b16 %v2571
        %v2806 = vunpack.c.l.b16 %v2572
        %v2807 = vunpack.c.l.b16 %v2573
        %v2808 = vunpack.c.l.b16 %v2574
        %v2809 = vunpack.c.l.b16 %v2575
        %v2810 = vunpack.c.l.b16 %v2576
        %v2811 = vunpack.c.l.b16 %v2577
        %v2812 = vunpack.c.l.b16 %v2578
        %v2813 = vunpack.c.l.b16 %v2579
        %v2814 = vunpack.c.l.b16 %v2580
        %v2815 = vunpack.c.l.b16 %v2581
        %v2816 = vunpack.c.l.b16 %v2582
        %v2817 = vunpack.c.l.b16 %v2583
        %v2818 = vunpack.c.l.b16 %v2584
        %v2819 = vunpack.c.l.b16 %v2585
        %v2820 = vpack.c.b16 %v2805, %v2804
        %v2821 = vpack.c.b16 %v2807, %v2806
        %v2822 = vpack.c.b16 %v2809, %v2808
        %v2823 = vpack.c.b16 %v2811, %v2810
        %v2824 = vpack.c.b16 %v2813, %v2812
        %v2825 = vpack.c.b16 %v2815, %v2814
        %v2826 = vpack.c.b16 %v2817, %v2816
        %v2827 = vpack.c.b16 %v2819, %v2818
        %2836 = vmatpush.bf16.msra.mxu0 %v2827
        %2837 = vmatpush.bf16.msra.mxu0 %v2826
        %2838 = vmatpush.bf16.msra.mxu0 %v2825
        %2839 = vmatpush.bf16.msra.mxu0 %v2824
        %2840 = vmatpush.bf16.msra.mxu0 %v2823
        %2841 = vmatpush.bf16.msra.mxu0 %v2822
        %2842 = vmatpush.bf16.msra.mxu0 %v2821
        %2843 = vmatpush.bf16.msra.mxu0 %v2820
        %2844 = vmatmul.bf16.gmra.mxu0 %v2554
        %v2845 = vpop.f32.mrf.mxu0
        %v2846 = vadd.f32 %v2709, %v2845
        %v2847 = vpop.f32.mrf.mxu0
        %v2848 = vadd.f32 %v2711, %v2847
        %2849 = vmatmul.bf16.gmra.mxu0 %v2555
        %v2850 = vpop.f32.mrf.mxu0
        %v2851 = vadd.f32 %v2714, %v2850
        %v2852 = vpop.f32.mrf.mxu0
        %v2853 = vadd.f32 %v2716, %v2852
        %2854 = vmatmul.bf16.gmra.mxu0 %v2556
        %v2855 = vpop.f32.mrf.mxu0
        %v2856 = vadd.f32 %v2719, %v2855
        %v2857 = vpop.f32.mrf.mxu0
        %v2858 = vadd.f32 %v2721, %v2857
        %2859 = vmatmul.bf16.gmra.mxu0 %v2557
        %v2860 = vpop.f32.mrf.mxu0
        %v2861 = vadd.f32 %v2724, %v2860
        %v2862 = vpop.f32.mrf.mxu0
        %v2863 = vadd.f32 %v2726, %v2862
        %2864 = vmatmul.bf16.gmra.mxu0 %v2558
        %v2865 = vpop.f32.mrf.mxu0
        %v2866 = vadd.f32 %v2729, %v2865
        %v2867 = vpop.f32.mrf.mxu0
        %v2868 = vadd.f32 %v2731, %v2867
        %2869 = vmatmul.bf16.gmra.mxu0 %v2559
        %v2870 = vpop.f32.mrf.mxu0
        %v2871 = vadd.f32 %v2734, %v2870
        %v2872 = vpop.f32.mrf.mxu0
        %v2873 = vadd.f32 %v2736, %v2872
        %2874 = vmatmul.bf16.gmra.mxu0 %v2560
        %v2875 = vpop.f32.mrf.mxu0
        %v2876 = vadd.f32 %v2739, %v2875
        %v2877 = vpop.f32.mrf.mxu0
        %v2878 = vadd.f32 %v2741, %v2877
        %2879 = vmatmul.bf16.gmra.mxu0 %v2561
        %v2880 = vpop.f32.mrf.mxu0
        %v2881 = vadd.f32 %v2744, %v2880
        %v2882 = vpop.f32.mrf.mxu0
        %v2883 = vadd.f32 %v2746, %v2882
        %2884 = vmatmul.bf16.gmra.mxu0 %v2562
        %v2885 = vpop.f32.mrf.mxu0
        %v2886 = vadd.f32 %v2749, %v2885
        %v2887 = vpop.f32.mrf.mxu0
        %v2888 = vadd.f32 %v2751, %v2887
        %2889 = vmatmul.bf16.gmra.mxu0 %v2563
        %v2890 = vpop.f32.mrf.mxu0
        %v2891 = vadd.f32 %v2754, %v2890
        %v2892 = vpop.f32.mrf.mxu0
        %v2893 = vadd.f32 %v2756, %v2892
        %2894 = vmatmul.bf16.gmra.mxu0 %v2564
        %v2895 = vpop.f32.mrf.mxu0
        %v2896 = vadd.f32 %v2759, %v2895
        %v2897 = vpop.f32.mrf.mxu0
        %v2898 = vadd.f32 %v2761, %v2897
        %2899 = vmatmul.bf16.gmra.mxu0 %v2565
        %v2900 = vpop.f32.mrf.mxu0
        %v2901 = vadd.f32 %v2764, %v2900
        %v2902 = vpop.f32.mrf.mxu0
        %v2903 = vadd.f32 %v2766, %v2902
        %2904 = vmatmul.bf16.gmra.mxu0 %v2566
        %v2905 = vpop.f32.mrf.mxu0
        %v2906 = vadd.f32 %v2769, %v2905
        %v2907 = vpop.f32.mrf.mxu0
        %v2908 = vadd.f32 %v2771, %v2907
        %2909 = vmatmul.bf16.gmra.mxu0 %v2567
        %v2910 = vpop.f32.mrf.mxu0
        %v2911 = vadd.f32 %v2774, %v2910
        %v2912 = vpop.f32.mrf.mxu0
        %v2913 = vadd.f32 %v2776, %v2912
        %2914 = vmatmul.bf16.gmra.mxu0 %v2568
        %v2915 = vpop.f32.mrf.mxu0
        %v2916 = vadd.f32 %v2779, %v2915
        %v2917 = vpop.f32.mrf.mxu0
        %v2918 = vadd.f32 %v2781, %v2917
        %2919 = vmatmul.bf16.gmra.mxu0 %v2569
        %v2920 = vpop.f32.mrf.mxu0
        %v2921 = vadd.f32 %v2784, %v2920
        %v2922 = vpop.f32.mrf.mxu0
        %v2923 = vadd.f32 %v2786, %v2922
        %2924 = vdwg.mxu0
        %v2925 = vld [vmem:[#allocation2 + $0x9] sm:$0xff]
        %v2926 = vld [vmem:[#allocation2 + $0x11] sm:$0xff]
        %v2927 = vld [vmem:[#allocation2 + $0x29] sm:$0xff]
        %v2928 = vld [vmem:[#allocation2 + $0x31] sm:$0xff]
        %v2929 = vld [vmem:[#allocation2 + $0x49] sm:$0xff]
        %v2930 = vld [vmem:[#allocation2 + $0x51] sm:$0xff]
        %v2931 = vld [vmem:[#allocation2 + $0x69] sm:$0xff]
        %v2932 = vld [vmem:[#allocation2 + $0x71] sm:$0xff]
        %v2933 = vld [vmem:[#allocation2 + $0x89] sm:$0xff]
        %v2934 = vld [vmem:[#allocation2 + $0x91] sm:$0xff]
        %v2935 = vld [vmem:[#allocation2 + $0xa9] sm:$0xff]
        %v2936 = vld [vmem:[#allocation2 + $0xb1] sm:$0xff]
        %v2937 = vld [vmem:[#allocation2 + $0xc9] sm:$0xff]
        %v2938 = vld [vmem:[#allocation2 + $0xd1] sm:$0xff]
        %v2939 = vld [vmem:[#allocation2 + $0xe9] sm:$0xff]
        %v2940 = vld [vmem:[#allocation2 + $0xf1] sm:$0xff]
        %v2941 = vld [vmem:[#allocation2 + $0x109] sm:$0xff]
        %v2942 = vld [vmem:[#allocation2 + $0x111] sm:$0xff]
        %v2943 = vld [vmem:[#allocation2 + $0x129] sm:$0xff]
        %v2944 = vld [vmem:[#allocation2 + $0x131] sm:$0xff]
        %v2945 = vld [vmem:[#allocation2 + $0x149] sm:$0xff]
        %v2946 = vld [vmem:[#allocation2 + $0x151] sm:$0xff]
        %v2947 = vld [vmem:[#allocation2 + $0x169] sm:$0xff]
        %v2948 = vld [vmem:[#allocation2 + $0x171] sm:$0xff]
        %v2949 = vld [vmem:[#allocation2 + $0x189] sm:$0xff]
        %v2950 = vld [vmem:[#allocation2 + $0x191] sm:$0xff]
        %v2951 = vld [vmem:[#allocation2 + $0x1a9] sm:$0xff]
        %v2952 = vld [vmem:[#allocation2 + $0x1b1] sm:$0xff]
        %v2953 = vld [vmem:[#allocation2 + $0x1c9] sm:$0xff]
        %v2954 = vld [vmem:[#allocation2 + $0x1d1] sm:$0xff]
        %v2955 = vld [vmem:[#allocation2 + $0x1e9] sm:$0xff]
        %v2956 = vld [vmem:[#allocation2 + $0x1f1] sm:$0xff]
        %v2957 = vpack.c.bf16 %v2926, %v2925
        %v2958 = vpack.c.bf16 %v2928, %v2927
        %v2959 = vpack.c.bf16 %v2930, %v2929
        %v2960 = vpack.c.bf16 %v2932, %v2931
        %v2961 = vpack.c.bf16 %v2934, %v2933
        %v2962 = vpack.c.bf16 %v2936, %v2935
        %v2963 = vpack.c.bf16 %v2938, %v2937
        %v2964 = vpack.c.bf16 %v2940, %v2939
        %v2965 = vpack.c.bf16 %v2942, %v2941
        %v2966 = vpack.c.bf16 %v2944, %v2943
        %v2967 = vpack.c.bf16 %v2946, %v2945
        %v2968 = vpack.c.bf16 %v2948, %v2947
        %v2969 = vpack.c.bf16 %v2950, %v2949
        %v2970 = vpack.c.bf16 %v2952, %v2951
        %v2971 = vpack.c.bf16 %v2954, %v2953
        %v2972 = vpack.c.bf16 %v2956, %v2955
        %s2973 = scalar_lea.vmem [#allocation3], 128
        %v2974 = vld [vmem:[%s2973] sm:$0xf]
        %v2975 = vld [vmem:[%s2973 + $0x4] sm:$0xf]
        %v2976 = vld [vmem:[%s2973 + $0x8] sm:$0xf]
        %v2977 = vld [vmem:[%s2973 + $0xc] sm:$0xf]
        %v2978 = vld [vmem:[%s2973 + $0x10] sm:$0xf]
        %v2979 = vld [vmem:[%s2973 + $0x14] sm:$0xf]
        %v2980 = vld [vmem:[%s2973 + $0x18] sm:$0xf]
        %v2981 = vld [vmem:[%s2973 + $0x1c] sm:$0xf]
        %v2982 = vld [vmem:[%s2973 + $0x20] sm:$0xf]
        %v2983 = vld [vmem:[%s2973 + $0x24] sm:$0xf]
        %v2984 = vld [vmem:[%s2973 + $0x28] sm:$0xf]
        %v2985 = vld [vmem:[%s2973 + $0x2c] sm:$0xf]
        %v2986 = vld [vmem:[%s2973 + $0x30] sm:$0xf]
        %v2987 = vld [vmem:[%s2973 + $0x34] sm:$0xf]
        %v2988 = vld [vmem:[%s2973 + $0x38] sm:$0xf]
        %v2989 = vld [vmem:[%s2973 + $0x3c] sm:$0xf]
        %v3006 = vunpack.c.l.b16 %v2974
        %v3007 = vunpack.c.l.b16 %v2975
        %v3008 = vunpack.c.l.b16 %v2976
        %v3009 = vunpack.c.l.b16 %v2977
        %v3010 = vunpack.c.l.b16 %v2978
        %v3011 = vunpack.c.l.b16 %v2979
        %v3012 = vunpack.c.l.b16 %v2980
        %v3013 = vunpack.c.l.b16 %v2981
        %v3014 = vunpack.c.l.b16 %v2982
        %v3015 = vunpack.c.l.b16 %v2983
        %v3016 = vunpack.c.l.b16 %v2984
        %v3017 = vunpack.c.l.b16 %v2985
        %v3018 = vunpack.c.l.b16 %v2986
        %v3019 = vunpack.c.l.b16 %v2987
        %v3020 = vunpack.c.l.b16 %v2988
        %v3021 = vunpack.c.l.b16 %v2989
        %v3022 = vpack.c.b16 %v3007, %v3006
        %v3023 = vpack.c.b16 %v3009, %v3008
        %v3024 = vpack.c.b16 %v3011, %v3010
        %v3025 = vpack.c.b16 %v3013, %v3012
        %v3026 = vpack.c.b16 %v3015, %v3014
        %v3027 = vpack.c.b16 %v3017, %v3016
        %v3028 = vpack.c.b16 %v3019, %v3018
        %v3029 = vpack.c.b16 %v3021, %v3020
        %3038 = vmatpush.bf16.msra.mxu0 %v3029
        %3039 = vmatpush.bf16.msra.mxu0 %v3028
        %3040 = vmatpush.bf16.msra.mxu0 %v3027
        %3041 = vmatpush.bf16.msra.mxu0 %v3026
        %3042 = vmatpush.bf16.msra.mxu0 %v3025
        %3043 = vmatpush.bf16.msra.mxu0 %v3024
        %3044 = vmatpush.bf16.msra.mxu0 %v3023
        %3045 = vmatpush.bf16.msra.mxu0 %v3022
        %3046 = vmatmul.bf16.gmra.mxu0 %v2957
        %v3047 = vpop.f32.mrf.mxu0
        %v3048 = vadd.f32 0.0, %v3047
        %v3049 = vpop.f32.mrf.mxu0
        %v3050 = vadd.f32 0.0, %v3049
        %3051 = vmatmul.bf16.gmra.mxu0 %v2958
        %v3052 = vpop.f32.mrf.mxu0
        %v3053 = vadd.f32 0.0, %v3052
        %v3054 = vpop.f32.mrf.mxu0
        %v3055 = vadd.f32 0.0, %v3054
        %3056 = vmatmul.bf16.gmra.mxu0 %v2959
        %v3057 = vpop.f32.mrf.mxu0
        %v3058 = vadd.f32 0.0, %v3057
        %v3059 = vpop.f32.mrf.mxu0
        %v3060 = vadd.f32 0.0, %v3059
        %3061 = vmatmul.bf16.gmra.mxu0 %v2960
        %v3062 = vpop.f32.mrf.mxu0
        %v3063 = vadd.f32 0.0, %v3062
        %v3064 = vpop.f32.mrf.mxu0
        %v3065 = vadd.f32 0.0, %v3064
        %3066 = vmatmul.bf16.gmra.mxu0 %v2961
        %v3067 = vpop.f32.mrf.mxu0
        %v3068 = vadd.f32 0.0, %v3067
        %v3069 = vpop.f32.mrf.mxu0
        %v3070 = vadd.f32 0.0, %v3069
        %3071 = vmatmul.bf16.gmra.mxu0 %v2962
        %v3072 = vpop.f32.mrf.mxu0
        %v3073 = vadd.f32 0.0, %v3072
        %v3074 = vpop.f32.mrf.mxu0
        %v3075 = vadd.f32 0.0, %v3074
        %3076 = vmatmul.bf16.gmra.mxu0 %v2963
        %v3077 = vpop.f32.mrf.mxu0
        %v3078 = vadd.f32 0.0, %v3077
        %v3079 = vpop.f32.mrf.mxu0
        %v3080 = vadd.f32 0.0, %v3079
        %3081 = vmatmul.bf16.gmra.mxu0 %v2964
        %v3082 = vpop.f32.mrf.mxu0
        %v3083 = vadd.f32 0.0, %v3082
        %v3084 = vpop.f32.mrf.mxu0
        %v3085 = vadd.f32 0.0, %v3084
        %3086 = vmatmul.bf16.gmra.mxu0 %v2965
        %v3087 = vpop.f32.mrf.mxu0
        %v3088 = vadd.f32 0.0, %v3087
        %v3089 = vpop.f32.mrf.mxu0
        %v3090 = vadd.f32 0.0, %v3089
        %3091 = vmatmul.bf16.gmra.mxu0 %v2966
        %v3092 = vpop.f32.mrf.mxu0
        %v3093 = vadd.f32 0.0, %v3092
        %v3094 = vpop.f32.mrf.mxu0
        %v3095 = vadd.f32 0.0, %v3094
        %3096 = vmatmul.bf16.gmra.mxu0 %v2967
        %v3097 = vpop.f32.mrf.mxu0
        %v3098 = vadd.f32 0.0, %v3097
        %v3099 = vpop.f32.mrf.mxu0
        %v3100 = vadd.f32 0.0, %v3099
        %3101 = vmatmul.bf16.gmra.mxu0 %v2968
        %v3102 = vpop.f32.mrf.mxu0
        %v3103 = vadd.f32 0.0, %v3102
        %v3104 = vpop.f32.mrf.mxu0
        %v3105 = vadd.f32 0.0, %v3104
        %3106 = vmatmul.bf16.gmra.mxu0 %v2969
        %v3107 = vpop.f32.mrf.mxu0
        %v3108 = vadd.f32 0.0, %v3107
        %v3109 = vpop.f32.mrf.mxu0
        %v3110 = vadd.f32 0.0, %v3109
        %3111 = vmatmul.bf16.gmra.mxu0 %v2970
        %v3112 = vpop.f32.mrf.mxu0
        %v3113 = vadd.f32 0.0, %v3112
        %v3114 = vpop.f32.mrf.mxu0
        %v3115 = vadd.f32 0.0, %v3114
        %3116 = vmatmul.bf16.gmra.mxu0 %v2971
        %v3117 = vpop.f32.mrf.mxu0
        %v3118 = vadd.f32 0.0, %v3117
        %v3119 = vpop.f32.mrf.mxu0
        %v3120 = vadd.f32 0.0, %v3119
        %3121 = vmatmul.bf16.gmra.mxu0 %v2972
        %v3122 = vpop.f32.mrf.mxu0
        %v3123 = vadd.f32 0.0, %v3122
        %v3124 = vpop.f32.mrf.mxu0
        %v3125 = vadd.f32 0.0, %v3124
        %3126 = vdwg.mxu0
        %v3127 = vadd.f32 %v2846, %v3048
        %v3128 = vadd.f32 %v2848, %v3050
        %v3129 = vadd.f32 %v2851, %v3053
        %v3130 = vadd.f32 %v2853, %v3055
        %v3131 = vadd.f32 %v2856, %v3058
        %v3132 = vadd.f32 %v2858, %v3060
        %v3133 = vadd.f32 %v2861, %v3063
        %v3134 = vadd.f32 %v2863, %v3065
        %v3135 = vadd.f32 %v2866, %v3068
        %v3136 = vadd.f32 %v2868, %v3070
        %v3137 = vadd.f32 %v2871, %v3073
        %v3138 = vadd.f32 %v2873, %v3075
        %v3139 = vadd.f32 %v2876, %v3078
        %v3140 = vadd.f32 %v2878, %v3080
        %v3141 = vadd.f32 %v2881, %v3083
        %v3142 = vadd.f32 %v2883, %v3085
        %v3143 = vadd.f32 %v2886, %v3088
        %v3144 = vadd.f32 %v2888, %v3090
        %v3145 = vadd.f32 %v2891, %v3093
        %v3146 = vadd.f32 %v2893, %v3095
        %v3147 = vadd.f32 %v2896, %v3098
        %v3148 = vadd.f32 %v2898, %v3100
        %v3149 = vadd.f32 %v2901, %v3103
        %v3150 = vadd.f32 %v2903, %v3105
        %v3151 = vadd.f32 %v2906, %v3108
        %v3152 = vadd.f32 %v2908, %v3110
        %v3153 = vadd.f32 %v2911, %v3113
        %v3154 = vadd.f32 %v2913, %v3115
        %v3155 = vadd.f32 %v2916, %v3118
        %v3156 = vadd.f32 %v2918, %v3120
        %v3157 = vadd.f32 %v2921, %v3123
        %v3158 = vadd.f32 %v2923, %v3125
        %v3159 = vld [vmem:[%s346 + $0x7] sm:$0xff]
        %v3160 = vld [vmem:[%s346 + $0xf] sm:$0xff]
        %v3161 = vld [vmem:[%s346 + $0x27] sm:$0xff]
        %v3162 = vld [vmem:[%s346 + $0x2f] sm:$0xff]
        %v3163 = vld [vmem:[%s346 + $0x47] sm:$0xff]
        %v3164 = vld [vmem:[%s346 + $0x4f] sm:$0xff]
        %v3165 = vld [vmem:[%s346 + $0x67] sm:$0xff]
        %v3166 = vld [vmem:[%s346 + $0x6f] sm:$0xff]
        %v3167 = vld [vmem:[%s346 + $0x87] sm:$0xff]
        %v3168 = vld [vmem:[%s346 + $0x8f] sm:$0xff]
        %v3169 = vld [vmem:[%s346 + $0xa7] sm:$0xff]
        %v3170 = vld [vmem:[%s346 + $0xaf] sm:$0xff]
        %v3171 = vld [vmem:[%s346 + $0xc7] sm:$0xff]
        %v3172 = vld [vmem:[%s346 + $0xcf] sm:$0xff]
        %v3173 = vld [vmem:[%s346 + $0xe7] sm:$0xff]
        %v3174 = vld [vmem:[%s346 + $0xef] sm:$0xff]
        %v3175 = vld [vmem:[%s346 + $0x107] sm:$0xff]
        %v3176 = vld [vmem:[%s346 + $0x10f] sm:$0xff]
        %v3177 = vld [vmem:[%s346 + $0x127] sm:$0xff]
        %v3178 = vld [vmem:[%s346 + $0x12f] sm:$0xff]
        %v3179 = vld [vmem:[%s346 + $0x147] sm:$0xff]
        %v3180 = vld [vmem:[%s346 + $0x14f] sm:$0xff]
        %v3181 = vld [vmem:[%s346 + $0x167] sm:$0xff]
        %v3182 = vld [vmem:[%s346 + $0x16f] sm:$0xff]
        %v3183 = vld [vmem:[%s346 + $0x187] sm:$0xff]
        %v3184 = vld [vmem:[%s346 + $0x18f] sm:$0xff]
        %v3185 = vld [vmem:[%s346 + $0x1a7] sm:$0xff]
        %v3186 = vld [vmem:[%s346 + $0x1af] sm:$0xff]
        %v3187 = vld [vmem:[%s346 + $0x1c7] sm:$0xff]
        %v3188 = vld [vmem:[%s346 + $0x1cf] sm:$0xff]
        %v3189 = vld [vmem:[%s346 + $0x1e7] sm:$0xff]
        %v3190 = vld [vmem:[%s346 + $0x1ef] sm:$0xff]
        %v3191 = vpack.c.bf16 %v3160, %v3159
        %v3192 = vpack.c.bf16 %v3162, %v3161
        %v3193 = vpack.c.bf16 %v3164, %v3163
        %v3194 = vpack.c.bf16 %v3166, %v3165
        %v3195 = vpack.c.bf16 %v3168, %v3167
        %v3196 = vpack.c.bf16 %v3170, %v3169
        %v3197 = vpack.c.bf16 %v3172, %v3171
        %v3198 = vpack.c.bf16 %v3174, %v3173
        %v3199 = vpack.c.bf16 %v3176, %v3175
        %v3200 = vpack.c.bf16 %v3178, %v3177
        %v3201 = vpack.c.bf16 %v3180, %v3179
        %v3202 = vpack.c.bf16 %v3182, %v3181
        %v3203 = vpack.c.bf16 %v3184, %v3183
        %v3204 = vpack.c.bf16 %v3186, %v3185
        %v3205 = vpack.c.bf16 %v3188, %v3187
        %v3206 = vpack.c.bf16 %v3190, %v3189
        %s3207 = scalar_lea.vmem [#allocation3], 192
        %v3208 = vld [vmem:[%s3207] sm:$0xf]
        %v3209 = vld [vmem:[%s3207 + $0x4] sm:$0xf]
        %v3210 = vld [vmem:[%s3207 + $0x8] sm:$0xf]
        %v3211 = vld [vmem:[%s3207 + $0xc] sm:$0xf]
        %v3212 = vld [vmem:[%s3207 + $0x10] sm:$0xf]
        %v3213 = vld [vmem:[%s3207 + $0x14] sm:$0xf]
        %v3214 = vld [vmem:[%s3207 + $0x18] sm:$0xf]
        %v3215 = vld [vmem:[%s3207 + $0x1c] sm:$0xf]
        %v3216 = vld [vmem:[%s3207 + $0x20] sm:$0xf]
        %v3217 = vld [vmem:[%s3207 + $0x24] sm:$0xf]
        %v3218 = vld [vmem:[%s3207 + $0x28] sm:$0xf]
        %v3219 = vld [vmem:[%s3207 + $0x2c] sm:$0xf]
        %v3220 = vld [vmem:[%s3207 + $0x30] sm:$0xf]
        %v3221 = vld [vmem:[%s3207 + $0x34] sm:$0xf]
        %v3222 = vld [vmem:[%s3207 + $0x38] sm:$0xf]
        %v3223 = vld [vmem:[%s3207 + $0x3c] sm:$0xf]
        %v3240 = vunpack.c.l.b16 %v3208
        %v3241 = vunpack.c.l.b16 %v3209
        %v3242 = vunpack.c.l.b16 %v3210
        %v3243 = vunpack.c.l.b16 %v3211
        %v3244 = vunpack.c.l.b16 %v3212
        %v3245 = vunpack.c.l.b16 %v3213
        %v3246 = vunpack.c.l.b16 %v3214
        %v3247 = vunpack.c.l.b16 %v3215
        %v3248 = vunpack.c.l.b16 %v3216
        %v3249 = vunpack.c.l.b16 %v3217
        %v3250 = vunpack.c.l.b16 %v3218
        %v3251 = vunpack.c.l.b16 %v3219
        %v3252 = vunpack.c.l.b16 %v3220
        %v3253 = vunpack.c.l.b16 %v3221
        %v3254 = vunpack.c.l.b16 %v3222
        %v3255 = vunpack.c.l.b16 %v3223
        %v3256 = vpack.c.b16 %v3241, %v3240
        %v3257 = vpack.c.b16 %v3243, %v3242
        %v3258 = vpack.c.b16 %v3245, %v3244
        %v3259 = vpack.c.b16 %v3247, %v3246
        %v3260 = vpack.c.b16 %v3249, %v3248
        %v3261 = vpack.c.b16 %v3251, %v3250
        %v3262 = vpack.c.b16 %v3253, %v3252
        %v3263 = vpack.c.b16 %v3255, %v3254
        %3272 = vmatpush.bf16.msra.mxu0 %v3263
        %3273 = vmatpush.bf16.msra.mxu0 %v3262
        %3274 = vmatpush.bf16.msra.mxu0 %v3261
        %3275 = vmatpush.bf16.msra.mxu0 %v3260
        %3276 = vmatpush.bf16.msra.mxu0 %v3259
        %3277 = vmatpush.bf16.msra.mxu0 %v3258
        %3278 = vmatpush.bf16.msra.mxu0 %v3257
        %3279 = vmatpush.bf16.msra.mxu0 %v3256
        %3280 = vmatmul.bf16.gmra.mxu0 %v3191
        %v3281 = vpop.f32.mrf.mxu0
        %v3282 = vadd.f32 0.0, %v3281
        %v3283 = vpop.f32.mrf.mxu0
        %v3284 = vadd.f32 0.0, %v3283
        %3285 = vmatmul.bf16.gmra.mxu0 %v3192
        %v3286 = vpop.f32.mrf.mxu0
        %v3287 = vadd.f32 0.0, %v3286
        %v3288 = vpop.f32.mrf.mxu0
        %v3289 = vadd.f32 0.0, %v3288
        %3290 = vmatmul.bf16.gmra.mxu0 %v3193
        %v3291 = vpop.f32.mrf.mxu0
        %v3292 = vadd.f32 0.0, %v3291
        %v3293 = vpop.f32.mrf.mxu0
        %v3294 = vadd.f32 0.0, %v3293
        %3295 = vmatmul.bf16.gmra.mxu0 %v3194
        %v3296 = vpop.f32.mrf.mxu0
        %v3297 = vadd.f32 0.0, %v3296
        %v3298 = vpop.f32.mrf.mxu0
        %v3299 = vadd.f32 0.0, %v3298
        %3300 = vmatmul.bf16.gmra.mxu0 %v3195
        %v3301 = vpop.f32.mrf.mxu0
        %v3302 = vadd.f32 0.0, %v3301
        %v3303 = vpop.f32.mrf.mxu0
        %v3304 = vadd.f32 0.0, %v3303
        %3305 = vmatmul.bf16.gmra.mxu0 %v3196
        %v3306 = vpop.f32.mrf.mxu0
        %v3307 = vadd.f32 0.0, %v3306
        %v3308 = vpop.f32.mrf.mxu0
        %v3309 = vadd.f32 0.0, %v3308
        %3310 = vmatmul.bf16.gmra.mxu0 %v3197
        %v3311 = vpop.f32.mrf.mxu0
        %v3312 = vadd.f32 0.0, %v3311
        %v3313 = vpop.f32.mrf.mxu0
        %v3314 = vadd.f32 0.0, %v3313
        %3315 = vmatmul.bf16.gmra.mxu0 %v3198
        %v3316 = vpop.f32.mrf.mxu0
        %v3317 = vadd.f32 0.0, %v3316
        %v3318 = vpop.f32.mrf.mxu0
        %v3319 = vadd.f32 0.0, %v3318
        %3320 = vmatmul.bf16.gmra.mxu0 %v3199
        %v3321 = vpop.f32.mrf.mxu0
        %v3322 = vadd.f32 0.0, %v3321
        %v3323 = vpop.f32.mrf.mxu0
        %v3324 = vadd.f32 0.0, %v3323
        %3325 = vmatmul.bf16.gmra.mxu0 %v3200
        %v3326 = vpop.f32.mrf.mxu0
        %v3327 = vadd.f32 0.0, %v3326
        %v3328 = vpop.f32.mrf.mxu0
        %v3329 = vadd.f32 0.0, %v3328
        %3330 = vmatmul.bf16.gmra.mxu0 %v3201
        %v3331 = vpop.f32.mrf.mxu0
        %v3332 = vadd.f32 0.0, %v3331
        %v3333 = vpop.f32.mrf.mxu0
        %v3334 = vadd.f32 0.0, %v3333
        %3335 = vmatmul.bf16.gmra.mxu0 %v3202
        %v3336 = vpop.f32.mrf.mxu0
        %v3337 = vadd.f32 0.0, %v3336
        %v3338 = vpop.f32.mrf.mxu0
        %v3339 = vadd.f32 0.0, %v3338
        %3340 = vmatmul.bf16.gmra.mxu0 %v3203
        %v3341 = vpop.f32.mrf.mxu0
        %v3342 = vadd.f32 0.0, %v3341
        %v3343 = vpop.f32.mrf.mxu0
        %v3344 = vadd.f32 0.0, %v3343
        %3345 = vmatmul.bf16.gmra.mxu0 %v3204
        %v3346 = vpop.f32.mrf.mxu0
        %v3347 = vadd.f32 0.0, %v3346
        %v3348 = vpop.f32.mrf.mxu0
        %v3349 = vadd.f32 0.0, %v3348
        %3350 = vmatmul.bf16.gmra.mxu0 %v3205
        %v3351 = vpop.f32.mrf.mxu0
        %v3352 = vadd.f32 0.0, %v3351
        %v3353 = vpop.f32.mrf.mxu0
        %v3354 = vadd.f32 0.0, %v3353
        %3355 = vmatmul.bf16.gmra.mxu0 %v3206
        %v3356 = vpop.f32.mrf.mxu0
        %v3357 = vadd.f32 0.0, %v3356
        %v3358 = vpop.f32.mrf.mxu0
        %v3359 = vadd.f32 0.0, %v3358
        %3360 = vdwg.mxu0
        %v3361 = vadd.f32 %v3127, %v3282
        %v3362 = vadd.f32 %v3128, %v3284
        %v3363 = vadd.f32 %v3129, %v3287
        %v3364 = vadd.f32 %v3130, %v3289
        %v3365 = vadd.f32 %v3131, %v3292
        %v3366 = vadd.f32 %v3132, %v3294
        %v3367 = vadd.f32 %v3133, %v3297
        %v3368 = vadd.f32 %v3134, %v3299
        %v3369 = vadd.f32 %v3135, %v3302
        %v3370 = vadd.f32 %v3136, %v3304
        %v3371 = vadd.f32 %v3137, %v3307
        %v3372 = vadd.f32 %v3138, %v3309
        %v3373 = vadd.f32 %v3139, %v3312
        %v3374 = vadd.f32 %v3140, %v3314
        %v3375 = vadd.f32 %v3141, %v3317
        %v3376 = vadd.f32 %v3142, %v3319
        %v3377 = vadd.f32 %v3143, %v3322
        %v3378 = vadd.f32 %v3144, %v3324
        %v3379 = vadd.f32 %v3145, %v3327
        %v3380 = vadd.f32 %v3146, %v3329
        %v3381 = vadd.f32 %v3147, %v3332
        %v3382 = vadd.f32 %v3148, %v3334
        %v3383 = vadd.f32 %v3149, %v3337
        %v3384 = vadd.f32 %v3150, %v3339
        %v3385 = vadd.f32 %v3151, %v3342
        %v3386 = vadd.f32 %v3152, %v3344
        %v3387 = vadd.f32 %v3153, %v3347
        %v3388 = vadd.f32 %v3154, %v3349
        %v3389 = vadd.f32 %v3155, %v3352
        %v3390 = vadd.f32 %v3156, %v3354
        %v3391 = vadd.f32 %v3157, %v3357
        %v3392 = vadd.f32 %v3158, %v3359
        %v3393 = vld [vmem:[%s346 + $0x8] sm:$0xff]
        %v3394 = vld [vmem:[%s346 + $0x10] sm:$0xff]
        %v3395 = vld [vmem:[%s346 + $0x28] sm:$0xff]
        %v3396 = vld [vmem:[%s346 + $0x30] sm:$0xff]
        %v3397 = vld [vmem:[%s346 + $0x48] sm:$0xff]
        %v3398 = vld [vmem:[%s346 + $0x50] sm:$0xff]
        %v3399 = vld [vmem:[%s346 + $0x68] sm:$0xff]
        %v3400 = vld [vmem:[%s346 + $0x70] sm:$0xff]
        %v3401 = vld [vmem:[%s346 + $0x88] sm:$0xff]
        %v3402 = vld [vmem:[%s346 + $0x90] sm:$0xff]
        %v3403 = vld [vmem:[%s346 + $0xa8] sm:$0xff]
        %v3404 = vld [vmem:[%s346 + $0xb0] sm:$0xff]
        %v3405 = vld [vmem:[%s346 + $0xc8] sm:$0xff]
        %v3406 = vld [vmem:[%s346 + $0xd0] sm:$0xff]
        %v3407 = vld [vmem:[%s346 + $0xe8] sm:$0xff]
        %v3408 = vld [vmem:[%s346 + $0xf0] sm:$0xff]
        %v3409 = vld [vmem:[%s346 + $0x108] sm:$0xff]
        %v3410 = vld [vmem:[%s346 + $0x110] sm:$0xff]
        %v3411 = vld [vmem:[%s346 + $0x128] sm:$0xff]
        %v3412 = vld [vmem:[%s346 + $0x130] sm:$0xff]
        %v3413 = vld [vmem:[%s346 + $0x148] sm:$0xff]
        %v3414 = vld [vmem:[%s346 + $0x150] sm:$0xff]
        %v3415 = vld [vmem:[%s346 + $0x168] sm:$0xff]
        %v3416 = vld [vmem:[%s346 + $0x170] sm:$0xff]
        %v3417 = vld [vmem:[%s346 + $0x188] sm:$0xff]
        %v3418 = vld [vmem:[%s346 + $0x190] sm:$0xff]
        %v3419 = vld [vmem:[%s346 + $0x1a8] sm:$0xff]
        %v3420 = vld [vmem:[%s346 + $0x1b0] sm:$0xff]
        %v3421 = vld [vmem:[%s346 + $0x1c8] sm:$0xff]
        %v3422 = vld [vmem:[%s346 + $0x1d0] sm:$0xff]
        %v3423 = vld [vmem:[%s346 + $0x1e8] sm:$0xff]
        %v3424 = vld [vmem:[%s346 + $0x1f0] sm:$0xff]
        %v3425 = vpack.c.bf16 %v3394, %v3393
        %v3426 = vpack.c.bf16 %v3396, %v3395
        %v3427 = vpack.c.bf16 %v3398, %v3397
        %v3428 = vpack.c.bf16 %v3400, %v3399
        %v3429 = vpack.c.bf16 %v3402, %v3401
        %v3430 = vpack.c.bf16 %v3404, %v3403
        %v3431 = vpack.c.bf16 %v3406, %v3405
        %v3432 = vpack.c.bf16 %v3408, %v3407
        %v3433 = vpack.c.bf16 %v3410, %v3409
        %v3434 = vpack.c.bf16 %v3412, %v3411
        %v3435 = vpack.c.bf16 %v3414, %v3413
        %v3436 = vpack.c.bf16 %v3416, %v3415
        %v3437 = vpack.c.bf16 %v3418, %v3417
        %v3438 = vpack.c.bf16 %v3420, %v3419
        %v3439 = vpack.c.bf16 %v3422, %v3421
        %v3440 = vpack.c.bf16 %v3424, %v3423
        %s3441 = scalar_lea.vmem [#allocation3], 256
        %v3442 = vld [vmem:[%s3441] sm:$0xf]
        %v3443 = vld [vmem:[%s3441 + $0x4] sm:$0xf]
        %v3444 = vld [vmem:[%s3441 + $0x8] sm:$0xf]
        %v3445 = vld [vmem:[%s3441 + $0xc] sm:$0xf]
        %v3446 = vld [vmem:[%s3441 + $0x10] sm:$0xf]
        %v3447 = vld [vmem:[%s3441 + $0x14] sm:$0xf]
        %v3448 = vld [vmem:[%s3441 + $0x18] sm:$0xf]
        %v3449 = vld [vmem:[%s3441 + $0x1c] sm:$0xf]
        %v3450 = vld [vmem:[%s3441 + $0x20] sm:$0xf]
        %v3451 = vld [vmem:[%s3441 + $0x24] sm:$0xf]
        %v3452 = vld [vmem:[%s3441 + $0x28] sm:$0xf]
        %v3453 = vld [vmem:[%s3441 + $0x2c] sm:$0xf]
        %v3454 = vld [vmem:[%s3441 + $0x30] sm:$0xf]
        %v3455 = vld [vmem:[%s3441 + $0x34] sm:$0xf]
        %v3456 = vld [vmem:[%s3441 + $0x38] sm:$0xf]
        %v3457 = vld [vmem:[%s3441 + $0x3c] sm:$0xf]
        %v3474 = vunpack.c.l.b16 %v3442
        %v3475 = vunpack.c.l.b16 %v3443
        %v3476 = vunpack.c.l.b16 %v3444
        %v3477 = vunpack.c.l.b16 %v3445
        %v3478 = vunpack.c.l.b16 %v3446
        %v3479 = vunpack.c.l.b16 %v3447
        %v3480 = vunpack.c.l.b16 %v3448
        %v3481 = vunpack.c.l.b16 %v3449
        %v3482 = vunpack.c.l.b16 %v3450
        %v3483 = vunpack.c.l.b16 %v3451
        %v3484 = vunpack.c.l.b16 %v3452
        %v3485 = vunpack.c.l.b16 %v3453
        %v3486 = vunpack.c.l.b16 %v3454
        %v3487 = vunpack.c.l.b16 %v3455
        %v3488 = vunpack.c.l.b16 %v3456
        %v3489 = vunpack.c.l.b16 %v3457
        %v3490 = vpack.c.b16 %v3475, %v3474
        %v3491 = vpack.c.b16 %v3477, %v3476
        %v3492 = vpack.c.b16 %v3479, %v3478
        %v3493 = vpack.c.b16 %v3481, %v3480
        %v3494 = vpack.c.b16 %v3483, %v3482
        %v3495 = vpack.c.b16 %v3485, %v3484
        %v3496 = vpack.c.b16 %v3487, %v3486
        %v3497 = vpack.c.b16 %v3489, %v3488
        %3506 = vmatpush.bf16.msra.mxu0 %v3497
        %3507 = vmatpush.bf16.msra.mxu0 %v3496
        %3508 = vmatpush.bf16.msra.mxu0 %v3495
        %3509 = vmatpush.bf16.msra.mxu0 %v3494
        %3510 = vmatpush.bf16.msra.mxu0 %v3493
        %3511 = vmatpush.bf16.msra.mxu0 %v3492
        %3512 = vmatpush.bf16.msra.mxu0 %v3491
        %3513 = vmatpush.bf16.msra.mxu0 %v3490
        %3514 = vmatmul.bf16.gmra.mxu0 %v3425
        %v3515 = vpop.f32.mrf.mxu0
        %v3516 = vadd.f32 0.0, %v3515
        %v3517 = vpop.f32.mrf.mxu0
        %v3518 = vadd.f32 0.0, %v3517
        %3519 = vmatmul.bf16.gmra.mxu0 %v3426
        %v3520 = vpop.f32.mrf.mxu0
        %v3521 = vadd.f32 0.0, %v3520
        %v3522 = vpop.f32.mrf.mxu0
        %v3523 = vadd.f32 0.0, %v3522
        %3524 = vmatmul.bf16.gmra.mxu0 %v3427
        %v3525 = vpop.f32.mrf.mxu0
        %v3526 = vadd.f32 0.0, %v3525
        %v3527 = vpop.f32.mrf.mxu0
        %v3528 = vadd.f32 0.0, %v3527
        %3529 = vmatmul.bf16.gmra.mxu0 %v3428
        %v3530 = vpop.f32.mrf.mxu0
        %v3531 = vadd.f32 0.0, %v3530
        %v3532 = vpop.f32.mrf.mxu0
        %v3533 = vadd.f32 0.0, %v3532
        %3534 = vmatmul.bf16.gmra.mxu0 %v3429
        %v3535 = vpop.f32.mrf.mxu0
        %v3536 = vadd.f32 0.0, %v3535
        %v3537 = vpop.f32.mrf.mxu0
        %v3538 = vadd.f32 0.0, %v3537
        %3539 = vmatmul.bf16.gmra.mxu0 %v3430
        %v3540 = vpop.f32.mrf.mxu0
        %v3541 = vadd.f32 0.0, %v3540
        %v3542 = vpop.f32.mrf.mxu0
        %v3543 = vadd.f32 0.0, %v3542
        %3544 = vmatmul.bf16.gmra.mxu0 %v3431
        %v3545 = vpop.f32.mrf.mxu0
        %v3546 = vadd.f32 0.0, %v3545
        %v3547 = vpop.f32.mrf.mxu0
        %v3548 = vadd.f32 0.0, %v3547
        %3549 = vmatmul.bf16.gmra.mxu0 %v3432
        %v3550 = vpop.f32.mrf.mxu0
        %v3551 = vadd.f32 0.0, %v3550
        %v3552 = vpop.f32.mrf.mxu0
        %v3553 = vadd.f32 0.0, %v3552
        %3554 = vmatmul.bf16.gmra.mxu0 %v3433
        %v3555 = vpop.f32.mrf.mxu0
        %v3556 = vadd.f32 0.0, %v3555
        %v3557 = vpop.f32.mrf.mxu0
        %v3558 = vadd.f32 0.0, %v3557
        %3559 = vmatmul.bf16.gmra.mxu0 %v3434
        %v3560 = vpop.f32.mrf.mxu0
        %v3561 = vadd.f32 0.0, %v3560
        %v3562 = vpop.f32.mrf.mxu0
        %v3563 = vadd.f32 0.0, %v3562
        %3564 = vmatmul.bf16.gmra.mxu0 %v3435
        %v3565 = vpop.f32.mrf.mxu0
        %v3566 = vadd.f32 0.0, %v3565
        %v3567 = vpop.f32.mrf.mxu0
        %v3568 = vadd.f32 0.0, %v3567
        %3569 = vmatmul.bf16.gmra.mxu0 %v3436
        %v3570 = vpop.f32.mrf.mxu0
        %v3571 = vadd.f32 0.0, %v3570
        %v3572 = vpop.f32.mrf.mxu0
        %v3573 = vadd.f32 0.0, %v3572
        %3574 = vmatmul.bf16.gmra.mxu0 %v3437
        %v3575 = vpop.f32.mrf.mxu0
        %v3576 = vadd.f32 0.0, %v3575
        %v3577 = vpop.f32.mrf.mxu0
        %v3578 = vadd.f32 0.0, %v3577
        %3579 = vmatmul.bf16.gmra.mxu0 %v3438
        %v3580 = vpop.f32.mrf.mxu0
        %v3581 = vadd.f32 0.0, %v3580
        %v3582 = vpop.f32.mrf.mxu0
        %v3583 = vadd.f32 0.0, %v3582
        %3584 = vmatmul.bf16.gmra.mxu0 %v3439
        %v3585 = vpop.f32.mrf.mxu0
        %v3586 = vadd.f32 0.0, %v3585
        %v3587 = vpop.f32.mrf.mxu0
        %v3588 = vadd.f32 0.0, %v3587
        %3589 = vmatmul.bf16.gmra.mxu0 %v3440
        %v3590 = vpop.f32.mrf.mxu0
        %v3591 = vadd.f32 0.0, %v3590
        %v3592 = vpop.f32.mrf.mxu0
        %v3593 = vadd.f32 0.0, %v3592
        %3594 = vdwg.mxu0
        %v3595 = vadd.f32 %v3361, %v3516
        %v3596 = vadd.f32 %v3362, %v3518
        %v3597 = vadd.f32 %v3363, %v3521
        %v3598 = vadd.f32 %v3364, %v3523
        %v3599 = vadd.f32 %v3365, %v3526
        %v3600 = vadd.f32 %v3366, %v3528
        %v3601 = vadd.f32 %v3367, %v3531
        %v3602 = vadd.f32 %v3368, %v3533
        %v3603 = vadd.f32 %v3369, %v3536
        %v3604 = vadd.f32 %v3370, %v3538
        %v3605 = vadd.f32 %v3371, %v3541
        %v3606 = vadd.f32 %v3372, %v3543
        %v3607 = vadd.f32 %v3373, %v3546
        %v3608 = vadd.f32 %v3374, %v3548
        %v3609 = vadd.f32 %v3375, %v3551
        %v3610 = vadd.f32 %v3376, %v3553
        %v3611 = vadd.f32 %v3377, %v3556
        %v3612 = vadd.f32 %v3378, %v3558
        %v3613 = vadd.f32 %v3379, %v3561
        %v3614 = vadd.f32 %v3380, %v3563
        %v3615 = vadd.f32 %v3381, %v3566
        %v3616 = vadd.f32 %v3382, %v3568
        %v3617 = vadd.f32 %v3383, %v3571
        %v3618 = vadd.f32 %v3384, %v3573
        %v3619 = vadd.f32 %v3385, %v3576
        %v3620 = vadd.f32 %v3386, %v3578
        %v3621 = vadd.f32 %v3387, %v3581
        %v3622 = vadd.f32 %v3388, %v3583
        %v3623 = vadd.f32 %v3389, %v3586
        %v3624 = vadd.f32 %v3390, %v3588
        %v3625 = vadd.f32 %v3391, %v3591
        %v3626 = vadd.f32 %v3392, %v3593
        %v3627 = vld [vmem:[%s346 + $0x9] sm:$0xff]
        %v3628 = vld [vmem:[%s346 + $0x11] sm:$0xff]
        %v3629 = vld [vmem:[%s346 + $0x29] sm:$0xff]
        %v3630 = vld [vmem:[%s346 + $0x31] sm:$0xff]
        %v3631 = vld [vmem:[%s346 + $0x49] sm:$0xff]
        %v3632 = vld [vmem:[%s346 + $0x51] sm:$0xff]
        %v3633 = vld [vmem:[%s346 + $0x69] sm:$0xff]
        %v3634 = vld [vmem:[%s346 + $0x71] sm:$0xff]
        %v3635 = vld [vmem:[%s346 + $0x89] sm:$0xff]
        %v3636 = vld [vmem:[%s346 + $0x91] sm:$0xff]
        %v3637 = vld [vmem:[%s346 + $0xa9] sm:$0xff]
        %v3638 = vld [vmem:[%s346 + $0xb1] sm:$0xff]
        %v3639 = vld [vmem:[%s346 + $0xc9] sm:$0xff]
        %v3640 = vld [vmem:[%s346 + $0xd1] sm:$0xff]
        %v3641 = vld [vmem:[%s346 + $0xe9] sm:$0xff]
        %v3642 = vld [vmem:[%s346 + $0xf1] sm:$0xff]
        %v3643 = vld [vmem:[%s346 + $0x109] sm:$0xff]
        %v3644 = vld [vmem:[%s346 + $0x111] sm:$0xff]
        %v3645 = vld [vmem:[%s346 + $0x129] sm:$0xff]
        %v3646 = vld [vmem:[%s346 + $0x131] sm:$0xff]
        %v3647 = vld [vmem:[%s346 + $0x149] sm:$0xff]
        %v3648 = vld [vmem:[%s346 + $0x151] sm:$0xff]
        %v3649 = vld [vmem:[%s346 + $0x169] sm:$0xff]
        %v3650 = vld [vmem:[%s346 + $0x171] sm:$0xff]
        %v3651 = vld [vmem:[%s346 + $0x189] sm:$0xff]
        %v3652 = vld [vmem:[%s346 + $0x191] sm:$0xff]
        %v3653 = vld [vmem:[%s346 + $0x1a9] sm:$0xff]
        %v3654 = vld [vmem:[%s346 + $0x1b1] sm:$0xff]
        %v3655 = vld [vmem:[%s346 + $0x1c9] sm:$0xff]
        %v3656 = vld [vmem:[%s346 + $0x1d1] sm:$0xff]
        %v3657 = vld [vmem:[%s346 + $0x1e9] sm:$0xff]
        %v3658 = vld [vmem:[%s346 + $0x1f1] sm:$0xff]
        %v3659 = vpack.c.bf16 %v3628, %v3627
        %v3660 = vpack.c.bf16 %v3630, %v3629
        %v3661 = vpack.c.bf16 %v3632, %v3631
        %v3662 = vpack.c.bf16 %v3634, %v3633
        %v3663 = vpack.c.bf16 %v3636, %v3635
        %v3664 = vpack.c.bf16 %v3638, %v3637
        %v3665 = vpack.c.bf16 %v3640, %v3639
        %v3666 = vpack.c.bf16 %v3642, %v3641
        %v3667 = vpack.c.bf16 %v3644, %v3643
        %v3668 = vpack.c.bf16 %v3646, %v3645
        %v3669 = vpack.c.bf16 %v3648, %v3647
        %v3670 = vpack.c.bf16 %v3650, %v3649
        %v3671 = vpack.c.bf16 %v3652, %v3651
        %v3672 = vpack.c.bf16 %v3654, %v3653
        %v3673 = vpack.c.bf16 %v3656, %v3655
        %v3674 = vpack.c.bf16 %v3658, %v3657
        %s3675 = scalar_lea.vmem [#allocation3], 320
        %v3676 = vld [vmem:[%s3675] sm:$0xf]
        %v3677 = vld [vmem:[%s3675 + $0x4] sm:$0xf]
        %v3678 = vld [vmem:[%s3675 + $0x8] sm:$0xf]
        %v3679 = vld [vmem:[%s3675 + $0xc] sm:$0xf]
        %v3680 = vld [vmem:[%s3675 + $0x10] sm:$0xf]
        %v3681 = vld [vmem:[%s3675 + $0x14] sm:$0xf]
        %v3682 = vld [vmem:[%s3675 + $0x18] sm:$0xf]
        %v3683 = vld [vmem:[%s3675 + $0x1c] sm:$0xf]
        %v3684 = vld [vmem:[%s3675 + $0x20] sm:$0xf]
        %v3685 = vld [vmem:[%s3675 + $0x24] sm:$0xf]
        %v3686 = vld [vmem:[%s3675 + $0x28] sm:$0xf]
        %v3687 = vld [vmem:[%s3675 + $0x2c] sm:$0xf]
        %v3688 = vld [vmem:[%s3675 + $0x30] sm:$0xf]
        %v3689 = vld [vmem:[%s3675 + $0x34] sm:$0xf]
        %v3690 = vld [vmem:[%s3675 + $0x38] sm:$0xf]
        %v3691 = vld [vmem:[%s3675 + $0x3c] sm:$0xf]
        %v3708 = vunpack.c.l.b16 %v3676
        %v3709 = vunpack.c.l.b16 %v3677
        %v3710 = vunpack.c.l.b16 %v3678
        %v3711 = vunpack.c.l.b16 %v3679
        %v3712 = vunpack.c.l.b16 %v3680
        %v3713 = vunpack.c.l.b16 %v3681
        %v3714 = vunpack.c.l.b16 %v3682
        %v3715 = vunpack.c.l.b16 %v3683
        %v3716 = vunpack.c.l.b16 %v3684
        %v3717 = vunpack.c.l.b16 %v3685
        %v3718 = vunpack.c.l.b16 %v3686
        %v3719 = vunpack.c.l.b16 %v3687
        %v3720 = vunpack.c.l.b16 %v3688
        %v3721 = vunpack.c.l.b16 %v3689
        %v3722 = vunpack.c.l.b16 %v3690
        %v3723 = vunpack.c.l.b16 %v3691
        %v3724 = vpack.c.b16 %v3709, %v3708
        %v3725 = vpack.c.b16 %v3711, %v3710
        %v3726 = vpack.c.b16 %v3713, %v3712
        %v3727 = vpack.c.b16 %v3715, %v3714
        %v3728 = vpack.c.b16 %v3717, %v3716
        %v3729 = vpack.c.b16 %v3719, %v3718
        %v3730 = vpack.c.b16 %v3721, %v3720
        %v3731 = vpack.c.b16 %v3723, %v3722
        %3740 = vmatpush.bf16.msra.mxu0 %v3731
        %3741 = vmatpush.bf16.msra.mxu0 %v3730
        %3742 = vmatpush.bf16.msra.mxu0 %v3729
        %3743 = vmatpush.bf16.msra.mxu0 %v3728
        %3744 = vmatpush.bf16.msra.mxu0 %v3727
        %3745 = vmatpush.bf16.msra.mxu0 %v3726
        %3746 = vmatpush.bf16.msra.mxu0 %v3725
        %3747 = vmatpush.bf16.msra.mxu0 %v3724
        %3748 = vmatmul.bf16.gmra.mxu0 %v3659
        %v3749 = vpop.f32.mrf.mxu0
        %v3750 = vadd.f32 0.0, %v3749
        %v3751 = vpop.f32.mrf.mxu0
        %v3752 = vadd.f32 0.0, %v3751
        %3753 = vmatmul.bf16.gmra.mxu0 %v3660
        %v3754 = vpop.f32.mrf.mxu0
        %v3755 = vadd.f32 0.0, %v3754
        %v3756 = vpop.f32.mrf.mxu0
        %v3757 = vadd.f32 0.0, %v3756
        %3758 = vmatmul.bf16.gmra.mxu0 %v3661
        %v3759 = vpop.f32.mrf.mxu0
        %v3760 = vadd.f32 0.0, %v3759
        %v3761 = vpop.f32.mrf.mxu0
        %v3762 = vadd.f32 0.0, %v3761
        %3763 = vmatmul.bf16.gmra.mxu0 %v3662
        %v3764 = vpop.f32.mrf.mxu0
        %v3765 = vadd.f32 0.0, %v3764
        %v3766 = vpop.f32.mrf.mxu0
        %v3767 = vadd.f32 0.0, %v3766
        %3768 = vmatmul.bf16.gmra.mxu0 %v3663
        %v3769 = vpop.f32.mrf.mxu0
        %v3770 = vadd.f32 0.0, %v3769
        %v3771 = vpop.f32.mrf.mxu0
        %v3772 = vadd.f32 0.0, %v3771
        %3773 = vmatmul.bf16.gmra.mxu0 %v3664
        %v3774 = vpop.f32.mrf.mxu0
        %v3775 = vadd.f32 0.0, %v3774
        %v3776 = vpop.f32.mrf.mxu0
        %v3777 = vadd.f32 0.0, %v3776
        %3778 = vmatmul.bf16.gmra.mxu0 %v3665
        %v3779 = vpop.f32.mrf.mxu0
        %v3780 = vadd.f32 0.0, %v3779
        %v3781 = vpop.f32.mrf.mxu0
        %v3782 = vadd.f32 0.0, %v3781
        %3783 = vmatmul.bf16.gmra.mxu0 %v3666
        %v3784 = vpop.f32.mrf.mxu0
        %v3785 = vadd.f32 0.0, %v3784
        %v3786 = vpop.f32.mrf.mxu0
        %v3787 = vadd.f32 0.0, %v3786
        %3788 = vmatmul.bf16.gmra.mxu0 %v3667
        %v3789 = vpop.f32.mrf.mxu0
        %v3790 = vadd.f32 0.0, %v3789
        %v3791 = vpop.f32.mrf.mxu0
        %v3792 = vadd.f32 0.0, %v3791
        %3793 = vmatmul.bf16.gmra.mxu0 %v3668
        %v3794 = vpop.f32.mrf.mxu0
        %v3795 = vadd.f32 0.0, %v3794
        %v3796 = vpop.f32.mrf.mxu0
        %v3797 = vadd.f32 0.0, %v3796
        %3798 = vmatmul.bf16.gmra.mxu0 %v3669
        %v3799 = vpop.f32.mrf.mxu0
        %v3800 = vadd.f32 0.0, %v3799
        %v3801 = vpop.f32.mrf.mxu0
        %v3802 = vadd.f32 0.0, %v3801
        %3803 = vmatmul.bf16.gmra.mxu0 %v3670
        %v3804 = vpop.f32.mrf.mxu0
        %v3805 = vadd.f32 0.0, %v3804
        %v3806 = vpop.f32.mrf.mxu0
        %v3807 = vadd.f32 0.0, %v3806
        %3808 = vmatmul.bf16.gmra.mxu0 %v3671
        %v3809 = vpop.f32.mrf.mxu0
        %v3810 = vadd.f32 0.0, %v3809
        %v3811 = vpop.f32.mrf.mxu0
        %v3812 = vadd.f32 0.0, %v3811
        %3813 = vmatmul.bf16.gmra.mxu0 %v3672
        %v3814 = vpop.f32.mrf.mxu0
        %v3815 = vadd.f32 0.0, %v3814
        %v3816 = vpop.f32.mrf.mxu0
        %v3817 = vadd.f32 0.0, %v3816
        %3818 = vmatmul.bf16.gmra.mxu0 %v3673
        %v3819 = vpop.f32.mrf.mxu0
        %v3820 = vadd.f32 0.0, %v3819
        %v3821 = vpop.f32.mrf.mxu0
        %v3822 = vadd.f32 0.0, %v3821
        %3823 = vmatmul.bf16.gmra.mxu0 %v3674
        %v3824 = vpop.f32.mrf.mxu0
        %v3825 = vadd.f32 0.0, %v3824
        %v3826 = vpop.f32.mrf.mxu0
        %v3827 = vadd.f32 0.0, %v3826
        %3828 = vdwg.mxu0
        %v3829 = vadd.f32 %v3595, %v3750
        %v3830 = vadd.f32 %v3596, %v3752
        %v3831 = vadd.f32 %v3597, %v3755
        %v3832 = vadd.f32 %v3598, %v3757
        %v3833 = vadd.f32 %v3599, %v3760
        %v3834 = vadd.f32 %v3600, %v3762
        %v3835 = vadd.f32 %v3601, %v3765
        %v3836 = vadd.f32 %v3602, %v3767
        %v3837 = vadd.f32 %v3603, %v3770
        %v3838 = vadd.f32 %v3604, %v3772
        %v3839 = vadd.f32 %v3605, %v3775
        %v3840 = vadd.f32 %v3606, %v3777
        %v3841 = vadd.f32 %v3607, %v3780
        %v3842 = vadd.f32 %v3608, %v3782
        %v3843 = vadd.f32 %v3609, %v3785
        %v3844 = vadd.f32 %v3610, %v3787
        %v3845 = vadd.f32 %v3611, %v3790
        %v3846 = vadd.f32 %v3612, %v3792
        %v3847 = vadd.f32 %v3613, %v3795
        %v3848 = vadd.f32 %v3614, %v3797
        %v3849 = vadd.f32 %v3615, %v3800
        %v3850 = vadd.f32 %v3616, %v3802
        %v3851 = vadd.f32 %v3617, %v3805
        %v3852 = vadd.f32 %v3618, %v3807
        %v3853 = vadd.f32 %v3619, %v3810
        %v3854 = vadd.f32 %v3620, %v3812
        %v3855 = vadd.f32 %v3621, %v3815
        %v3856 = vadd.f32 %v3622, %v3817
        %v3857 = vadd.f32 %v3623, %v3820
        %v3858 = vadd.f32 %v3624, %v3822
        %v3859 = vadd.f32 %v3625, %v3825
        %v3860 = vadd.f32 %v3626, %v3827
        %v3861 = vld [vmem:[%s1719 + $0x7] sm:$0xff]
        %v3862 = vld [vmem:[%s1719 + $0xf] sm:$0xff]
        %v3863 = vld [vmem:[%s1719 + $0x27] sm:$0xff]
        %v3864 = vld [vmem:[%s1719 + $0x2f] sm:$0xff]
        %v3865 = vld [vmem:[%s1719 + $0x47] sm:$0xff]
        %v3866 = vld [vmem:[%s1719 + $0x4f] sm:$0xff]
        %v3867 = vld [vmem:[%s1719 + $0x67] sm:$0xff]
        %v3868 = vld [vmem:[%s1719 + $0x6f] sm:$0xff]
        %v3869 = vld [vmem:[%s1719 + $0x87] sm:$0xff]
        %v3870 = vld [vmem:[%s1719 + $0x8f] sm:$0xff]
        %v3871 = vld [vmem:[%s1719 + $0xa7] sm:$0xff]
        %v3872 = vld [vmem:[%s1719 + $0xaf] sm:$0xff]
        %v3873 = vld [vmem:[%s1719 + $0xc7] sm:$0xff]
        %v3874 = vld [vmem:[%s1719 + $0xcf] sm:$0xff]
        %v3875 = vld [vmem:[%s1719 + $0xe7] sm:$0xff]
        %v3876 = vld [vmem:[%s1719 + $0xef] sm:$0xff]
        %v3877 = vld [vmem:[%s1719 + $0x107] sm:$0xff]
        %v3878 = vld [vmem:[%s1719 + $0x10f] sm:$0xff]
        %v3879 = vld [vmem:[%s1719 + $0x127] sm:$0xff]
        %v3880 = vld [vmem:[%s1719 + $0x12f] sm:$0xff]
        %v3881 = vld [vmem:[%s1719 + $0x147] sm:$0xff]
        %v3882 = vld [vmem:[%s1719 + $0x14f] sm:$0xff]
        %v3883 = vld [vmem:[%s1719 + $0x167] sm:$0xff]
        %v3884 = vld [vmem:[%s1719 + $0x16f] sm:$0xff]
        %v3885 = vld [vmem:[%s1719 + $0x187] sm:$0xff]
        %v3886 = vld [vmem:[%s1719 + $0x18f] sm:$0xff]
        %v3887 = vld [vmem:[%s1719 + $0x1a7] sm:$0xff]
        %v3888 = vld [vmem:[%s1719 + $0x1af] sm:$0xff]
        %v3889 = vld [vmem:[%s1719 + $0x1c7] sm:$0xff]
        %v3890 = vld [vmem:[%s1719 + $0x1cf] sm:$0xff]
        %v3891 = vld [vmem:[%s1719 + $0x1e7] sm:$0xff]
        %v3892 = vld [vmem:[%s1719 + $0x1ef] sm:$0xff]
        %v3893 = vpack.c.bf16 %v3862, %v3861
        %v3894 = vpack.c.bf16 %v3864, %v3863
        %v3895 = vpack.c.bf16 %v3866, %v3865
        %v3896 = vpack.c.bf16 %v3868, %v3867
        %v3897 = vpack.c.bf16 %v3870, %v3869
        %v3898 = vpack.c.bf16 %v3872, %v3871
        %v3899 = vpack.c.bf16 %v3874, %v3873
        %v3900 = vpack.c.bf16 %v3876, %v3875
        %v3901 = vpack.c.bf16 %v3878, %v3877
        %v3902 = vpack.c.bf16 %v3880, %v3879
        %v3903 = vpack.c.bf16 %v3882, %v3881
        %v3904 = vpack.c.bf16 %v3884, %v3883
        %v3905 = vpack.c.bf16 %v3886, %v3885
        %v3906 = vpack.c.bf16 %v3888, %v3887
        %v3907 = vpack.c.bf16 %v3890, %v3889
        %v3908 = vpack.c.bf16 %v3892, %v3891
        %s3909 = scalar_lea.vmem [#allocation3], 384
        %v3910 = vld [vmem:[%s3909] sm:$0xf]
        %v3911 = vld [vmem:[%s3909 + $0x4] sm:$0xf]
        %v3912 = vld [vmem:[%s3909 + $0x8] sm:$0xf]
        %v3913 = vld [vmem:[%s3909 + $0xc] sm:$0xf]
        %v3914 = vld [vmem:[%s3909 + $0x10] sm:$0xf]
        %v3915 = vld [vmem:[%s3909 + $0x14] sm:$0xf]
        %v3916 = vld [vmem:[%s3909 + $0x18] sm:$0xf]
        %v3917 = vld [vmem:[%s3909 + $0x1c] sm:$0xf]
        %v3918 = vld [vmem:[%s3909 + $0x20] sm:$0xf]
        %v3919 = vld [vmem:[%s3909 + $0x24] sm:$0xf]
        %v3920 = vld [vmem:[%s3909 + $0x28] sm:$0xf]
        %v3921 = vld [vmem:[%s3909 + $0x2c] sm:$0xf]
        %v3922 = vld [vmem:[%s3909 + $0x30] sm:$0xf]
        %v3923 = vld [vmem:[%s3909 + $0x34] sm:$0xf]
        %v3924 = vld [vmem:[%s3909 + $0x38] sm:$0xf]
        %v3925 = vld [vmem:[%s3909 + $0x3c] sm:$0xf]
        %v3942 = vunpack.c.l.b16 %v3910
        %v3943 = vunpack.c.l.b16 %v3911
        %v3944 = vunpack.c.l.b16 %v3912
        %v3945 = vunpack.c.l.b16 %v3913
        %v3946 = vunpack.c.l.b16 %v3914
        %v3947 = vunpack.c.l.b16 %v3915
        %v3948 = vunpack.c.l.b16 %v3916
        %v3949 = vunpack.c.l.b16 %v3917
        %v3950 = vunpack.c.l.b16 %v3918
        %v3951 = vunpack.c.l.b16 %v3919
        %v3952 = vunpack.c.l.b16 %v3920
        %v3953 = vunpack.c.l.b16 %v3921
        %v3954 = vunpack.c.l.b16 %v3922
        %v3955 = vunpack.c.l.b16 %v3923
        %v3956 = vunpack.c.l.b16 %v3924
        %v3957 = vunpack.c.l.b16 %v3925
        %v3958 = vpack.c.b16 %v3943, %v3942
        %v3959 = vpack.c.b16 %v3945, %v3944
        %v3960 = vpack.c.b16 %v3947, %v3946
        %v3961 = vpack.c.b16 %v3949, %v3948
        %v3962 = vpack.c.b16 %v3951, %v3950
        %v3963 = vpack.c.b16 %v3953, %v3952
        %v3964 = vpack.c.b16 %v3955, %v3954
        %v3965 = vpack.c.b16 %v3957, %v3956
        %3974 = vmatpush.bf16.msra.mxu0 %v3965
        %3975 = vmatpush.bf16.msra.mxu0 %v3964
        %3976 = vmatpush.bf16.msra.mxu0 %v3963
        %3977 = vmatpush.bf16.msra.mxu0 %v3962
        %3978 = vmatpush.bf16.msra.mxu0 %v3961
        %3979 = vmatpush.bf16.msra.mxu0 %v3960
        %3980 = vmatpush.bf16.msra.mxu0 %v3959
        %3981 = vmatpush.bf16.msra.mxu0 %v3958
        %3982 = vmatmul.bf16.gmra.mxu0 %v3893
        %v3983 = vpop.f32.mrf.mxu0
        %v3984 = vadd.f32 0.0, %v3983
        %v3985 = vpop.f32.mrf.mxu0
        %v3986 = vadd.f32 0.0, %v3985
        %3987 = vmatmul.bf16.gmra.mxu0 %v3894
        %v3988 = vpop.f32.mrf.mxu0
        %v3989 = vadd.f32 0.0, %v3988
        %v3990 = vpop.f32.mrf.mxu0
        %v3991 = vadd.f32 0.0, %v3990
        %3992 = vmatmul.bf16.gmra.mxu0 %v3895
        %v3993 = vpop.f32.mrf.mxu0
        %v3994 = vadd.f32 0.0, %v3993
        %v3995 = vpop.f32.mrf.mxu0
        %v3996 = vadd.f32 0.0, %v3995
        %3997 = vmatmul.bf16.gmra.mxu0 %v3896
        %v3998 = vpop.f32.mrf.mxu0
        %v3999 = vadd.f32 0.0, %v3998
        %v4000 = vpop.f32.mrf.mxu0
        %v4001 = vadd.f32 0.0, %v4000
        %4002 = vmatmul.bf16.gmra.mxu0 %v3897
        %v4003 = vpop.f32.mrf.mxu0
        %v4004 = vadd.f32 0.0, %v4003
        %v4005 = vpop.f32.mrf.mxu0
        %v4006 = vadd.f32 0.0, %v4005
        %4007 = vmatmul.bf16.gmra.mxu0 %v3898
        %v4008 = vpop.f32.mrf.mxu0
        %v4009 = vadd.f32 0.0, %v4008
        %v4010 = vpop.f32.mrf.mxu0
        %v4011 = vadd.f32 0.0, %v4010
        %4012 = vmatmul.bf16.gmra.mxu0 %v3899
        %v4013 = vpop.f32.mrf.mxu0
        %v4014 = vadd.f32 0.0, %v4013
        %v4015 = vpop.f32.mrf.mxu0
        %v4016 = vadd.f32 0.0, %v4015
        %4017 = vmatmul.bf16.gmra.mxu0 %v3900
        %v4018 = vpop.f32.mrf.mxu0
        %v4019 = vadd.f32 0.0, %v4018
        %v4020 = vpop.f32.mrf.mxu0
        %v4021 = vadd.f32 0.0, %v4020
        %4022 = vmatmul.bf16.gmra.mxu0 %v3901
        %v4023 = vpop.f32.mrf.mxu0
        %v4024 = vadd.f32 0.0, %v4023
        %v4025 = vpop.f32.mrf.mxu0
        %v4026 = vadd.f32 0.0, %v4025
        %4027 = vmatmul.bf16.gmra.mxu0 %v3902
        %v4028 = vpop.f32.mrf.mxu0
        %v4029 = vadd.f32 0.0, %v4028
        %v4030 = vpop.f32.mrf.mxu0
        %v4031 = vadd.f32 0.0, %v4030
        %4032 = vmatmul.bf16.gmra.mxu0 %v3903
        %v4033 = vpop.f32.mrf.mxu0
        %v4034 = vadd.f32 0.0, %v4033
        %v4035 = vpop.f32.mrf.mxu0
        %v4036 = vadd.f32 0.0, %v4035
        %4037 = vmatmul.bf16.gmra.mxu0 %v3904
        %v4038 = vpop.f32.mrf.mxu0
        %v4039 = vadd.f32 0.0, %v4038
        %v4040 = vpop.f32.mrf.mxu0
        %v4041 = vadd.f32 0.0, %v4040
        %4042 = vmatmul.bf16.gmra.mxu0 %v3905
        %v4043 = vpop.f32.mrf.mxu0
        %v4044 = vadd.f32 0.0, %v4043
        %v4045 = vpop.f32.mrf.mxu0
        %v4046 = vadd.f32 0.0, %v4045
        %4047 = vmatmul.bf16.gmra.mxu0 %v3906
        %v4048 = vpop.f32.mrf.mxu0
        %v4049 = vadd.f32 0.0, %v4048
        %v4050 = vpop.f32.mrf.mxu0
        %v4051 = vadd.f32 0.0, %v4050
        %4052 = vmatmul.bf16.gmra.mxu0 %v3907
        %v4053 = vpop.f32.mrf.mxu0
        %v4054 = vadd.f32 0.0, %v4053
        %v4055 = vpop.f32.mrf.mxu0
        %v4056 = vadd.f32 0.0, %v4055
        %4057 = vmatmul.bf16.gmra.mxu0 %v3908
        %v4058 = vpop.f32.mrf.mxu0
        %v4059 = vadd.f32 0.0, %v4058
        %v4060 = vpop.f32.mrf.mxu0
        %v4061 = vadd.f32 0.0, %v4060
        %4062 = vdwg.mxu0
        %v4063 = vadd.f32 %v3829, %v3984
        %v4064 = vadd.f32 %v3830, %v3986
        %v4065 = vadd.f32 %v3831, %v3989
        %v4066 = vadd.f32 %v3832, %v3991
        %v4067 = vadd.f32 %v3833, %v3994
        %v4068 = vadd.f32 %v3834, %v3996
        %v4069 = vadd.f32 %v3835, %v3999
        %v4070 = vadd.f32 %v3836, %v4001
        %v4071 = vadd.f32 %v3837, %v4004
        %v4072 = vadd.f32 %v3838, %v4006
        %v4073 = vadd.f32 %v3839, %v4009
        %v4074 = vadd.f32 %v3840, %v4011
        %v4075 = vadd.f32 %v3841, %v4014
        %v4076 = vadd.f32 %v3842, %v4016
        %v4077 = vadd.f32 %v3843, %v4019
        %v4078 = vadd.f32 %v3844, %v4021
        %v4079 = vadd.f32 %v3845, %v4024
        %v4080 = vadd.f32 %v3846, %v4026
        %v4081 = vadd.f32 %v3847, %v4029
        %v4082 = vadd.f32 %v3848, %v4031
        %v4083 = vadd.f32 %v3849, %v4034
        %v4084 = vadd.f32 %v3850, %v4036
        %v4085 = vadd.f32 %v3851, %v4039
        %v4086 = vadd.f32 %v3852, %v4041
        %v4087 = vadd.f32 %v3853, %v4044
        %v4088 = vadd.f32 %v3854, %v4046
        %v4089 = vadd.f32 %v3855, %v4049
        %v4090 = vadd.f32 %v3856, %v4051
        %v4091 = vadd.f32 %v3857, %v4054
        %v4092 = vadd.f32 %v3858, %v4056
        %v4093 = vadd.f32 %v3859, %v4059
        %v4094 = vadd.f32 %v3860, %v4061
        %v4095 = vld [vmem:[%s1719 + $0x8] sm:$0xff]
        %v4096 = vld [vmem:[%s1719 + $0x10] sm:$0xff]
        %v4097 = vld [vmem:[%s1719 + $0x28] sm:$0xff]
        %v4098 = vld [vmem:[%s1719 + $0x30] sm:$0xff]
        %v4099 = vld [vmem:[%s1719 + $0x48] sm:$0xff]
        %v4100 = vld [vmem:[%s1719 + $0x50] sm:$0xff]
        %v4101 = vld [vmem:[%s1719 + $0x68] sm:$0xff]
        %v4102 = vld [vmem:[%s1719 + $0x70] sm:$0xff]
        %v4103 = vld [vmem:[%s1719 + $0x88] sm:$0xff]
        %v4104 = vld [vmem:[%s1719 + $0x90] sm:$0xff]
        %v4105 = vld [vmem:[%s1719 + $0xa8] sm:$0xff]
        %v4106 = vld [vmem:[%s1719 + $0xb0] sm:$0xff]
        %v4107 = vld [vmem:[%s1719 + $0xc8] sm:$0xff]
        %v4108 = vld [vmem:[%s1719 + $0xd0] sm:$0xff]
        %v4109 = vld [vmem:[%s1719 + $0xe8] sm:$0xff]
        %v4110 = vld [vmem:[%s1719 + $0xf0] sm:$0xff]
        %v4111 = vld [vmem:[%s1719 + $0x108] sm:$0xff]
        %v4112 = vld [vmem:[%s1719 + $0x110] sm:$0xff]
        %v4113 = vld [vmem:[%s1719 + $0x128] sm:$0xff]
        %v4114 = vld [vmem:[%s1719 + $0x130] sm:$0xff]
        %v4115 = vld [vmem:[%s1719 + $0x148] sm:$0xff]
        %v4116 = vld [vmem:[%s1719 + $0x150] sm:$0xff]
        %v4117 = vld [vmem:[%s1719 + $0x168] sm:$0xff]
        %v4118 = vld [vmem:[%s1719 + $0x170] sm:$0xff]
        %v4119 = vld [vmem:[%s1719 + $0x188] sm:$0xff]
        %v4120 = vld [vmem:[%s1719 + $0x190] sm:$0xff]
        %v4121 = vld [vmem:[%s1719 + $0x1a8] sm:$0xff]
        %v4122 = vld [vmem:[%s1719 + $0x1b0] sm:$0xff]
        %v4123 = vld [vmem:[%s1719 + $0x1c8] sm:$0xff]
        %v4124 = vld [vmem:[%s1719 + $0x1d0] sm:$0xff]
        %v4125 = vld [vmem:[%s1719 + $0x1e8] sm:$0xff]
        %v4126 = vld [vmem:[%s1719 + $0x1f0] sm:$0xff]
        %v4127 = vpack.c.bf16 %v4096, %v4095
        %v4128 = vpack.c.bf16 %v4098, %v4097
        %v4129 = vpack.c.bf16 %v4100, %v4099
        %v4130 = vpack.c.bf16 %v4102, %v4101
        %v4131 = vpack.c.bf16 %v4104, %v4103
        %v4132 = vpack.c.bf16 %v4106, %v4105
        %v4133 = vpack.c.bf16 %v4108, %v4107
        %v4134 = vpack.c.bf16 %v4110, %v4109
        %v4135 = vpack.c.bf16 %v4112, %v4111
        %v4136 = vpack.c.bf16 %v4114, %v4113
        %v4137 = vpack.c.bf16 %v4116, %v4115
        %v4138 = vpack.c.bf16 %v4118, %v4117
        %v4139 = vpack.c.bf16 %v4120, %v4119
        %v4140 = vpack.c.bf16 %v4122, %v4121
        %v4141 = vpack.c.bf16 %v4124, %v4123
        %v4142 = vpack.c.bf16 %v4126, %v4125
        %s4143 = scalar_lea.vmem [#allocation3], 448
        %v4144 = vld [vmem:[%s4143] sm:$0xf]
        %v4145 = vld [vmem:[%s4143 + $0x4] sm:$0xf]
        %v4146 = vld [vmem:[%s4143 + $0x8] sm:$0xf]
        %v4147 = vld [vmem:[%s4143 + $0xc] sm:$0xf]
        %v4148 = vld [vmem:[%s4143 + $0x10] sm:$0xf]
        %v4149 = vld [vmem:[%s4143 + $0x14] sm:$0xf]
        %v4150 = vld [vmem:[%s4143 + $0x18] sm:$0xf]
        %v4151 = vld [vmem:[%s4143 + $0x1c] sm:$0xf]
        %v4152 = vld [vmem:[%s4143 + $0x20] sm:$0xf]
        %v4153 = vld [vmem:[%s4143 + $0x24] sm:$0xf]
        %v4154 = vld [vmem:[%s4143 + $0x28] sm:$0xf]
        %v4155 = vld [vmem:[%s4143 + $0x2c] sm:$0xf]
        %v4156 = vld [vmem:[%s4143 + $0x30] sm:$0xf]
        %v4157 = vld [vmem:[%s4143 + $0x34] sm:$0xf]
        %v4158 = vld [vmem:[%s4143 + $0x38] sm:$0xf]
        %v4159 = vld [vmem:[%s4143 + $0x3c] sm:$0xf]
        %v4176 = vunpack.c.l.b16 %v4144
        %v4177 = vunpack.c.l.b16 %v4145
        %v4178 = vunpack.c.l.b16 %v4146
        %v4179 = vunpack.c.l.b16 %v4147
        %v4180 = vunpack.c.l.b16 %v4148
        %v4181 = vunpack.c.l.b16 %v4149
        %v4182 = vunpack.c.l.b16 %v4150
        %v4183 = vunpack.c.l.b16 %v4151
        %v4184 = vunpack.c.l.b16 %v4152
        %v4185 = vunpack.c.l.b16 %v4153
        %v4186 = vunpack.c.l.b16 %v4154
        %v4187 = vunpack.c.l.b16 %v4155
        %v4188 = vunpack.c.l.b16 %v4156
        %v4189 = vunpack.c.l.b16 %v4157
        %v4190 = vunpack.c.l.b16 %v4158
        %v4191 = vunpack.c.l.b16 %v4159
        %v4192 = vpack.c.b16 %v4177, %v4176
        %v4193 = vpack.c.b16 %v4179, %v4178
        %v4194 = vpack.c.b16 %v4181, %v4180
        %v4195 = vpack.c.b16 %v4183, %v4182
        %v4196 = vpack.c.b16 %v4185, %v4184
        %v4197 = vpack.c.b16 %v4187, %v4186
        %v4198 = vpack.c.b16 %v4189, %v4188
        %v4199 = vpack.c.b16 %v4191, %v4190
        %4208 = vmatpush.bf16.msra.mxu0 %v4199
        %4209 = vmatpush.bf16.msra.mxu0 %v4198
        %4210 = vmatpush.bf16.msra.mxu0 %v4197
        %4211 = vmatpush.bf16.msra.mxu0 %v4196
        %4212 = vmatpush.bf16.msra.mxu0 %v4195
        %4213 = vmatpush.bf16.msra.mxu0 %v4194
        %4214 = vmatpush.bf16.msra.mxu0 %v4193
        %4215 = vmatpush.bf16.msra.mxu0 %v4192
        %4216 = vmatmul.bf16.gmra.mxu0 %v4127
        %v4217 = vpop.f32.mrf.mxu0
        %v4218 = vadd.f32 0.0, %v4217
        %v4219 = vpop.f32.mrf.mxu0
        %v4220 = vadd.f32 0.0, %v4219
        %4221 = vmatmul.bf16.gmra.mxu0 %v4128
        %v4222 = vpop.f32.mrf.mxu0
        %v4223 = vadd.f32 0.0, %v4222
        %v4224 = vpop.f32.mrf.mxu0
        %v4225 = vadd.f32 0.0, %v4224
        %4226 = vmatmul.bf16.gmra.mxu0 %v4129
        %v4227 = vpop.f32.mrf.mxu0
        %v4228 = vadd.f32 0.0, %v4227
        %v4229 = vpop.f32.mrf.mxu0
        %v4230 = vadd.f32 0.0, %v4229
        %4231 = vmatmul.bf16.gmra.mxu0 %v4130
        %v4232 = vpop.f32.mrf.mxu0
        %v4233 = vadd.f32 0.0, %v4232
        %v4234 = vpop.f32.mrf.mxu0
        %v4235 = vadd.f32 0.0, %v4234
        %4236 = vmatmul.bf16.gmra.mxu0 %v4131
        %v4237 = vpop.f32.mrf.mxu0
        %v4238 = vadd.f32 0.0, %v4237
        %v4239 = vpop.f32.mrf.mxu0
        %v4240 = vadd.f32 0.0, %v4239
        %4241 = vmatmul.bf16.gmra.mxu0 %v4132
        %v4242 = vpop.f32.mrf.mxu0
        %v4243 = vadd.f32 0.0, %v4242
        %v4244 = vpop.f32.mrf.mxu0
        %v4245 = vadd.f32 0.0, %v4244
        %4246 = vmatmul.bf16.gmra.mxu0 %v4133
        %v4247 = vpop.f32.mrf.mxu0
        %v4248 = vadd.f32 0.0, %v4247
        %v4249 = vpop.f32.mrf.mxu0
        %v4250 = vadd.f32 0.0, %v4249
        %4251 = vmatmul.bf16.gmra.mxu0 %v4134
        %v4252 = vpop.f32.mrf.mxu0
        %v4253 = vadd.f32 0.0, %v4252
        %v4254 = vpop.f32.mrf.mxu0
        %v4255 = vadd.f32 0.0, %v4254
        %4256 = vmatmul.bf16.gmra.mxu0 %v4135
        %v4257 = vpop.f32.mrf.mxu0
        %v4258 = vadd.f32 0.0, %v4257
        %v4259 = vpop.f32.mrf.mxu0
        %v4260 = vadd.f32 0.0, %v4259
        %4261 = vmatmul.bf16.gmra.mxu0 %v4136
        %v4262 = vpop.f32.mrf.mxu0
        %v4263 = vadd.f32 0.0, %v4262
        %v4264 = vpop.f32.mrf.mxu0
        %v4265 = vadd.f32 0.0, %v4264
        %4266 = vmatmul.bf16.gmra.mxu0 %v4137
        %v4267 = vpop.f32.mrf.mxu0
        %v4268 = vadd.f32 0.0, %v4267
        %v4269 = vpop.f32.mrf.mxu0
        %v4270 = vadd.f32 0.0, %v4269
        %4271 = vmatmul.bf16.gmra.mxu0 %v4138
        %v4272 = vpop.f32.mrf.mxu0
        %v4273 = vadd.f32 0.0, %v4272
        %v4274 = vpop.f32.mrf.mxu0
        %v4275 = vadd.f32 0.0, %v4274
        %4276 = vmatmul.bf16.gmra.mxu0 %v4139
        %v4277 = vpop.f32.mrf.mxu0
        %v4278 = vadd.f32 0.0, %v4277
        %v4279 = vpop.f32.mrf.mxu0
        %v4280 = vadd.f32 0.0, %v4279
        %4281 = vmatmul.bf16.gmra.mxu0 %v4140
        %v4282 = vpop.f32.mrf.mxu0
        %v4283 = vadd.f32 0.0, %v4282
        %v4284 = vpop.f32.mrf.mxu0
        %v4285 = vadd.f32 0.0, %v4284
        %4286 = vmatmul.bf16.gmra.mxu0 %v4141
        %v4287 = vpop.f32.mrf.mxu0
        %v4288 = vadd.f32 0.0, %v4287
        %v4289 = vpop.f32.mrf.mxu0
        %v4290 = vadd.f32 0.0, %v4289
        %4291 = vmatmul.bf16.gmra.mxu0 %v4142
        %v4292 = vpop.f32.mrf.mxu0
        %v4293 = vadd.f32 0.0, %v4292
        %v4294 = vpop.f32.mrf.mxu0
        %v4295 = vadd.f32 0.0, %v4294
        %4296 = vdwg.mxu0
        %v4297 = vadd.f32 %v4063, %v4218
        %v4298 = vadd.f32 %v4064, %v4220
        %v4299 = vadd.f32 %v4065, %v4223
        %v4300 = vadd.f32 %v4066, %v4225
        %v4301 = vadd.f32 %v4067, %v4228
        %v4302 = vadd.f32 %v4068, %v4230
        %v4303 = vadd.f32 %v4069, %v4233
        %v4304 = vadd.f32 %v4070, %v4235
        %v4305 = vadd.f32 %v4071, %v4238
        %v4306 = vadd.f32 %v4072, %v4240
        %v4307 = vadd.f32 %v4073, %v4243
        %v4308 = vadd.f32 %v4074, %v4245
        %v4309 = vadd.f32 %v4075, %v4248
        %v4310 = vadd.f32 %v4076, %v4250
        %v4311 = vadd.f32 %v4077, %v4253
        %v4312 = vadd.f32 %v4078, %v4255
        %v4313 = vadd.f32 %v4079, %v4258
        %v4314 = vadd.f32 %v4080, %v4260
        %v4315 = vadd.f32 %v4081, %v4263
        %v4316 = vadd.f32 %v4082, %v4265
        %v4317 = vadd.f32 %v4083, %v4268
        %v4318 = vadd.f32 %v4084, %v4270
        %v4319 = vadd.f32 %v4085, %v4273
        %v4320 = vadd.f32 %v4086, %v4275
        %v4321 = vadd.f32 %v4087, %v4278
        %v4322 = vadd.f32 %v4088, %v4280
        %v4323 = vadd.f32 %v4089, %v4283
        %v4324 = vadd.f32 %v4090, %v4285
        %v4325 = vadd.f32 %v4091, %v4288
        %v4326 = vadd.f32 %v4092, %v4290
        %v4327 = vadd.f32 %v4093, %v4293
        %v4328 = vadd.f32 %v4094, %v4295
        %v4329 = vld [vmem:[%s1719 + $0x9] sm:$0xff]
        %v4330 = vld [vmem:[%s1719 + $0x11] sm:$0xff]
        %v4331 = vld [vmem:[%s1719 + $0x29] sm:$0xff]
        %v4332 = vld [vmem:[%s1719 + $0x31] sm:$0xff]
        %v4333 = vld [vmem:[%s1719 + $0x49] sm:$0xff]
        %v4334 = vld [vmem:[%s1719 + $0x51] sm:$0xff]
        %v4335 = vld [vmem:[%s1719 + $0x69] sm:$0xff]
        %v4336 = vld [vmem:[%s1719 + $0x71] sm:$0xff]
        %v4337 = vld [vmem:[%s1719 + $0x89] sm:$0xff]
        %v4338 = vld [vmem:[%s1719 + $0x91] sm:$0xff]
        %v4339 = vld [vmem:[%s1719 + $0xa9] sm:$0xff]
        %v4340 = vld [vmem:[%s1719 + $0xb1] sm:$0xff]
        %v4341 = vld [vmem:[%s1719 + $0xc9] sm:$0xff]
        %v4342 = vld [vmem:[%s1719 + $0xd1] sm:$0xff]
        %v4343 = vld [vmem:[%s1719 + $0xe9] sm:$0xff]
        %v4344 = vld [vmem:[%s1719 + $0xf1] sm:$0xff]
        %v4345 = vld [vmem:[%s1719 + $0x109] sm:$0xff]
        %v4346 = vld [vmem:[%s1719 + $0x111] sm:$0xff]
        %v4347 = vld [vmem:[%s1719 + $0x129] sm:$0xff]
        %v4348 = vld [vmem:[%s1719 + $0x131] sm:$0xff]
        %v4349 = vld [vmem:[%s1719 + $0x149] sm:$0xff]
        %v4350 = vld [vmem:[%s1719 + $0x151] sm:$0xff]
        %v4351 = vld [vmem:[%s1719 + $0x169] sm:$0xff]
        %v4352 = vld [vmem:[%s1719 + $0x171] sm:$0xff]
        %v4353 = vld [vmem:[%s1719 + $0x189] sm:$0xff]
        %v4354 = vld [vmem:[%s1719 + $0x191] sm:$0xff]
        %v4355 = vld [vmem:[%s1719 + $0x1a9] sm:$0xff]
        %v4356 = vld [vmem:[%s1719 + $0x1b1] sm:$0xff]
        %v4357 = vld [vmem:[%s1719 + $0x1c9] sm:$0xff]
        %v4358 = vld [vmem:[%s1719 + $0x1d1] sm:$0xff]
        %v4359 = vld [vmem:[%s1719 + $0x1e9] sm:$0xff]
        %v4360 = vld [vmem:[%s1719 + $0x1f1] sm:$0xff]
        %v4361 = vpack.c.bf16 %v4330, %v4329
        %v4362 = vpack.c.bf16 %v4332, %v4331
        %v4363 = vpack.c.bf16 %v4334, %v4333
        %v4364 = vpack.c.bf16 %v4336, %v4335
        %v4365 = vpack.c.bf16 %v4338, %v4337
        %v4366 = vpack.c.bf16 %v4340, %v4339
        %v4367 = vpack.c.bf16 %v4342, %v4341
        %v4368 = vpack.c.bf16 %v4344, %v4343
        %v4369 = vpack.c.bf16 %v4346, %v4345
        %v4370 = vpack.c.bf16 %v4348, %v4347
        %v4371 = vpack.c.bf16 %v4350, %v4349
        %v4372 = vpack.c.bf16 %v4352, %v4351
        %v4373 = vpack.c.bf16 %v4354, %v4353
        %v4374 = vpack.c.bf16 %v4356, %v4355
        %v4375 = vpack.c.bf16 %v4358, %v4357
        %v4376 = vpack.c.bf16 %v4360, %v4359
        %s4377 = scalar_lea.vmem [#allocation3], 512
        %v4378 = vld [vmem:[%s4377] sm:$0xf]
        %v4379 = vld [vmem:[%s4377 + $0x4] sm:$0xf]
        %v4380 = vld [vmem:[%s4377 + $0x8] sm:$0xf]
        %v4381 = vld [vmem:[%s4377 + $0xc] sm:$0xf]
        %v4382 = vld [vmem:[%s4377 + $0x10] sm:$0xf]
        %v4383 = vld [vmem:[%s4377 + $0x14] sm:$0xf]
        %v4384 = vld [vmem:[%s4377 + $0x18] sm:$0xf]
        %v4385 = vld [vmem:[%s4377 + $0x1c] sm:$0xf]
        %v4386 = vld [vmem:[%s4377 + $0x20] sm:$0xf]
        %v4387 = vld [vmem:[%s4377 + $0x24] sm:$0xf]
        %v4388 = vld [vmem:[%s4377 + $0x28] sm:$0xf]
        %v4389 = vld [vmem:[%s4377 + $0x2c] sm:$0xf]
        %v4390 = vld [vmem:[%s4377 + $0x30] sm:$0xf]
        %v4391 = vld [vmem:[%s4377 + $0x34] sm:$0xf]
        %v4392 = vld [vmem:[%s4377 + $0x38] sm:$0xf]
        %v4393 = vld [vmem:[%s4377 + $0x3c] sm:$0xf]
        %v4410 = vunpack.c.l.b16 %v4378
        %v4411 = vunpack.c.l.b16 %v4379
        %v4412 = vunpack.c.l.b16 %v4380
        %v4413 = vunpack.c.l.b16 %v4381
        %v4414 = vunpack.c.l.b16 %v4382
        %v4415 = vunpack.c.l.b16 %v4383
        %v4416 = vunpack.c.l.b16 %v4384
        %v4417 = vunpack.c.l.b16 %v4385
        %v4418 = vunpack.c.l.b16 %v4386
        %v4419 = vunpack.c.l.b16 %v4387
        %v4420 = vunpack.c.l.b16 %v4388
        %v4421 = vunpack.c.l.b16 %v4389
        %v4422 = vunpack.c.l.b16 %v4390
        %v4423 = vunpack.c.l.b16 %v4391
        %v4424 = vunpack.c.l.b16 %v4392
        %v4425 = vunpack.c.l.b16 %v4393
        %v4426 = vpack.c.b16 %v4411, %v4410
        %v4427 = vpack.c.b16 %v4413, %v4412
        %v4428 = vpack.c.b16 %v4415, %v4414
        %v4429 = vpack.c.b16 %v4417, %v4416
        %v4430 = vpack.c.b16 %v4419, %v4418
        %v4431 = vpack.c.b16 %v4421, %v4420
        %v4432 = vpack.c.b16 %v4423, %v4422
        %v4433 = vpack.c.b16 %v4425, %v4424
        %4442 = vmatpush.bf16.msra.mxu0 %v4433
        %4443 = vmatpush.bf16.msra.mxu0 %v4432
        %4444 = vmatpush.bf16.msra.mxu0 %v4431
        %4445 = vmatpush.bf16.msra.mxu0 %v4430
        %4446 = vmatpush.bf16.msra.mxu0 %v4429
        %4447 = vmatpush.bf16.msra.mxu0 %v4428
        %4448 = vmatpush.bf16.msra.mxu0 %v4427
        %4449 = vmatpush.bf16.msra.mxu0 %v4426
        %4450 = vmatmul.bf16.gmra.mxu0 %v4361
        %v4451 = vpop.f32.mrf.mxu0
        %v4452 = vadd.f32 0.0, %v4451
        %v4453 = vpop.f32.mrf.mxu0
        %v4454 = vadd.f32 0.0, %v4453
        %4455 = vmatmul.bf16.gmra.mxu0 %v4362
        %v4456 = vpop.f32.mrf.mxu0
        %v4457 = vadd.f32 0.0, %v4456
        %v4458 = vpop.f32.mrf.mxu0
        %v4459 = vadd.f32 0.0, %v4458
        %4460 = vmatmul.bf16.gmra.mxu0 %v4363
        %v4461 = vpop.f32.mrf.mxu0
        %v4462 = vadd.f32 0.0, %v4461
        %v4463 = vpop.f32.mrf.mxu0
        %v4464 = vadd.f32 0.0, %v4463
        %4465 = vmatmul.bf16.gmra.mxu0 %v4364
        %v4466 = vpop.f32.mrf.mxu0
        %v4467 = vadd.f32 0.0, %v4466
        %v4468 = vpop.f32.mrf.mxu0
        %v4469 = vadd.f32 0.0, %v4468
        %4470 = vmatmul.bf16.gmra.mxu0 %v4365
        %v4471 = vpop.f32.mrf.mxu0
        %v4472 = vadd.f32 0.0, %v4471
        %v4473 = vpop.f32.mrf.mxu0
        %v4474 = vadd.f32 0.0, %v4473
        %4475 = vmatmul.bf16.gmra.mxu0 %v4366
        %v4476 = vpop.f32.mrf.mxu0
        %v4477 = vadd.f32 0.0, %v4476
        %v4478 = vpop.f32.mrf.mxu0
        %v4479 = vadd.f32 0.0, %v4478
        %4480 = vmatmul.bf16.gmra.mxu0 %v4367
        %v4481 = vpop.f32.mrf.mxu0
        %v4482 = vadd.f32 0.0, %v4481
        %v4483 = vpop.f32.mrf.mxu0
        %v4484 = vadd.f32 0.0, %v4483
        %4485 = vmatmul.bf16.gmra.mxu0 %v4368
        %v4486 = vpop.f32.mrf.mxu0
        %v4487 = vadd.f32 0.0, %v4486
        %v4488 = vpop.f32.mrf.mxu0
        %v4489 = vadd.f32 0.0, %v4488
        %4490 = vmatmul.bf16.gmra.mxu0 %v4369
        %v4491 = vpop.f32.mrf.mxu0
        %v4492 = vadd.f32 0.0, %v4491
        %v4493 = vpop.f32.mrf.mxu0
        %v4494 = vadd.f32 0.0, %v4493
        %4495 = vmatmul.bf16.gmra.mxu0 %v4370
        %v4496 = vpop.f32.mrf.mxu0
        %v4497 = vadd.f32 0.0, %v4496
        %v4498 = vpop.f32.mrf.mxu0
        %v4499 = vadd.f32 0.0, %v4498
        %4500 = vmatmul.bf16.gmra.mxu0 %v4371
        %v4501 = vpop.f32.mrf.mxu0
        %v4502 = vadd.f32 0.0, %v4501
        %v4503 = vpop.f32.mrf.mxu0
        %v4504 = vadd.f32 0.0, %v4503
        %4505 = vmatmul.bf16.gmra.mxu0 %v4372
        %v4506 = vpop.f32.mrf.mxu0
        %v4507 = vadd.f32 0.0, %v4506
        %v4508 = vpop.f32.mrf.mxu0
        %v4509 = vadd.f32 0.0, %v4508
        %4510 = vmatmul.bf16.gmra.mxu0 %v4373
        %v4511 = vpop.f32.mrf.mxu0
        %v4512 = vadd.f32 0.0, %v4511
        %v4513 = vpop.f32.mrf.mxu0
        %v4514 = vadd.f32 0.0, %v4513
        %4515 = vmatmul.bf16.gmra.mxu0 %v4374
        %v4516 = vpop.f32.mrf.mxu0
        %v4517 = vadd.f32 0.0, %v4516
        %v4518 = vpop.f32.mrf.mxu0
        %v4519 = vadd.f32 0.0, %v4518
        %4520 = vmatmul.bf16.gmra.mxu0 %v4375
        %v4521 = vpop.f32.mrf.mxu0
        %v4522 = vadd.f32 0.0, %v4521
        %v4523 = vpop.f32.mrf.mxu0
        %v4524 = vadd.f32 0.0, %v4523
        %4525 = vmatmul.bf16.gmra.mxu0 %v4376
        %v4526 = vpop.f32.mrf.mxu0
        %v4527 = vadd.f32 0.0, %v4526
        %v4528 = vpop.f32.mrf.mxu0
        %v4529 = vadd.f32 0.0, %v4528
        %4530 = vdwg.mxu0
        %v4531 = vadd.f32 %v4297, %v4452
        %v4532 = vadd.f32 %v4298, %v4454
        %v4533 = vadd.f32 %v4299, %v4457
        %v4534 = vadd.f32 %v4300, %v4459
        %v4535 = vadd.f32 %v4301, %v4462
        %v4536 = vadd.f32 %v4302, %v4464
        %v4537 = vadd.f32 %v4303, %v4467
        %v4538 = vadd.f32 %v4304, %v4469
        %v4539 = vadd.f32 %v4305, %v4472
        %v4540 = vadd.f32 %v4306, %v4474
        %v4541 = vadd.f32 %v4307, %v4477
        %v4542 = vadd.f32 %v4308, %v4479
        %v4543 = vadd.f32 %v4309, %v4482
        %v4544 = vadd.f32 %v4310, %v4484
        %v4545 = vadd.f32 %v4311, %v4487
        %v4546 = vadd.f32 %v4312, %v4489
        %v4547 = vadd.f32 %v4313, %v4492
        %v4548 = vadd.f32 %v4314, %v4494
        %v4549 = vadd.f32 %v4315, %v4497
        %v4550 = vadd.f32 %v4316, %v4499
        %v4551 = vadd.f32 %v4317, %v4502
        %v4552 = vadd.f32 %v4318, %v4504
        %v4553 = vadd.f32 %v4319, %v4507
        %v4554 = vadd.f32 %v4320, %v4509
        %v4555 = vadd.f32 %v4321, %v4512
        %v4556 = vadd.f32 %v4322, %v4514
        %v4557 = vadd.f32 %v4323, %v4517
        %v4558 = vadd.f32 %v4324, %v4519
        %v4559 = vadd.f32 %v4325, %v4522
        %v4560 = vadd.f32 %v4326, %v4524
        %v4561 = vadd.f32 %v4327, %v4527
        %v4562 = vadd.f32 %v4328, %v4529
        %v4563 = vld [vmem:[%s4] sm:$0x1]
        %v4565 = vperm.slane %v4563, 0
        %v4567 = vadd.f32 %v4531, %v4565
        %v4568 = vadd.f32 %v4532, %v4565
        %v4569 = vadd.f32 %v4533, %v4565
        %v4570 = vadd.f32 %v4534, %v4565
        %v4571 = vadd.f32 %v4535, %v4565
        %v4572 = vadd.f32 %v4536, %v4565
        %v4573 = vadd.f32 %v4537, %v4565
        %v4574 = vadd.f32 %v4538, %v4565
        %v4575 = vadd.f32 %v4539, %v4565
        %v4576 = vadd.f32 %v4540, %v4565
        %v4577 = vadd.f32 %v4541, %v4565
        %v4578 = vadd.f32 %v4542, %v4565
        %v4579 = vadd.f32 %v4543, %v4565
        %v4580 = vadd.f32 %v4544, %v4565
        %v4581 = vadd.f32 %v4545, %v4565
        %v4582 = vadd.f32 %v4546, %v4565
        %v4583 = vadd.f32 %v4547, %v4565
        %v4584 = vadd.f32 %v4548, %v4565
        %v4585 = vadd.f32 %v4549, %v4565
        %v4586 = vadd.f32 %v4550, %v4565
        %v4587 = vadd.f32 %v4551, %v4565
        %v4588 = vadd.f32 %v4552, %v4565
        %v4589 = vadd.f32 %v4553, %v4565
        %v4590 = vadd.f32 %v4554, %v4565
        %v4591 = vadd.f32 %v4555, %v4565
        %v4592 = vadd.f32 %v4556, %v4565
        %v4593 = vadd.f32 %v4557, %v4565
        %v4594 = vadd.f32 %v4558, %v4565
        %v4595 = vadd.f32 %v4559, %v4565
        %v4596 = vadd.f32 %v4560, %v4565
        %v4597 = vadd.f32 %v4561, %v4565
        %v4598 = vadd.f32 %v4562, %v4565
        %v4599 = vmax.f32 %v4567, 0.0
        %v4600 = vmax.f32 %v4568, 0.0
        %v4601 = vmax.f32 %v4569, 0.0
        %v4602 = vmax.f32 %v4570, 0.0
        %v4603 = vmax.f32 %v4571, 0.0
        %v4604 = vmax.f32 %v4572, 0.0
        %v4605 = vmax.f32 %v4573, 0.0
        %v4606 = vmax.f32 %v4574, 0.0
        %v4607 = vmax.f32 %v4575, 0.0
        %v4608 = vmax.f32 %v4576, 0.0
        %v4609 = vmax.f32 %v4577, 0.0
        %v4610 = vmax.f32 %v4578, 0.0
        %v4611 = vmax.f32 %v4579, 0.0
        %v4612 = vmax.f32 %v4580, 0.0
        %v4613 = vmax.f32 %v4581, 0.0
        %v4614 = vmax.f32 %v4582, 0.0
        %v4615 = vmax.f32 %v4583, 0.0
        %v4616 = vmax.f32 %v4584, 0.0
        %v4617 = vmax.f32 %v4585, 0.0
        %v4618 = vmax.f32 %v4586, 0.0
        %v4619 = vmax.f32 %v4587, 0.0
        %v4620 = vmax.f32 %v4588, 0.0
        %v4621 = vmax.f32 %v4589, 0.0
        %v4622 = vmax.f32 %v4590, 0.0
        %v4623 = vmax.f32 %v4591, 0.0
        %v4624 = vmax.f32 %v4592, 0.0
        %v4625 = vmax.f32 %v4593, 0.0
        %v4626 = vmax.f32 %v4594, 0.0
        %v4627 = vmax.f32 %v4595, 0.0
        %v4628 = vmax.f32 %v4596, 0.0
        %v4629 = vmax.f32 %v4597, 0.0
        %v4630 = vmax.f32 %v4598, 0.0
        %v4663 = vrot.slane %v4599, 2
        %v4664 = vrot.slane %v4599, 4
        %v4665 = vrot.slane %v4599, 6
        %v4666 = vrot.slane %v4600, 2
        %v4667 = vrot.slane %v4600, 4
        %v4668 = vrot.slane %v4600, 6
        %v4669 = vrot.slane %v4601, 2
        %v4670 = vrot.slane %v4601, 4
        %v4671 = vrot.slane %v4601, 6
        %v4672 = vrot.slane %v4602, 2
        %v4673 = vrot.slane %v4602, 4
        %v4674 = vrot.slane %v4602, 6
        %v4675 = vrot.slane %v4603, 2
        %v4676 = vrot.slane %v4603, 4
        %v4677 = vrot.slane %v4603, 6
        %v4678 = vrot.slane %v4604, 2
        %v4679 = vrot.slane %v4604, 4
        %v4680 = vrot.slane %v4604, 6
        %v4681 = vrot.slane %v4605, 2
        %v4682 = vrot.slane %v4605, 4
        %v4683 = vrot.slane %v4605, 6
        %v4684 = vrot.slane %v4606, 2
        %v4685 = vrot.slane %v4606, 4
        %v4686 = vrot.slane %v4606, 6
        %v4687 = vrot.slane %v4607, 2
        %v4688 = vrot.slane %v4607, 4
        %v4689 = vrot.slane %v4607, 6
        %v4690 = vrot.slane %v4608, 2
        %v4691 = vrot.slane %v4608, 4
        %v4692 = vrot.slane %v4608, 6
        %v4693 = vrot.slane %v4609, 2
        %v4694 = vrot.slane %v4609, 4
        %v4695 = vrot.slane %v4609, 6
        %v4696 = vrot.slane %v4610, 2
        %v4697 = vrot.slane %v4610, 4
        %v4698 = vrot.slane %v4610, 6
        %v4699 = vrot.slane %v4611, 2
        %v4700 = vrot.slane %v4611, 4
        %v4701 = vrot.slane %v4611, 6
        %v4702 = vrot.slane %v4612, 2
        %v4703 = vrot.slane %v4612, 4
        %v4704 = vrot.slane %v4612, 6
        %v4705 = vrot.slane %v4613, 2
        %v4706 = vrot.slane %v4613, 4
        %v4707 = vrot.slane %v4613, 6
        %v4708 = vrot.slane %v4614, 2
        %v4709 = vrot.slane %v4614, 4
        %v4710 = vrot.slane %v4614, 6
        %v4711 = vrot.slane %v4615, 2
        %v4712 = vrot.slane %v4615, 4
        %v4713 = vrot.slane %v4615, 6
        %v4714 = vrot.slane %v4616, 2
        %v4715 = vrot.slane %v4616, 4
        %v4716 = vrot.slane %v4616, 6
        %v4717 = vrot.slane %v4617, 2
        %v4718 = vrot.slane %v4617, 4
        %v4719 = vrot.slane %v4617, 6
        %v4720 = vrot.slane %v4618, 2
        %v4721 = vrot.slane %v4618, 4
        %v4722 = vrot.slane %v4618, 6
        %v4723 = vrot.slane %v4619, 2
        %v4724 = vrot.slane %v4619, 4
        %v4725 = vrot.slane %v4619, 6
        %v4726 = vrot.slane %v4620, 2
        %v4727 = vrot.slane %v4620, 4
        %v4728 = vrot.slane %v4620, 6
        %v4729 = vrot.slane %v4621, 2
        %v4730 = vrot.slane %v4621, 4
        %v4731 = vrot.slane %v4621, 6
        %v4732 = vrot.slane %v4622, 2
        %v4733 = vrot.slane %v4622, 4
        %v4734 = vrot.slane %v4622, 6
        %v4735 = vrot.slane %v4623, 2
        %v4736 = vrot.slane %v4623, 4
        %v4737 = vrot.slane %v4623, 6
        %v4738 = vrot.slane %v4624, 2
        %v4739 = vrot.slane %v4624, 4
        %v4740 = vrot.slane %v4624, 6
        %v4741 = vrot.slane %v4625, 2
        %v4742 = vrot.slane %v4625, 4
        %v4743 = vrot.slane %v4625, 6
        %v4744 = vrot.slane %v4626, 2
        %v4745 = vrot.slane %v4626, 4
        %v4746 = vrot.slane %v4626, 6
        %v4747 = vrot.slane %v4627, 2
        %v4748 = vrot.slane %v4627, 4
        %v4749 = vrot.slane %v4627, 6
        %v4750 = vrot.slane %v4628, 2
        %v4751 = vrot.slane %v4628, 4
        %v4752 = vrot.slane %v4628, 6
        %v4753 = vrot.slane %v4629, 2
        %v4754 = vrot.slane %v4629, 4
        %v4755 = vrot.slane %v4629, 6
        %v4756 = vrot.slane %v4630, 2
        %v4757 = vrot.slane %v4630, 4
        %v4758 = vrot.slane %v4630, 6
        %vm4855 = vcmask 1041408
        %v4856 = vsel %vm4855, %v4599, -inf
        %v4857 = vrot.slane %v4856, 4
        %v4858 = vmax.f32 %v4856, %v4857
        %v4859 = vrot.slane %v4858, 2
        %v4860 = vmax.f32 %v4858, %v4859
        %v4861 = vrot.slane %v4860, 1
        %v4862 = vmax.f32 %v4860, %v4861
        %v4863 = vsel %vm4855, %v4663, -inf
        %v4864 = vrot.slane %v4863, 4
        %v4865 = vmax.f32 %v4863, %v4864
        %v4866 = vrot.slane %v4865, 2
        %v4867 = vmax.f32 %v4865, %v4866
        %v4868 = vrot.slane %v4867, 1
        %v4869 = vmax.f32 %v4867, %v4868
        %v4870 = vsel %vm4855, %v4664, -inf
        %v4871 = vrot.slane %v4870, 4
        %v4872 = vmax.f32 %v4870, %v4871
        %v4873 = vrot.slane %v4872, 2
        %v4874 = vmax.f32 %v4872, %v4873
        %v4875 = vrot.slane %v4874, 1
        %v4876 = vmax.f32 %v4874, %v4875
        %v4877 = vsel %vm4855, %v4665, -inf
        %v4878 = vrot.slane %v4877, 4
        %v4879 = vmax.f32 %v4877, %v4878
        %v4880 = vrot.slane %v4879, 2
        %v4881 = vmax.f32 %v4879, %v4880
        %v4882 = vrot.slane %v4881, 1
        %v4883 = vmax.f32 %v4881, %v4882
        %v4884 = vsel %vm4855, %v4600, -inf
        %v4885 = vrot.slane %v4884, 4
        %v4886 = vmax.f32 %v4884, %v4885
        %v4887 = vrot.slane %v4886, 2
        %v4888 = vmax.f32 %v4886, %v4887
        %v4889 = vrot.slane %v4888, 1
        %v4890 = vmax.f32 %v4888, %v4889
        %v4891 = vsel %vm4855, %v4666, -inf
        %v4892 = vrot.slane %v4891, 4
        %v4893 = vmax.f32 %v4891, %v4892
        %v4894 = vrot.slane %v4893, 2
        %v4895 = vmax.f32 %v4893, %v4894
        %v4896 = vrot.slane %v4895, 1
        %v4897 = vmax.f32 %v4895, %v4896
        %v4898 = vsel %vm4855, %v4667, -inf
        %v4899 = vrot.slane %v4898, 4
        %v4900 = vmax.f32 %v4898, %v4899
        %v4901 = vrot.slane %v4900, 2
        %v4902 = vmax.f32 %v4900, %v4901
        %v4903 = vrot.slane %v4902, 1
        %v4904 = vmax.f32 %v4902, %v4903
        %v4905 = vsel %vm4855, %v4668, -inf
        %v4906 = vrot.slane %v4905, 4
        %v4907 = vmax.f32 %v4905, %v4906
        %v4908 = vrot.slane %v4907, 2
        %v4909 = vmax.f32 %v4907, %v4908
        %v4910 = vrot.slane %v4909, 1
        %v4911 = vmax.f32 %v4909, %v4910
        %v4912 = vsel %vm4855, %v4601, -inf
        %v4913 = vrot.slane %v4912, 4
        %v4914 = vmax.f32 %v4912, %v4913
        %v4915 = vrot.slane %v4914, 2
        %v4916 = vmax.f32 %v4914, %v4915
        %v4917 = vrot.slane %v4916, 1
        %v4918 = vmax.f32 %v4916, %v4917
        %v4919 = vsel %vm4855, %v4669, -inf
        %v4920 = vrot.slane %v4919, 4
        %v4921 = vmax.f32 %v4919, %v4920
        %v4922 = vrot.slane %v4921, 2
        %v4923 = vmax.f32 %v4921, %v4922
        %v4924 = vrot.slane %v4923, 1
        %v4925 = vmax.f32 %v4923, %v4924
        %v4926 = vsel %vm4855, %v4670, -inf
        %v4927 = vrot.slane %v4926, 4
        %v4928 = vmax.f32 %v4926, %v4927
        %v4929 = vrot.slane %v4928, 2
        %v4930 = vmax.f32 %v4928, %v4929
        %v4931 = vrot.slane %v4930, 1
        %v4932 = vmax.f32 %v4930, %v4931
        %v4933 = vsel %vm4855, %v4671, -inf
        %v4934 = vrot.slane %v4933, 4
        %v4935 = vmax.f32 %v4933, %v4934
        %v4936 = vrot.slane %v4935, 2
        %v4937 = vmax.f32 %v4935, %v4936
        %v4938 = vrot.slane %v4937, 1
        %v4939 = vmax.f32 %v4937, %v4938
        %v4940 = vsel %vm4855, %v4602, -inf
        %v4941 = vrot.slane %v4940, 4
        %v4942 = vmax.f32 %v4940, %v4941
        %v4943 = vrot.slane %v4942, 2
        %v4944 = vmax.f32 %v4942, %v4943
        %v4945 = vrot.slane %v4944, 1
        %v4946 = vmax.f32 %v4944, %v4945
        %v4947 = vsel %vm4855, %v4672, -inf
        %v4948 = vrot.slane %v4947, 4
        %v4949 = vmax.f32 %v4947, %v4948
        %v4950 = vrot.slane %v4949, 2
        %v4951 = vmax.f32 %v4949, %v4950
        %v4952 = vrot.slane %v4951, 1
        %v4953 = vmax.f32 %v4951, %v4952
        %v4954 = vsel %vm4855, %v4673, -inf
        %v4955 = vrot.slane %v4954, 4
        %v4956 = vmax.f32 %v4954, %v4955
        %v4957 = vrot.slane %v4956, 2
        %v4958 = vmax.f32 %v4956, %v4957
        %v4959 = vrot.slane %v4958, 1
        %v4960 = vmax.f32 %v4958, %v4959
        %v4961 = vsel %vm4855, %v4674, -inf
        %v4962 = vrot.slane %v4961, 4
        %v4963 = vmax.f32 %v4961, %v4962
        %v4964 = vrot.slane %v4963, 2
        %v4965 = vmax.f32 %v4963, %v4964
        %v4966 = vrot.slane %v4965, 1
        %v4967 = vmax.f32 %v4965, %v4966
        %v4968 = vsel %vm4855, %v4603, -inf
        %v4969 = vrot.slane %v4968, 4
        %v4970 = vmax.f32 %v4968, %v4969
        %v4971 = vrot.slane %v4970, 2
        %v4972 = vmax.f32 %v4970, %v4971
        %v4973 = vrot.slane %v4972, 1
        %v4974 = vmax.f32 %v4972, %v4973
        %v4975 = vsel %vm4855, %v4675, -inf
        %v4976 = vrot.slane %v4975, 4
        %v4977 = vmax.f32 %v4975, %v4976
        %v4978 = vrot.slane %v4977, 2
        %v4979 = vmax.f32 %v4977, %v4978
        %v4980 = vrot.slane %v4979, 1
        %v4981 = vmax.f32 %v4979, %v4980
        %v4982 = vsel %vm4855, %v4676, -inf
        %v4983 = vrot.slane %v4982, 4
        %v4984 = vmax.f32 %v4982, %v4983
        %v4985 = vrot.slane %v4984, 2
        %v4986 = vmax.f32 %v4984, %v4985
        %v4987 = vrot.slane %v4986, 1
        %v4988 = vmax.f32 %v4986, %v4987
        %v4989 = vsel %vm4855, %v4677, -inf
        %v4990 = vrot.slane %v4989, 4
        %v4991 = vmax.f32 %v4989, %v4990
        %v4992 = vrot.slane %v4991, 2
        %v4993 = vmax.f32 %v4991, %v4992
        %v4994 = vrot.slane %v4993, 1
        %v4995 = vmax.f32 %v4993, %v4994
        %v4996 = vsel %vm4855, %v4604, -inf
        %v4997 = vrot.slane %v4996, 4
        %v4998 = vmax.f32 %v4996, %v4997
        %v4999 = vrot.slane %v4998, 2
        %v5000 = vmax.f32 %v4998, %v4999
        %v5001 = vrot.slane %v5000, 1
        %v5002 = vmax.f32 %v5000, %v5001
        %v5003 = vsel %vm4855, %v4678, -inf
        %v5004 = vrot.slane %v5003, 4
        %v5005 = vmax.f32 %v5003, %v5004
        %v5006 = vrot.slane %v5005, 2
        %v5007 = vmax.f32 %v5005, %v5006
        %v5008 = vrot.slane %v5007, 1
        %v5009 = vmax.f32 %v5007, %v5008
        %v5010 = vsel %vm4855, %v4679, -inf
        %v5011 = vrot.slane %v5010, 4
        %v5012 = vmax.f32 %v5010, %v5011
        %v5013 = vrot.slane %v5012, 2
        %v5014 = vmax.f32 %v5012, %v5013
        %v5015 = vrot.slane %v5014, 1
        %v5016 = vmax.f32 %v5014, %v5015
        %v5017 = vsel %vm4855, %v4680, -inf
        %v5018 = vrot.slane %v5017, 4
        %v5019 = vmax.f32 %v5017, %v5018
        %v5020 = vrot.slane %v5019, 2
        %v5021 = vmax.f32 %v5019, %v5020
        %v5022 = vrot.slane %v5021, 1
        %v5023 = vmax.f32 %v5021, %v5022
        %v5024 = vsel %vm4855, %v4605, -inf
        %v5025 = vrot.slane %v5024, 4
        %v5026 = vmax.f32 %v5024, %v5025
        %v5027 = vrot.slane %v5026, 2
        %v5028 = vmax.f32 %v5026, %v5027
        %v5029 = vrot.slane %v5028, 1
        %v5030 = vmax.f32 %v5028, %v5029
        %v5031 = vsel %vm4855, %v4681, -inf
        %v5032 = vrot.slane %v5031, 4
        %v5033 = vmax.f32 %v5031, %v5032
        %v5034 = vrot.slane %v5033, 2
        %v5035 = vmax.f32 %v5033, %v5034
        %v5036 = vrot.slane %v5035, 1
        %v5037 = vmax.f32 %v5035, %v5036
        %v5038 = vsel %vm4855, %v4682, -inf
        %v5039 = vrot.slane %v5038, 4
        %v5040 = vmax.f32 %v5038, %v5039
        %v5041 = vrot.slane %v5040, 2
        %v5042 = vmax.f32 %v5040, %v5041
        %v5043 = vrot.slane %v5042, 1
        %v5044 = vmax.f32 %v5042, %v5043
        %v5045 = vsel %vm4855, %v4683, -inf
        %v5046 = vrot.slane %v5045, 4
        %v5047 = vmax.f32 %v5045, %v5046
        %v5048 = vrot.slane %v5047, 2
        %v5049 = vmax.f32 %v5047, %v5048
        %v5050 = vrot.slane %v5049, 1
        %v5051 = vmax.f32 %v5049, %v5050
        %v5052 = vsel %vm4855, %v4606, -inf
        %v5053 = vrot.slane %v5052, 4
        %v5054 = vmax.f32 %v5052, %v5053
        %v5055 = vrot.slane %v5054, 2
        %v5056 = vmax.f32 %v5054, %v5055
        %v5057 = vrot.slane %v5056, 1
        %v5058 = vmax.f32 %v5056, %v5057
        %v5059 = vsel %vm4855, %v4684, -inf
        %v5060 = vrot.slane %v5059, 4
        %v5061 = vmax.f32 %v5059, %v5060
        %v5062 = vrot.slane %v5061, 2
        %v5063 = vmax.f32 %v5061, %v5062
        %v5064 = vrot.slane %v5063, 1
        %v5065 = vmax.f32 %v5063, %v5064
        %v5066 = vsel %vm4855, %v4685, -inf
        %v5067 = vrot.slane %v5066, 4
        %v5068 = vmax.f32 %v5066, %v5067
        %v5069 = vrot.slane %v5068, 2
        %v5070 = vmax.f32 %v5068, %v5069
        %v5071 = vrot.slane %v5070, 1
        %v5072 = vmax.f32 %v5070, %v5071
        %v5073 = vsel %vm4855, %v4686, -inf
        %v5074 = vrot.slane %v5073, 4
        %v5075 = vmax.f32 %v5073, %v5074
        %v5076 = vrot.slane %v5075, 2
        %v5077 = vmax.f32 %v5075, %v5076
        %v5078 = vrot.slane %v5077, 1
        %v5079 = vmax.f32 %v5077, %v5078
        %v5080 = vsel %vm4855, %v4607, -inf
        %v5081 = vrot.slane %v5080, 4
        %v5082 = vmax.f32 %v5080, %v5081
        %v5083 = vrot.slane %v5082, 2
        %v5084 = vmax.f32 %v5082, %v5083
        %v5085 = vrot.slane %v5084, 1
        %v5086 = vmax.f32 %v5084, %v5085
        %v5087 = vsel %vm4855, %v4687, -inf
        %v5088 = vrot.slane %v5087, 4
        %v5089 = vmax.f32 %v5087, %v5088
        %v5090 = vrot.slane %v5089, 2
        %v5091 = vmax.f32 %v5089, %v5090
        %v5092 = vrot.slane %v5091, 1
        %v5093 = vmax.f32 %v5091, %v5092
        %v5094 = vsel %vm4855, %v4688, -inf
        %v5095 = vrot.slane %v5094, 4
        %v5096 = vmax.f32 %v5094, %v5095
        %v5097 = vrot.slane %v5096, 2
        %v5098 = vmax.f32 %v5096, %v5097
        %v5099 = vrot.slane %v5098, 1
        %v5100 = vmax.f32 %v5098, %v5099
        %v5101 = vsel %vm4855, %v4689, -inf
        %v5102 = vrot.slane %v5101, 4
        %v5103 = vmax.f32 %v5101, %v5102
        %v5104 = vrot.slane %v5103, 2
        %v5105 = vmax.f32 %v5103, %v5104
        %v5106 = vrot.slane %v5105, 1
        %v5107 = vmax.f32 %v5105, %v5106
        %v5108 = vsel %vm4855, %v4608, -inf
        %v5109 = vrot.slane %v5108, 4
        %v5110 = vmax.f32 %v5108, %v5109
        %v5111 = vrot.slane %v5110, 2
        %v5112 = vmax.f32 %v5110, %v5111
        %v5113 = vrot.slane %v5112, 1
        %v5114 = vmax.f32 %v5112, %v5113
        %v5115 = vsel %vm4855, %v4690, -inf
        %v5116 = vrot.slane %v5115, 4
        %v5117 = vmax.f32 %v5115, %v5116
        %v5118 = vrot.slane %v5117, 2
        %v5119 = vmax.f32 %v5117, %v5118
        %v5120 = vrot.slane %v5119, 1
        %v5121 = vmax.f32 %v5119, %v5120
        %v5122 = vsel %vm4855, %v4691, -inf
        %v5123 = vrot.slane %v5122, 4
        %v5124 = vmax.f32 %v5122, %v5123
        %v5125 = vrot.slane %v5124, 2
        %v5126 = vmax.f32 %v5124, %v5125
        %v5127 = vrot.slane %v5126, 1
        %v5128 = vmax.f32 %v5126, %v5127
        %v5129 = vsel %vm4855, %v4692, -inf
        %v5130 = vrot.slane %v5129, 4
        %v5131 = vmax.f32 %v5129, %v5130
        %v5132 = vrot.slane %v5131, 2
        %v5133 = vmax.f32 %v5131, %v5132
        %v5134 = vrot.slane %v5133, 1
        %v5135 = vmax.f32 %v5133, %v5134
        %v5136 = vsel %vm4855, %v4609, -inf
        %v5137 = vrot.slane %v5136, 4
        %v5138 = vmax.f32 %v5136, %v5137
        %v5139 = vrot.slane %v5138, 2
        %v5140 = vmax.f32 %v5138, %v5139
        %v5141 = vrot.slane %v5140, 1
        %v5142 = vmax.f32 %v5140, %v5141
        %v5143 = vsel %vm4855, %v4693, -inf
        %v5144 = vrot.slane %v5143, 4
        %v5145 = vmax.f32 %v5143, %v5144
        %v5146 = vrot.slane %v5145, 2
        %v5147 = vmax.f32 %v5145, %v5146
        %v5148 = vrot.slane %v5147, 1
        %v5149 = vmax.f32 %v5147, %v5148
        %v5150 = vsel %vm4855, %v4694, -inf
        %v5151 = vrot.slane %v5150, 4
        %v5152 = vmax.f32 %v5150, %v5151
        %v5153 = vrot.slane %v5152, 2
        %v5154 = vmax.f32 %v5152, %v5153
        %v5155 = vrot.slane %v5154, 1
        %v5156 = vmax.f32 %v5154, %v5155
        %v5157 = vsel %vm4855, %v4695, -inf
        %v5158 = vrot.slane %v5157, 4
        %v5159 = vmax.f32 %v5157, %v5158
        %v5160 = vrot.slane %v5159, 2
        %v5161 = vmax.f32 %v5159, %v5160
        %v5162 = vrot.slane %v5161, 1
        %v5163 = vmax.f32 %v5161, %v5162
        %v5164 = vsel %vm4855, %v4610, -inf
        %v5165 = vrot.slane %v5164, 4
        %v5166 = vmax.f32 %v5164, %v5165
        %v5167 = vrot.slane %v5166, 2
        %v5168 = vmax.f32 %v5166, %v5167
        %v5169 = vrot.slane %v5168, 1
        %v5170 = vmax.f32 %v5168, %v5169
        %v5171 = vsel %vm4855, %v4696, -inf
        %v5172 = vrot.slane %v5171, 4
        %v5173 = vmax.f32 %v5171, %v5172
        %v5174 = vrot.slane %v5173, 2
        %v5175 = vmax.f32 %v5173, %v5174
        %v5176 = vrot.slane %v5175, 1
        %v5177 = vmax.f32 %v5175, %v5176
        %v5178 = vsel %vm4855, %v4697, -inf
        %v5179 = vrot.slane %v5178, 4
        %v5180 = vmax.f32 %v5178, %v5179
        %v5181 = vrot.slane %v5180, 2
        %v5182 = vmax.f32 %v5180, %v5181
        %v5183 = vrot.slane %v5182, 1
        %v5184 = vmax.f32 %v5182, %v5183
        %v5185 = vsel %vm4855, %v4698, -inf
        %v5186 = vrot.slane %v5185, 4
        %v5187 = vmax.f32 %v5185, %v5186
        %v5188 = vrot.slane %v5187, 2
        %v5189 = vmax.f32 %v5187, %v5188
        %v5190 = vrot.slane %v5189, 1
        %v5191 = vmax.f32 %v5189, %v5190
        %v5192 = vsel %vm4855, %v4611, -inf
        %v5193 = vrot.slane %v5192, 4
        %v5194 = vmax.f32 %v5192, %v5193
        %v5195 = vrot.slane %v5194, 2
        %v5196 = vmax.f32 %v5194, %v5195
        %v5197 = vrot.slane %v5196, 1
        %v5198 = vmax.f32 %v5196, %v5197
        %v5199 = vsel %vm4855, %v4699, -inf
        %v5200 = vrot.slane %v5199, 4
        %v5201 = vmax.f32 %v5199, %v5200
        %v5202 = vrot.slane %v5201, 2
        %v5203 = vmax.f32 %v5201, %v5202
        %v5204 = vrot.slane %v5203, 1
        %v5205 = vmax.f32 %v5203, %v5204
        %v5206 = vsel %vm4855, %v4700, -inf
        %v5207 = vrot.slane %v5206, 4
        %v5208 = vmax.f32 %v5206, %v5207
        %v5209 = vrot.slane %v5208, 2
        %v5210 = vmax.f32 %v5208, %v5209
        %v5211 = vrot.slane %v5210, 1
        %v5212 = vmax.f32 %v5210, %v5211
        %v5213 = vsel %vm4855, %v4701, -inf
        %v5214 = vrot.slane %v5213, 4
        %v5215 = vmax.f32 %v5213, %v5214
        %v5216 = vrot.slane %v5215, 2
        %v5217 = vmax.f32 %v5215, %v5216
        %v5218 = vrot.slane %v5217, 1
        %v5219 = vmax.f32 %v5217, %v5218
        %v5220 = vsel %vm4855, %v4612, -inf
        %v5221 = vrot.slane %v5220, 4
        %v5222 = vmax.f32 %v5220, %v5221
        %v5223 = vrot.slane %v5222, 2
        %v5224 = vmax.f32 %v5222, %v5223
        %v5225 = vrot.slane %v5224, 1
        %v5226 = vmax.f32 %v5224, %v5225
        %v5227 = vsel %vm4855, %v4702, -inf
        %v5228 = vrot.slane %v5227, 4
        %v5229 = vmax.f32 %v5227, %v5228
        %v5230 = vrot.slane %v5229, 2
        %v5231 = vmax.f32 %v5229, %v5230
        %v5232 = vrot.slane %v5231, 1
        %v5233 = vmax.f32 %v5231, %v5232
        %v5234 = vsel %vm4855, %v4703, -inf
        %v5235 = vrot.slane %v5234, 4
        %v5236 = vmax.f32 %v5234, %v5235
        %v5237 = vrot.slane %v5236, 2
        %v5238 = vmax.f32 %v5236, %v5237
        %v5239 = vrot.slane %v5238, 1
        %v5240 = vmax.f32 %v5238, %v5239
        %v5241 = vsel %vm4855, %v4704, -inf
        %v5242 = vrot.slane %v5241, 4
        %v5243 = vmax.f32 %v5241, %v5242
        %v5244 = vrot.slane %v5243, 2
        %v5245 = vmax.f32 %v5243, %v5244
        %v5246 = vrot.slane %v5245, 1
        %v5247 = vmax.f32 %v5245, %v5246
        %v5248 = vsel %vm4855, %v4613, -inf
        %v5249 = vrot.slane %v5248, 4
        %v5250 = vmax.f32 %v5248, %v5249
        %v5251 = vrot.slane %v5250, 2
        %v5252 = vmax.f32 %v5250, %v5251
        %v5253 = vrot.slane %v5252, 1
        %v5254 = vmax.f32 %v5252, %v5253
        %v5255 = vsel %vm4855, %v4705, -inf
        %v5256 = vrot.slane %v5255, 4
        %v5257 = vmax.f32 %v5255, %v5256
        %v5258 = vrot.slane %v5257, 2
        %v5259 = vmax.f32 %v5257, %v5258
        %v5260 = vrot.slane %v5259, 1
        %v5261 = vmax.f32 %v5259, %v5260
        %v5262 = vsel %vm4855, %v4706, -inf
        %v5263 = vrot.slane %v5262, 4
        %v5264 = vmax.f32 %v5262, %v5263
        %v5265 = vrot.slane %v5264, 2
        %v5266 = vmax.f32 %v5264, %v5265
        %v5267 = vrot.slane %v5266, 1
        %v5268 = vmax.f32 %v5266, %v5267
        %v5269 = vsel %vm4855, %v4707, -inf
        %v5270 = vrot.slane %v5269, 4
        %v5271 = vmax.f32 %v5269, %v5270
        %v5272 = vrot.slane %v5271, 2
        %v5273 = vmax.f32 %v5271, %v5272
        %v5274 = vrot.slane %v5273, 1
        %v5275 = vmax.f32 %v5273, %v5274
        %v5276 = vsel %vm4855, %v4614, -inf
        %v5277 = vrot.slane %v5276, 4
        %v5278 = vmax.f32 %v5276, %v5277
        %v5279 = vrot.slane %v5278, 2
        %v5280 = vmax.f32 %v5278, %v5279
        %v5281 = vrot.slane %v5280, 1
        %v5282 = vmax.f32 %v5280, %v5281
        %v5283 = vsel %vm4855, %v4708, -inf
        %v5284 = vrot.slane %v5283, 4
        %v5285 = vmax.f32 %v5283, %v5284
        %v5286 = vrot.slane %v5285, 2
        %v5287 = vmax.f32 %v5285, %v5286
        %v5288 = vrot.slane %v5287, 1
        %v5289 = vmax.f32 %v5287, %v5288
        %v5290 = vsel %vm4855, %v4709, -inf
        %v5291 = vrot.slane %v5290, 4
        %v5292 = vmax.f32 %v5290, %v5291
        %v5293 = vrot.slane %v5292, 2
        %v5294 = vmax.f32 %v5292, %v5293
        %v5295 = vrot.slane %v5294, 1
        %v5296 = vmax.f32 %v5294, %v5295
        %v5297 = vsel %vm4855, %v4710, -inf
        %v5298 = vrot.slane %v5297, 4
        %v5299 = vmax.f32 %v5297, %v5298
        %v5300 = vrot.slane %v5299, 2
        %v5301 = vmax.f32 %v5299, %v5300
        %v5302 = vrot.slane %v5301, 1
        %v5303 = vmax.f32 %v5301, %v5302
        %v5304 = vsel %vm4855, %v4615, -inf
        %v5305 = vrot.slane %v5304, 4
        %v5306 = vmax.f32 %v5304, %v5305
        %v5307 = vrot.slane %v5306, 2
        %v5308 = vmax.f32 %v5306, %v5307
        %v5309 = vrot.slane %v5308, 1
        %v5310 = vmax.f32 %v5308, %v5309
        %v5311 = vsel %vm4855, %v4711, -inf
        %v5312 = vrot.slane %v5311, 4
        %v5313 = vmax.f32 %v5311, %v5312
        %v5314 = vrot.slane %v5313, 2
        %v5315 = vmax.f32 %v5313, %v5314
        %v5316 = vrot.slane %v5315, 1
        %v5317 = vmax.f32 %v5315, %v5316
        %v5318 = vsel %vm4855, %v4712, -inf
        %v5319 = vrot.slane %v5318, 4
        %v5320 = vmax.f32 %v5318, %v5319
        %v5321 = vrot.slane %v5320, 2
        %v5322 = vmax.f32 %v5320, %v5321
        %v5323 = vrot.slane %v5322, 1
        %v5324 = vmax.f32 %v5322, %v5323
        %v5325 = vsel %vm4855, %v4713, -inf
        %v5326 = vrot.slane %v5325, 4
        %v5327 = vmax.f32 %v5325, %v5326
        %v5328 = vrot.slane %v5327, 2
        %v5329 = vmax.f32 %v5327, %v5328
        %v5330 = vrot.slane %v5329, 1
        %v5331 = vmax.f32 %v5329, %v5330
        %v5332 = vsel %vm4855, %v4616, -inf
        %v5333 = vrot.slane %v5332, 4
        %v5334 = vmax.f32 %v5332, %v5333
        %v5335 = vrot.slane %v5334, 2
        %v5336 = vmax.f32 %v5334, %v5335
        %v5337 = vrot.slane %v5336, 1
        %v5338 = vmax.f32 %v5336, %v5337
        %v5339 = vsel %vm4855, %v4714, -inf
        %v5340 = vrot.slane %v5339, 4
        %v5341 = vmax.f32 %v5339, %v5340
        %v5342 = vrot.slane %v5341, 2
        %v5343 = vmax.f32 %v5341, %v5342
        %v5344 = vrot.slane %v5343, 1
        %v5345 = vmax.f32 %v5343, %v5344
        %v5346 = vsel %vm4855, %v4715, -inf
        %v5347 = vrot.slane %v5346, 4
        %v5348 = vmax.f32 %v5346, %v5347
        %v5349 = vrot.slane %v5348, 2
        %v5350 = vmax.f32 %v5348, %v5349
        %v5351 = vrot.slane %v5350, 1
        %v5352 = vmax.f32 %v5350, %v5351
        %v5353 = vsel %vm4855, %v4716, -inf
        %v5354 = vrot.slane %v5353, 4
        %v5355 = vmax.f32 %v5353, %v5354
        %v5356 = vrot.slane %v5355, 2
        %v5357 = vmax.f32 %v5355, %v5356
        %v5358 = vrot.slane %v5357, 1
        %v5359 = vmax.f32 %v5357, %v5358
        %v5360 = vsel %vm4855, %v4617, -inf
        %v5361 = vrot.slane %v5360, 4
        %v5362 = vmax.f32 %v5360, %v5361
        %v5363 = vrot.slane %v5362, 2
        %v5364 = vmax.f32 %v5362, %v5363
        %v5365 = vrot.slane %v5364, 1
        %v5366 = vmax.f32 %v5364, %v5365
        %v5367 = vsel %vm4855, %v4717, -inf
        %v5368 = vrot.slane %v5367, 4
        %v5369 = vmax.f32 %v5367, %v5368
        %v5370 = vrot.slane %v5369, 2
        %v5371 = vmax.f32 %v5369, %v5370
        %v5372 = vrot.slane %v5371, 1
        %v5373 = vmax.f32 %v5371, %v5372
        %v5374 = vsel %vm4855, %v4718, -inf
        %v5375 = vrot.slane %v5374, 4
        %v5376 = vmax.f32 %v5374, %v5375
        %v5377 = vrot.slane %v5376, 2
        %v5378 = vmax.f32 %v5376, %v5377
        %v5379 = vrot.slane %v5378, 1
        %v5380 = vmax.f32 %v5378, %v5379
        %v5381 = vsel %vm4855, %v4719, -inf
        %v5382 = vrot.slane %v5381, 4
        %v5383 = vmax.f32 %v5381, %v5382
        %v5384 = vrot.slane %v5383, 2
        %v5385 = vmax.f32 %v5383, %v5384
        %v5386 = vrot.slane %v5385, 1
        %v5387 = vmax.f32 %v5385, %v5386
        %v5388 = vsel %vm4855, %v4618, -inf
        %v5389 = vrot.slane %v5388, 4
        %v5390 = vmax.f32 %v5388, %v5389
        %v5391 = vrot.slane %v5390, 2
        %v5392 = vmax.f32 %v5390, %v5391
        %v5393 = vrot.slane %v5392, 1
        %v5394 = vmax.f32 %v5392, %v5393
        %v5395 = vsel %vm4855, %v4720, -inf
        %v5396 = vrot.slane %v5395, 4
        %v5397 = vmax.f32 %v5395, %v5396
        %v5398 = vrot.slane %v5397, 2
        %v5399 = vmax.f32 %v5397, %v5398
        %v5400 = vrot.slane %v5399, 1
        %v5401 = vmax.f32 %v5399, %v5400
        %v5402 = vsel %vm4855, %v4721, -inf
        %v5403 = vrot.slane %v5402, 4
        %v5404 = vmax.f32 %v5402, %v5403
        %v5405 = vrot.slane %v5404, 2
        %v5406 = vmax.f32 %v5404, %v5405
        %v5407 = vrot.slane %v5406, 1
        %v5408 = vmax.f32 %v5406, %v5407
        %v5409 = vsel %vm4855, %v4722, -inf
        %v5410 = vrot.slane %v5409, 4
        %v5411 = vmax.f32 %v5409, %v5410
        %v5412 = vrot.slane %v5411, 2
        %v5413 = vmax.f32 %v5411, %v5412
        %v5414 = vrot.slane %v5413, 1
        %v5415 = vmax.f32 %v5413, %v5414
        %v5416 = vsel %vm4855, %v4619, -inf
        %v5417 = vrot.slane %v5416, 4
        %v5418 = vmax.f32 %v5416, %v5417
        %v5419 = vrot.slane %v5418, 2
        %v5420 = vmax.f32 %v5418, %v5419
        %v5421 = vrot.slane %v5420, 1
        %v5422 = vmax.f32 %v5420, %v5421
        %v5423 = vsel %vm4855, %v4723, -inf
        %v5424 = vrot.slane %v5423, 4
        %v5425 = vmax.f32 %v5423, %v5424
        %v5426 = vrot.slane %v5425, 2
        %v5427 = vmax.f32 %v5425, %v5426
        %v5428 = vrot.slane %v5427, 1
        %v5429 = vmax.f32 %v5427, %v5428
        %v5430 = vsel %vm4855, %v4724, -inf
        %v5431 = vrot.slane %v5430, 4
        %v5432 = vmax.f32 %v5430, %v5431
        %v5433 = vrot.slane %v5432, 2
        %v5434 = vmax.f32 %v5432, %v5433
        %v5435 = vrot.slane %v5434, 1
        %v5436 = vmax.f32 %v5434, %v5435
        %v5437 = vsel %vm4855, %v4725, -inf
        %v5438 = vrot.slane %v5437, 4
        %v5439 = vmax.f32 %v5437, %v5438
        %v5440 = vrot.slane %v5439, 2
        %v5441 = vmax.f32 %v5439, %v5440
        %v5442 = vrot.slane %v5441, 1
        %v5443 = vmax.f32 %v5441, %v5442
        %v5444 = vsel %vm4855, %v4620, -inf
        %v5445 = vrot.slane %v5444, 4
        %v5446 = vmax.f32 %v5444, %v5445
        %v5447 = vrot.slane %v5446, 2
        %v5448 = vmax.f32 %v5446, %v5447
        %v5449 = vrot.slane %v5448, 1
        %v5450 = vmax.f32 %v5448, %v5449
        %v5451 = vsel %vm4855, %v4726, -inf
        %v5452 = vrot.slane %v5451, 4
        %v5453 = vmax.f32 %v5451, %v5452
        %v5454 = vrot.slane %v5453, 2
        %v5455 = vmax.f32 %v5453, %v5454
        %v5456 = vrot.slane %v5455, 1
        %v5457 = vmax.f32 %v5455, %v5456
        %v5458 = vsel %vm4855, %v4727, -inf
        %v5459 = vrot.slane %v5458, 4
        %v5460 = vmax.f32 %v5458, %v5459
        %v5461 = vrot.slane %v5460, 2
        %v5462 = vmax.f32 %v5460, %v5461
        %v5463 = vrot.slane %v5462, 1
        %v5464 = vmax.f32 %v5462, %v5463
        %v5465 = vsel %vm4855, %v4728, -inf
        %v5466 = vrot.slane %v5465, 4
        %v5467 = vmax.f32 %v5465, %v5466
        %v5468 = vrot.slane %v5467, 2
        %v5469 = vmax.f32 %v5467, %v5468
        %v5470 = vrot.slane %v5469, 1
        %v5471 = vmax.f32 %v5469, %v5470
        %v5472 = vsel %vm4855, %v4621, -inf
        %v5473 = vrot.slane %v5472, 4
        %v5474 = vmax.f32 %v5472, %v5473
        %v5475 = vrot.slane %v5474, 2
        %v5476 = vmax.f32 %v5474, %v5475
        %v5477 = vrot.slane %v5476, 1
        %v5478 = vmax.f32 %v5476, %v5477
        %v5479 = vsel %vm4855, %v4729, -inf
        %v5480 = vrot.slane %v5479, 4
        %v5481 = vmax.f32 %v5479, %v5480
        %v5482 = vrot.slane %v5481, 2
        %v5483 = vmax.f32 %v5481, %v5482
        %v5484 = vrot.slane %v5483, 1
        %v5485 = vmax.f32 %v5483, %v5484
        %v5486 = vsel %vm4855, %v4730, -inf
        %v5487 = vrot.slane %v5486, 4
        %v5488 = vmax.f32 %v5486, %v5487
        %v5489 = vrot.slane %v5488, 2
        %v5490 = vmax.f32 %v5488, %v5489
        %v5491 = vrot.slane %v5490, 1
        %v5492 = vmax.f32 %v5490, %v5491
        %v5493 = vsel %vm4855, %v4731, -inf
        %v5494 = vrot.slane %v5493, 4
        %v5495 = vmax.f32 %v5493, %v5494
        %v5496 = vrot.slane %v5495, 2
        %v5497 = vmax.f32 %v5495, %v5496
        %v5498 = vrot.slane %v5497, 1
        %v5499 = vmax.f32 %v5497, %v5498
        %v5500 = vsel %vm4855, %v4622, -inf
        %v5501 = vrot.slane %v5500, 4
        %v5502 = vmax.f32 %v5500, %v5501
        %v5503 = vrot.slane %v5502, 2
        %v5504 = vmax.f32 %v5502, %v5503
        %v5505 = vrot.slane %v5504, 1
        %v5506 = vmax.f32 %v5504, %v5505
        %v5507 = vsel %vm4855, %v4732, -inf
        %v5508 = vrot.slane %v5507, 4
        %v5509 = vmax.f32 %v5507, %v5508
        %v5510 = vrot.slane %v5509, 2
        %v5511 = vmax.f32 %v5509, %v5510
        %v5512 = vrot.slane %v5511, 1
        %v5513 = vmax.f32 %v5511, %v5512
        %v5514 = vsel %vm4855, %v4733, -inf
        %v5515 = vrot.slane %v5514, 4
        %v5516 = vmax.f32 %v5514, %v5515
        %v5517 = vrot.slane %v5516, 2
        %v5518 = vmax.f32 %v5516, %v5517
        %v5519 = vrot.slane %v5518, 1
        %v5520 = vmax.f32 %v5518, %v5519
        %v5521 = vsel %vm4855, %v4734, -inf
        %v5522 = vrot.slane %v5521, 4
        %v5523 = vmax.f32 %v5521, %v5522
        %v5524 = vrot.slane %v5523, 2
        %v5525 = vmax.f32 %v5523, %v5524
        %v5526 = vrot.slane %v5525, 1
        %v5527 = vmax.f32 %v5525, %v5526
        %v5528 = vsel %vm4855, %v4623, -inf
        %v5529 = vrot.slane %v5528, 4
        %v5530 = vmax.f32 %v5528, %v5529
        %v5531 = vrot.slane %v5530, 2
        %v5532 = vmax.f32 %v5530, %v5531
        %v5533 = vrot.slane %v5532, 1
        %v5534 = vmax.f32 %v5532, %v5533
        %v5535 = vsel %vm4855, %v4735, -inf
        %v5536 = vrot.slane %v5535, 4
        %v5537 = vmax.f32 %v5535, %v5536
        %v5538 = vrot.slane %v5537, 2
        %v5539 = vmax.f32 %v5537, %v5538
        %v5540 = vrot.slane %v5539, 1
        %v5541 = vmax.f32 %v5539, %v5540
        %v5542 = vsel %vm4855, %v4736, -inf
        %v5543 = vrot.slane %v5542, 4
        %v5544 = vmax.f32 %v5542, %v5543
        %v5545 = vrot.slane %v5544, 2
        %v5546 = vmax.f32 %v5544, %v5545
        %v5547 = vrot.slane %v5546, 1
        %v5548 = vmax.f32 %v5546, %v5547
        %v5549 = vsel %vm4855, %v4737, -inf
        %v5550 = vrot.slane %v5549, 4
        %v5551 = vmax.f32 %v5549, %v5550
        %v5552 = vrot.slane %v5551, 2
        %v5553 = vmax.f32 %v5551, %v5552
        %v5554 = vrot.slane %v5553, 1
        %v5555 = vmax.f32 %v5553, %v5554
        %v5556 = vsel %vm4855, %v4624, -inf
        %v5557 = vrot.slane %v5556, 4
        %v5558 = vmax.f32 %v5556, %v5557
        %v5559 = vrot.slane %v5558, 2
        %v5560 = vmax.f32 %v5558, %v5559
        %v5561 = vrot.slane %v5560, 1
        %v5562 = vmax.f32 %v5560, %v5561
        %v5563 = vsel %vm4855, %v4738, -inf
        %v5564 = vrot.slane %v5563, 4
        %v5565 = vmax.f32 %v5563, %v5564
        %v5566 = vrot.slane %v5565, 2
        %v5567 = vmax.f32 %v5565, %v5566
        %v5568 = vrot.slane %v5567, 1
        %v5569 = vmax.f32 %v5567, %v5568
        %v5570 = vsel %vm4855, %v4739, -inf
        %v5571 = vrot.slane %v5570, 4
        %v5572 = vmax.f32 %v5570, %v5571
        %v5573 = vrot.slane %v5572, 2
        %v5574 = vmax.f32 %v5572, %v5573
        %v5575 = vrot.slane %v5574, 1
        %v5576 = vmax.f32 %v5574, %v5575
        %v5577 = vsel %vm4855, %v4740, -inf
        %v5578 = vrot.slane %v5577, 4
        %v5579 = vmax.f32 %v5577, %v5578
        %v5580 = vrot.slane %v5579, 2
        %v5581 = vmax.f32 %v5579, %v5580
        %v5582 = vrot.slane %v5581, 1
        %v5583 = vmax.f32 %v5581, %v5582
        %v5584 = vsel %vm4855, %v4625, -inf
        %v5585 = vrot.slane %v5584, 4
        %v5586 = vmax.f32 %v5584, %v5585
        %v5587 = vrot.slane %v5586, 2
        %v5588 = vmax.f32 %v5586, %v5587
        %v5589 = vrot.slane %v5588, 1
        %v5590 = vmax.f32 %v5588, %v5589
        %v5591 = vsel %vm4855, %v4741, -inf
        %v5592 = vrot.slane %v5591, 4
        %v5593 = vmax.f32 %v5591, %v5592
        %v5594 = vrot.slane %v5593, 2
        %v5595 = vmax.f32 %v5593, %v5594
        %v5596 = vrot.slane %v5595, 1
        %v5597 = vmax.f32 %v5595, %v5596
        %v5598 = vsel %vm4855, %v4742, -inf
        %v5599 = vrot.slane %v5598, 4
        %v5600 = vmax.f32 %v5598, %v5599
        %v5601 = vrot.slane %v5600, 2
        %v5602 = vmax.f32 %v5600, %v5601
        %v5603 = vrot.slane %v5602, 1
        %v5604 = vmax.f32 %v5602, %v5603
        %v5605 = vsel %vm4855, %v4743, -inf
        %v5606 = vrot.slane %v5605, 4
        %v5607 = vmax.f32 %v5605, %v5606
        %v5608 = vrot.slane %v5607, 2
        %v5609 = vmax.f32 %v5607, %v5608
        %v5610 = vrot.slane %v5609, 1
        %v5611 = vmax.f32 %v5609, %v5610
        %v5612 = vsel %vm4855, %v4626, -inf
        %v5613 = vrot.slane %v5612, 4
        %v5614 = vmax.f32 %v5612, %v5613
        %v5615 = vrot.slane %v5614, 2
        %v5616 = vmax.f32 %v5614, %v5615
        %v5617 = vrot.slane %v5616, 1
        %v5618 = vmax.f32 %v5616, %v5617
        %v5619 = vsel %vm4855, %v4744, -inf
        %v5620 = vrot.slane %v5619, 4
        %v5621 = vmax.f32 %v5619, %v5620
        %v5622 = vrot.slane %v5621, 2
        %v5623 = vmax.f32 %v5621, %v5622
        %v5624 = vrot.slane %v5623, 1
        %v5625 = vmax.f32 %v5623, %v5624
        %v5626 = vsel %vm4855, %v4745, -inf
        %v5627 = vrot.slane %v5626, 4
        %v5628 = vmax.f32 %v5626, %v5627
        %v5629 = vrot.slane %v5628, 2
        %v5630 = vmax.f32 %v5628, %v5629
        %v5631 = vrot.slane %v5630, 1
        %v5632 = vmax.f32 %v5630, %v5631
        %v5633 = vsel %vm4855, %v4746, -inf
        %v5634 = vrot.slane %v5633, 4
        %v5635 = vmax.f32 %v5633, %v5634
        %v5636 = vrot.slane %v5635, 2
        %v5637 = vmax.f32 %v5635, %v5636
        %v5638 = vrot.slane %v5637, 1
        %v5639 = vmax.f32 %v5637, %v5638
        %v5640 = vsel %vm4855, %v4627, -inf
        %v5641 = vrot.slane %v5640, 4
        %v5642 = vmax.f32 %v5640, %v5641
        %v5643 = vrot.slane %v5642, 2
        %v5644 = vmax.f32 %v5642, %v5643
        %v5645 = vrot.slane %v5644, 1
        %v5646 = vmax.f32 %v5644, %v5645
        %v5647 = vsel %vm4855, %v4747, -inf
        %v5648 = vrot.slane %v5647, 4
        %v5649 = vmax.f32 %v5647, %v5648
        %v5650 = vrot.slane %v5649, 2
        %v5651 = vmax.f32 %v5649, %v5650
        %v5652 = vrot.slane %v5651, 1
        %v5653 = vmax.f32 %v5651, %v5652
        %v5654 = vsel %vm4855, %v4748, -inf
        %v5655 = vrot.slane %v5654, 4
        %v5656 = vmax.f32 %v5654, %v5655
        %v5657 = vrot.slane %v5656, 2
        %v5658 = vmax.f32 %v5656, %v5657
        %v5659 = vrot.slane %v5658, 1
        %v5660 = vmax.f32 %v5658, %v5659
        %v5661 = vsel %vm4855, %v4749, -inf
        %v5662 = vrot.slane %v5661, 4
        %v5663 = vmax.f32 %v5661, %v5662
        %v5664 = vrot.slane %v5663, 2
        %v5665 = vmax.f32 %v5663, %v5664
        %v5666 = vrot.slane %v5665, 1
        %v5667 = vmax.f32 %v5665, %v5666
        %v5668 = vsel %vm4855, %v4628, -inf
        %v5669 = vrot.slane %v5668, 4
        %v5670 = vmax.f32 %v5668, %v5669
        %v5671 = vrot.slane %v5670, 2
        %v5672 = vmax.f32 %v5670, %v5671
        %v5673 = vrot.slane %v5672, 1
        %v5674 = vmax.f32 %v5672, %v5673
        %v5675 = vsel %vm4855, %v4750, -inf
        %v5676 = vrot.slane %v5675, 4
        %v5677 = vmax.f32 %v5675, %v5676
        %v5678 = vrot.slane %v5677, 2
        %v5679 = vmax.f32 %v5677, %v5678
        %v5680 = vrot.slane %v5679, 1
        %v5681 = vmax.f32 %v5679, %v5680
        %v5682 = vsel %vm4855, %v4751, -inf
        %v5683 = vrot.slane %v5682, 4
        %v5684 = vmax.f32 %v5682, %v5683
        %v5685 = vrot.slane %v5684, 2
        %v5686 = vmax.f32 %v5684, %v5685
        %v5687 = vrot.slane %v5686, 1
        %v5688 = vmax.f32 %v5686, %v5687
        %v5689 = vsel %vm4855, %v4752, -inf
        %v5690 = vrot.slane %v5689, 4
        %v5691 = vmax.f32 %v5689, %v5690
        %v5692 = vrot.slane %v5691, 2
        %v5693 = vmax.f32 %v5691, %v5692
        %v5694 = vrot.slane %v5693, 1
        %v5695 = vmax.f32 %v5693, %v5694
        %v5696 = vsel %vm4855, %v4629, -inf
        %v5697 = vrot.slane %v5696, 4
        %v5698 = vmax.f32 %v5696, %v5697
        %v5699 = vrot.slane %v5698, 2
        %v5700 = vmax.f32 %v5698, %v5699
        %v5701 = vrot.slane %v5700, 1
        %v5702 = vmax.f32 %v5700, %v5701
        %v5703 = vsel %vm4855, %v4753, -inf
        %v5704 = vrot.slane %v5703, 4
        %v5705 = vmax.f32 %v5703, %v5704
        %v5706 = vrot.slane %v5705, 2
        %v5707 = vmax.f32 %v5705, %v5706
        %v5708 = vrot.slane %v5707, 1
        %v5709 = vmax.f32 %v5707, %v5708
        %v5710 = vsel %vm4855, %v4754, -inf
        %v5711 = vrot.slane %v5710, 4
        %v5712 = vmax.f32 %v5710, %v5711
        %v5713 = vrot.slane %v5712, 2
        %v5714 = vmax.f32 %v5712, %v5713
        %v5715 = vrot.slane %v5714, 1
        %v5716 = vmax.f32 %v5714, %v5715
        %v5717 = vsel %vm4855, %v4755, -inf
        %v5718 = vrot.slane %v5717, 4
        %v5719 = vmax.f32 %v5717, %v5718
        %v5720 = vrot.slane %v5719, 2
        %v5721 = vmax.f32 %v5719, %v5720
        %v5722 = vrot.slane %v5721, 1
        %v5723 = vmax.f32 %v5721, %v5722
        %v5724 = vsel %vm4855, %v4630, -inf
        %v5725 = vrot.slane %v5724, 4
        %v5726 = vmax.f32 %v5724, %v5725
        %v5727 = vrot.slane %v5726, 2
        %v5728 = vmax.f32 %v5726, %v5727
        %v5729 = vrot.slane %v5728, 1
        %v5730 = vmax.f32 %v5728, %v5729
        %v5731 = vsel %vm4855, %v4756, -inf
        %v5732 = vrot.slane %v5731, 4
        %v5733 = vmax.f32 %v5731, %v5732
        %v5734 = vrot.slane %v5733, 2
        %v5735 = vmax.f32 %v5733, %v5734
        %v5736 = vrot.slane %v5735, 1
        %v5737 = vmax.f32 %v5735, %v5736
        %v5738 = vsel %vm4855, %v4757, -inf
        %v5739 = vrot.slane %v5738, 4
        %v5740 = vmax.f32 %v5738, %v5739
        %v5741 = vrot.slane %v5740, 2
        %v5742 = vmax.f32 %v5740, %v5741
        %v5743 = vrot.slane %v5742, 1
        %v5744 = vmax.f32 %v5742, %v5743
        %v5745 = vsel %vm4855, %v4758, -inf
        %v5746 = vrot.slane %v5745, 4
        %v5747 = vmax.f32 %v5745, %v5746
        %v5748 = vrot.slane %v5747, 2
        %v5749 = vmax.f32 %v5747, %v5748
        %v5750 = vrot.slane %v5749, 1
        %v5751 = vmax.f32 %v5749, %v5750
        %v5752 = vmax.f32 %v4862, %v4918
        %v5753 = vmax.f32 %v4869, %v4925
        %v5754 = vmax.f32 %v4876, %v4932
        %v5755 = vmax.f32 %v4883, %v4939
        %v5756 = vmax.f32 %v4890, %v4946
        %v5757 = vmax.f32 %v4897, %v4953
        %v5758 = vmax.f32 %v4904, %v4960
        %v5759 = vmax.f32 %v4911, %v4967
        %v5760 = vmax.f32 %v4974, %v5030
        %v5761 = vmax.f32 %v4981, %v5037
        %v5762 = vmax.f32 %v4988, %v5044
        %v5763 = vmax.f32 %v4995, %v5051
        %v5764 = vmax.f32 %v5002, %v5058
        %v5765 = vmax.f32 %v5009, %v5065
        %v5766 = vmax.f32 %v5016, %v5072
        %v5767 = vmax.f32 %v5023, %v5079
        %v5768 = vmax.f32 %v5086, %v5142
        %v5769 = vmax.f32 %v5093, %v5149
        %v5770 = vmax.f32 %v5100, %v5156
        %v5771 = vmax.f32 %v5107, %v5163
        %v5772 = vmax.f32 %v5114, %v5170
        %v5773 = vmax.f32 %v5121, %v5177
        %v5774 = vmax.f32 %v5128, %v5184
        %v5775 = vmax.f32 %v5135, %v5191
        %v5776 = vmax.f32 %v5198, %v5254
        %v5777 = vmax.f32 %v5205, %v5261
        %v5778 = vmax.f32 %v5212, %v5268
        %v5779 = vmax.f32 %v5219, %v5275
        %v5780 = vmax.f32 %v5226, %v5282
        %v5781 = vmax.f32 %v5233, %v5289
        %v5782 = vmax.f32 %v5240, %v5296
        %v5783 = vmax.f32 %v5247, %v5303
        %v5784 = vmax.f32 %v5310, %v5366
        %v5785 = vmax.f32 %v5317, %v5373
        %v5786 = vmax.f32 %v5324, %v5380
        %v5787 = vmax.f32 %v5331, %v5387
        %v5788 = vmax.f32 %v5338, %v5394
        %v5789 = vmax.f32 %v5345, %v5401
        %v5790 = vmax.f32 %v5352, %v5408
        %v5791 = vmax.f32 %v5359, %v5415
        %v5792 = vmax.f32 %v5422, %v5478
        %v5793 = vmax.f32 %v5429, %v5485
        %v5794 = vmax.f32 %v5436, %v5492
        %v5795 = vmax.f32 %v5443, %v5499
        %v5796 = vmax.f32 %v5450, %v5506
        %v5797 = vmax.f32 %v5457, %v5513
        %v5798 = vmax.f32 %v5464, %v5520
        %v5799 = vmax.f32 %v5471, %v5527
        %v5800 = vmax.f32 %v5534, %v5590
        %v5801 = vmax.f32 %v5541, %v5597
        %v5802 = vmax.f32 %v5548, %v5604
        %v5803 = vmax.f32 %v5555, %v5611
        %v5804 = vmax.f32 %v5562, %v5618
        %v5805 = vmax.f32 %v5569, %v5625
        %v5806 = vmax.f32 %v5576, %v5632
        %v5807 = vmax.f32 %v5583, %v5639
        %v5808 = vmax.f32 %v5646, %v5702
        %v5809 = vmax.f32 %v5653, %v5709
        %v5810 = vmax.f32 %v5660, %v5716
        %v5811 = vmax.f32 %v5667, %v5723
        %v5812 = vmax.f32 %v5674, %v5730
        %v5813 = vmax.f32 %v5681, %v5737
        %v5814 = vmax.f32 %v5688, %v5744
        %v5815 = vmax.f32 %v5695, %v5751
        %vm5880 = vcmask 1041409
        %v5881 = vsel %vm5880, %v5753, %v5752
        %vm5882 = vcmask 1042434
        %v5883 = vsel %vm5882, %v5754, %v5881
        %vm5884 = vcmask 1043459
        %v5885 = vsel %vm5884, %v5755, %v5883
        %vm5886 = vcmask 1044484
        %v5887 = vsel %vm5886, %v5756, %v5885
        %vm5888 = vcmask 1045509
        %v5889 = vsel %vm5888, %v5757, %v5887
        %vm5890 = vcmask 1046534
        %v5891 = vsel %vm5890, %v5758, %v5889
        %vm5892 = vcmask 1047559
        %v5893 = vsel %vm5892, %v5759, %v5891
        %v5894 = vsel %vm5880, %v5761, %v5760
        %v5895 = vsel %vm5882, %v5762, %v5894
        %v5896 = vsel %vm5884, %v5763, %v5895
        %v5897 = vsel %vm5886, %v5764, %v5896
        %v5898 = vsel %vm5888, %v5765, %v5897
        %v5899 = vsel %vm5890, %v5766, %v5898
        %v5900 = vsel %vm5892, %v5767, %v5899
        %v5901 = vsel %vm5880, %v5769, %v5768
        %v5902 = vsel %vm5882, %v5770, %v5901
        %v5903 = vsel %vm5884, %v5771, %v5902
        %v5904 = vsel %vm5886, %v5772, %v5903
        %v5905 = vsel %vm5888, %v5773, %v5904
        %v5906 = vsel %vm5890, %v5774, %v5905
        %v5907 = vsel %vm5892, %v5775, %v5906
        %v5908 = vsel %vm5880, %v5777, %v5776
        %v5909 = vsel %vm5882, %v5778, %v5908
        %v5910 = vsel %vm5884, %v5779, %v5909
        %v5911 = vsel %vm5886, %v5780, %v5910
        %v5912 = vsel %vm5888, %v5781, %v5911
        %v5913 = vsel %vm5890, %v5782, %v5912
        %v5914 = vsel %vm5892, %v5783, %v5913
        %v5915 = vsel %vm5880, %v5785, %v5784
        %v5916 = vsel %vm5882, %v5786, %v5915
        %v5917 = vsel %vm5884, %v5787, %v5916
        %v5918 = vsel %vm5886, %v5788, %v5917
        %v5919 = vsel %vm5888, %v5789, %v5918
        %v5920 = vsel %vm5890, %v5790, %v5919
        %v5921 = vsel %vm5892, %v5791, %v5920
        %v5922 = vsel %vm5880, %v5793, %v5792
        %v5923 = vsel %vm5882, %v5794, %v5922
        %v5924 = vsel %vm5884, %v5795, %v5923
        %v5925 = vsel %vm5886, %v5796, %v5924
        %v5926 = vsel %vm5888, %v5797, %v5925
        %v5927 = vsel %vm5890, %v5798, %v5926
        %v5928 = vsel %vm5892, %v5799, %v5927
        %v5929 = vsel %vm5880, %v5801, %v5800
        %v5930 = vsel %vm5882, %v5802, %v5929
        %v5931 = vsel %vm5884, %v5803, %v5930
        %v5932 = vsel %vm5886, %v5804, %v5931
        %v5933 = vsel %vm5888, %v5805, %v5932
        %v5934 = vsel %vm5890, %v5806, %v5933
        %v5935 = vsel %vm5892, %v5807, %v5934
        %v5936 = vsel %vm5880, %v5809, %v5808
        %v5937 = vsel %vm5882, %v5810, %v5936
        %v5938 = vsel %vm5884, %v5811, %v5937
        %v5939 = vsel %vm5886, %v5812, %v5938
        %v5940 = vsel %vm5888, %v5813, %v5939
        %v5941 = vsel %vm5890, %v5814, %v5940
        %v5942 = vsel %vm5892, %v5815, %v5941
        %5951 = vst [vmem:[%s241] sm:$0xff] %v5893
        %5952 = vst [vmem:[%s241 + $0x8] sm:$0xff] %v5900
        %5953 = vst [vmem:[%s241 + $0x10] sm:$0xff] %v5907
        %5954 = vst [vmem:[%s241 + $0x18] sm:$0xff] %v5914
        %5955 = vst [vmem:[%s241 + $0x20] sm:$0xff] %v5921
        %5956 = vst [vmem:[%s241 + $0x28] sm:$0xff] %v5928
        %5957 = vst [vmem:[%s241 + $0x30] sm:$0xff] %v5935
        %5958 = vst [vmem:[%s241 + $0x38] sm:$0xff] %v5942
        %p5959 = scmp.lt.s32.totalorder %s17, 1
        %s5960 = scalar_select %p5959, %s17, 1
        %s5961 = smul.addr %s5960, 8
        %s5962 = smul.addr %s5961, 8
        %s5963 = scalar_lea.vmem %s5, %s5962
        // Predicated region
        $region45: #{conv_classifier_forward.2} parent=39 // pred_check
          %p5964 = pneg %p145
        $region46: #{conv_classifier_forward.2} parent=39 // pred_check_branch
          %5966 = sbr.rel (%p5964) target = $region48
        $region47: #{conv_classifier_forward.2} parent=39 // pred_region
          _
        $region48: #{conv_classifier_forward.2} parent=39 // pred_fallthru
          _
      $region40: #{conv_classifier_forward.2} parent=5 // pred_fallthru
        _
      %p5967 = scmp.le.s32.totalorder 2, %s12
      // Predicated region
      $region49: #{conv_classifier_forward.2} parent=5 // pred_check
        %p5968 = pneg %p5967
      $region50: #{conv_classifier_forward.2} parent=5 // pred_check_branch
        %5970 = sbr.rel (%p5968) target = $region52
      $region51: #{conv_classifier_forward.2} parent=5 // pred_region
        %s5971 = ssub.s32 %s12, 2
        // Predicated region
        $region53: #{conv_classifier_forward.2} parent=51 // pred_check
          %p5972 = pneg %p151
        $region54: #{conv_classifier_forward.2} parent=51 // pred_check_branch
          %5974 = sbr.rel (%p5972) target = $region56
        $region55: #{conv_classifier_forward.2} parent=51 // pred_region
          %p5975 = scmp.lt.s32.totalorder %s18, 1
          %s5976 = scalar_select %p5975, %s18, 1
          %s5977 = smul.addr %s5976, 8
          %s5978 = smul.addr %s5977, 8
          %s5979 = scalar_lea.vmem %s5, %s5978
        $region56: #{conv_classifier_forward.2} parent=51 // pred_fallthru
          _
      $region52: #{conv_classifier_forward.2} parent=5 // pred_fallthru
        _
    $region6: #{conv_classifier_forward.2} parent=1 // loop_footer
      %s16 = sadd.s32 1, %s12
    $region7: #{conv_classifier_forward.2} parent=1 // loop_footer_branch
      %11 = sbr.rel target = $region3
    $region8: #{conv_classifier_forward.2} parent=1 // loop_exit
      _
    %5980 = vsyncpa [#allocation4], 1
    %s5981 = scalar_lea.sflag [#allocation4], 1
    %5982 = vsyncpa %s5981, 1

</llo_original>
